<compile_context>
chip_gen: v7x
topology: tpu7x:2x2x1
jax: 0.10.0
libtpu: 0.0.40
codegen_flags: <defaults>
</compile_context>

<pallas_src>
import math

import jax
import jax.numpy as jnp
from jax.experimental import pallas as pl
from jax.experimental.pallas import tpu as pltpu


# ----------------------------------------------------------------------------
# Fused Pallas kernel
# ----------------------------------------------------------------------------
def _vep_fused_kernel(x_ref,
                      w1c_ref, b1c_ref, w2c_ref, b2c_ref,
                      w3c_ref, b3c_ref, w4c_ref, b4c_ref,
                      wf1_ref, bf1_ref, wf2_ref, bf2_ref,
                      wf3_ref, bf3_ref, wf4_ref, bf4_ref,
                      o_ref):
    """Whole network for one batch tile.

    x_ref: (TB, L_in, 1) f32      o_ref: (TB, 1, 1) f32
    conv1 weight (3, 32) f32; conv2..4 weights (3*C_in, C_out) bf16;
    fc weights (in, out) bf16 (fc1 rows permuted to time-major); biases f32.
    """
    TB, L_in, _ = x_ref.shape
    L1 = L_in - 2

    # ---- hoist every weight / bias load out of the per-sample loop ----
    w1c, b1c = w1c_ref[...], b1c_ref[...]
    w2c, b2c = w2c_ref[...], b2c_ref[...]
    w3c, b3c = w3c_ref[...], b3c_ref[...]
    w4c, b4c = w4c_ref[...], b4c_ref[...]
    wf1, bf1 = wf1_ref[...], bf1_ref[...]
    wf2, bf2 = wf2_ref[...], bf2_ref[...]
    wf3, bf3 = wf3_ref[...], bf3_ref[...]
    wf4, bf4 = wf4_ref[...], bf4_ref[...]

    def conv_relu_pool(h, w, b):
        """conv1d(k=3, valid) + ReLU + maxpool(2) via one im2col MXU dot.

        h: (L, C_in) f32; w: (3*C_in, C_out) bf16; b: (1, C_out) f32.
        """
        L, _ = h.shape
        L_out = L - 2
        # im2col: one (L_out, 3*C_in) slab -> a single MXU dot with K = 3*C_in
        slab = jnp.concatenate([h[k:k + L_out, :] for k in range(3)], axis=1)
        acc = jnp.dot(slab.astype(w.dtype), w,
                      preferred_element_type=jnp.float32)
        acc = jnp.maximum(acc + b, 0.0)                  # bias + ReLU in f32
        L_pool = L_out // 2
        C_out = acc.shape[1]
        return jnp.max(acc[:2 * L_pool].reshape(L_pool, 2, C_out), axis=1)

    flat_rows = []
    for t in range(TB):                                  # TB is static & small
        x = x_ref[t]                                     # (L_in, 1) f32
        # ---- conv1 (C_in = 1): pure VPU broadcast multiply-adds ----
        acc = (x[0:L1, :]     * w1c[0:1, :] +
               x[1:L1 + 1, :] * w1c[1:2, :] +
               x[2:L1 + 2, :] * w1c[2:3, :])             # (L1, 32)
        acc = jnp.maximum(acc + b1c, 0.0)
        Lp = L1 // 2
        h = jnp.max(acc[:2 * Lp].reshape(Lp, 2, acc.shape[1]), axis=1)

        # ---- conv2..conv4: im2col MXU dots ----
        h = conv_relu_pool(h, w2c, b2c)
        h = conv_relu_pool(h, w3c, b3c)
        h = conv_relu_pool(h, w4c, b4c)                  # (L_f, 256)

        # time-major flatten (consumed by the permuted fc1 weight);
        # concat offsets are multiples of 256 lanes -> cheap placement.
        L_f = h.shape[0]
        flat_rows.append(jnp.concatenate([h[l:l + 1, :] for l in range(L_f)],
                                         axis=1))        # (1, L_f*256)

    feats = flat_rows[0] if TB == 1 else jnp.concatenate(flat_rows, axis=0)

    # ---- MLP head (batched over the tile): bf16 operands, f32 accumulation ----
    def dense(v, w, b):
        return jnp.dot(v.astype(w.dtype), w,
                       preferred_element_type=jnp.float32) + b

    y = jnp.maximum(dense(feats, wf1, bf1), 0.0)
    y = jnp.maximum(dense(y, wf2, bf2), 0.0)
    y = jnp.maximum(dense(y, wf3, bf3), 0.0)
    y = jax.nn.sigmoid(dense(y, wf4, bf4))               # (TB, 1)
    o_ref[...] = y.reshape(o_ref.shape)


# ----------------------------------------------------------------------------
# Wrapper
# ----------------------------------------------------------------------------
def _replicated_spec(shape):
    zeros = (0,) * len(shape)
    return pl.BlockSpec(shape, lambda b, _z=zeros: _z)


def _pick_batch_tile(batch):
    """Largest divisor of batch that is <= 8 while keeping >= 2 grid steps."""
    best = 1
    for tb in range(1, min(batch, 8) + 1):
        if batch % tb == 0 and (batch // tb >= 2 or batch == 1):
            best = tb
    return best


def vep_forward(x_ncw, kparams):
    """Full VEPIdentificationModel.forward.  x_ncw: (B, 1, input_size) NCW."""
    B, _, L_in = x_ncw.shape
    x = jnp.transpose(x_ncw, (0, 2, 1)).astype(jnp.float32)   # (B, L_in, 1)
    tb = _pick_batch_tile(B)
    weights = kparams["weights"]
    in_specs = ([pl.BlockSpec((tb, L_in, 1), lambda b: (b, 0, 0))]
                + [_replicated_spec(w.shape) for w in weights])
    out = pl.pallas_call(
        _vep_fused_kernel,
        out_shape=jax.ShapeDtypeStruct((B, 1, 1), jnp.float32),
        grid=(B // tb,),
        in_specs=in_specs,
        out_specs=pl.BlockSpec((tb, 1, 1), lambda b: (b, 0, 0)),
        compiler_params=pltpu.CompilerParams(dimension_semantics=("parallel",)),
    )(x, *weights)
    return out.reshape(B, 1)


# ----------------------------------------------------------------------------
# Parameters (synthetic, PyTorch-style shapes/init) + kernel-layout prep
# ----------------------------------------------------------------------------
def make_params(key, input_size):
    conv_channels = [(1, 32), (32, 64), (64, 128), (128, 256)]
    raw = {"convs": []}
    L = input_size
    for (cin, cout) in conv_channels:
        key, kw, kb = jax.random.split(key, 3)
        bound = 1.0 / math.sqrt(cin * 3)
        w = jax.random.uniform(kw, (3, cin, cout), jnp.float32, -bound, bound)
        b = jax.random.uniform(kb, (1, cout), jnp.float32, -bound, bound)
        raw["convs"].append((w, b))
        L = (L - 2) // 2
    raw["conv_out_len"] = L
    to_linear = 256 * L
    fc_dims = [(to_linear, 256), (256, 128), (128, 64), (64, 1)]
    for i, (fin, fout) in enumerate(fc_dims, start=1):
        key, kw, kb = jax.random.split(key, 3)
        bound = 1.0 / math.sqrt(fin)
        raw[f"w{i}"] = jax.random.uniform(kw, (fin, fout), jnp.float32,
                                          -bound, bound)
        raw[f"b{i}"] = jax.random.uniform(kb, (1, fout), jnp.float32,
                                          -bound, bound)
    return raw, to_linear


def prepare_kernel_params(raw, weight_dtype=jnp.bfloat16):
    """Host-side, one-time reshape/permute/cast into the fused kernel layout."""
    (w1, b1), (w2, b2), (w3, b3), (w4, b4) = raw["convs"]
    L = raw["conv_out_len"]
    C = w4.shape[2]                       # 256 channels out of conv4
    # fc1 rows: channel-major (c*L + l)  ->  time-major (l*C + c)
    wf1 = raw["w1"].reshape(C, L, -1).transpose(1, 0, 2).reshape(C * L, -1)
    weights = [
        w1[:, 0, :].astype(jnp.float32), b1.astype(jnp.float32),       # conv1 (VPU)
        w2.reshape(-1, w2.shape[2]).astype(weight_dtype), b2.astype(jnp.float32),
        w3.reshape(-1, w3.shape[2]).astype(weight_dtype), b3.astype(jnp.float32),
        w4.reshape(-1, w4.shape[2]).astype(weight_dtype), b4.astype(jnp.float32),
        wf1.astype(weight_dtype),           raw["b1"].astype(jnp.float32),
        raw["w2"].astype(weight_dtype),     raw["b2"].astype(jnp.float32),
        raw["w3"].astype(weight_dtype),     raw["b3"].astype(jnp.float32),
        raw["w4"].astype(weight_dtype),     raw["b4"].astype(jnp.float32),
    ]
    return {"weights": weights}


# ----------------------------------------------------------------------------
# Pure-JAX reference (same bf16-operand / f32-accumulation math)
# ----------------------------------------------------------------------------
def reference_forward(x_ncw, raw, weight_dtype=jnp.bfloat16):
    x = jnp.transpose(x_ncw, (0, 2, 1)).astype(jnp.float32)   # (B, L, C)

    def conv_block(x, w, b, cast):
        B, L, _ = x.shape
        Lo = L - 2
        if cast:
            acc = sum(jnp.einsum("blc,co->blo",
                                 x[:, k:k + Lo, :].astype(weight_dtype),
                                 w[k].astype(weight_dtype),
                                 preferred_element_type=jnp.float32)
                      for k in range(3))
        else:
            acc = sum(jnp.einsum("blc,co->blo", x[:, k:k + Lo, :], w[k])
                      for k in range(3))
        acc = jnp.maximum(acc + b[None], 0.0)
        Lp = Lo // 2
        return jnp.max(acc[:, :2 * Lp].reshape(B, Lp, 2, -1), axis=2)

    for i, (w, b) in enumerate(raw["convs"]):
        x = conv_block(x, w, b, cast=(i > 0))
    B = x.shape[0]
    h = jnp.transpose(x, (0, 2, 1)).reshape(B, -1)   # PyTorch channel-major flatten

    def dense(v, w, b):
        return jnp.dot(v.astype(weight_dtype), w.astype(weight_dtype),
                       preferred_element_type=jnp.float32) + b

    h = jnp.maximum(dense(h, raw["w1"], raw["b1"]), 0.0)
    h = jnp.maximum(dense(h, raw["w2"], raw["b2"]), 0.0)
    h = jnp.maximum(dense(h, raw["w3"], raw["b3"]), 0.0)
    return jax.nn.sigmoid(dense(h, raw["w4"], raw["b4"]))


# ----------------------------------------------------------------------------
if __name__ == "__main__":
    INPUT_SIZE = 200   # 200-sample VEP windows (as used by the module)
    BATCH = 2

    key = jax.random.PRNGKey(0)
    key, pkey, xkey = jax.random.split(key, 3)
    raw, to_linear = make_params(pkey, INPUT_SIZE)
    kparams = prepare_kernel_params(raw)

    # PyTorch forward receives (B, 1, input_size) after unsqueeze(1)
    x = jax.random.normal(xkey, (BATCH, 1, INPUT_SIZE), jnp.float32)

    out = jax.block_until_ready(vep_forward(x, kparams))
    ref = jax.block_until_ready(reference_forward(x, raw))

    assert out.shape == (BATCH, 1), out.shape
    assert jnp.allclose(out, ref, rtol=2e-2, atol=2e-3), (out, ref)

    # TODO(synk): dropout1/dropout2 are identity in eval mode and are omitted;
    # training/evaluation/file-logging/model-saving methods have no kernel
    # equivalent.
    print("KERNEL_OK")
</pallas_src>

<mosaic_0001>
module attributes {stable_mosaic.version = 11 : i64} {
  func.func @_vep_fused_kernel(%arg0: i32, %arg1: memref<1x200x1xf32, #tpu.memory_space<vmem>>, %arg2: memref<3x32xf32, #tpu.memory_space<vmem>>, %arg3: memref<1x32xf32, #tpu.memory_space<vmem>>, %arg4: memref<96x64xbf16, #tpu.memory_space<vmem>>, %arg5: memref<1x64xf32, #tpu.memory_space<vmem>>, %arg6: memref<192x128xbf16, #tpu.memory_space<vmem>>, %arg7: memref<1x128xf32, #tpu.memory_space<vmem>>, %arg8: memref<384x256xbf16, #tpu.memory_space<vmem>>, %arg9: memref<1x256xf32, #tpu.memory_space<vmem>>, %arg10: memref<2560x256xbf16, #tpu.memory_space<vmem>>, %arg11: memref<1x256xf32, #tpu.memory_space<vmem>>, %arg12: memref<256x128xbf16, #tpu.memory_space<vmem>>, %arg13: memref<1x128xf32, #tpu.memory_space<vmem>>, %arg14: memref<128x64xbf16, #tpu.memory_space<vmem>>, %arg15: memref<1x64xf32, #tpu.memory_space<vmem>>, %arg16: memref<64x1xbf16, #tpu.memory_space<vmem>>, %arg17: memref<1x1xf32, #tpu.memory_space<vmem>>, %arg18: memref<1x1x1xf32, #tpu.memory_space<vmem>>) attributes {dimension_semantics = [#tpu.dimension_semantics<parallel>], iteration_bounds = array<i64: 2>, scalar_prefetch = 0 : i64, scratch_operands = 0 : i64, tpu.core_type = #tpu.core_type<tc>, window_params = [{transform_indices = @transform_0, window_bounds = array<i64: 1, 200, 1>}, {pipeline_mode = #tpu.pipeline_mode<synchronous>, transform_indices = @transform_1, window_bounds = array<i64: 3, 32>}, {pipeline_mode = #tpu.pipeline_mode<synchronous>, transform_indices = @transform_2, window_bounds = array<i64: 1, 32>}, {pipeline_mode = #tpu.pipeline_mode<synchronous>, transform_indices = @transform_3, window_bounds = array<i64: 96, 64>}, {pipeline_mode = #tpu.pipeline_mode<synchronous>, transform_indices = @transform_4, window_bounds = array<i64: 1, 64>}, {pipeline_mode = #tpu.pipeline_mode<synchronous>, transform_indices = @transform_5, window_bounds = array<i64: 192, 128>}, {pipeline_mode = #tpu.pipeline_mode<synchronous>, transform_indices = @transform_6, window_bounds = array<i64: 1, 128>}, {pipeline_mode = #tpu.pipeline_mode<synchronous>, transform_indices = @transform_7, window_bounds = array<i64: 384, 256>}, {pipeline_mode = #tpu.pipeline_mode<synchronous>, transform_indices = @transform_8, window_bounds = array<i64: 1, 256>}, {pipeline_mode = #tpu.pipeline_mode<synchronous>, transform_indices = @transform_9, window_bounds = array<i64: 2560, 256>}, {pipeline_mode = #tpu.pipeline_mode<synchronous>, transform_indices = @transform_10, window_bounds = array<i64: 1, 256>}, {pipeline_mode = #tpu.pipeline_mode<synchronous>, transform_indices = @transform_11, window_bounds = array<i64: 256, 128>}, {pipeline_mode = #tpu.pipeline_mode<synchronous>, transform_indices = @transform_12, window_bounds = array<i64: 1, 128>}, {pipeline_mode = #tpu.pipeline_mode<synchronous>, transform_indices = @transform_13, window_bounds = array<i64: 128, 64>}, {pipeline_mode = #tpu.pipeline_mode<synchronous>, transform_indices = @transform_14, window_bounds = array<i64: 1, 64>}, {pipeline_mode = #tpu.pipeline_mode<synchronous>, transform_indices = @transform_15, window_bounds = array<i64: 64, 1>}, {pipeline_mode = #tpu.pipeline_mode<synchronous>, transform_indices = @transform_16, window_bounds = array<i64: 1, 1>}, {transform_indices = @transform_17, window_bounds = array<i64: 1, 1, 1>}]} {
    %c0 = arith.constant 0 : index
    %c0_0 = arith.constant 0 : index
    %0 = vector.load %arg2[%c0, %c0_0] : memref<3x32xf32, #tpu.memory_space<vmem>>, vector<3x32xf32>
    %c0_1 = arith.constant 0 : index
    %c0_2 = arith.constant 0 : index
    %1 = vector.load %arg3[%c0_1, %c0_2] : memref<1x32xf32, #tpu.memory_space<vmem>>, vector<1x32xf32>
    %c0_3 = arith.constant 0 : index
    %c0_4 = arith.constant 0 : index
    %2 = vector.load %arg4[%c0_3, %c0_4] : memref<96x64xbf16, #tpu.memory_space<vmem>>, vector<96x64xbf16>
    %c0_5 = arith.constant 0 : index
    %c0_6 = arith.constant 0 : index
    %3 = vector.load %arg5[%c0_5, %c0_6] : memref<1x64xf32, #tpu.memory_space<vmem>>, vector<1x64xf32>
    %c0_7 = arith.constant 0 : index
    %c0_8 = arith.constant 0 : index
    %4 = vector.load %arg6[%c0_7, %c0_8] : memref<192x128xbf16, #tpu.memory_space<vmem>>, vector<192x128xbf16>
    %c0_9 = arith.constant 0 : index
    %c0_10 = arith.constant 0 : index
    %5 = vector.load %arg7[%c0_9, %c0_10] : memref<1x128xf32, #tpu.memory_space<vmem>>, vector<1x128xf32>
    %c0_11 = arith.constant 0 : index
    %c0_12 = arith.constant 0 : index
    %6 = vector.load %arg8[%c0_11, %c0_12] : memref<384x256xbf16, #tpu.memory_space<vmem>>, vector<384x256xbf16>
    %c0_13 = arith.constant 0 : index
    %c0_14 = arith.constant 0 : index
    %7 = vector.load %arg9[%c0_13, %c0_14] : memref<1x256xf32, #tpu.memory_space<vmem>>, vector<1x256xf32>
    %c0_15 = arith.constant 0 : index
    %c0_16 = arith.constant 0 : index
    %8 = vector.load %arg10[%c0_15, %c0_16] : memref<2560x256xbf16, #tpu.memory_space<vmem>>, vector<2560x256xbf16>
    %c0_17 = arith.constant 0 : index
    %c0_18 = arith.constant 0 : index
    %9 = vector.load %arg11[%c0_17, %c0_18] : memref<1x256xf32, #tpu.memory_space<vmem>>, vector<1x256xf32>
    %c0_19 = arith.constant 0 : index
    %c0_20 = arith.constant 0 : index
    %10 = vector.load %arg12[%c0_19, %c0_20] : memref<256x128xbf16, #tpu.memory_space<vmem>>, vector<256x128xbf16>
    %c0_21 = arith.constant 0 : index
    %c0_22 = arith.constant 0 : index
    %11 = vector.load %arg13[%c0_21, %c0_22] : memref<1x128xf32, #tpu.memory_space<vmem>>, vector<1x128xf32>
    %c0_23 = arith.constant 0 : index
    %c0_24 = arith.constant 0 : index
    %12 = vector.load %arg14[%c0_23, %c0_24] : memref<128x64xbf16, #tpu.memory_space<vmem>>, vector<128x64xbf16>
    %c0_25 = arith.constant 0 : index
    %c0_26 = arith.constant 0 : index
    %13 = vector.load %arg15[%c0_25, %c0_26] : memref<1x64xf32, #tpu.memory_space<vmem>>, vector<1x64xf32>
    %c0_27 = arith.constant 0 : index
    %c0_28 = arith.constant 0 : index
    %14 = vector.load %arg16[%c0_27, %c0_28] : memref<64x1xbf16, #tpu.memory_space<vmem>>, vector<64x1xbf16>
    %c0_29 = arith.constant 0 : index
    %c0_30 = arith.constant 0 : index
    %15 = vector.load %arg17[%c0_29, %c0_30] : memref<1x1xf32, #tpu.memory_space<vmem>>, vector<1x1xf32>
    %c0_31 = arith.constant 0 : index
    %c0_32 = arith.constant 0 : index
    %c0_33 = arith.constant 0 : index
    %16 = vector.load %arg1[%c0_31, %c0_32, %c0_33] : memref<1x200x1xf32, #tpu.memory_space<vmem>>, vector<1x200x1xf32>
    %17 = vector.shape_cast %16 : vector<1x200x1xf32> to vector<200x1xf32>
    %18 = vector.extract_strided_slice %17 {offsets = [0, 0], sizes = [198, 1], strides = [1, 1]} : vector<200x1xf32> to vector<198x1xf32>
    %19 = vector.extract_strided_slice %0 {offsets = [0, 0], sizes = [1, 32], strides = [1, 1]} : vector<3x32xf32> to vector<1x32xf32>
    %20 = vector.broadcast %18 : vector<198x1xf32> to vector<198x32xf32>
    %21 = vector.broadcast %19 : vector<1x32xf32> to vector<198x32xf32>
    %22 = arith.mulf %20, %21 : vector<198x32xf32>
    %23 = vector.extract_strided_slice %17 {offsets = [1, 0], sizes = [198, 1], strides = [1, 1]} : vector<200x1xf32> to vector<198x1xf32>
    %24 = vector.extract_strided_slice %0 {offsets = [1, 0], sizes = [1, 32], strides = [1, 1]} : vector<3x32xf32> to vector<1x32xf32>
    %25 = vector.broadcast %23 : vector<198x1xf32> to vector<198x32xf32>
    %26 = vector.broadcast %24 : vector<1x32xf32> to vector<198x32xf32>
    %27 = arith.mulf %25, %26 : vector<198x32xf32>
    %28 = arith.addf %22, %27 : vector<198x32xf32>
    %29 = vector.extract_strided_slice %17 {offsets = [2, 0], sizes = [198, 1], strides = [1, 1]} : vector<200x1xf32> to vector<198x1xf32>
    %30 = vector.extract_strided_slice %0 {offsets = [2, 0], sizes = [1, 32], strides = [1, 1]} : vector<3x32xf32> to vector<1x32xf32>
    %31 = vector.broadcast %29 : vector<198x1xf32> to vector<198x32xf32>
    %32 = vector.broadcast %30 : vector<1x32xf32> to vector<198x32xf32>
    %33 = arith.mulf %31, %32 : vector<198x32xf32>
    %34 = arith.addf %28, %33 : vector<198x32xf32>
    %35 = vector.broadcast %1 : vector<1x32xf32> to vector<198x32xf32>
    %36 = arith.addf %34, %35 : vector<198x32xf32>
    %cst = arith.constant 0.000000e+00 : f32
    %37 = vector.broadcast %cst : f32 to vector<198x32xf32>
    %38 = arith.maximumf %36, %37 : vector<198x32xf32>
    %39 = vector.shape_cast %38 : vector<198x32xf32> to vector<99x2x32xf32>
    %cst_34 = arith.constant dense<0xFF800000> : vector<99x32xf32>
    %40 = vector.multi_reduction <maximumf>, %39, %cst_34 [1] : vector<99x2x32xf32> to vector<99x32xf32>
    %41 = vector.extract_strided_slice %40 {offsets = [0, 0], sizes = [97, 32], strides = [1, 1]} : vector<99x32xf32> to vector<97x32xf32>
    %42 = vector.extract_strided_slice %40 {offsets = [1, 0], sizes = [97, 32], strides = [1, 1]} : vector<99x32xf32> to vector<97x32xf32>
    %43 = vector.extract_strided_slice %40 {offsets = [2, 0], sizes = [97, 32], strides = [1, 1]} : vector<99x32xf32> to vector<97x32xf32>
    %44 = tpu.concatenate %41, %42, %43 in 1 : vector<97x32xf32>, vector<97x32xf32>, vector<97x32xf32> -> vector<97x96xf32>
    %45 = arith.truncf %44 : vector<97x96xf32> to vector<97x96xbf16>
    %cst_35 = arith.constant dense<0.000000e+00> : vector<97x64xf32>
    %46 = tpu.matmul %45, %2, %cst_35 {dimension_numbers = #tpu.dot_dimension_numbers<[1], [0], [0], [1], [0, 0, 1, 1], [], []>} : vector<97x96xbf16>, vector<96x64xbf16>, vector<97x64xf32> -> vector<97x64xf32>
    %47 = vector.broadcast %3 : vector<1x64xf32> to vector<97x64xf32>
    %48 = arith.addf %46, %47 : vector<97x64xf32>
    %cst_36 = arith.constant 0.000000e+00 : f32
    %49 = vector.broadcast %cst_36 : f32 to vector<97x64xf32>
    %50 = arith.maximumf %48, %49 : vector<97x64xf32>
    %51 = vector.extract_strided_slice %50 {offsets = [0, 0], sizes = [96, 64], strides = [1, 1]} : vector<97x64xf32> to vector<96x64xf32>
    %52 = vector.shape_cast %51 : vector<96x64xf32> to vector<48x2x64xf32>
    %cst_37 = arith.constant dense<0xFF800000> : vector<48x64xf32>
    %53 = vector.multi_reduction <maximumf>, %52, %cst_37 [1] : vector<48x2x64xf32> to vector<48x64xf32>
    %54 = vector.extract_strided_slice %53 {offsets = [0, 0], sizes = [46, 64], strides = [1, 1]} : vector<48x64xf32> to vector<46x64xf32>
    %55 = vector.extract_strided_slice %53 {offsets = [1, 0], sizes = [46, 64], strides = [1, 1]} : vector<48x64xf32> to vector<46x64xf32>
    %56 = vector.extract_strided_slice %53 {offsets = [2, 0], sizes = [46, 64], strides = [1, 1]} : vector<48x64xf32> to vector<46x64xf32>
    %57 = tpu.concatenate %54, %55, %56 in 1 : vector<46x64xf32>, vector<46x64xf32>, vector<46x64xf32> -> vector<46x192xf32>
    %58 = arith.truncf %57 : vector<46x192xf32> to vector<46x192xbf16>
    %cst_38 = arith.constant dense<0.000000e+00> : vector<46x128xf32>
    %59 = tpu.matmul %58, %4, %cst_38 {dimension_numbers = #tpu.dot_dimension_numbers<[1], [0], [0], [1], [0, 0, 1, 1], [], []>} : vector<46x192xbf16>, vector<192x128xbf16>, vector<46x128xf32> -> vector<46x128xf32>
    %60 = vector.broadcast %5 : vector<1x128xf32> to vector<46x128xf32>
    %61 = arith.addf %59, %60 : vector<46x128xf32>
    %cst_39 = arith.constant 0.000000e+00 : f32
    %62 = vector.broadcast %cst_39 : f32 to vector<46x128xf32>
    %63 = arith.maximumf %61, %62 : vector<46x128xf32>
    %64 = vector.shape_cast %63 : vector<46x128xf32> to vector<23x2x128xf32>
    %cst_40 = arith.constant dense<0xFF800000> : vector<23x128xf32>
    %65 = vector.multi_reduction <maximumf>, %64, %cst_40 [1] : vector<23x2x128xf32> to vector<23x128xf32>
    %66 = vector.extract_strided_slice %65 {offsets = [0, 0], sizes = [21, 128], strides = [1, 1]} : vector<23x128xf32> to vector<21x128xf32>
    %67 = vector.extract_strided_slice %65 {offsets = [1, 0], sizes = [21, 128], strides = [1, 1]} : vector<23x128xf32> to vector<21x128xf32>
    %68 = vector.extract_strided_slice %65 {offsets = [2, 0], sizes = [21, 128], strides = [1, 1]} : vector<23x128xf32> to vector<21x128xf32>
    %69 = tpu.concatenate %66, %67, %68 in 1 : vector<21x128xf32>, vector<21x128xf32>, vector<21x128xf32> -> vector<21x384xf32>
    %70 = arith.truncf %69 : vector<21x384xf32> to vector<21x384xbf16>
    %cst_41 = arith.constant dense<0.000000e+00> : vector<21x256xf32>
    %71 = tpu.matmul %70, %6, %cst_41 {dimension_numbers = #tpu.dot_dimension_numbers<[1], [0], [0], [1], [0, 0, 1, 1], [], []>} : vector<21x384xbf16>, vector<384x256xbf16>, vector<21x256xf32> -> vector<21x256xf32>
    %72 = vector.broadcast %7 : vector<1x256xf32> to vector<21x256xf32>
    %73 = arith.addf %71, %72 : vector<21x256xf32>
    %cst_42 = arith.constant 0.000000e+00 : f32
    %74 = vector.broadcast %cst_42 : f32 to vector<21x256xf32>
    %75 = arith.maximumf %73, %74 : vector<21x256xf32>
    %76 = vector.extract_strided_slice %75 {offsets = [0, 0], sizes = [20, 256], strides = [1, 1]} : vector<21x256xf32> to vector<20x256xf32>
    %77 = vector.shape_cast %76 : vector<20x256xf32> to vector<10x2x256xf32>
    %cst_43 = arith.constant dense<0xFF800000> : vector<10x256xf32>
    %78 = vector.multi_reduction <maximumf>, %77, %cst_43 [1] : vector<10x2x256xf32> to vector<10x256xf32>
    %79 = vector.extract_strided_slice %78 {offsets = [0, 0], sizes = [1, 256], strides = [1, 1]} : vector<10x256xf32> to vector<1x256xf32>
    %80 = vector.extract_strided_slice %78 {offsets = [1, 0], sizes = [1, 256], strides = [1, 1]} : vector<10x256xf32> to vector<1x256xf32>
    %81 = vector.extract_strided_slice %78 {offsets = [2, 0], sizes = [1, 256], strides = [1, 1]} : vector<10x256xf32> to vector<1x256xf32>
    %82 = vector.extract_strided_slice %78 {offsets = [3, 0], sizes = [1, 256], strides = [1, 1]} : vector<10x256xf32> to vector<1x256xf32>
    %83 = vector.extract_strided_slice %78 {offsets = [4, 0], sizes = [1, 256], strides = [1, 1]} : vector<10x256xf32> to vector<1x256xf32>
    %84 = vector.extract_strided_slice %78 {offsets = [5, 0], sizes = [1, 256], strides = [1, 1]} : vector<10x256xf32> to vector<1x256xf32>
    %85 = vector.extract_strided_slice %78 {offsets = [6, 0], sizes = [1, 256], strides = [1, 1]} : vector<10x256xf32> to vector<1x256xf32>
    %86 = vector.extract_strided_slice %78 {offsets = [7, 0], sizes = [1, 256], strides = [1, 1]} : vector<10x256xf32> to vector<1x256xf32>
    %87 = vector.extract_strided_slice %78 {offsets = [8, 0], sizes = [1, 256], strides = [1, 1]} : vector<10x256xf32> to vector<1x256xf32>
    %88 = vector.extract_strided_slice %78 {offsets = [9, 0], sizes = [1, 256], strides = [1, 1]} : vector<10x256xf32> to vector<1x256xf32>
    %89 = tpu.concatenate %79, %80, %81, %82, %83, %84, %85, %86, %87, %88 in 1 : vector<1x256xf32>, vector<1x256xf32>, vector<1x256xf32>, vector<1x256xf32>, vector<1x256xf32>, vector<1x256xf32>, vector<1x256xf32>, vector<1x256xf32>, vector<1x256xf32>, vector<1x256xf32> -> vector<1x2560xf32>
    %90 = arith.truncf %89 : vector<1x2560xf32> to vector<1x2560xbf16>
    %cst_44 = arith.constant dense<0.000000e+00> : vector<1x256xf32>
    %91 = tpu.matmul %90, %8, %cst_44 {dimension_numbers = #tpu.dot_dimension_numbers<[1], [0], [0], [1], [0, 0, 1, 1], [], []>} : vector<1x2560xbf16>, vector<2560x256xbf16>, vector<1x256xf32> -> vector<1x256xf32>
    %92 = arith.addf %91, %9 : vector<1x256xf32>
    %cst_45 = arith.constant 0.000000e+00 : f32
    %93 = vector.broadcast %cst_45 : f32 to vector<1x256xf32>
    %94 = arith.maximumf %92, %93 : vector<1x256xf32>
    %95 = arith.truncf %94 : vector<1x256xf32> to vector<1x256xbf16>
    %cst_46 = arith.constant dense<0.000000e+00> : vector<1x128xf32>
    %96 = tpu.matmul %95, %10, %cst_46 {dimension_numbers = #tpu.dot_dimension_numbers<[1], [0], [0], [1], [0, 0, 1, 1], [], []>} : vector<1x256xbf16>, vector<256x128xbf16>, vector<1x128xf32> -> vector<1x128xf32>
    %97 = arith.addf %96, %11 : vector<1x128xf32>
    %cst_47 = arith.constant 0.000000e+00 : f32
    %98 = vector.broadcast %cst_47 : f32 to vector<1x128xf32>
    %99 = arith.maximumf %97, %98 : vector<1x128xf32>
    %100 = arith.truncf %99 : vector<1x128xf32> to vector<1x128xbf16>
    %cst_48 = arith.constant dense<0.000000e+00> : vector<1x64xf32>
    %101 = tpu.matmul %100, %12, %cst_48 {dimension_numbers = #tpu.dot_dimension_numbers<[1], [0], [0], [1], [0, 0, 1, 1], [], []>} : vector<1x128xbf16>, vector<128x64xbf16>, vector<1x64xf32> -> vector<1x64xf32>
    %102 = arith.addf %101, %13 : vector<1x64xf32>
    %cst_49 = arith.constant 0.000000e+00 : f32
    %103 = vector.broadcast %cst_49 : f32 to vector<1x64xf32>
    %104 = arith.maximumf %102, %103 : vector<1x64xf32>
    %105 = arith.truncf %104 : vector<1x64xf32> to vector<1x64xbf16>
    %cst_50 = arith.constant dense<0.000000e+00> : vector<1x1xf32>
    %106 = tpu.matmul %105, %14, %cst_50 {dimension_numbers = #tpu.dot_dimension_numbers<[1], [0], [0], [1], [0, 0, 1, 1], [], []>} : vector<1x64xbf16>, vector<64x1xbf16>, vector<1x1xf32> -> vector<1x1xf32>
    %107 = arith.addf %106, %15 : vector<1x1xf32>
    %108 = arith.negf %107 : vector<1x1xf32>
    %109 = math.exp %108 : vector<1x1xf32>
    %cst_51 = arith.constant 1.000000e+00 : f32
    %110 = vector.broadcast %cst_51 : f32 to vector<1x1xf32>
    %111 = arith.addf %110, %109 : vector<1x1xf32>
    %112 = arith.divf %110, %111 : vector<1x1xf32>
    %113 = vector.shape_cast %112 : vector<1x1xf32> to vector<1x1x1xf32>
    %c0_52 = arith.constant 0 : index
    %c0_53 = arith.constant 0 : index
    %c0_54 = arith.constant 0 : index
    %114 = vector.load %arg18[%c0_52, %c0_53, %c0_54] : memref<1x1x1xf32, #tpu.memory_space<vmem>>, vector<1x1x1xf32>
    tpu.vector_store %arg18[%c0_52, %c0_53, %c0_54], %113 {strides = array<i32>} : memref<1x1x1xf32, #tpu.memory_space<vmem>>, vector<1x1x1xf32>,
    return
  }
  func.func @transform_0(%arg0: i32) -> (i32, i32, i32) {
    %c0_i32 = arith.constant 0 : i32
    %c0_i32_0 = arith.constant 0 : i32
    %c0_i32_1 = arith.constant 0 : i32
    return %arg0, %c0_i32, %c0_i32_0 : i32, i32, i32
  }
  func.func @transform_1(%arg0: i32) -> (i32, i32) {
    %c0_i32 = arith.constant 0 : i32
    %c0_i32_0 = arith.constant 0 : i32
    %c0_i32_1 = arith.constant 0 : i32
    return %c0_i32, %c0_i32_0 : i32, i32
  }
  func.func @transform_2(%arg0: i32) -> (i32, i32) {
    %c0_i32 = arith.constant 0 : i32
    %c0_i32_0 = arith.constant 0 : i32
    %c0_i32_1 = arith.constant 0 : i32
    return %c0_i32, %c0_i32_0 : i32, i32
  }
  func.func @transform_3(%arg0: i32) -> (i32, i32) {
    %c0_i32 = arith.constant 0 : i32
    %c0_i32_0 = arith.constant 0 : i32
    %c0_i32_1 = arith.constant 0 : i32
    return %c0_i32, %c0_i32_0 : i32, i32
  }
  func.func @transform_4(%arg0: i32) -> (i32, i32) {
    %c0_i32 = arith.constant 0 : i32
    %c0_i32_0 = arith.constant 0 : i32
    %c0_i32_1 = arith.constant 0 : i32
    return %c0_i32, %c0_i32_0 : i32, i32
  }
  func.func @transform_5(%arg0: i32) -> (i32, i32) {
    %c0_i32 = arith.constant 0 : i32
    %c0_i32_0 = arith.constant 0 : i32
    %c0_i32_1 = arith.constant 0 : i32
    return %c0_i32, %c0_i32_0 : i32, i32
  }
  func.func @transform_6(%arg0: i32) -> (i32, i32) {
    %c0_i32 = arith.constant 0 : i32
    %c0_i32_0 = arith.constant 0 : i32
    %c0_i32_1 = arith.constant 0 : i32
    return %c0_i32, %c0_i32_0 : i32, i32
  }
  func.func @transform_7(%arg0: i32) -> (i32, i32) {
    %c0_i32 = arith.constant 0 : i32
    %c0_i32_0 = arith.constant 0 : i32
    %c0_i32_1 = arith.constant 0 : i32
    return %c0_i32, %c0_i32_0 : i32, i32
  }
  func.func @transform_8(%arg0: i32) -> (i32, i32) {
    %c0_i32 = arith.constant 0 : i32
    %c0_i32_0 = arith.constant 0 : i32
    %c0_i32_1 = arith.constant 0 : i32
    return %c0_i32, %c0_i32_0 : i32, i32
  }
  func.func @transform_9(%arg0: i32) -> (i32, i32) {
    %c0_i32 = arith.constant 0 : i32
    %c0_i32_0 = arith.constant 0 : i32
    %c0_i32_1 = arith.constant 0 : i32
    return %c0_i32, %c0_i32_0 : i32, i32
  }
  func.func @transform_10(%arg0: i32) -> (i32, i32) {
    %c0_i32 = arith.constant 0 : i32
    %c0_i32_0 = arith.constant 0 : i32
    %c0_i32_1 = arith.constant 0 : i32
    return %c0_i32, %c0_i32_0 : i32, i32
  }
  func.func @transform_11(%arg0: i32) -> (i32, i32) {
    %c0_i32 = arith.constant 0 : i32
    %c0_i32_0 = arith.constant 0 : i32
    %c0_i32_1 = arith.constant 0 : i32
    return %c0_i32, %c0_i32_0 : i32, i32
  }
  func.func @transform_12(%arg0: i32) -> (i32, i32) {
    %c0_i32 = arith.constant 0 : i32
    %c0_i32_0 = arith.constant 0 : i32
    %c0_i32_1 = arith.constant 0 : i32
    return %c0_i32, %c0_i32_0 : i32, i32
  }
  func.func @transform_13(%arg0: i32) -> (i32, i32) {
    %c0_i32 = arith.constant 0 : i32
    %c0_i32_0 = arith.constant 0 : i32
    %c0_i32_1 = arith.constant 0 : i32
    return %c0_i32, %c0_i32_0 : i32, i32
  }
  func.func @transform_14(%arg0: i32) -> (i32, i32) {
    %c0_i32 = arith.constant 0 : i32
    %c0_i32_0 = arith.constant 0 : i32
    %c0_i32_1 = arith.constant 0 : i32
    return %c0_i32, %c0_i32_0 : i32, i32
  }
  func.func @transform_15(%arg0: i32) -> (i32, i32) {
    %c0_i32 = arith.constant 0 : i32
    %c0_i32_0 = arith.constant 0 : i32
    %c0_i32_1 = arith.constant 0 : i32
    return %c0_i32, %c0_i32_0 : i32, i32
  }
  func.func @transform_16(%arg0: i32) -> (i32, i32) {
    %c0_i32 = arith.constant 0 : i32
    %c0_i32_0 = arith.constant 0 : i32
    %c0_i32_1 = arith.constant 0 : i32
    return %c0_i32, %c0_i32_0 : i32, i32
  }
  func.func @transform_17(%arg0: i32) -> (i32, i32, i32) {
    %c0_i32 = arith.constant 0 : i32
    %c0_i32_0 = arith.constant 0 : i32
    %c0_i32_1 = arith.constant 0 : i32
    return %arg0, %c0_i32, %c0_i32_0 : i32, i32, i32
  }
}

</mosaic_0001>

<llo_original>
// kernel: tpu_custom_call.1
$region0: #{tpu_custom_call.1}
  #allocation0 [shape = 'u32[]', space=smem, size = 0x4, offset = 0x4, fixed_abs, tag = 'smem constant byte address 0x4 - core index']
  #allocation1 [shape = 'u32[144,128]{1,0:T(1,128)}', space=vmem, size = 0x12000, scoped, tag = 'internal scratch']
  #allocation2 [shape = 'f32[1,1]{1,0:T(1,128)S(1)}', space=vmem, size = 0x200, scoped, tag = 'scoped memory for tpu_custom_call.1']
  %s0 = inlined_call_operand.vmem [shape: f32[2,200,1], index: 0, kind: input, shape index: {}]
  %s1 = inlined_call_operand.hbm [shape: f32[3,32], index: 1, kind: input, shape index: {}]
  %s2 = inlined_call_operand.hbm [shape: f32[1,32], index: 2, kind: input, shape index: {}]
  %s3 = inlined_call_operand.vmem [shape: bf16[96,64], index: 3, kind: input, shape index: {}]
  %s4 = inlined_call_operand.hbm [shape: f32[1,64], index: 4, kind: input, shape index: {}]
  %s5 = inlined_call_operand.hbm [shape: bf16[192,128], index: 5, kind: input, shape index: {}]
  %s6 = inlined_call_operand.hbm [shape: f32[1,128], index: 6, kind: input, shape index: {}]
  %s7 = inlined_call_operand.hbm [shape: bf16[384,256], index: 7, kind: input, shape index: {}]
  %s8 = inlined_call_operand.hbm [shape: f32[1,256], index: 8, kind: input, shape index: {}]
  %s9 = inlined_call_operand.hbm [shape: bf16[2560,256], index: 9, kind: input, shape index: {}]
  %s10 = inlined_call_operand.hbm [shape: f32[1,256], index: 10, kind: input, shape index: {}]
  %s11 = inlined_call_operand.hbm [shape: bf16[256,128], index: 11, kind: input, shape index: {}]
  %s12 = inlined_call_operand.hbm [shape: f32[1,128], index: 12, kind: input, shape index: {}]
  %s13 = inlined_call_operand.vmem [shape: bf16[128,64], index: 13, kind: input, shape index: {}]
  %s14 = inlined_call_operand.hbm [shape: f32[1,64], index: 14, kind: input, shape index: {}]
  %s15 = inlined_call_operand.vmem [shape: bf16[64,1], index: 15, kind: input, shape index: {}]
  %s16 = inlined_call_operand.<no memory space> [shape: f32[1,1], index: 16, kind: input, shape index: {}]
  %s17 = inlined_call_operand.vmem [shape: f32[2,1,1], index: 17, kind: output, shape index: {}]
  %s18 = sld [smem:[#allocation0]]
  $region149: #{tpu_custom_call.1} parent=0
    _
  %s20 = ssub.s32 1, %s18
  %s21 = scalar_select 0, %s20, %s18
  %v22 = vstv %s16
  %23 = vst [vmem:[#allocation2] sm:$0x1] %v22
  $region1: #{tpu_custom_call.1} parent=0
    #allocation3 [shape = 'u8[2048]{0}', space=vmem, size = 0x800, scoped, tag = 'input window, operand 1, single buffered']
    #allocation4 [shape = 's32[2]{0}', space=sflag, size = 0x8, scoped, tag = 'scoped memory for tpu_custom_call.1']
    #allocation5 [shape = 'u8[512]{0}', space=vmem, size = 0x400, scoped, tag = 'input window, operand 2, single buffered']
    #allocation6 [shape = 's32[1]{0}', space=sflag, size = 0x4, scoped, tag = 'scoped memory for tpu_custom_call.1']
    #allocation7 [shape = 'u8[512]{0}', space=vmem, size = 0x400, scoped, tag = 'input window, operand 4, single buffered']
    #allocation8 [shape = 'u8[49152]{0}', space=vmem, size = 0xc000, scoped, tag = 'input window, operand 5, single buffered']
    #allocation9 [shape = 's32[1]{0}', space=sflag, size = 0x4, scoped, tag = 'scoped memory for tpu_custom_call.1']
    #allocation10 [shape = 'u8[512]{0}', space=vmem, size = 0x400, scoped, tag = 'input window, operand 6, single buffered']
    #allocation11 [shape = 'u8[196608]{0}', space=vmem, size = 0x30000, scoped, tag = 'input window, operand 7, single buffered']
    #allocation12 [shape = 's32[1]{0}', space=sflag, size = 0x4, scoped, tag = 'scoped memory for tpu_custom_call.1']
    #allocation13 [shape = 'u8[1024]{0}', space=vmem, size = 0x400, scoped, tag = 'input window, operand 8, single buffered']
    #allocation14 [shape = 'u8[1310720]{0}', space=vmem, size = 0x140000, scoped, tag = 'input window, operand 9, single buffered']
    #allocation15 [shape = 's32[1]{0}', space=sflag, size = 0x4, scoped, tag = 'scoped memory for tpu_custom_call.1']
    #allocation16 [shape = 'u8[1024]{0}', space=vmem, size = 0x400, scoped, tag = 'input window, operand 10, single buffered']
    #allocation17 [shape = 'u8[65536]{0}', space=vmem, size = 0x10000, scoped, tag = 'input window, operand 11, single buffered']
    #allocation18 [shape = 's32[1]{0}', space=sflag, size = 0x4, scoped, tag = 'scoped memory for tpu_custom_call.1']
    #allocation19 [shape = 'u8[512]{0}', space=vmem, size = 0x400, scoped, tag = 'input window, operand 12, single buffered']
    #allocation20 [shape = 'u8[512]{0}', space=vmem, size = 0x400, scoped, tag = 'input window, operand 14, single buffered']
    #allocation21 [shape = 's32[1]{0}', space=sflag, size = 0x4, scoped, tag = 'scoped memory for tpu_custom_call.1']
    %24 = vsyncpa [#allocation4], 0
    %25 = vsyncpa [#allocation6], 0
    %26 = vsyncpa [#allocation9], 0
    %27 = vsyncpa [#allocation12], 0
    %28 = vsyncpa [#allocation15], 0
    %29 = vsyncpa [#allocation18], 0
    %30 = vsyncpa [#allocation21], 0
    loop: start=0, step=1, limit=4
    $region2: #{tpu_custom_call.1} parent=1 // loop_pre_header
      _
    $region3: #{tpu_custom_call.1} parent=1 // loop_header
      %s32 = sphi 0, %s36
      %p33 = scmp.ge.s32.totalorder %s32, 4
      %s42 = sphi 0, %s44
      %s45 = sphi 0, %s42
      %s46 = sphi 0, %s45
      %s62 = sphi 0, %s46
      %s66 = sphi 0, %s66
      %s68 = sphi 0, %s66
      %s69 = sphi 0, %s68
      %s83 = sphi 0, %s69
      %s87 = sphi 0, %s87
      %s89 = sphi 0, %s87
      %s90 = sphi 0, %s89
      %s104 = sphi 0, %s90
      %s108 = sphi 0, %s108
      %s110 = sphi 0, %s108
      %s111 = sphi 0, %s110
      %s125 = sphi 0, %s111
      %s129 = sphi 0, %s129
      %s131 = sphi 0, %s129
      %s132 = sphi 0, %s131
      %s146 = sphi 0, %s132
      %s150 = sphi 0, %s150
      %s152 = sphi 0, %s150
      %s153 = sphi 0, %s152
      %s167 = sphi 0, %s153
      %s171 = sphi 0, %s171
      %s173 = sphi 0, %s171
      %s174 = sphi 0, %s173
      %s188 = sphi 0, %s174
      %s192 = sphi 0, %s192
      %s194 = sphi 0, %s192
      %s195 = sphi 0, %s194
      %s209 = sphi 0, %s195
      %s213 = sphi 0, %s213
      %s215 = sphi 0, %s213
      %s216 = sphi 0, %s215
      %s230 = sphi 0, %s216
      %s234 = sphi 0, %s234
      %s236 = sphi 0, %s234
      %s237 = sphi 0, %s236
      %s251 = sphi 0, %s237
      %s255 = sphi 0, %s255
      %s257 = sphi 0, %s255
      %s258 = sphi 0, %s257
      %s272 = sphi 0, %s258
      %s276 = sphi 0, %s276
      %s278 = sphi 0, %s276
      %s279 = sphi 0, %s278
      %s293 = sphi 0, %s279
      %s297 = sphi 0, %s297
      %s299 = sphi 0, %s297
      %s300 = sphi 0, %s299
      %s314 = sphi 0, %s300
      %s318 = sphi 0, %s318
      %s320 = sphi 0, %s318
      %s321 = sphi 0, %s320
      %s335 = sphi 0, %s321
      %s339 = sphi 0, %s339
      %s341 = sphi 0, %s339
      %s342 = sphi 0, %s341
      %s356 = sphi 0, %s342
      %s360 = sphi 0, %s360
      %s362 = sphi 0, %s360
      %s363 = sphi 0, %s362
      %s377 = sphi 0, %s363
      %s381 = sphi 0, %s381
      %s383 = sphi 0, %s381
      %s384 = sphi 0, %s383
      %s398 = sphi 0, %s384
      %s404 = sphi 0, %s406
      %s407 = sphi 0, %s404
      %s408 = sphi 0, %s407
      %s424 = sphi 0, %s408
    $region4: #{tpu_custom_call.1} parent=1 // loop_header_branch
      %35 = sbr.rel (%p33) target = $region8
    $region5: #{tpu_custom_call.1} parent=1 // loop_body
      %s37 = ssub.s32 %s32, 1
      %s38 = ssub.s32 %s32, 2
      %s39 = sadd.s32 %s32, 1
      %s40 = ssub.s32 %s32, %s39
      %p41 = scmp.eq.s32.totalorder %s40, 0
      %s43 = sadd.s32 %s42, 1
      %s44 = scalar_select %p41, %s42, %s43
      %p47 = pneg %p41
      %p48 = scmp.eq.s32.totalorder %s32, 1
      %p49 = por %p47, %p48
      %p50 = scmp.ne.s32.totalorder %s42, %s45
      %p51 = scmp.eq.s32.totalorder %s32, 0
      %p52 = por %p50, %p51
      %p53 = scmp.ne.s32.totalorder %s42, %s45
      %p54 = scmp.eq.s32.totalorder %s37, 1
      %p55 = por %p53, %p54
      %p56 = scmp.ne.s32.totalorder %s45, %s46
      %p57 = scmp.eq.s32.totalorder %s37, 0
      %p58 = por %p56, %p57
      %p59 = scmp.ne.s32.totalorder %s45, %s46
      %p60 = scmp.eq.s32.totalorder %s38, 1
      %p61 = por %p59, %p60
      %p63 = scmp.ne.s32.totalorder %s46, %s62
      %p64 = scmp.eq.s32.totalorder %s38, 0
      %p65 = por %p63, %p64
      %s67 = sadd.s32 %s66, 1
      %p70 = scmp.eq.s32.totalorder %s32, 1
      %p71 = scmp.ne.s32.totalorder %s66, %s68
      %p72 = scmp.eq.s32.totalorder %s32, 0
      %p73 = por %p71, %p72
      %p74 = scmp.ne.s32.totalorder %s66, %s68
      %p75 = scmp.eq.s32.totalorder %s37, 1
      %p76 = por %p74, %p75
      %p77 = scmp.ne.s32.totalorder %s68, %s69
      %p78 = scmp.eq.s32.totalorder %s37, 0
      %p79 = por %p77, %p78
      %p80 = scmp.ne.s32.totalorder %s68, %s69
      %p81 = scmp.eq.s32.totalorder %s38, 1
      %p82 = por %p80, %p81
      %p84 = scmp.ne.s32.totalorder %s69, %s83
      %p85 = scmp.eq.s32.totalorder %s38, 0
      %p86 = por %p84, %p85
      %s88 = sadd.s32 %s87, 1
      %p91 = scmp.eq.s32.totalorder %s32, 1
      %p92 = scmp.ne.s32.totalorder %s87, %s89
      %p93 = scmp.eq.s32.totalorder %s32, 0
      %p94 = por %p92, %p93
      %p95 = scmp.ne.s32.totalorder %s87, %s89
      %p96 = scmp.eq.s32.totalorder %s37, 1
      %p97 = por %p95, %p96
      %p98 = scmp.ne.s32.totalorder %s89, %s90
      %p99 = scmp.eq.s32.totalorder %s37, 0
      %p100 = por %p98, %p99
      %p101 = scmp.ne.s32.totalorder %s89, %s90
      %p102 = scmp.eq.s32.totalorder %s38, 1
      %p103 = por %p101, %p102
      %p105 = scmp.ne.s32.totalorder %s90, %s104
      %p106 = scmp.eq.s32.totalorder %s38, 0
      %p107 = por %p105, %p106
      %s109 = sadd.s32 %s108, 1
      %p112 = scmp.eq.s32.totalorder %s32, 1
      %p113 = scmp.ne.s32.totalorder %s108, %s110
      %p114 = scmp.eq.s32.totalorder %s32, 0
      %p115 = por %p113, %p114
      %p116 = scmp.ne.s32.totalorder %s108, %s110
      %p117 = scmp.eq.s32.totalorder %s37, 1
      %p118 = por %p116, %p117
      %p119 = scmp.ne.s32.totalorder %s110, %s111
      %p120 = scmp.eq.s32.totalorder %s37, 0
      %p121 = por %p119, %p120
      %p122 = scmp.ne.s32.totalorder %s110, %s111
      %p123 = scmp.eq.s32.totalorder %s38, 1
      %p124 = por %p122, %p123
      %p126 = scmp.ne.s32.totalorder %s111, %s125
      %p127 = scmp.eq.s32.totalorder %s38, 0
      %p128 = por %p126, %p127
      %s130 = sadd.s32 %s129, 1
      %p133 = scmp.eq.s32.totalorder %s32, 1
      %p134 = scmp.ne.s32.totalorder %s129, %s131
      %p135 = scmp.eq.s32.totalorder %s32, 0
      %p136 = por %p134, %p135
      %p137 = scmp.ne.s32.totalorder %s129, %s131
      %p138 = scmp.eq.s32.totalorder %s37, 1
      %p139 = por %p137, %p138
      %p140 = scmp.ne.s32.totalorder %s131, %s132
      %p141 = scmp.eq.s32.totalorder %s37, 0
      %p142 = por %p140, %p141
      %p143 = scmp.ne.s32.totalorder %s131, %s132
      %p144 = scmp.eq.s32.totalorder %s38, 1
      %p145 = por %p143, %p144
      %p147 = scmp.ne.s32.totalorder %s132, %s146
      %p148 = scmp.eq.s32.totalorder %s38, 0
      %p149 = por %p147, %p148
      %s151 = sadd.s32 %s150, 1
      %p154 = scmp.eq.s32.totalorder %s32, 1
      %p155 = scmp.ne.s32.totalorder %s150, %s152
      %p156 = scmp.eq.s32.totalorder %s32, 0
      %p157 = por %p155, %p156
      %p158 = scmp.ne.s32.totalorder %s150, %s152
      %p159 = scmp.eq.s32.totalorder %s37, 1
      %p160 = por %p158, %p159
      %p161 = scmp.ne.s32.totalorder %s152, %s153
      %p162 = scmp.eq.s32.totalorder %s37, 0
      %p163 = por %p161, %p162
      %p164 = scmp.ne.s32.totalorder %s152, %s153
      %p165 = scmp.eq.s32.totalorder %s38, 1
      %p166 = por %p164, %p165
      %p168 = scmp.ne.s32.totalorder %s153, %s167
      %p169 = scmp.eq.s32.totalorder %s38, 0
      %p170 = por %p168, %p169
      %s172 = sadd.s32 %s171, 1
      %p175 = scmp.eq.s32.totalorder %s32, 1
      %p176 = scmp.ne.s32.totalorder %s171, %s173
      %p177 = scmp.eq.s32.totalorder %s32, 0
      %p178 = por %p176, %p177
      %p179 = scmp.ne.s32.totalorder %s171, %s173
      %p180 = scmp.eq.s32.totalorder %s37, 1
      %p181 = por %p179, %p180
      %p182 = scmp.ne.s32.totalorder %s173, %s174
      %p183 = scmp.eq.s32.totalorder %s37, 0
      %p184 = por %p182, %p183
      %p185 = scmp.ne.s32.totalorder %s173, %s174
      %p186 = scmp.eq.s32.totalorder %s38, 1
      %p187 = por %p185, %p186
      %p189 = scmp.ne.s32.totalorder %s174, %s188
      %p190 = scmp.eq.s32.totalorder %s38, 0
      %p191 = por %p189, %p190
      %s193 = sadd.s32 %s192, 1
      %p196 = scmp.eq.s32.totalorder %s32, 1
      %p197 = scmp.ne.s32.totalorder %s192, %s194
      %p198 = scmp.eq.s32.totalorder %s32, 0
      %p199 = por %p197, %p198
      %p200 = scmp.ne.s32.totalorder %s192, %s194
      %p201 = scmp.eq.s32.totalorder %s37, 1
      %p202 = por %p200, %p201
      %p203 = scmp.ne.s32.totalorder %s194, %s195
      %p204 = scmp.eq.s32.totalorder %s37, 0
      %p205 = por %p203, %p204
      %p206 = scmp.ne.s32.totalorder %s194, %s195
      %p207 = scmp.eq.s32.totalorder %s38, 1
      %p208 = por %p206, %p207
      %p210 = scmp.ne.s32.totalorder %s195, %s209
      %p211 = scmp.eq.s32.totalorder %s38, 0
      %p212 = por %p210, %p211
      %s214 = sadd.s32 %s213, 1
      %p217 = scmp.eq.s32.totalorder %s32, 1
      %p218 = scmp.ne.s32.totalorder %s213, %s215
      %p219 = scmp.eq.s32.totalorder %s32, 0
      %p220 = por %p218, %p219
      %p221 = scmp.ne.s32.totalorder %s213, %s215
      %p222 = scmp.eq.s32.totalorder %s37, 1
      %p223 = por %p221, %p222
      %p224 = scmp.ne.s32.totalorder %s215, %s216
      %p225 = scmp.eq.s32.totalorder %s37, 0
      %p226 = por %p224, %p225
      %p227 = scmp.ne.s32.totalorder %s215, %s216
      %p228 = scmp.eq.s32.totalorder %s38, 1
      %p229 = por %p227, %p228
      %p231 = scmp.ne.s32.totalorder %s216, %s230
      %p232 = scmp.eq.s32.totalorder %s38, 0
      %p233 = por %p231, %p232
      %s235 = sadd.s32 %s234, 1
      %p238 = scmp.eq.s32.totalorder %s32, 1
      %p239 = scmp.ne.s32.totalorder %s234, %s236
      %p240 = scmp.eq.s32.totalorder %s32, 0
      %p241 = por %p239, %p240
      %p242 = scmp.ne.s32.totalorder %s234, %s236
      %p243 = scmp.eq.s32.totalorder %s37, 1
      %p244 = por %p242, %p243
      %p245 = scmp.ne.s32.totalorder %s236, %s237
      %p246 = scmp.eq.s32.totalorder %s37, 0
      %p247 = por %p245, %p246
      %p248 = scmp.ne.s32.totalorder %s236, %s237
      %p249 = scmp.eq.s32.totalorder %s38, 1
      %p250 = por %p248, %p249
      %p252 = scmp.ne.s32.totalorder %s237, %s251
      %p253 = scmp.eq.s32.totalorder %s38, 0
      %p254 = por %p252, %p253
      %s256 = sadd.s32 %s255, 1
      %p259 = scmp.eq.s32.totalorder %s32, 1
      %p260 = scmp.ne.s32.totalorder %s255, %s257
      %p261 = scmp.eq.s32.totalorder %s32, 0
      %p262 = por %p260, %p261
      %p263 = scmp.ne.s32.totalorder %s255, %s257
      %p264 = scmp.eq.s32.totalorder %s37, 1
      %p265 = por %p263, %p264
      %p266 = scmp.ne.s32.totalorder %s257, %s258
      %p267 = scmp.eq.s32.totalorder %s37, 0
      %p268 = por %p266, %p267
      %p269 = scmp.ne.s32.totalorder %s257, %s258
      %p270 = scmp.eq.s32.totalorder %s38, 1
      %p271 = por %p269, %p270
      %p273 = scmp.ne.s32.totalorder %s258, %s272
      %p274 = scmp.eq.s32.totalorder %s38, 0
      %p275 = por %p273, %p274
      %s277 = sadd.s32 %s276, 1
      %p280 = scmp.eq.s32.totalorder %s32, 1
      %p281 = scmp.ne.s32.totalorder %s276, %s278
      %p282 = scmp.eq.s32.totalorder %s32, 0
      %p283 = por %p281, %p282
      %p284 = scmp.ne.s32.totalorder %s276, %s278
      %p285 = scmp.eq.s32.totalorder %s37, 1
      %p286 = por %p284, %p285
      %p287 = scmp.ne.s32.totalorder %s278, %s279
      %p288 = scmp.eq.s32.totalorder %s37, 0
      %p289 = por %p287, %p288
      %p290 = scmp.ne.s32.totalorder %s278, %s279
      %p291 = scmp.eq.s32.totalorder %s38, 1
      %p292 = por %p290, %p291
      %p294 = scmp.ne.s32.totalorder %s279, %s293
      %p295 = scmp.eq.s32.totalorder %s38, 0
      %p296 = por %p294, %p295
      %s298 = sadd.s32 %s297, 1
      %p301 = scmp.eq.s32.totalorder %s32, 1
      %p302 = scmp.ne.s32.totalorder %s297, %s299
      %p303 = scmp.eq.s32.totalorder %s32, 0
      %p304 = por %p302, %p303
      %p305 = scmp.ne.s32.totalorder %s297, %s299
      %p306 = scmp.eq.s32.totalorder %s37, 1
      %p307 = por %p305, %p306
      %p308 = scmp.ne.s32.totalorder %s299, %s300
      %p309 = scmp.eq.s32.totalorder %s37, 0
      %p310 = por %p308, %p309
      %p311 = scmp.ne.s32.totalorder %s299, %s300
      %p312 = scmp.eq.s32.totalorder %s38, 1
      %p313 = por %p311, %p312
      %p315 = scmp.ne.s32.totalorder %s300, %s314
      %p316 = scmp.eq.s32.totalorder %s38, 0
      %p317 = por %p315, %p316
      %s319 = sadd.s32 %s318, 1
      %p322 = scmp.eq.s32.totalorder %s32, 1
      %p323 = scmp.ne.s32.totalorder %s318, %s320
      %p324 = scmp.eq.s32.totalorder %s32, 0
      %p325 = por %p323, %p324
      %p326 = scmp.ne.s32.totalorder %s318, %s320
      %p327 = scmp.eq.s32.totalorder %s37, 1
      %p328 = por %p326, %p327
      %p329 = scmp.ne.s32.totalorder %s320, %s321
      %p330 = scmp.eq.s32.totalorder %s37, 0
      %p331 = por %p329, %p330
      %p332 = scmp.ne.s32.totalorder %s320, %s321
      %p333 = scmp.eq.s32.totalorder %s38, 1
      %p334 = por %p332, %p333
      %p336 = scmp.ne.s32.totalorder %s321, %s335
      %p337 = scmp.eq.s32.totalorder %s38, 0
      %p338 = por %p336, %p337
      %s340 = sadd.s32 %s339, 1
      %p343 = scmp.eq.s32.totalorder %s32, 1
      %p344 = scmp.ne.s32.totalorder %s339, %s341
      %p345 = scmp.eq.s32.totalorder %s32, 0
      %p346 = por %p344, %p345
      %p347 = scmp.ne.s32.totalorder %s339, %s341
      %p348 = scmp.eq.s32.totalorder %s37, 1
      %p349 = por %p347, %p348
      %p350 = scmp.ne.s32.totalorder %s341, %s342
      %p351 = scmp.eq.s32.totalorder %s37, 0
      %p352 = por %p350, %p351
      %p353 = scmp.ne.s32.totalorder %s341, %s342
      %p354 = scmp.eq.s32.totalorder %s38, 1
      %p355 = por %p353, %p354
      %p357 = scmp.ne.s32.totalorder %s342, %s356
      %p358 = scmp.eq.s32.totalorder %s38, 0
      %p359 = por %p357, %p358
      %s361 = sadd.s32 %s360, 1
      %p364 = scmp.eq.s32.totalorder %s32, 1
      %p365 = scmp.ne.s32.totalorder %s360, %s362
      %p366 = scmp.eq.s32.totalorder %s32, 0
      %p367 = por %p365, %p366
      %p368 = scmp.ne.s32.totalorder %s360, %s362
      %p369 = scmp.eq.s32.totalorder %s37, 1
      %p370 = por %p368, %p369
      %p371 = scmp.ne.s32.totalorder %s362, %s363
      %p372 = scmp.eq.s32.totalorder %s37, 0
      %p373 = por %p371, %p372
      %p374 = scmp.ne.s32.totalorder %s362, %s363
      %p375 = scmp.eq.s32.totalorder %s38, 1
      %p376 = por %p374, %p375
      %p378 = scmp.ne.s32.totalorder %s363, %s377
      %p379 = scmp.eq.s32.totalorder %s38, 0
      %p380 = por %p378, %p379
      %s382 = sadd.s32 %s381, 1
      %p385 = scmp.eq.s32.totalorder %s32, 1
      %p386 = scmp.ne.s32.totalorder %s381, %s383
      %p387 = scmp.eq.s32.totalorder %s32, 0
      %p388 = por %p386, %p387
      %p389 = scmp.ne.s32.totalorder %s381, %s383
      %p390 = scmp.eq.s32.totalorder %s37, 1
      %p391 = por %p389, %p390
      %p392 = scmp.ne.s32.totalorder %s383, %s384
      %p393 = scmp.eq.s32.totalorder %s37, 0
      %p394 = por %p392, %p393
      %p395 = scmp.ne.s32.totalorder %s383, %s384
      %p396 = scmp.eq.s32.totalorder %s38, 1
      %p397 = por %p395, %p396
      %p399 = scmp.ne.s32.totalorder %s384, %s398
      %p400 = scmp.eq.s32.totalorder %s38, 0
      %p401 = por %p399, %p400
      %s402 = ssub.s32 %s32, %s39
      %p403 = scmp.eq.s32.totalorder %s402, 0
      %s405 = sadd.s32 %s404, 1
      %s406 = scalar_select %p403, %s404, %s405
      %p409 = pneg %p403
      %p410 = scmp.eq.s32.totalorder %s32, 1
      %p411 = por %p409, %p410
      %p412 = scmp.ne.s32.totalorder %s404, %s407
      %p413 = scmp.eq.s32.totalorder %s32, 0
      %p414 = por %p412, %p413
      %p415 = scmp.ne.s32.totalorder %s404, %s407
      %p416 = scmp.eq.s32.totalorder %s37, 1
      %p417 = por %p415, %p416
      %p418 = scmp.ne.s32.totalorder %s407, %s408
      %p419 = scmp.eq.s32.totalorder %s37, 0
      %p420 = por %p418, %p419
      %p421 = scmp.ne.s32.totalorder %s407, %s408
      %p422 = scmp.eq.s32.totalorder %s38, 1
      %p423 = por %p421, %p422
      %p425 = scmp.ne.s32.totalorder %s408, %s424
      %p426 = scmp.eq.s32.totalorder %s38, 0
      %p427 = por %p425, %p426
      %p428 = scmp.le.s32.totalorder 1, %s32
      %p429 = scmp.lt.s32.totalorder %s32, 3
      %p430 = pnand %p428, %p429
      %p431 = pneg %p430
      // Predicated region
      $region9: #{tpu_custom_call.1} parent=5 // pred_check
        _
      $region10: #{tpu_custom_call.1} parent=5 // pred_check_branch
        %433 = sbr.rel (%p430) target = $region12
      $region11: #{tpu_custom_call.1} parent=5 // pred_region
        %s434 = ssub.s32 %s32, 1
        // Predicated region
        $region13: #{tpu_custom_call.1} parent=11 // pred_check
          %p435 = pneg %p79
        $region14: #{tpu_custom_call.1} parent=11 // pred_check_branch
          %437 = sbr.rel (%p435) target = $region16
        $region15: #{tpu_custom_call.1} parent=11 // pred_region
          %s439 = ssub.s32 64, 64
          %440 = vsyncadd [#allocation4], %s439
          %s442 = sshll.u32 [#allocation3], 4
          %s443 = int_to_ptr.vmem [resolvable:$true] %s442
          %445 = dma.hbm_to_vmem [thread:$0]  %s1, 64, %s443, [#allocation4]
        $region16: #{tpu_custom_call.1} parent=11 // pred_fallthru
          _
        // Predicated region
        $region17: #{tpu_custom_call.1} parent=11 // pred_check
          %p446 = pneg %p100
        $region18: #{tpu_custom_call.1} parent=11 // pred_check_branch
          %448 = sbr.rel (%p446) target = $region20
        $region19: #{tpu_custom_call.1} parent=11 // pred_region
          %s450 = ssub.s32 16, 16
          %451 = vsyncadd [#allocation6], %s450
          %s453 = sshll.u32 [#allocation5], 4
          %s454 = int_to_ptr.vmem [resolvable:$true] %s453
          %456 = dma.hbm_to_vmem [thread:$0]  %s2, 16, %s454, [#allocation6]
        $region20: #{tpu_custom_call.1} parent=11 // pred_fallthru
          _
        // Predicated region
        $region21: #{tpu_custom_call.1} parent=11 // pred_check
          %p457 = pneg %p121
        $region22: #{tpu_custom_call.1} parent=11 // pred_check_branch
          %459 = sbr.rel (%p457) target = $region24
        $region23: #{tpu_custom_call.1} parent=11 // pred_region
          _
        $region24: #{tpu_custom_call.1} parent=11 // pred_fallthru
          _
        // Predicated region
        $region25: #{tpu_custom_call.1} parent=11 // pred_check
          %p460 = pneg %p142
        $region26: #{tpu_custom_call.1} parent=11 // pred_check_branch
          %462 = sbr.rel (%p460) target = $region28
        $region27: #{tpu_custom_call.1} parent=11 // pred_region
          %s464 = ssub.s32 16, 16
          %465 = vsyncadd [#allocation6], %s464
          %s467 = sshll.u32 [#allocation7], 4
          %s468 = int_to_ptr.vmem [resolvable:$true] %s467
          %470 = dma.hbm_to_vmem [thread:$0]  %s4, 16, %s468, [#allocation6]
        $region28: #{tpu_custom_call.1} parent=11 // pred_fallthru
          _
        // Predicated region
        $region29: #{tpu_custom_call.1} parent=11 // pred_check
          %p471 = pneg %p163
        $region30: #{tpu_custom_call.1} parent=11 // pred_check_branch
          %473 = sbr.rel (%p471) target = $region32
        $region31: #{tpu_custom_call.1} parent=11 // pred_region
          %s475 = ssub.s32 1536, 1536
          %476 = vsyncadd [#allocation9], %s475
          %s477 = sshll.u32 [#allocation8], 4
          %s478 = int_to_ptr.vmem [resolvable:$true] %s477
          %483 = dma.hbm_to_vmem [thread:$0]  %s5, 1536, %s478, [#allocation9], 64, 64, 4
        $region32: #{tpu_custom_call.1} parent=11 // pred_fallthru
          _
        // Predicated region
        $region33: #{tpu_custom_call.1} parent=11 // pred_check
          %p484 = pneg %p184
        $region34: #{tpu_custom_call.1} parent=11 // pred_check_branch
          %486 = sbr.rel (%p484) target = $region36
        $region35: #{tpu_custom_call.1} parent=11 // pred_region
          %s488 = ssub.s32 16, 16
          %489 = vsyncadd [#allocation9], %s488
          %s491 = sshll.u32 [#allocation10], 4
          %s492 = int_to_ptr.vmem [resolvable:$true] %s491
          %494 = dma.hbm_to_vmem [thread:$0]  %s6, 16, %s492, [#allocation9]
        $region36: #{tpu_custom_call.1} parent=11 // pred_fallthru
          _
        // Predicated region
        $region37: #{tpu_custom_call.1} parent=11 // pred_check
          %p495 = pneg %p205
        $region38: #{tpu_custom_call.1} parent=11 // pred_check_branch
          %497 = sbr.rel (%p495) target = $region40
        $region39: #{tpu_custom_call.1} parent=11 // pred_region
          %s499 = ssub.s32 6144, 6144
          %500 = vsyncadd [#allocation12], %s499
          %s501 = sshll.u32 [#allocation11], 4
          %s502 = int_to_ptr.vmem [resolvable:$true] %s501
          %507 = dma.hbm_to_vmem [thread:$0]  %s7, 6144, %s502, [#allocation12], 128, 128, 8
        $region40: #{tpu_custom_call.1} parent=11 // pred_fallthru
          _
        // Predicated region
        $region41: #{tpu_custom_call.1} parent=11 // pred_check
          %p508 = pneg %p226
        $region42: #{tpu_custom_call.1} parent=11 // pred_check_branch
          %510 = sbr.rel (%p508) target = $region44
        $region43: #{tpu_custom_call.1} parent=11 // pred_region
          %s512 = ssub.s32 32, 32
          %513 = vsyncadd [#allocation12], %s512
          %s515 = sshll.u32 [#allocation13], 4
          %s516 = int_to_ptr.vmem [resolvable:$true] %s515
          %518 = dma.hbm_to_vmem [thread:$0]  %s8, 32, %s516, [#allocation12]
        $region44: #{tpu_custom_call.1} parent=11 // pred_fallthru
          _
        // Predicated region
        $region45: #{tpu_custom_call.1} parent=11 // pred_check
          %p519 = pneg %p247
        $region46: #{tpu_custom_call.1} parent=11 // pred_check_branch
          %521 = sbr.rel (%p519) target = $region48
        $region47: #{tpu_custom_call.1} parent=11 // pred_region
          %s523 = ssub.s32 40960, 40960
          %524 = vsyncadd [#allocation15], %s523
          %s525 = sshll.u32 [#allocation14], 4
          %s526 = int_to_ptr.vmem [resolvable:$true] %s525
          %531 = dma.hbm_to_vmem [thread:$0]  %s9, 40960, %s526, [#allocation15], 128, 128, 8
        $region48: #{tpu_custom_call.1} parent=11 // pred_fallthru
          _
        // Predicated region
        $region49: #{tpu_custom_call.1} parent=11 // pred_check
          %p532 = pneg %p268
        $region50: #{tpu_custom_call.1} parent=11 // pred_check_branch
          %534 = sbr.rel (%p532) target = $region52
        $region51: #{tpu_custom_call.1} parent=11 // pred_region
          %s536 = ssub.s32 32, 32
          %537 = vsyncadd [#allocation15], %s536
          %s539 = sshll.u32 [#allocation16], 4
          %s540 = int_to_ptr.vmem [resolvable:$true] %s539
          %542 = dma.hbm_to_vmem [thread:$0]  %s10, 32, %s540, [#allocation15]
        $region52: #{tpu_custom_call.1} parent=11 // pred_fallthru
          _
        // Predicated region
        $region53: #{tpu_custom_call.1} parent=11 // pred_check
          %p543 = pneg %p289
        $region54: #{tpu_custom_call.1} parent=11 // pred_check_branch
          %545 = sbr.rel (%p543) target = $region56
        $region55: #{tpu_custom_call.1} parent=11 // pred_region
          %s547 = ssub.s32 2048, 2048
          %548 = vsyncadd [#allocation18], %s547
          %s549 = sshll.u32 [#allocation17], 4
          %s550 = int_to_ptr.vmem [resolvable:$true] %s549
          %555 = dma.hbm_to_vmem [thread:$0]  %s11, 2048, %s550, [#allocation18], 64, 64, 4
        $region56: #{tpu_custom_call.1} parent=11 // pred_fallthru
          _
        // Predicated region
        $region57: #{tpu_custom_call.1} parent=11 // pred_check
          %p556 = pneg %p310
        $region58: #{tpu_custom_call.1} parent=11 // pred_check_branch
          %558 = sbr.rel (%p556) target = $region60
        $region59: #{tpu_custom_call.1} parent=11 // pred_region
          %s560 = ssub.s32 16, 16
          %561 = vsyncadd [#allocation18], %s560
          %s563 = sshll.u32 [#allocation19], 4
          %s564 = int_to_ptr.vmem [resolvable:$true] %s563
          %566 = dma.hbm_to_vmem [thread:$0]  %s12, 16, %s564, [#allocation18]
        $region60: #{tpu_custom_call.1} parent=11 // pred_fallthru
          _
        // Predicated region
        $region61: #{tpu_custom_call.1} parent=11 // pred_check
          %p567 = pneg %p331
        $region62: #{tpu_custom_call.1} parent=11 // pred_check_branch
          %569 = sbr.rel (%p567) target = $region64
        $region63: #{tpu_custom_call.1} parent=11 // pred_region
          _
        $region64: #{tpu_custom_call.1} parent=11 // pred_fallthru
          _
        // Predicated region
        $region65: #{tpu_custom_call.1} parent=11 // pred_check
          %p570 = pneg %p352
        $region66: #{tpu_custom_call.1} parent=11 // pred_check_branch
          %572 = sbr.rel (%p570) target = $region68
        $region67: #{tpu_custom_call.1} parent=11 // pred_region
          %s574 = ssub.s32 16, 16
          %575 = vsyncadd [#allocation21], %s574
          %s577 = sshll.u32 [#allocation20], 4
          %s578 = int_to_ptr.vmem [resolvable:$true] %s577
          %580 = dma.hbm_to_vmem [thread:$0]  %s14, 16, %s578, [#allocation21]
        $region68: #{tpu_custom_call.1} parent=11 // pred_fallthru
          _
        // Predicated region
        $region69: #{tpu_custom_call.1} parent=11 // pred_check
          %p581 = pneg %p373
        $region70: #{tpu_custom_call.1} parent=11 // pred_check_branch
          %583 = sbr.rel (%p581) target = $region72
        $region71: #{tpu_custom_call.1} parent=11 // pred_region
          _
        $region72: #{tpu_custom_call.1} parent=11 // pred_fallthru
          _
        // Predicated region
        $region73: #{tpu_custom_call.1} parent=11 // pred_check
          %p584 = pneg %p394
        $region74: #{tpu_custom_call.1} parent=11 // pred_check_branch
          %586 = sbr.rel (%p584) target = $region76
        $region75: #{tpu_custom_call.1} parent=11 // pred_region
          _
        $region76: #{tpu_custom_call.1} parent=11 // pred_fallthru
          _
      $region12: #{tpu_custom_call.1} parent=5 // pred_fallthru
        _
      %p587 = scmp.lt.s32.totalorder %s32, 2
      // Predicated region
      $region77: #{tpu_custom_call.1} parent=5 // pred_check
        %p588 = pneg %p587
      $region78: #{tpu_custom_call.1} parent=5 // pred_check_branch
        %590 = sbr.rel (%p588) target = $region80
      $region79: #{tpu_custom_call.1} parent=5 // pred_region
        // Predicated region
        $region81: #{tpu_custom_call.1} parent=79 // pred_check
          %p591 = pneg %p52
        $region82: #{tpu_custom_call.1} parent=79 // pred_check_branch
          %593 = sbr.rel (%p591) target = $region84
        $region83: #{tpu_custom_call.1} parent=79 // pred_region
          %p594 = scmp.lt.s32.totalorder %s32, 1
          %s595 = scalar_select %p594, %s32, 1
          %s596 = smul.addr %s595, 25
          %s597 = smul.addr %s596, 8
          %s598 = scalar_lea.vmem %s0, %s597
        $region84: #{tpu_custom_call.1} parent=79 // pred_fallthru
          _
      $region80: #{tpu_custom_call.1} parent=5 // pred_fallthru
        _
      %p599 = scmp.le.s32.totalorder 1, %s32
      %p600 = scmp.lt.s32.totalorder %s32, 3
      %p601 = pnand %p599, %p600
      %p602 = pneg %p601
      // Predicated region
      $region85: #{tpu_custom_call.1} parent=5 // pred_check
        _
      $region86: #{tpu_custom_call.1} parent=5 // pred_check_branch
        %604 = sbr.rel (%p601) target = $region88
      $region87: #{tpu_custom_call.1} parent=5 // pred_region
        %s605 = ssub.s32 %s32, 1
        // Predicated region
        $region89: #{tpu_custom_call.1} parent=87 // pred_check
          %p606 = pneg %p79
        $region90: #{tpu_custom_call.1} parent=87 // pred_check_branch
          %608 = sbr.rel (%p606) target = $region92
        $region91: #{tpu_custom_call.1} parent=87 // pred_region
          %609 = dma.done [#allocation4], 64
        $region92: #{tpu_custom_call.1} parent=87 // pred_fallthru
          _
        // Predicated region
        $region93: #{tpu_custom_call.1} parent=87 // pred_check
          %p610 = pneg %p100
        $region94: #{tpu_custom_call.1} parent=87 // pred_check_branch
          %612 = sbr.rel (%p610) target = $region96
        $region95: #{tpu_custom_call.1} parent=87 // pred_region
          %613 = dma.done [#allocation6], 16
        $region96: #{tpu_custom_call.1} parent=87 // pred_fallthru
          _
        // Predicated region
        $region97: #{tpu_custom_call.1} parent=87 // pred_check
          %p614 = pneg %p142
        $region98: #{tpu_custom_call.1} parent=87 // pred_check_branch
          %616 = sbr.rel (%p614) target = $region100
        $region99: #{tpu_custom_call.1} parent=87 // pred_region
          %617 = dma.done [#allocation6], 16
        $region100: #{tpu_custom_call.1} parent=87 // pred_fallthru
          _
        // Predicated region
        $region101: #{tpu_custom_call.1} parent=87 // pred_check
          %p618 = pneg %p163
        $region102: #{tpu_custom_call.1} parent=87 // pred_check_branch
          %620 = sbr.rel (%p618) target = $region104
        $region103: #{tpu_custom_call.1} parent=87 // pred_region
          %621 = dma.done [#allocation9], 1536
        $region104: #{tpu_custom_call.1} parent=87 // pred_fallthru
          _
        // Predicated region
        $region105: #{tpu_custom_call.1} parent=87 // pred_check
          %p622 = pneg %p184
        $region106: #{tpu_custom_call.1} parent=87 // pred_check_branch
          %624 = sbr.rel (%p622) target = $region108
        $region107: #{tpu_custom_call.1} parent=87 // pred_region
          %625 = dma.done [#allocation9], 16
        $region108: #{tpu_custom_call.1} parent=87 // pred_fallthru
          _
        // Predicated region
        $region109: #{tpu_custom_call.1} parent=87 // pred_check
          %p626 = pneg %p205
        $region110: #{tpu_custom_call.1} parent=87 // pred_check_branch
          %628 = sbr.rel (%p626) target = $region112
        $region111: #{tpu_custom_call.1} parent=87 // pred_region
          %629 = dma.done [#allocation12], 6144
        $region112: #{tpu_custom_call.1} parent=87 // pred_fallthru
          _
        // Predicated region
        $region113: #{tpu_custom_call.1} parent=87 // pred_check
          %p630 = pneg %p226
        $region114: #{tpu_custom_call.1} parent=87 // pred_check_branch
          %632 = sbr.rel (%p630) target = $region116
        $region115: #{tpu_custom_call.1} parent=87 // pred_region
          %633 = dma.done [#allocation12], 32
        $region116: #{tpu_custom_call.1} parent=87 // pred_fallthru
          _
        // Predicated region
        $region117: #{tpu_custom_call.1} parent=87 // pred_check
          %p634 = pneg %p247
        $region118: #{tpu_custom_call.1} parent=87 // pred_check_branch
          %636 = sbr.rel (%p634) target = $region120
        $region119: #{tpu_custom_call.1} parent=87 // pred_region
          %637 = dma.done [#allocation15], 40960
        $region120: #{tpu_custom_call.1} parent=87 // pred_fallthru
          _
        // Predicated region
        $region121: #{tpu_custom_call.1} parent=87 // pred_check
          %p638 = pneg %p268
        $region122: #{tpu_custom_call.1} parent=87 // pred_check_branch
          %640 = sbr.rel (%p638) target = $region124
        $region123: #{tpu_custom_call.1} parent=87 // pred_region
          %641 = dma.done [#allocation15], 32
        $region124: #{tpu_custom_call.1} parent=87 // pred_fallthru
          _
        // Predicated region
        $region125: #{tpu_custom_call.1} parent=87 // pred_check
          %p642 = pneg %p289
        $region126: #{tpu_custom_call.1} parent=87 // pred_check_branch
          %644 = sbr.rel (%p642) target = $region128
        $region127: #{tpu_custom_call.1} parent=87 // pred_region
          %645 = dma.done [#allocation18], 2048
        $region128: #{tpu_custom_call.1} parent=87 // pred_fallthru
          _
        // Predicated region
        $region129: #{tpu_custom_call.1} parent=87 // pred_check
          %p646 = pneg %p310
        $region130: #{tpu_custom_call.1} parent=87 // pred_check_branch
          %648 = sbr.rel (%p646) target = $region132
        $region131: #{tpu_custom_call.1} parent=87 // pred_region
          %649 = dma.done [#allocation18], 16
        $region132: #{tpu_custom_call.1} parent=87 // pred_fallthru
          _
        // Predicated region
        $region133: #{tpu_custom_call.1} parent=87 // pred_check
          %p650 = pneg %p352
        $region134: #{tpu_custom_call.1} parent=87 // pred_check_branch
          %652 = sbr.rel (%p650) target = $region136
        $region135: #{tpu_custom_call.1} parent=87 // pred_region
          %653 = dma.done [#allocation21], 16
        $region136: #{tpu_custom_call.1} parent=87 // pred_fallthru
          _
        %p654 = scmp.lt.s32.totalorder %s37, 1
        %s655 = scalar_select %p654, %s37, 1
        %s656 = smul.addr %s655, 25
        %s657 = smul.addr %s656, 8
        %s658 = scalar_lea.vmem %s0, %s657
        %p659 = pneg %p58
        %p660 = pneg %p55
        %p661 = pneg %p79
        %p662 = pneg %p76
        %p663 = pneg %p100
        %p664 = pneg %p97
        %p665 = pneg %p121
        %p666 = pneg %p118
        %p667 = pneg %p142
        %p668 = pneg %p139
        %p669 = pneg %p163
        %p670 = pneg %p160
        %p671 = pneg %p184
        %p672 = pneg %p181
        %p673 = pneg %p205
        %p674 = pneg %p202
        %p675 = pneg %p226
        %p676 = pneg %p223
        %p677 = pneg %p247
        %p678 = pneg %p244
        %p679 = pneg %p268
        %p680 = pneg %p265
        %p681 = pneg %p289
        %p682 = pneg %p286
        %p683 = pneg %p310
        %p684 = pneg %p307
        %p685 = pneg %p331
        %p686 = pneg %p328
        %p687 = pneg %p352
        %p688 = pneg %p349
        %p689 = pneg %p373
        %p690 = pneg %p370
        %p691 = pneg %p394
        %p692 = pneg %p391
        %p693 = pneg %p420
        %p694 = pneg %p417
        %p695 = scmp.lt.s32.totalorder %s37, 1
        %s696 = scalar_select %p695, %s37, 1
        %s697 = scalar_lea.vmem %s17, %s696
        %p698 = scmp.lt.s32.totalorder %s37, 1
        %s699 = scalar_select %p698, %s37, 1
        %s700 = smul.addr %s699, 25
        %s701 = smul.addr %s700, 8
        %s702 = scalar_lea.vmem %s0, %s701
        %p703 = scmp.lt.s32.totalorder %s37, 1
        %s704 = scalar_select %p703, %s37, 1
        %s705 = scalar_lea.vmem %s17, %s704
        %v707 = vld [vmem:[#allocation3] sm:$0x7]
        %v708 = vld [vmem:[#allocation5] sm:$0x1]
        %v709 = vld [vmem:[%s3] sm:$0xf]
        %v710 = vld [vmem:[%s3 + $0x4] sm:$0xf]
        %v711 = vld [vmem:[%s3 + $0x8] sm:$0xf]
        %v712 = vld [vmem:[%s3 + $0xc] sm:$0xf]
        %v713 = vld [vmem:[%s3 + $0x10] sm:$0xf]
        %v714 = vld [vmem:[%s3 + $0x14] sm:$0xf]
        %v715 = vld [vmem:[%s3 + $0x18] sm:$0xf]
        %v716 = vld [vmem:[%s3 + $0x1c] sm:$0xf]
        %v717 = vld [vmem:[%s3 + $0x20] sm:$0xf]
        %v718 = vld [vmem:[%s3 + $0x24] sm:$0xf]
        %v719 = vld [vmem:[%s3 + $0x28] sm:$0xf]
        %v720 = vld [vmem:[%s3 + $0x2c] sm:$0xf]
        %v721 = vld [vmem:[#allocation7] sm:$0x1]
        %v722 = vld [vmem:[#allocation8] sm:$0xf]
        %v723 = vld [vmem:[#allocation8 + $0x4] sm:$0xf]
        %v724 = vld [vmem:[#allocation8 + $0x8] sm:$0xf]
        %v725 = vld [vmem:[#allocation8 + $0xc] sm:$0xf]
        %v726 = vld [vmem:[#allocation8 + $0x10] sm:$0xf]
        %v727 = vld [vmem:[#allocation8 + $0x14] sm:$0xf]
        %v728 = vld [vmem:[#allocation8 + $0x18] sm:$0xf]
        %v729 = vld [vmem:[#allocation8 + $0x1c] sm:$0xf]
        %v730 = vld [vmem:[#allocation8 + $0x20] sm:$0xf]
        %v731 = vld [vmem:[#allocation8 + $0x24] sm:$0xf]
        %v732 = vld [vmem:[#allocation8 + $0x28] sm:$0xf]
        %v733 = vld [vmem:[#allocation8 + $0x2c] sm:$0xf]
        %v734 = vld [vmem:[#allocation8 + $0x30] sm:$0xf]
        %v735 = vld [vmem:[#allocation8 + $0x34] sm:$0xf]
        %v736 = vld [vmem:[#allocation8 + $0x38] sm:$0xf]
        %v737 = vld [vmem:[#allocation8 + $0x3c] sm:$0xf]
        %v738 = vld [vmem:[#allocation8 + $0x40] sm:$0xf]
        %v739 = vld [vmem:[#allocation8 + $0x44] sm:$0xf]
        %v740 = vld [vmem:[#allocation8 + $0x48] sm:$0xf]
        %v741 = vld [vmem:[#allocation8 + $0x4c] sm:$0xf]
        %v742 = vld [vmem:[#allocation8 + $0x50] sm:$0xf]
        %v743 = vld [vmem:[#allocation8 + $0x54] sm:$0xf]
        %v744 = vld [vmem:[#allocation8 + $0x58] sm:$0xf]
        %v745 = vld [vmem:[#allocation8 + $0x5c] sm:$0xf]
        %v746 = vld [vmem:[#allocation10] sm:$0x1]
        %v747 = vld [vmem:[#allocation11] sm:$0xff]
        %v748 = vld [vmem:[#allocation11 + $0x8] sm:$0xff]
        %v749 = vld [vmem:[#allocation11 + $0x10] sm:$0xff]
        %v750 = vld [vmem:[#allocation11 + $0x18] sm:$0xff]
        %v751 = vld [vmem:[#allocation11 + $0x20] sm:$0xff]
        %v752 = vld [vmem:[#allocation11 + $0x28] sm:$0xff]
        %v753 = vld [vmem:[#allocation11 + $0x30] sm:$0xff]
        %v754 = vld [vmem:[#allocation11 + $0x38] sm:$0xff]
        %v755 = vld [vmem:[#allocation11 + $0x40] sm:$0xff]
        %v756 = vld [vmem:[#allocation11 + $0x48] sm:$0xff]
        %v757 = vld [vmem:[#allocation11 + $0x50] sm:$0xff]
        %v758 = vld [vmem:[#allocation11 + $0x58] sm:$0xff]
        %v759 = vld [vmem:[#allocation11 + $0x60] sm:$0xff]
        %v760 = vld [vmem:[#allocation11 + $0x68] sm:$0xff]
        %v761 = vld [vmem:[#allocation11 + $0x70] sm:$0xff]
        %v762 = vld [vmem:[#allocation11 + $0x78] sm:$0xff]
        %v763 = vld [vmem:[#allocation11 + $0x80] sm:$0xff]
        %v764 = vld [vmem:[#allocation11 + $0x88] sm:$0xff]
        %v765 = vld [vmem:[#allocation11 + $0x90] sm:$0xff]
        %v766 = vld [vmem:[#allocation11 + $0x98] sm:$0xff]
        %v767 = vld [vmem:[#allocation11 + $0xa0] sm:$0xff]
        %v768 = vld [vmem:[#allocation11 + $0xa8] sm:$0xff]
        %v769 = vld [vmem:[#allocation11 + $0xb0] sm:$0xff]
        %v770 = vld [vmem:[#allocation11 + $0xb8] sm:$0xff]
        %v771 = vld [vmem:[#allocation11 + $0xc0] sm:$0xff]
        %v772 = vld [vmem:[#allocation11 + $0xc8] sm:$0xff]
        %v773 = vld [vmem:[#allocation11 + $0xd0] sm:$0xff]
        %v774 = vld [vmem:[#allocation11 + $0xd8] sm:$0xff]
        %v775 = vld [vmem:[#allocation11 + $0xe0] sm:$0xff]
        %v776 = vld [vmem:[#allocation11 + $0xe8] sm:$0xff]
        %v777 = vld [vmem:[#allocation11 + $0xf0] sm:$0xff]
        %v778 = vld [vmem:[#allocation11 + $0xf8] sm:$0xff]
        %v779 = vld [vmem:[#allocation11 + $0x100] sm:$0xff]
        %v780 = vld [vmem:[#allocation11 + $0x108] sm:$0xff]
        %v781 = vld [vmem:[#allocation11 + $0x110] sm:$0xff]
        %v782 = vld [vmem:[#allocation11 + $0x118] sm:$0xff]
        %v783 = vld [vmem:[#allocation11 + $0x120] sm:$0xff]
        %v784 = vld [vmem:[#allocation11 + $0x128] sm:$0xff]
        %v785 = vld [vmem:[#allocation11 + $0x130] sm:$0xff]
        %v786 = vld [vmem:[#allocation11 + $0x138] sm:$0xff]
        %v787 = vld [vmem:[#allocation11 + $0x140] sm:$0xff]
        %v788 = vld [vmem:[#allocation11 + $0x148] sm:$0xff]
        %v789 = vld [vmem:[#allocation11 + $0x150] sm:$0xff]
        %v790 = vld [vmem:[#allocation11 + $0x158] sm:$0xff]
        %v791 = vld [vmem:[#allocation11 + $0x160] sm:$0xff]
        %v792 = vld [vmem:[#allocation11 + $0x168] sm:$0xff]
        %v793 = vld [vmem:[#allocation11 + $0x170] sm:$0xff]
        %v794 = vld [vmem:[#allocation11 + $0x178] sm:$0xff]
        %v795 = vld [vmem:[#allocation13] sm:$0x3]
        %v796 = vld [vmem:[#allocation14] sm:$0xff]
        %v797 = vld [vmem:[#allocation14 + $0x8] sm:$0xff]
        %v798 = vld [vmem:[#allocation14 + $0x10] sm:$0xff]
        %v799 = vld [vmem:[#allocation14 + $0x18] sm:$0xff]
        %v800 = vld [vmem:[#allocation14 + $0x20] sm:$0xff]
        %v801 = vld [vmem:[#allocation14 + $0x28] sm:$0xff]
        %v802 = vld [vmem:[#allocation14 + $0x30] sm:$0xff]
        %v803 = vld [vmem:[#allocation14 + $0x38] sm:$0xff]
        %v804 = vld [vmem:[#allocation14 + $0x40] sm:$0xff]
        %v805 = vld [vmem:[#allocation14 + $0x48] sm:$0xff]
        %v806 = vld [vmem:[#allocation14 + $0x50] sm:$0xff]
        %v807 = vld [vmem:[#allocation14 + $0x58] sm:$0xff]
        %v808 = vld [vmem:[#allocation14 + $0x60] sm:$0xff]
        %v809 = vld [vmem:[#allocation14 + $0x68] sm:$0xff]
        %v810 = vld [vmem:[#allocation14 + $0x70] sm:$0xff]
        %v811 = vld [vmem:[#allocation14 + $0x78] sm:$0xff]
        %v812 = vld [vmem:[#allocation14 + $0x80] sm:$0xff]
        %v813 = vld [vmem:[#allocation14 + $0x88] sm:$0xff]
        %v814 = vld [vmem:[#allocation14 + $0x90] sm:$0xff]
        %v815 = vld [vmem:[#allocation14 + $0x98] sm:$0xff]
        %v816 = vld [vmem:[#allocation14 + $0xa0] sm:$0xff]
        %v817 = vld [vmem:[#allocation14 + $0xa8] sm:$0xff]
        %v818 = vld [vmem:[#allocation14 + $0xb0] sm:$0xff]
        %v819 = vld [vmem:[#allocation14 + $0xb8] sm:$0xff]
        %v820 = vld [vmem:[#allocation14 + $0xc0] sm:$0xff]
        %v821 = vld [vmem:[#allocation14 + $0xc8] sm:$0xff]
        %v822 = vld [vmem:[#allocation14 + $0xd0] sm:$0xff]
        %v823 = vld [vmem:[#allocation14 + $0xd8] sm:$0xff]
        %v824 = vld [vmem:[#allocation14 + $0xe0] sm:$0xff]
        %v825 = vld [vmem:[#allocation14 + $0xe8] sm:$0xff]
        %v826 = vld [vmem:[#allocation14 + $0xf0] sm:$0xff]
        %v827 = vld [vmem:[#allocation14 + $0xf8] sm:$0xff]
        %v828 = vld [vmem:[#allocation14 + $0x100] sm:$0xff]
        %v829 = vld [vmem:[#allocation14 + $0x108] sm:$0xff]
        %v830 = vld [vmem:[#allocation14 + $0x110] sm:$0xff]
        %v831 = vld [vmem:[#allocation14 + $0x118] sm:$0xff]
        %v832 = vld [vmem:[#allocation14 + $0x120] sm:$0xff]
        %v833 = vld [vmem:[#allocation14 + $0x128] sm:$0xff]
        %v834 = vld [vmem:[#allocation14 + $0x130] sm:$0xff]
        %v835 = vld [vmem:[#allocation14 + $0x138] sm:$0xff]
        %v836 = vld [vmem:[#allocation14 + $0x140] sm:$0xff]
        %v837 = vld [vmem:[#allocation14 + $0x148] sm:$0xff]
        %v838 = vld [vmem:[#allocation14 + $0x150] sm:$0xff]
        %v839 = vld [vmem:[#allocation14 + $0x158] sm:$0xff]
        %v840 = vld [vmem:[#allocation14 + $0x160] sm:$0xff]
        %v841 = vld [vmem:[#allocation14 + $0x168] sm:$0xff]
        %v842 = vld [vmem:[#allocation14 + $0x170] sm:$0xff]
        %v843 = vld [vmem:[#allocation14 + $0x178] sm:$0xff]
        %v844 = vld [vmem:[#allocation14 + $0x180] sm:$0xff]
        %v845 = vld [vmem:[#allocation14 + $0x188] sm:$0xff]
        %v846 = vld [vmem:[#allocation14 + $0x190] sm:$0xff]
        %v847 = vld [vmem:[#allocation14 + $0x198] sm:$0xff]
        %v848 = vld [vmem:[#allocation14 + $0x1a0] sm:$0xff]
        %v849 = vld [vmem:[#allocation14 + $0x1a8] sm:$0xff]
        %v850 = vld [vmem:[#allocation14 + $0x1b0] sm:$0xff]
        %v851 = vld [vmem:[#allocation14 + $0x1b8] sm:$0xff]
        %v852 = vld [vmem:[#allocation14 + $0x1c0] sm:$0xff]
        %v853 = vld [vmem:[#allocation14 + $0x1c8] sm:$0xff]
        %v854 = vld [vmem:[#allocation14 + $0x1d0] sm:$0xff]
        %v855 = vld [vmem:[#allocation14 + $0x1d8] sm:$0xff]
        %v856 = vld [vmem:[#allocation14 + $0x1e0] sm:$0xff]
        %v857 = vld [vmem:[#allocation14 + $0x1e8] sm:$0xff]
        %v858 = vld [vmem:[#allocation14 + $0x1f0] sm:$0xff]
        %v859 = vld [vmem:[#allocation14 + $0x1f8] sm:$0xff]
        %v860 = vld [vmem:[#allocation14 + $0x200] sm:$0xff]
        %v861 = vld [vmem:[#allocation14 + $0x208] sm:$0xff]
        %v862 = vld [vmem:[#allocation14 + $0x210] sm:$0xff]
        %v863 = vld [vmem:[#allocation14 + $0x218] sm:$0xff]
        %v864 = vld [vmem:[#allocation14 + $0x220] sm:$0xff]
        %v865 = vld [vmem:[#allocation14 + $0x228] sm:$0xff]
        %v866 = vld [vmem:[#allocation14 + $0x230] sm:$0xff]
        %v867 = vld [vmem:[#allocation14 + $0x238] sm:$0xff]
        %v868 = vld [vmem:[#allocation14 + $0x240] sm:$0xff]
        %v869 = vld [vmem:[#allocation14 + $0x248] sm:$0xff]
        %v870 = vld [vmem:[#allocation14 + $0x250] sm:$0xff]
        %v871 = vld [vmem:[#allocation14 + $0x258] sm:$0xff]
        %v872 = vld [vmem:[#allocation14 + $0x260] sm:$0xff]
        %v873 = vld [vmem:[#allocation14 + $0x268] sm:$0xff]
        %v874 = vld [vmem:[#allocation14 + $0x270] sm:$0xff]
        %v875 = vld [vmem:[#allocation14 + $0x278] sm:$0xff]
        %v876 = vld [vmem:[#allocation14 + $0x280] sm:$0xff]
        %v877 = vld [vmem:[#allocation14 + $0x288] sm:$0xff]
        %v878 = vld [vmem:[#allocation14 + $0x290] sm:$0xff]
        %v879 = vld [vmem:[#allocation14 + $0x298] sm:$0xff]
        %v880 = vld [vmem:[#allocation14 + $0x2a0] sm:$0xff]
        %v881 = vld [vmem:[#allocation14 + $0x2a8] sm:$0xff]
        %v882 = vld [vmem:[#allocation14 + $0x2b0] sm:$0xff]
        %v883 = vld [vmem:[#allocation14 + $0x2b8] sm:$0xff]
        %v884 = vld [vmem:[#allocation14 + $0x2c0] sm:$0xff]
        %v885 = vld [vmem:[#allocation14 + $0x2c8] sm:$0xff]
        %v886 = vld [vmem:[#allocation14 + $0x2d0] sm:$0xff]
        %v887 = vld [vmem:[#allocation14 + $0x2d8] sm:$0xff]
        %v888 = vld [vmem:[#allocation14 + $0x2e0] sm:$0xff]
        %v889 = vld [vmem:[#allocation14 + $0x2e8] sm:$0xff]
        %v890 = vld [vmem:[#allocation14 + $0x2f0] sm:$0xff]
        %v891 = vld [vmem:[#allocation14 + $0x2f8] sm:$0xff]
        %v892 = vld [vmem:[#allocation14 + $0x300] sm:$0xff]
        %v893 = vld [vmem:[#allocation14 + $0x308] sm:$0xff]
        %v894 = vld [vmem:[#allocation14 + $0x310] sm:$0xff]
        %v895 = vld [vmem:[#allocation14 + $0x318] sm:$0xff]
        %v896 = vld [vmem:[#allocation14 + $0x320] sm:$0xff]
        %v897 = vld [vmem:[#allocation14 + $0x328] sm:$0xff]
        %v898 = vld [vmem:[#allocation14 + $0x330] sm:$0xff]
        %v899 = vld [vmem:[#allocation14 + $0x338] sm:$0xff]
        %v900 = vld [vmem:[#allocation14 + $0x340] sm:$0xff]
        %v901 = vld [vmem:[#allocation14 + $0x348] sm:$0xff]
        %v902 = vld [vmem:[#allocation14 + $0x350] sm:$0xff]
        %v903 = vld [vmem:[#allocation14 + $0x358] sm:$0xff]
        %v904 = vld [vmem:[#allocation14 + $0x360] sm:$0xff]
        %v905 = vld [vmem:[#allocation14 + $0x368] sm:$0xff]
        %v906 = vld [vmem:[#allocation14 + $0x370] sm:$0xff]
        %v907 = vld [vmem:[#allocation14 + $0x378] sm:$0xff]
        %v908 = vld [vmem:[#allocation14 + $0x380] sm:$0xff]
        %v909 = vld [vmem:[#allocation14 + $0x388] sm:$0xff]
        %v910 = vld [vmem:[#allocation14 + $0x390] sm:$0xff]
        %v911 = vld [vmem:[#allocation14 + $0x398] sm:$0xff]
        %v912 = vld [vmem:[#allocation14 + $0x3a0] sm:$0xff]
        %v913 = vld [vmem:[#allocation14 + $0x3a8] sm:$0xff]
        %v914 = vld [vmem:[#allocation14 + $0x3b0] sm:$0xff]
        %v915 = vld [vmem:[#allocation14 + $0x3b8] sm:$0xff]
        %v916 = vld [vmem:[#allocation14 + $0x3c0] sm:$0xff]
        %v917 = vld [vmem:[#allocation14 + $0x3c8] sm:$0xff]
        %v918 = vld [vmem:[#allocation14 + $0x3d0] sm:$0xff]
        %v919 = vld [vmem:[#allocation14 + $0x3d8] sm:$0xff]
        %v920 = vld [vmem:[#allocation14 + $0x3e0] sm:$0xff]
        %v921 = vld [vmem:[#allocation14 + $0x3e8] sm:$0xff]
        %v922 = vld [vmem:[#allocation14 + $0x3f0] sm:$0xff]
        %v923 = vld [vmem:[#allocation14 + $0x3f8] sm:$0xff]
        %v924 = vld [vmem:[#allocation14 + $0x400] sm:$0xff]
        %v925 = vld [vmem:[#allocation14 + $0x408] sm:$0xff]
        %v926 = vld [vmem:[#allocation14 + $0x410] sm:$0xff]
        %v927 = vld [vmem:[#allocation14 + $0x418] sm:$0xff]
        %v928 = vld [vmem:[#allocation14 + $0x420] sm:$0xff]
        %v929 = vld [vmem:[#allocation14 + $0x428] sm:$0xff]
        %v930 = vld [vmem:[#allocation14 + $0x430] sm:$0xff]
        %v931 = vld [vmem:[#allocation14 + $0x438] sm:$0xff]
        %v932 = vld [vmem:[#allocation14 + $0x440] sm:$0xff]
        %v933 = vld [vmem:[#allocation14 + $0x448] sm:$0xff]
        %v934 = vld [vmem:[#allocation14 + $0x450] sm:$0xff]
        %v935 = vld [vmem:[#allocation14 + $0x458] sm:$0xff]
        %v936 = vld [vmem:[#allocation14 + $0x460] sm:$0xff]
        %v937 = vld [vmem:[#allocation14 + $0x468] sm:$0xff]
        %v938 = vld [vmem:[#allocation14 + $0x470] sm:$0xff]
        %v939 = vld [vmem:[#allocation14 + $0x478] sm:$0xff]
        %v940 = vld [vmem:[#allocation14 + $0x480] sm:$0xff]
        %v941 = vld [vmem:[#allocation14 + $0x488] sm:$0xff]
        %v942 = vld [vmem:[#allocation14 + $0x490] sm:$0xff]
        %v943 = vld [vmem:[#allocation14 + $0x498] sm:$0xff]
        %v944 = vld [vmem:[#allocation14 + $0x4a0] sm:$0xff]
        %v945 = vld [vmem:[#allocation14 + $0x4a8] sm:$0xff]
        %v946 = vld [vmem:[#allocation14 + $0x4b0] sm:$0xff]
        %v947 = vld [vmem:[#allocation14 + $0x4b8] sm:$0xff]
        %v948 = vld [vmem:[#allocation14 + $0x4c0] sm:$0xff]
        %v949 = vld [vmem:[#allocation14 + $0x4c8] sm:$0xff]
        %v950 = vld [vmem:[#allocation14 + $0x4d0] sm:$0xff]
        %v951 = vld [vmem:[#allocation14 + $0x4d8] sm:$0xff]
        %v952 = vld [vmem:[#allocation14 + $0x4e0] sm:$0xff]
        %v953 = vld [vmem:[#allocation14 + $0x4e8] sm:$0xff]
        %v954 = vld [vmem:[#allocation14 + $0x4f0] sm:$0xff]
        %v955 = vld [vmem:[#allocation14 + $0x4f8] sm:$0xff]
        %v956 = vld [vmem:[#allocation14 + $0x500] sm:$0xff]
        %v957 = vld [vmem:[#allocation14 + $0x508] sm:$0xff]
        %v958 = vld [vmem:[#allocation14 + $0x510] sm:$0xff]
        %v959 = vld [vmem:[#allocation14 + $0x518] sm:$0xff]
        %v960 = vld [vmem:[#allocation14 + $0x520] sm:$0xff]
        %v961 = vld [vmem:[#allocation14 + $0x528] sm:$0xff]
        %v962 = vld [vmem:[#allocation14 + $0x530] sm:$0xff]
        %v963 = vld [vmem:[#allocation14 + $0x538] sm:$0xff]
        %v964 = vld [vmem:[#allocation14 + $0x540] sm:$0xff]
        %v965 = vld [vmem:[#allocation14 + $0x548] sm:$0xff]
        %v966 = vld [vmem:[#allocation14 + $0x550] sm:$0xff]
        %v967 = vld [vmem:[#allocation14 + $0x558] sm:$0xff]
        %v968 = vld [vmem:[#allocation14 + $0x560] sm:$0xff]
        %v969 = vld [vmem:[#allocation14 + $0x568] sm:$0xff]
        %v970 = vld [vmem:[#allocation14 + $0x570] sm:$0xff]
        %v971 = vld [vmem:[#allocation14 + $0x578] sm:$0xff]
        %v972 = vld [vmem:[#allocation14 + $0x580] sm:$0xff]
        %v973 = vld [vmem:[#allocation14 + $0x588] sm:$0xff]
        %v974 = vld [vmem:[#allocation14 + $0x590] sm:$0xff]
        %v975 = vld [vmem:[#allocation14 + $0x598] sm:$0xff]
        %v976 = vld [vmem:[#allocation14 + $0x5a0] sm:$0xff]
        %v977 = vld [vmem:[#allocation14 + $0x5a8] sm:$0xff]
        %v978 = vld [vmem:[#allocation14 + $0x5b0] sm:$0xff]
        %v979 = vld [vmem:[#allocation14 + $0x5b8] sm:$0xff]
        %v980 = vld [vmem:[#allocation14 + $0x5c0] sm:$0xff]
        %v981 = vld [vmem:[#allocation14 + $0x5c8] sm:$0xff]
        %v982 = vld [vmem:[#allocation14 + $0x5d0] sm:$0xff]
        %v983 = vld [vmem:[#allocation14 + $0x5d8] sm:$0xff]
        %v984 = vld [vmem:[#allocation14 + $0x5e0] sm:$0xff]
        %v985 = vld [vmem:[#allocation14 + $0x5e8] sm:$0xff]
        %v986 = vld [vmem:[#allocation14 + $0x5f0] sm:$0xff]
        %v987 = vld [vmem:[#allocation14 + $0x5f8] sm:$0xff]
        %v988 = vld [vmem:[#allocation14 + $0x600] sm:$0xff]
        %v989 = vld [vmem:[#allocation14 + $0x608] sm:$0xff]
        %v990 = vld [vmem:[#allocation14 + $0x610] sm:$0xff]
        %v991 = vld [vmem:[#allocation14 + $0x618] sm:$0xff]
        %v992 = vld [vmem:[#allocation14 + $0x620] sm:$0xff]
        %v993 = vld [vmem:[#allocation14 + $0x628] sm:$0xff]
        %v994 = vld [vmem:[#allocation14 + $0x630] sm:$0xff]
        %v995 = vld [vmem:[#allocation14 + $0x638] sm:$0xff]
        %v996 = vld [vmem:[#allocation14 + $0x640] sm:$0xff]
        %v997 = vld [vmem:[#allocation14 + $0x648] sm:$0xff]
        %v998 = vld [vmem:[#allocation14 + $0x650] sm:$0xff]
        %v999 = vld [vmem:[#allocation14 + $0x658] sm:$0xff]
        %v1000 = vld [vmem:[#allocation14 + $0x660] sm:$0xff]
        %v1001 = vld [vmem:[#allocation14 + $0x668] sm:$0xff]
        %v1002 = vld [vmem:[#allocation14 + $0x670] sm:$0xff]
        %v1003 = vld [vmem:[#allocation14 + $0x678] sm:$0xff]
        %v1004 = vld [vmem:[#allocation14 + $0x680] sm:$0xff]
        %v1005 = vld [vmem:[#allocation14 + $0x688] sm:$0xff]
        %v1006 = vld [vmem:[#allocation14 + $0x690] sm:$0xff]
        %v1007 = vld [vmem:[#allocation14 + $0x698] sm:$0xff]
        %v1008 = vld [vmem:[#allocation14 + $0x6a0] sm:$0xff]
        %v1009 = vld [vmem:[#allocation14 + $0x6a8] sm:$0xff]
        %v1010 = vld [vmem:[#allocation14 + $0x6b0] sm:$0xff]
        %v1011 = vld [vmem:[#allocation14 + $0x6b8] sm:$0xff]
        %v1012 = vld [vmem:[#allocation14 + $0x6c0] sm:$0xff]
        %v1013 = vld [vmem:[#allocation14 + $0x6c8] sm:$0xff]
        %v1014 = vld [vmem:[#allocation14 + $0x6d0] sm:$0xff]
        %v1015 = vld [vmem:[#allocation14 + $0x6d8] sm:$0xff]
        %v1016 = vld [vmem:[#allocation14 + $0x6e0] sm:$0xff]
        %v1017 = vld [vmem:[#allocation14 + $0x6e8] sm:$0xff]
        %v1018 = vld [vmem:[#allocation14 + $0x6f0] sm:$0xff]
        %v1019 = vld [vmem:[#allocation14 + $0x6f8] sm:$0xff]
        %v1020 = vld [vmem:[#allocation14 + $0x700] sm:$0xff]
        %v1021 = vld [vmem:[#allocation14 + $0x708] sm:$0xff]
        %v1022 = vld [vmem:[#allocation14 + $0x710] sm:$0xff]
        %v1023 = vld [vmem:[#allocation14 + $0x718] sm:$0xff]
        %v1024 = vld [vmem:[#allocation14 + $0x720] sm:$0xff]
        %v1025 = vld [vmem:[#allocation14 + $0x728] sm:$0xff]
        %v1026 = vld [vmem:[#allocation14 + $0x730] sm:$0xff]
        %v1027 = vld [vmem:[#allocation14 + $0x738] sm:$0xff]
        %v1028 = vld [vmem:[#allocation14 + $0x740] sm:$0xff]
        %v1029 = vld [vmem:[#allocation14 + $0x748] sm:$0xff]
        %v1030 = vld [vmem:[#allocation14 + $0x750] sm:$0xff]
        %v1031 = vld [vmem:[#allocation14 + $0x758] sm:$0xff]
        %v1032 = vld [vmem:[#allocation14 + $0x760] sm:$0xff]
        %v1033 = vld [vmem:[#allocation14 + $0x768] sm:$0xff]
        %v1034 = vld [vmem:[#allocation14 + $0x770] sm:$0xff]
        %v1035 = vld [vmem:[#allocation14 + $0x778] sm:$0xff]
        %v1036 = vld [vmem:[#allocation14 + $0x780] sm:$0xff]
        %v1037 = vld [vmem:[#allocation14 + $0x788] sm:$0xff]
        %v1038 = vld [vmem:[#allocation14 + $0x790] sm:$0xff]
        %v1039 = vld [vmem:[#allocation14 + $0x798] sm:$0xff]
        %v1040 = vld [vmem:[#allocation14 + $0x7a0] sm:$0xff]
        %v1041 = vld [vmem:[#allocation14 + $0x7a8] sm:$0xff]
        %v1042 = vld [vmem:[#allocation14 + $0x7b0] sm:$0xff]
        %v1043 = vld [vmem:[#allocation14 + $0x7b8] sm:$0xff]
        %v1044 = vld [vmem:[#allocation14 + $0x7c0] sm:$0xff]
        %v1045 = vld [vmem:[#allocation14 + $0x7c8] sm:$0xff]
        %v1046 = vld [vmem:[#allocation14 + $0x7d0] sm:$0xff]
        %v1047 = vld [vmem:[#allocation14 + $0x7d8] sm:$0xff]
        %v1048 = vld [vmem:[#allocation14 + $0x7e0] sm:$0xff]
        %v1049 = vld [vmem:[#allocation14 + $0x7e8] sm:$0xff]
        %v1050 = vld [vmem:[#allocation14 + $0x7f0] sm:$0xff]
        %v1051 = vld [vmem:[#allocation14 + $0x7f8] sm:$0xff]
        %v1052 = vld [vmem:[#allocation14 + $0x800] sm:$0xff]
        %v1053 = vld [vmem:[#allocation14 + $0x808] sm:$0xff]
        %v1054 = vld [vmem:[#allocation14 + $0x810] sm:$0xff]
        %v1055 = vld [vmem:[#allocation14 + $0x818] sm:$0xff]
        %v1056 = vld [vmem:[#allocation14 + $0x820] sm:$0xff]
        %v1057 = vld [vmem:[#allocation14 + $0x828] sm:$0xff]
        %v1058 = vld [vmem:[#allocation14 + $0x830] sm:$0xff]
        %v1059 = vld [vmem:[#allocation14 + $0x838] sm:$0xff]
        %v1060 = vld [vmem:[#allocation14 + $0x840] sm:$0xff]
        %v1061 = vld [vmem:[#allocation14 + $0x848] sm:$0xff]
        %v1062 = vld [vmem:[#allocation14 + $0x850] sm:$0xff]
        %v1063 = vld [vmem:[#allocation14 + $0x858] sm:$0xff]
        %v1064 = vld [vmem:[#allocation14 + $0x860] sm:$0xff]
        %v1065 = vld [vmem:[#allocation14 + $0x868] sm:$0xff]
        %v1066 = vld [vmem:[#allocation14 + $0x870] sm:$0xff]
        %v1067 = vld [vmem:[#allocation14 + $0x878] sm:$0xff]
        %v1068 = vld [vmem:[#allocation14 + $0x880] sm:$0xff]
        %v1069 = vld [vmem:[#allocation14 + $0x888] sm:$0xff]
        %v1070 = vld [vmem:[#allocation14 + $0x890] sm:$0xff]
        %v1071 = vld [vmem:[#allocation14 + $0x898] sm:$0xff]
        %v1072 = vld [vmem:[#allocation14 + $0x8a0] sm:$0xff]
        %v1073 = vld [vmem:[#allocation14 + $0x8a8] sm:$0xff]
        %v1074 = vld [vmem:[#allocation14 + $0x8b0] sm:$0xff]
        %v1075 = vld [vmem:[#allocation14 + $0x8b8] sm:$0xff]
        %v1076 = vld [vmem:[#allocation14 + $0x8c0] sm:$0xff]
        %v1077 = vld [vmem:[#allocation14 + $0x8c8] sm:$0xff]
        %v1078 = vld [vmem:[#allocation14 + $0x8d0] sm:$0xff]
        %v1079 = vld [vmem:[#allocation14 + $0x8d8] sm:$0xff]
        %v1080 = vld [vmem:[#allocation14 + $0x8e0] sm:$0xff]
        %v1081 = vld [vmem:[#allocation14 + $0x8e8] sm:$0xff]
        %v1082 = vld [vmem:[#allocation14 + $0x8f0] sm:$0xff]
        %v1083 = vld [vmem:[#allocation14 + $0x8f8] sm:$0xff]
        %v1084 = vld [vmem:[#allocation14 + $0x900] sm:$0xff]
        %v1085 = vld [vmem:[#allocation14 + $0x908] sm:$0xff]
        %v1086 = vld [vmem:[#allocation14 + $0x910] sm:$0xff]
        %v1087 = vld [vmem:[#allocation14 + $0x918] sm:$0xff]
        %v1088 = vld [vmem:[#allocation14 + $0x920] sm:$0xff]
        %v1089 = vld [vmem:[#allocation14 + $0x928] sm:$0xff]
        %v1090 = vld [vmem:[#allocation14 + $0x930] sm:$0xff]
        %v1091 = vld [vmem:[#allocation14 + $0x938] sm:$0xff]
        %v1092 = vld [vmem:[#allocation14 + $0x940] sm:$0xff]
        %v1093 = vld [vmem:[#allocation14 + $0x948] sm:$0xff]
        %v1094 = vld [vmem:[#allocation14 + $0x950] sm:$0xff]
        %v1095 = vld [vmem:[#allocation14 + $0x958] sm:$0xff]
        %v1096 = vld [vmem:[#allocation14 + $0x960] sm:$0xff]
        %v1097 = vld [vmem:[#allocation14 + $0x968] sm:$0xff]
        %v1098 = vld [vmem:[#allocation14 + $0x970] sm:$0xff]
        %v1099 = vld [vmem:[#allocation14 + $0x978] sm:$0xff]
        %v1100 = vld [vmem:[#allocation14 + $0x980] sm:$0xff]
        %v1101 = vld [vmem:[#allocation14 + $0x988] sm:$0xff]
        %v1102 = vld [vmem:[#allocation14 + $0x990] sm:$0xff]
        %v1103 = vld [vmem:[#allocation14 + $0x998] sm:$0xff]
        %v1104 = vld [vmem:[#allocation14 + $0x9a0] sm:$0xff]
        %v1105 = vld [vmem:[#allocation14 + $0x9a8] sm:$0xff]
        %v1106 = vld [vmem:[#allocation14 + $0x9b0] sm:$0xff]
        %v1107 = vld [vmem:[#allocation14 + $0x9b8] sm:$0xff]
        %v1108 = vld [vmem:[#allocation14 + $0x9c0] sm:$0xff]
        %v1109 = vld [vmem:[#allocation14 + $0x9c8] sm:$0xff]
        %v1110 = vld [vmem:[#allocation14 + $0x9d0] sm:$0xff]
        %v1111 = vld [vmem:[#allocation14 + $0x9d8] sm:$0xff]
        %v1112 = vld [vmem:[#allocation14 + $0x9e0] sm:$0xff]
        %v1113 = vld [vmem:[#allocation14 + $0x9e8] sm:$0xff]
        %v1114 = vld [vmem:[#allocation14 + $0x9f0] sm:$0xff]
        %v1115 = vld [vmem:[#allocation14 + $0x9f8] sm:$0xff]
        %v1116 = vld [vmem:[#allocation16] sm:$0x3]
        %v1117 = vld [vmem:[#allocation17] sm:$0xf]
        %v1118 = vld [vmem:[#allocation17 + $0x4] sm:$0xf]
        %v1119 = vld [vmem:[#allocation17 + $0x8] sm:$0xf]
        %v1120 = vld [vmem:[#allocation17 + $0xc] sm:$0xf]
        %v1121 = vld [vmem:[#allocation17 + $0x10] sm:$0xf]
        %v1122 = vld [vmem:[#allocation17 + $0x14] sm:$0xf]
        %v1123 = vld [vmem:[#allocation17 + $0x18] sm:$0xf]
        %v1124 = vld [vmem:[#allocation17 + $0x1c] sm:$0xf]
        %v1125 = vld [vmem:[#allocation17 + $0x20] sm:$0xf]
        %v1126 = vld [vmem:[#allocation17 + $0x24] sm:$0xf]
        %v1127 = vld [vmem:[#allocation17 + $0x28] sm:$0xf]
        %v1128 = vld [vmem:[#allocation17 + $0x2c] sm:$0xf]
        %v1129 = vld [vmem:[#allocation17 + $0x30] sm:$0xf]
        %v1130 = vld [vmem:[#allocation17 + $0x34] sm:$0xf]
        %v1131 = vld [vmem:[#allocation17 + $0x38] sm:$0xf]
        %v1132 = vld [vmem:[#allocation17 + $0x3c] sm:$0xf]
        %v1133 = vld [vmem:[#allocation17 + $0x40] sm:$0xf]
        %v1134 = vld [vmem:[#allocation17 + $0x44] sm:$0xf]
        %v1135 = vld [vmem:[#allocation17 + $0x48] sm:$0xf]
        %v1136 = vld [vmem:[#allocation17 + $0x4c] sm:$0xf]
        %v1137 = vld [vmem:[#allocation17 + $0x50] sm:$0xf]
        %v1138 = vld [vmem:[#allocation17 + $0x54] sm:$0xf]
        %v1139 = vld [vmem:[#allocation17 + $0x58] sm:$0xf]
        %v1140 = vld [vmem:[#allocation17 + $0x5c] sm:$0xf]
        %v1141 = vld [vmem:[#allocation17 + $0x60] sm:$0xf]
        %v1142 = vld [vmem:[#allocation17 + $0x64] sm:$0xf]
        %v1143 = vld [vmem:[#allocation17 + $0x68] sm:$0xf]
        %v1144 = vld [vmem:[#allocation17 + $0x6c] sm:$0xf]
        %v1145 = vld [vmem:[#allocation17 + $0x70] sm:$0xf]
        %v1146 = vld [vmem:[#allocation17 + $0x74] sm:$0xf]
        %v1147 = vld [vmem:[#allocation17 + $0x78] sm:$0xf]
        %v1148 = vld [vmem:[#allocation17 + $0x7c] sm:$0xf]
        %v1149 = vld [vmem:[#allocation19] sm:$0x1]
        %v1150 = vld [vmem:[%s13] sm:$0xf]
        %v1151 = vld [vmem:[%s13 + $0x4] sm:$0xf]
        %v1152 = vld [vmem:[%s13 + $0x8] sm:$0xf]
        %v1153 = vld [vmem:[%s13 + $0xc] sm:$0xf]
        %v1154 = vld [vmem:[%s13 + $0x10] sm:$0xf]
        %v1155 = vld [vmem:[%s13 + $0x14] sm:$0xf]
        %v1156 = vld [vmem:[%s13 + $0x18] sm:$0xf]
        %v1157 = vld [vmem:[%s13 + $0x1c] sm:$0xf]
        %v1158 = vld [vmem:[%s13 + $0x20] sm:$0xf]
        %v1159 = vld [vmem:[%s13 + $0x24] sm:$0xf]
        %v1160 = vld [vmem:[%s13 + $0x28] sm:$0xf]
        %v1161 = vld [vmem:[%s13 + $0x2c] sm:$0xf]
        %v1162 = vld [vmem:[%s13 + $0x30] sm:$0xf]
        %v1163 = vld [vmem:[%s13 + $0x34] sm:$0xf]
        %v1164 = vld [vmem:[%s13 + $0x38] sm:$0xf]
        %v1165 = vld [vmem:[%s13 + $0x3c] sm:$0xf]
        %v1166 = vld [vmem:[#allocation20] sm:$0x1]
        %v1167 = vld [vmem:[%s15] sm:$0xf]
        %v1168 = vld [vmem:[%s15 + $0x4] sm:$0xf]
        %v1169 = vld [vmem:[%s15 + $0x8] sm:$0xf]
        %v1170 = vld [vmem:[%s15 + $0xc] sm:$0xf]
        %v1171 = vld [vmem:[%s15 + $0x10] sm:$0xf]
        %v1172 = vld [vmem:[%s15 + $0x14] sm:$0xf]
        %v1173 = vld [vmem:[%s15 + $0x18] sm:$0xf]
        %v1174 = vld [vmem:[%s15 + $0x1c] sm:$0xf]
        %v1175 = vld [vmem:[#allocation2] sm:$0x1]
        %v1176 = vld [vmem:[%s702] sm:$0xff]
        %v1177 = vld [vmem:[%s702 + $0x8] sm:$0xff]
        %v1178 = vld [vmem:[%s702 + $0x10] sm:$0xff]
        %v1179 = vld [vmem:[%s702 + $0x18] sm:$0xff]
        %v1180 = vld [vmem:[%s702 + $0x20] sm:$0xff]
        %v1181 = vld [vmem:[%s702 + $0x28] sm:$0xff]
        %v1182 = vld [vmem:[%s702 + $0x30] sm:$0xff]
        %v1183 = vld [vmem:[%s702 + $0x38] sm:$0xff]
        %v1184 = vld [vmem:[%s702 + $0x40] sm:$0xff]
        %v1185 = vld [vmem:[%s702 + $0x48] sm:$0xff]
        %v1186 = vld [vmem:[%s702 + $0x50] sm:$0xff]
        %v1187 = vld [vmem:[%s702 + $0x58] sm:$0xff]
        %v1188 = vld [vmem:[%s702 + $0x60] sm:$0xff]
        %v1189 = vld [vmem:[%s702 + $0x68] sm:$0xff]
        %v1190 = vld [vmem:[%s702 + $0x70] sm:$0xff]
        %v1191 = vld [vmem:[%s702 + $0x78] sm:$0xff]
        %v1192 = vld [vmem:[%s702 + $0x80] sm:$0xff]
        %v1193 = vld [vmem:[%s702 + $0x88] sm:$0xff]
        %v1194 = vld [vmem:[%s702 + $0x90] sm:$0xff]
        %v1195 = vld [vmem:[%s702 + $0x98] sm:$0xff]
        %v1196 = vld [vmem:[%s702 + $0xa0] sm:$0xff]
        %v1197 = vld [vmem:[%s702 + $0xa8] sm:$0xff]
        %v1198 = vld [vmem:[%s702 + $0xb0] sm:$0xff]
        %v1199 = vld [vmem:[%s702 + $0xb8] sm:$0xff]
        %v1200 = vld [vmem:[%s702 + $0xc0] sm:$0xff]
        %1202 = vset.pattern.permute.xlu0 0
        %1203 = vperm.xlu0 %1202, %v1176
        %v1204 = vpop.permute.xlu0 %1203
        %1207 = vset.pattern.permute.xlu0 0
        %1208 = vperm.xlu0 %1207, %v1177
        %v1209 = vpop.permute.xlu0 %1208
        %1212 = vset.pattern.permute.xlu0 0
        %1213 = vperm.xlu0 %1212, %v1178
        %v1214 = vpop.permute.xlu0 %1213
        %1217 = vset.pattern.permute.xlu0 0
        %1218 = vperm.xlu0 %1217, %v1179
        %v1219 = vpop.permute.xlu0 %1218
        %1222 = vset.pattern.permute.xlu0 0
        %1223 = vperm.xlu0 %1222, %v1180
        %v1224 = vpop.permute.xlu0 %1223
        %1227 = vset.pattern.permute.xlu0 0
        %1228 = vperm.xlu0 %1227, %v1181
        %v1229 = vpop.permute.xlu0 %1228
        %1232 = vset.pattern.permute.xlu0 0
        %1233 = vperm.xlu0 %1232, %v1182
        %v1234 = vpop.permute.xlu0 %1233
        %1237 = vset.pattern.permute.xlu0 0
        %1238 = vperm.xlu0 %1237, %v1183
        %v1239 = vpop.permute.xlu0 %1238
        %1242 = vset.pattern.permute.xlu0 0
        %1243 = vperm.xlu0 %1242, %v1184
        %v1244 = vpop.permute.xlu0 %1243
        %1247 = vset.pattern.permute.xlu0 0
        %1248 = vperm.xlu0 %1247, %v1185
        %v1249 = vpop.permute.xlu0 %1248
        %1252 = vset.pattern.permute.xlu0 0
        %1253 = vperm.xlu0 %1252, %v1186
        %v1254 = vpop.permute.xlu0 %1253
        %1257 = vset.pattern.permute.xlu0 0
        %1258 = vperm.xlu0 %1257, %v1187
        %v1259 = vpop.permute.xlu0 %1258
        %1262 = vset.pattern.permute.xlu0 0
        %1263 = vperm.xlu0 %1262, %v1188
        %v1264 = vpop.permute.xlu0 %1263
        %1267 = vset.pattern.permute.xlu0 0
        %1268 = vperm.xlu0 %1267, %v1189
        %v1269 = vpop.permute.xlu0 %1268
        %1272 = vset.pattern.permute.xlu0 0
        %1273 = vperm.xlu0 %1272, %v1190
        %v1274 = vpop.permute.xlu0 %1273
        %1277 = vset.pattern.permute.xlu0 0
        %1278 = vperm.xlu0 %1277, %v1191
        %v1279 = vpop.permute.xlu0 %1278
        %1282 = vset.pattern.permute.xlu0 0
        %1283 = vperm.xlu0 %1282, %v1192
        %v1284 = vpop.permute.xlu0 %1283
        %1287 = vset.pattern.permute.xlu0 0
        %1288 = vperm.xlu0 %1287, %v1193
        %v1289 = vpop.permute.xlu0 %1288
        %1292 = vset.pattern.permute.xlu0 0
        %1293 = vperm.xlu0 %1292, %v1194
        %v1294 = vpop.permute.xlu0 %1293
        %1297 = vset.pattern.permute.xlu0 0
        %1298 = vperm.xlu0 %1297, %v1195
        %v1299 = vpop.permute.xlu0 %1298
        %1302 = vset.pattern.permute.xlu0 0
        %1303 = vperm.xlu0 %1302, %v1196
        %v1304 = vpop.permute.xlu0 %1303
        %1307 = vset.pattern.permute.xlu0 0
        %1308 = vperm.xlu0 %1307, %v1197
        %v1309 = vpop.permute.xlu0 %1308
        %1312 = vset.pattern.permute.xlu0 0
        %1313 = vperm.xlu0 %1312, %v1198
        %v1314 = vpop.permute.xlu0 %1313
        %1317 = vset.pattern.permute.xlu0 0
        %1318 = vperm.xlu0 %1317, %v1199
        %v1319 = vpop.permute.xlu0 %1318
        %1322 = vset.pattern.permute.xlu0 0
        %1323 = vperm.xlu0 %1322, %v1200
        %v1324 = vpop.permute.xlu0 %1323
        %v1326 = vlaneseq
        %v1327 = vshrl.u32 %v1326, 7
        %v1328 = vsub.s32 0, %v1327
        %v1329 = vrot.slane %v707, %v1328
        %v1330 = vmul.f32 %v1204, %v1329
        %v1331 = vmul.f32 %v1209, %v1329
        %v1332 = vmul.f32 %v1214, %v1329
        %v1333 = vmul.f32 %v1219, %v1329
        %v1334 = vmul.f32 %v1224, %v1329
        %v1335 = vmul.f32 %v1229, %v1329
        %v1336 = vmul.f32 %v1234, %v1329
        %v1337 = vmul.f32 %v1239, %v1329
        %v1338 = vmul.f32 %v1244, %v1329
        %v1339 = vmul.f32 %v1249, %v1329
        %v1340 = vmul.f32 %v1254, %v1329
        %v1341 = vmul.f32 %v1259, %v1329
        %v1342 = vmul.f32 %v1264, %v1329
        %v1343 = vmul.f32 %v1269, %v1329
        %v1344 = vmul.f32 %v1274, %v1329
        %v1345 = vmul.f32 %v1279, %v1329
        %v1346 = vmul.f32 %v1284, %v1329
        %v1347 = vmul.f32 %v1289, %v1329
        %v1348 = vmul.f32 %v1294, %v1329
        %v1349 = vmul.f32 %v1299, %v1329
        %v1350 = vmul.f32 %v1304, %v1329
        %v1351 = vmul.f32 %v1309, %v1329
        %v1352 = vmul.f32 %v1314, %v1329
        %v1353 = vmul.f32 %v1319, %v1329
        %v1354 = vmul.f32 %v1324, %v1329
        %v1355 = vlaneseq
        %v1356 = vshrl.u32 %v1355, 7
        %v1357 = vsub.s32 1, %v1356
        %v1358 = vrot.slane %v707, %v1357
        %v1359 = vmul.f32 %v1204, %v1358
        %v1360 = vmul.f32 %v1209, %v1358
        %v1361 = vmul.f32 %v1214, %v1358
        %v1362 = vmul.f32 %v1219, %v1358
        %v1363 = vmul.f32 %v1224, %v1358
        %v1364 = vmul.f32 %v1229, %v1358
        %v1365 = vmul.f32 %v1234, %v1358
        %v1366 = vmul.f32 %v1239, %v1358
        %v1367 = vmul.f32 %v1244, %v1358
        %v1368 = vmul.f32 %v1249, %v1358
        %v1369 = vmul.f32 %v1254, %v1358
        %v1370 = vmul.f32 %v1259, %v1358
        %v1371 = vmul.f32 %v1264, %v1358
        %v1372 = vmul.f32 %v1269, %v1358
        %v1373 = vmul.f32 %v1274, %v1358
        %v1374 = vmul.f32 %v1279, %v1358
        %v1375 = vmul.f32 %v1284, %v1358
        %v1376 = vmul.f32 %v1289, %v1358
        %v1377 = vmul.f32 %v1294, %v1358
        %v1378 = vmul.f32 %v1299, %v1358
        %v1379 = vmul.f32 %v1304, %v1358
        %v1380 = vmul.f32 %v1309, %v1358
        %v1381 = vmul.f32 %v1314, %v1358
        %v1382 = vmul.f32 %v1319, %v1358
        %v1383 = vmul.f32 %v1324, %v1358
        %vm1409 = vcmask 1046528
        %v1410 = vrot.slane %v1359, 1
        %v1411 = vrot.slane %v1360, 1
        %v1412 = vsel %vm1409, %v1410, %v1411
        %v1413 = vrot.slane %v1361, 1
        %v1414 = vsel %vm1409, %v1411, %v1413
        %v1415 = vrot.slane %v1362, 1
        %v1416 = vsel %vm1409, %v1413, %v1415
        %v1417 = vrot.slane %v1363, 1
        %v1418 = vsel %vm1409, %v1415, %v1417
        %v1419 = vrot.slane %v1364, 1
        %v1420 = vsel %vm1409, %v1417, %v1419
        %v1421 = vrot.slane %v1365, 1
        %v1422 = vsel %vm1409, %v1419, %v1421
        %v1423 = vrot.slane %v1366, 1
        %v1424 = vsel %vm1409, %v1421, %v1423
        %v1425 = vrot.slane %v1367, 1
        %v1426 = vsel %vm1409, %v1423, %v1425
        %v1427 = vrot.slane %v1368, 1
        %v1428 = vsel %vm1409, %v1425, %v1427
        %v1429 = vrot.slane %v1369, 1
        %v1430 = vsel %vm1409, %v1427, %v1429
        %v1431 = vrot.slane %v1370, 1
        %v1432 = vsel %vm1409, %v1429, %v1431
        %v1433 = vrot.slane %v1371, 1
        %v1434 = vsel %vm1409, %v1431, %v1433
        %v1435 = vrot.slane %v1372, 1
        %v1436 = vsel %vm1409, %v1433, %v1435
        %v1437 = vrot.slane %v1373, 1
        %v1438 = vsel %vm1409, %v1435, %v1437
        %v1439 = vrot.slane %v1374, 1
        %v1440 = vsel %vm1409, %v1437, %v1439
        %v1441 = vrot.slane %v1375, 1
        %v1442 = vsel %vm1409, %v1439, %v1441
        %v1443 = vrot.slane %v1376, 1
        %v1444 = vsel %vm1409, %v1441, %v1443
        %v1445 = vrot.slane %v1377, 1
        %v1446 = vsel %vm1409, %v1443, %v1445
        %v1447 = vrot.slane %v1378, 1
        %v1448 = vsel %vm1409, %v1445, %v1447
        %v1449 = vrot.slane %v1379, 1
        %v1450 = vsel %vm1409, %v1447, %v1449
        %v1451 = vrot.slane %v1380, 1
        %v1452 = vsel %vm1409, %v1449, %v1451
        %v1453 = vrot.slane %v1381, 1
        %v1454 = vsel %vm1409, %v1451, %v1453
        %v1455 = vrot.slane %v1382, 1
        %v1456 = vsel %vm1409, %v1453, %v1455
        %v1457 = vrot.slane %v1383, 1
        %v1458 = vsel %vm1409, %v1455, %v1457
        %v1484 = vadd.f32 %v1330, %v1412
        %v1485 = vadd.f32 %v1331, %v1414
        %v1486 = vadd.f32 %v1332, %v1416
        %v1487 = vadd.f32 %v1333, %v1418
        %v1488 = vadd.f32 %v1334, %v1420
        %v1489 = vadd.f32 %v1335, %v1422
        %v1490 = vadd.f32 %v1336, %v1424
        %v1491 = vadd.f32 %v1337, %v1426
        %v1492 = vadd.f32 %v1338, %v1428
        %v1493 = vadd.f32 %v1339, %v1430
        %v1494 = vadd.f32 %v1340, %v1432
        %v1495 = vadd.f32 %v1341, %v1434
        %v1496 = vadd.f32 %v1342, %v1436
        %v1497 = vadd.f32 %v1343, %v1438
        %v1498 = vadd.f32 %v1344, %v1440
        %v1499 = vadd.f32 %v1345, %v1442
        %v1500 = vadd.f32 %v1346, %v1444
        %v1501 = vadd.f32 %v1347, %v1446
        %v1502 = vadd.f32 %v1348, %v1448
        %v1503 = vadd.f32 %v1349, %v1450
        %v1504 = vadd.f32 %v1350, %v1452
        %v1505 = vadd.f32 %v1351, %v1454
        %v1506 = vadd.f32 %v1352, %v1456
        %v1507 = vadd.f32 %v1353, %v1458
        %v1508 = vadd.f32 %v1354, %v1457
        %v1509 = vlaneseq
        %v1510 = vshrl.u32 %v1509, 7
        %v1511 = vsub.s32 2, %v1510
        %v1512 = vrot.slane %v707, %v1511
        %v1513 = vmul.f32 %v1204, %v1512
        %v1514 = vmul.f32 %v1209, %v1512
        %v1515 = vmul.f32 %v1214, %v1512
        %v1516 = vmul.f32 %v1219, %v1512
        %v1517 = vmul.f32 %v1224, %v1512
        %v1518 = vmul.f32 %v1229, %v1512
        %v1519 = vmul.f32 %v1234, %v1512
        %v1520 = vmul.f32 %v1239, %v1512
        %v1521 = vmul.f32 %v1244, %v1512
        %v1522 = vmul.f32 %v1249, %v1512
        %v1523 = vmul.f32 %v1254, %v1512
        %v1524 = vmul.f32 %v1259, %v1512
        %v1525 = vmul.f32 %v1264, %v1512
        %v1526 = vmul.f32 %v1269, %v1512
        %v1527 = vmul.f32 %v1274, %v1512
        %v1528 = vmul.f32 %v1279, %v1512
        %v1529 = vmul.f32 %v1284, %v1512
        %v1530 = vmul.f32 %v1289, %v1512
        %v1531 = vmul.f32 %v1294, %v1512
        %v1532 = vmul.f32 %v1299, %v1512
        %v1533 = vmul.f32 %v1304, %v1512
        %v1534 = vmul.f32 %v1309, %v1512
        %v1535 = vmul.f32 %v1314, %v1512
        %v1536 = vmul.f32 %v1319, %v1512
        %v1537 = vmul.f32 %v1324, %v1512
        %vm1563 = vcmask 1045504
        %v1564 = vrot.slane %v1513, 2
        %v1565 = vrot.slane %v1514, 2
        %v1566 = vsel %vm1563, %v1564, %v1565
        %v1567 = vrot.slane %v1515, 2
        %v1568 = vsel %vm1563, %v1565, %v1567
        %v1569 = vrot.slane %v1516, 2
        %v1570 = vsel %vm1563, %v1567, %v1569
        %v1571 = vrot.slane %v1517, 2
        %v1572 = vsel %vm1563, %v1569, %v1571
        %v1573 = vrot.slane %v1518, 2
        %v1574 = vsel %vm1563, %v1571, %v1573
        %v1575 = vrot.slane %v1519, 2
        %v1576 = vsel %vm1563, %v1573, %v1575
        %v1577 = vrot.slane %v1520, 2
        %v1578 = vsel %vm1563, %v1575, %v1577
        %v1579 = vrot.slane %v1521, 2
        %v1580 = vsel %vm1563, %v1577, %v1579
        %v1581 = vrot.slane %v1522, 2
        %v1582 = vsel %vm1563, %v1579, %v1581
        %v1583 = vrot.slane %v1523, 2
        %v1584 = vsel %vm1563, %v1581, %v1583
        %v1585 = vrot.slane %v1524, 2
        %v1586 = vsel %vm1563, %v1583, %v1585
        %v1587 = vrot.slane %v1525, 2
        %v1588 = vsel %vm1563, %v1585, %v1587
        %v1589 = vrot.slane %v1526, 2
        %v1590 = vsel %vm1563, %v1587, %v1589
        %v1591 = vrot.slane %v1527, 2
        %v1592 = vsel %vm1563, %v1589, %v1591
        %v1593 = vrot.slane %v1528, 2
        %v1594 = vsel %vm1563, %v1591, %v1593
        %v1595 = vrot.slane %v1529, 2
        %v1596 = vsel %vm1563, %v1593, %v1595
        %v1597 = vrot.slane %v1530, 2
        %v1598 = vsel %vm1563, %v1595, %v1597
        %v1599 = vrot.slane %v1531, 2
        %v1600 = vsel %vm1563, %v1597, %v1599
        %v1601 = vrot.slane %v1532, 2
        %v1602 = vsel %vm1563, %v1599, %v1601
        %v1603 = vrot.slane %v1533, 2
        %v1604 = vsel %vm1563, %v1601, %v1603
        %v1605 = vrot.slane %v1534, 2
        %v1606 = vsel %vm1563, %v1603, %v1605
        %v1607 = vrot.slane %v1535, 2
        %v1608 = vsel %vm1563, %v1605, %v1607
        %v1609 = vrot.slane %v1536, 2
        %v1610 = vsel %vm1563, %v1607, %v1609
        %v1611 = vrot.slane %v1537, 2
        %v1612 = vsel %vm1563, %v1609, %v1611
        %v1638 = vadd.f32 %v1484, %v1566
        %v1639 = vadd.f32 %v1485, %v1568
        %v1640 = vadd.f32 %v1486, %v1570
        %v1641 = vadd.f32 %v1487, %v1572
        %v1642 = vadd.f32 %v1488, %v1574
        %v1643 = vadd.f32 %v1489, %v1576
        %v1644 = vadd.f32 %v1490, %v1578
        %v1645 = vadd.f32 %v1491, %v1580
        %v1646 = vadd.f32 %v1492, %v1582
        %v1647 = vadd.f32 %v1493, %v1584
        %v1648 = vadd.f32 %v1494, %v1586
        %v1649 = vadd.f32 %v1495, %v1588
        %v1650 = vadd.f32 %v1496, %v1590
        %v1651 = vadd.f32 %v1497, %v1592
        %v1652 = vadd.f32 %v1498, %v1594
        %v1653 = vadd.f32 %v1499, %v1596
        %v1654 = vadd.f32 %v1500, %v1598
        %v1655 = vadd.f32 %v1501, %v1600
        %v1656 = vadd.f32 %v1502, %v1602
        %v1657 = vadd.f32 %v1503, %v1604
        %v1658 = vadd.f32 %v1504, %v1606
        %v1659 = vadd.f32 %v1505, %v1608
        %v1660 = vadd.f32 %v1506, %v1610
        %v1661 = vadd.f32 %v1507, %v1612
        %v1662 = vadd.f32 %v1508, %v1611
        %v1664 = vlaneseq
        %v1665 = vshrl.u32 %v1664, 7
        %v1666 = vsub.s32 0, %v1665
        %v1667 = vrot.slane %v708, %v1666
        %v1669 = vadd.f32 %v1638, %v1667
        %v1670 = vadd.f32 %v1639, %v1667
        %v1671 = vadd.f32 %v1640, %v1667
        %v1672 = vadd.f32 %v1641, %v1667
        %v1673 = vadd.f32 %v1642, %v1667
        %v1674 = vadd.f32 %v1643, %v1667
        %v1675 = vadd.f32 %v1644, %v1667
        %v1676 = vadd.f32 %v1645, %v1667
        %v1677 = vadd.f32 %v1646, %v1667
        %v1678 = vadd.f32 %v1647, %v1667
        %v1679 = vadd.f32 %v1648, %v1667
        %v1680 = vadd.f32 %v1649, %v1667
        %v1681 = vadd.f32 %v1650, %v1667
        %v1682 = vadd.f32 %v1651, %v1667
        %v1683 = vadd.f32 %v1652, %v1667
        %v1684 = vadd.f32 %v1653, %v1667
        %v1685 = vadd.f32 %v1654, %v1667
        %v1686 = vadd.f32 %v1655, %v1667
        %v1687 = vadd.f32 %v1656, %v1667
        %v1688 = vadd.f32 %v1657, %v1667
        %v1689 = vadd.f32 %v1658, %v1667
        %v1690 = vadd.f32 %v1659, %v1667
        %v1691 = vadd.f32 %v1660, %v1667
        %v1692 = vadd.f32 %v1661, %v1667
        %v1693 = vadd.f32 %v1662, %v1667
        %v1694 = vmax.f32 %v1669, 0.0
        %v1695 = vmax.f32 %v1670, 0.0
        %v1696 = vmax.f32 %v1671, 0.0
        %v1697 = vmax.f32 %v1672, 0.0
        %v1698 = vmax.f32 %v1673, 0.0
        %v1699 = vmax.f32 %v1674, 0.0
        %v1700 = vmax.f32 %v1675, 0.0
        %v1701 = vmax.f32 %v1676, 0.0
        %v1702 = vmax.f32 %v1677, 0.0
        %v1703 = vmax.f32 %v1678, 0.0
        %v1704 = vmax.f32 %v1679, 0.0
        %v1705 = vmax.f32 %v1680, 0.0
        %v1706 = vmax.f32 %v1681, 0.0
        %v1707 = vmax.f32 %v1682, 0.0
        %v1708 = vmax.f32 %v1683, 0.0
        %v1709 = vmax.f32 %v1684, 0.0
        %v1710 = vmax.f32 %v1685, 0.0
        %v1711 = vmax.f32 %v1686, 0.0
        %v1712 = vmax.f32 %v1687, 0.0
        %v1713 = vmax.f32 %v1688, 0.0
        %v1714 = vmax.f32 %v1689, 0.0
        %v1715 = vmax.f32 %v1690, 0.0
        %v1716 = vmax.f32 %v1691, 0.0
        %v1717 = vmax.f32 %v1692, 0.0
        %v1718 = vmax.f32 %v1693, 0.0
        %v1744 = vcombine.high %v1694, %v1694
        %v1746 = vunpack.c.l.s4 1983009808
        %v1747 = vunpack.c.0.s8 %v1746
        %v1748 = vlaneseq
        %v1749 = vshrl.u32 %v1748, 7
        %v1750 = vsub.s32 %v1747, %v1749
        %v1751 = vrot.slane %v1694, %v1750
        %v1753 = vunpack.c.l.s4 1983009808
        %v1754 = vunpack.c.0.s8 %v1753
        %v1755 = vlaneseq
        %v1756 = vshrl.u32 %v1755, 7
        %v1757 = vsub.s32 %v1754, %v1756
        %v1758 = vrot.slane %v1744, %v1757
        %v1759 = vcombine.high %v1751, %v1751
        %v1760 = vcombine.high %v1758, %v1758
        %v1761 = vcombine.high %v1695, %v1695
        %v1763 = vunpack.c.l.s4 1983009808
        %v1764 = vunpack.c.0.s8 %v1763
        %v1765 = vlaneseq
        %v1766 = vshrl.u32 %v1765, 7
        %v1767 = vsub.s32 %v1764, %v1766
        %v1768 = vrot.slane %v1695, %v1767
        %v1770 = vunpack.c.l.s4 1983009808
        %v1771 = vunpack.c.0.s8 %v1770
        %v1772 = vlaneseq
        %v1773 = vshrl.u32 %v1772, 7
        %v1774 = vsub.s32 %v1771, %v1773
        %v1775 = vrot.slane %v1761, %v1774
        %v1776 = vcombine.high %v1768, %v1768
        %v1777 = vcombine.high %v1775, %v1775
        %v1778 = vcombine.high %v1696, %v1696
        %v1780 = vunpack.c.l.s4 1983009808
        %v1781 = vunpack.c.0.s8 %v1780
        %v1782 = vlaneseq
        %v1783 = vshrl.u32 %v1782, 7
        %v1784 = vsub.s32 %v1781, %v1783
        %v1785 = vrot.slane %v1696, %v1784
        %v1787 = vunpack.c.l.s4 1983009808
        %v1788 = vunpack.c.0.s8 %v1787
        %v1789 = vlaneseq
        %v1790 = vshrl.u32 %v1789, 7
        %v1791 = vsub.s32 %v1788, %v1790
        %v1792 = vrot.slane %v1778, %v1791
        %v1793 = vcombine.high %v1785, %v1785
        %v1794 = vcombine.high %v1792, %v1792
        %v1795 = vcombine.high %v1697, %v1697
        %v1797 = vunpack.c.l.s4 1983009808
        %v1798 = vunpack.c.0.s8 %v1797
        %v1799 = vlaneseq
        %v1800 = vshrl.u32 %v1799, 7
        %v1801 = vsub.s32 %v1798, %v1800
        %v1802 = vrot.slane %v1697, %v1801
        %v1804 = vunpack.c.l.s4 1983009808
        %v1805 = vunpack.c.0.s8 %v1804
        %v1806 = vlaneseq
        %v1807 = vshrl.u32 %v1806, 7
        %v1808 = vsub.s32 %v1805, %v1807
        %v1809 = vrot.slane %v1795, %v1808
        %v1810 = vcombine.high %v1802, %v1802
        %v1811 = vcombine.high %v1809, %v1809
        %v1812 = vcombine.high %v1698, %v1698
        %v1814 = vunpack.c.l.s4 1983009808
        %v1815 = vunpack.c.0.s8 %v1814
        %v1816 = vlaneseq
        %v1817 = vshrl.u32 %v1816, 7
        %v1818 = vsub.s32 %v1815, %v1817
        %v1819 = vrot.slane %v1698, %v1818
        %v1821 = vunpack.c.l.s4 1983009808
        %v1822 = vunpack.c.0.s8 %v1821
        %v1823 = vlaneseq
        %v1824 = vshrl.u32 %v1823, 7
        %v1825 = vsub.s32 %v1822, %v1824
        %v1826 = vrot.slane %v1812, %v1825
        %v1827 = vcombine.high %v1819, %v1819
        %v1828 = vcombine.high %v1826, %v1826
        %v1829 = vcombine.high %v1699, %v1699
        %v1831 = vunpack.c.l.s4 1983009808
        %v1832 = vunpack.c.0.s8 %v1831
        %v1833 = vlaneseq
        %v1834 = vshrl.u32 %v1833, 7
        %v1835 = vsub.s32 %v1832, %v1834
        %v1836 = vrot.slane %v1699, %v1835
        %v1838 = vunpack.c.l.s4 1983009808
        %v1839 = vunpack.c.0.s8 %v1838
        %v1840 = vlaneseq
        %v1841 = vshrl.u32 %v1840, 7
        %v1842 = vsub.s32 %v1839, %v1841
        %v1843 = vrot.slane %v1829, %v1842
        %v1844 = vcombine.high %v1836, %v1836
        %v1845 = vcombine.high %v1843, %v1843
        %v1846 = vcombine.high %v1700, %v1700
        %v1848 = vunpack.c.l.s4 1983009808
        %v1849 = vunpack.c.0.s8 %v1848
        %v1850 = vlaneseq
        %v1851 = vshrl.u32 %v1850, 7
        %v1852 = vsub.s32 %v1849, %v1851
        %v1853 = vrot.slane %v1700, %v1852
        %v1855 = vunpack.c.l.s4 1983009808
        %v1856 = vunpack.c.0.s8 %v1855
        %v1857 = vlaneseq
        %v1858 = vshrl.u32 %v1857, 7
        %v1859 = vsub.s32 %v1856, %v1858
        %v1860 = vrot.slane %v1846, %v1859
        %v1861 = vcombine.high %v1853, %v1853
        %v1862 = vcombine.high %v1860, %v1860
        %v1863 = vcombine.high %v1701, %v1701
        %v1865 = vunpack.c.l.s4 1983009808
        %v1866 = vunpack.c.0.s8 %v1865
        %v1867 = vlaneseq
        %v1868 = vshrl.u32 %v1867, 7
        %v1869 = vsub.s32 %v1866, %v1868
        %v1870 = vrot.slane %v1701, %v1869
        %v1872 = vunpack.c.l.s4 1983009808
        %v1873 = vunpack.c.0.s8 %v1872
        %v1874 = vlaneseq
        %v1875 = vshrl.u32 %v1874, 7
        %v1876 = vsub.s32 %v1873, %v1875
        %v1877 = vrot.slane %v1863, %v1876
        %v1878 = vcombine.high %v1870, %v1870
        %v1879 = vcombine.high %v1877, %v1877
        %v1880 = vcombine.high %v1702, %v1702
        %v1882 = vunpack.c.l.s4 1983009808
        %v1883 = vunpack.c.0.s8 %v1882
        %v1884 = vlaneseq
        %v1885 = vshrl.u32 %v1884, 7
        %v1886 = vsub.s32 %v1883, %v1885
        %v1887 = vrot.slane %v1702, %v1886
        %v1889 = vunpack.c.l.s4 1983009808
        %v1890 = vunpack.c.0.s8 %v1889
        %v1891 = vlaneseq
        %v1892 = vshrl.u32 %v1891, 7
        %v1893 = vsub.s32 %v1890, %v1892
        %v1894 = vrot.slane %v1880, %v1893
        %v1895 = vcombine.high %v1887, %v1887
        %v1896 = vcombine.high %v1894, %v1894
        %v1897 = vcombine.high %v1703, %v1703
        %v1899 = vunpack.c.l.s4 1983009808
        %v1900 = vunpack.c.0.s8 %v1899
        %v1901 = vlaneseq
        %v1902 = vshrl.u32 %v1901, 7
        %v1903 = vsub.s32 %v1900, %v1902
        %v1904 = vrot.slane %v1703, %v1903
        %v1906 = vunpack.c.l.s4 1983009808
        %v1907 = vunpack.c.0.s8 %v1906
        %v1908 = vlaneseq
        %v1909 = vshrl.u32 %v1908, 7
        %v1910 = vsub.s32 %v1907, %v1909
        %v1911 = vrot.slane %v1897, %v1910
        %v1912 = vcombine.high %v1904, %v1904
        %v1913 = vcombine.high %v1911, %v1911
        %v1914 = vcombine.high %v1704, %v1704
        %v1916 = vunpack.c.l.s4 1983009808
        %v1917 = vunpack.c.0.s8 %v1916
        %v1918 = vlaneseq
        %v1919 = vshrl.u32 %v1918, 7
        %v1920 = vsub.s32 %v1917, %v1919
        %v1921 = vrot.slane %v1704, %v1920
        %v1923 = vunpack.c.l.s4 1983009808
        %v1924 = vunpack.c.0.s8 %v1923
        %v1925 = vlaneseq
        %v1926 = vshrl.u32 %v1925, 7
        %v1927 = vsub.s32 %v1924, %v1926
        %v1928 = vrot.slane %v1914, %v1927
        %v1929 = vcombine.high %v1921, %v1921
        %v1930 = vcombine.high %v1928, %v1928
        %v1931 = vcombine.high %v1705, %v1705
        %v1933 = vunpack.c.l.s4 1983009808
        %v1934 = vunpack.c.0.s8 %v1933
        %v1935 = vlaneseq
        %v1936 = vshrl.u32 %v1935, 7
        %v1937 = vsub.s32 %v1934, %v1936
        %v1938 = vrot.slane %v1705, %v1937
        %v1940 = vunpack.c.l.s4 1983009808
        %v1941 = vunpack.c.0.s8 %v1940
        %v1942 = vlaneseq
        %v1943 = vshrl.u32 %v1942, 7
        %v1944 = vsub.s32 %v1941, %v1943
        %v1945 = vrot.slane %v1931, %v1944
        %v1946 = vcombine.high %v1938, %v1938
        %v1947 = vcombine.high %v1945, %v1945
        %v1948 = vcombine.high %v1706, %v1706
        %v1950 = vunpack.c.l.s4 1983009808
        %v1951 = vunpack.c.0.s8 %v1950
        %v1952 = vlaneseq
        %v1953 = vshrl.u32 %v1952, 7
        %v1954 = vsub.s32 %v1951, %v1953
        %v1955 = vrot.slane %v1706, %v1954
        %v1957 = vunpack.c.l.s4 1983009808
        %v1958 = vunpack.c.0.s8 %v1957
        %v1959 = vlaneseq
        %v1960 = vshrl.u32 %v1959, 7
        %v1961 = vsub.s32 %v1958, %v1960
        %v1962 = vrot.slane %v1948, %v1961
        %v1963 = vcombine.high %v1955, %v1955
        %v1964 = vcombine.high %v1962, %v1962
        %v1965 = vcombine.high %v1707, %v1707
        %v1967 = vunpack.c.l.s4 1983009808
        %v1968 = vunpack.c.0.s8 %v1967
        %v1969 = vlaneseq
        %v1970 = vshrl.u32 %v1969, 7
        %v1971 = vsub.s32 %v1968, %v1970
        %v1972 = vrot.slane %v1707, %v1971
        %v1974 = vunpack.c.l.s4 1983009808
        %v1975 = vunpack.c.0.s8 %v1974
        %v1976 = vlaneseq
        %v1977 = vshrl.u32 %v1976, 7
        %v1978 = vsub.s32 %v1975, %v1977
        %v1979 = vrot.slane %v1965, %v1978
        %v1980 = vcombine.high %v1972, %v1972
        %v1981 = vcombine.high %v1979, %v1979
        %v1982 = vcombine.high %v1708, %v1708
        %v1984 = vunpack.c.l.s4 1983009808
        %v1985 = vunpack.c.0.s8 %v1984
        %v1986 = vlaneseq
        %v1987 = vshrl.u32 %v1986, 7
        %v1988 = vsub.s32 %v1985, %v1987
        %v1989 = vrot.slane %v1708, %v1988
        %v1991 = vunpack.c.l.s4 1983009808
        %v1992 = vunpack.c.0.s8 %v1991
        %v1993 = vlaneseq
        %v1994 = vshrl.u32 %v1993, 7
        %v1995 = vsub.s32 %v1992, %v1994
        %v1996 = vrot.slane %v1982, %v1995
        %v1997 = vcombine.high %v1989, %v1989
        %v1998 = vcombine.high %v1996, %v1996
        %v1999 = vcombine.high %v1709, %v1709
        %v2001 = vunpack.c.l.s4 1983009808
        %v2002 = vunpack.c.0.s8 %v2001
        %v2003 = vlaneseq
        %v2004 = vshrl.u32 %v2003, 7
        %v2005 = vsub.s32 %v2002, %v2004
        %v2006 = vrot.slane %v1709, %v2005
        %v2008 = vunpack.c.l.s4 1983009808
        %v2009 = vunpack.c.0.s8 %v2008
        %v2010 = vlaneseq
        %v2011 = vshrl.u32 %v2010, 7
        %v2012 = vsub.s32 %v2009, %v2011
        %v2013 = vrot.slane %v1999, %v2012
        %v2014 = vcombine.high %v2006, %v2006
        %v2015 = vcombine.high %v2013, %v2013
        %v2016 = vcombine.high %v1710, %v1710
        %v2018 = vunpack.c.l.s4 1983009808
        %v2019 = vunpack.c.0.s8 %v2018
        %v2020 = vlaneseq
        %v2021 = vshrl.u32 %v2020, 7
        %v2022 = vsub.s32 %v2019, %v2021
        %v2023 = vrot.slane %v1710, %v2022
        %v2025 = vunpack.c.l.s4 1983009808
        %v2026 = vunpack.c.0.s8 %v2025
        %v2027 = vlaneseq
        %v2028 = vshrl.u32 %v2027, 7
        %v2029 = vsub.s32 %v2026, %v2028
        %v2030 = vrot.slane %v2016, %v2029
        %v2031 = vcombine.high %v2023, %v2023
        %v2032 = vcombine.high %v2030, %v2030
        %v2033 = vcombine.high %v1711, %v1711
        %v2035 = vunpack.c.l.s4 1983009808
        %v2036 = vunpack.c.0.s8 %v2035
        %v2037 = vlaneseq
        %v2038 = vshrl.u32 %v2037, 7
        %v2039 = vsub.s32 %v2036, %v2038
        %v2040 = vrot.slane %v1711, %v2039
        %v2042 = vunpack.c.l.s4 1983009808
        %v2043 = vunpack.c.0.s8 %v2042
        %v2044 = vlaneseq
        %v2045 = vshrl.u32 %v2044, 7
        %v2046 = vsub.s32 %v2043, %v2045
        %v2047 = vrot.slane %v2033, %v2046
        %v2048 = vcombine.high %v2040, %v2040
        %v2049 = vcombine.high %v2047, %v2047
        %v2050 = vcombine.high %v1712, %v1712
        %v2052 = vunpack.c.l.s4 1983009808
        %v2053 = vunpack.c.0.s8 %v2052
        %v2054 = vlaneseq
        %v2055 = vshrl.u32 %v2054, 7
        %v2056 = vsub.s32 %v2053, %v2055
        %v2057 = vrot.slane %v1712, %v2056
        %v2059 = vunpack.c.l.s4 1983009808
        %v2060 = vunpack.c.0.s8 %v2059
        %v2061 = vlaneseq
        %v2062 = vshrl.u32 %v2061, 7
        %v2063 = vsub.s32 %v2060, %v2062
        %v2064 = vrot.slane %v2050, %v2063
        %v2065 = vcombine.high %v2057, %v2057
        %v2066 = vcombine.high %v2064, %v2064
        %v2067 = vcombine.high %v1713, %v1713
        %v2069 = vunpack.c.l.s4 1983009808
        %v2070 = vunpack.c.0.s8 %v2069
        %v2071 = vlaneseq
        %v2072 = vshrl.u32 %v2071, 7
        %v2073 = vsub.s32 %v2070, %v2072
        %v2074 = vrot.slane %v1713, %v2073
        %v2076 = vunpack.c.l.s4 1983009808
        %v2077 = vunpack.c.0.s8 %v2076
        %v2078 = vlaneseq
        %v2079 = vshrl.u32 %v2078, 7
        %v2080 = vsub.s32 %v2077, %v2079
        %v2081 = vrot.slane %v2067, %v2080
        %v2082 = vcombine.high %v2074, %v2074
        %v2083 = vcombine.high %v2081, %v2081
        %v2084 = vcombine.high %v1714, %v1714
        %v2086 = vunpack.c.l.s4 1983009808
        %v2087 = vunpack.c.0.s8 %v2086
        %v2088 = vlaneseq
        %v2089 = vshrl.u32 %v2088, 7
        %v2090 = vsub.s32 %v2087, %v2089
        %v2091 = vrot.slane %v1714, %v2090
        %v2093 = vunpack.c.l.s4 1983009808
        %v2094 = vunpack.c.0.s8 %v2093
        %v2095 = vlaneseq
        %v2096 = vshrl.u32 %v2095, 7
        %v2097 = vsub.s32 %v2094, %v2096
        %v2098 = vrot.slane %v2084, %v2097
        %v2099 = vcombine.high %v2091, %v2091
        %v2100 = vcombine.high %v2098, %v2098
        %v2101 = vcombine.high %v1715, %v1715
        %v2103 = vunpack.c.l.s4 1983009808
        %v2104 = vunpack.c.0.s8 %v2103
        %v2105 = vlaneseq
        %v2106 = vshrl.u32 %v2105, 7
        %v2107 = vsub.s32 %v2104, %v2106
        %v2108 = vrot.slane %v1715, %v2107
        %v2110 = vunpack.c.l.s4 1983009808
        %v2111 = vunpack.c.0.s8 %v2110
        %v2112 = vlaneseq
        %v2113 = vshrl.u32 %v2112, 7
        %v2114 = vsub.s32 %v2111, %v2113
        %v2115 = vrot.slane %v2101, %v2114
        %v2116 = vcombine.high %v2108, %v2108
        %v2117 = vcombine.high %v2115, %v2115
        %v2118 = vcombine.high %v1716, %v1716
        %v2120 = vunpack.c.l.s4 1983009808
        %v2121 = vunpack.c.0.s8 %v2120
        %v2122 = vlaneseq
        %v2123 = vshrl.u32 %v2122, 7
        %v2124 = vsub.s32 %v2121, %v2123
        %v2125 = vrot.slane %v1716, %v2124
        %v2127 = vunpack.c.l.s4 1983009808
        %v2128 = vunpack.c.0.s8 %v2127
        %v2129 = vlaneseq
        %v2130 = vshrl.u32 %v2129, 7
        %v2131 = vsub.s32 %v2128, %v2130
        %v2132 = vrot.slane %v2118, %v2131
        %v2133 = vcombine.high %v2125, %v2125
        %v2134 = vcombine.high %v2132, %v2132
        %v2135 = vcombine.high %v1717, %v1717
        %v2137 = vunpack.c.l.s4 1983009808
        %v2138 = vunpack.c.0.s8 %v2137
        %v2139 = vlaneseq
        %v2140 = vshrl.u32 %v2139, 7
        %v2141 = vsub.s32 %v2138, %v2140
        %v2142 = vrot.slane %v1717, %v2141
        %v2144 = vunpack.c.l.s4 1983009808
        %v2145 = vunpack.c.0.s8 %v2144
        %v2146 = vlaneseq
        %v2147 = vshrl.u32 %v2146, 7
        %v2148 = vsub.s32 %v2145, %v2147
        %v2149 = vrot.slane %v2135, %v2148
        %v2150 = vcombine.high %v2142, %v2142
        %v2151 = vcombine.high %v2149, %v2149
        %v2152 = vcombine.high %v1718, %v1718
        %v2154 = vunpack.c.l.s4 1983009808
        %v2155 = vunpack.c.0.s8 %v2154
        %v2156 = vlaneseq
        %v2157 = vshrl.u32 %v2156, 7
        %v2158 = vsub.s32 %v2155, %v2157
        %v2159 = vrot.slane %v1718, %v2158
        %v2161 = vunpack.c.l.s4 1983009808
        %v2162 = vunpack.c.0.s8 %v2161
        %v2163 = vlaneseq
        %v2164 = vshrl.u32 %v2163, 7
        %v2165 = vsub.s32 %v2162, %v2164
        %v2166 = vrot.slane %v2152, %v2165
        %v2167 = vcombine.high %v2159, %v2159
        %vm2267 = vcmask 254976
        %v2268 = vsel %vm2267, %v1751, -inf
        %v2269 = vrot.slane %v2268, 4
        %v2270 = vmax.f32 %v2268, %v2269
        %v2271 = vrot.slane %v2270, 2
        %v2272 = vmax.f32 %v2270, %v2271
        %v2273 = vrot.slane %v2272, 1
        %v2274 = vmax.f32 %v2272, %v2273
        %v2275 = vsel %vm2267, %v1759, -inf
        %v2276 = vrot.slane %v2275, 4
        %v2277 = vmax.f32 %v2275, %v2276
        %v2278 = vrot.slane %v2277, 2
        %v2279 = vmax.f32 %v2277, %v2278
        %v2280 = vrot.slane %v2279, 1
        %v2281 = vmax.f32 %v2279, %v2280
        %v2282 = vsel %vm2267, %v1758, -inf
        %v2283 = vrot.slane %v2282, 4
        %v2284 = vmax.f32 %v2282, %v2283
        %v2285 = vrot.slane %v2284, 2
        %v2286 = vmax.f32 %v2284, %v2285
        %v2287 = vrot.slane %v2286, 1
        %v2288 = vmax.f32 %v2286, %v2287
        %v2289 = vsel %vm2267, %v1760, -inf
        %v2290 = vrot.slane %v2289, 4
        %v2291 = vmax.f32 %v2289, %v2290
        %v2292 = vrot.slane %v2291, 2
        %v2293 = vmax.f32 %v2291, %v2292
        %v2294 = vrot.slane %v2293, 1
        %v2295 = vmax.f32 %v2293, %v2294
        %v2296 = vsel %vm2267, %v1768, -inf
        %v2297 = vrot.slane %v2296, 4
        %v2298 = vmax.f32 %v2296, %v2297
        %v2299 = vrot.slane %v2298, 2
        %v2300 = vmax.f32 %v2298, %v2299
        %v2301 = vrot.slane %v2300, 1
        %v2302 = vmax.f32 %v2300, %v2301
        %v2303 = vsel %vm2267, %v1776, -inf
        %v2304 = vrot.slane %v2303, 4
        %v2305 = vmax.f32 %v2303, %v2304
        %v2306 = vrot.slane %v2305, 2
        %v2307 = vmax.f32 %v2305, %v2306
        %v2308 = vrot.slane %v2307, 1
        %v2309 = vmax.f32 %v2307, %v2308
        %v2310 = vsel %vm2267, %v1775, -inf
        %v2311 = vrot.slane %v2310, 4
        %v2312 = vmax.f32 %v2310, %v2311
        %v2313 = vrot.slane %v2312, 2
        %v2314 = vmax.f32 %v2312, %v2313
        %v2315 = vrot.slane %v2314, 1
        %v2316 = vmax.f32 %v2314, %v2315
        %v2317 = vsel %vm2267, %v1777, -inf
        %v2318 = vrot.slane %v2317, 4
        %v2319 = vmax.f32 %v2317, %v2318
        %v2320 = vrot.slane %v2319, 2
        %v2321 = vmax.f32 %v2319, %v2320
        %v2322 = vrot.slane %v2321, 1
        %v2323 = vmax.f32 %v2321, %v2322
        %v2324 = vsel %vm2267, %v1785, -inf
        %v2325 = vrot.slane %v2324, 4
        %v2326 = vmax.f32 %v2324, %v2325
        %v2327 = vrot.slane %v2326, 2
        %v2328 = vmax.f32 %v2326, %v2327
        %v2329 = vrot.slane %v2328, 1
        %v2330 = vmax.f32 %v2328, %v2329
        %v2331 = vsel %vm2267, %v1793, -inf
        %v2332 = vrot.slane %v2331, 4
        %v2333 = vmax.f32 %v2331, %v2332
        %v2334 = vrot.slane %v2333, 2
        %v2335 = vmax.f32 %v2333, %v2334
        %v2336 = vrot.slane %v2335, 1
        %v2337 = vmax.f32 %v2335, %v2336
        %v2338 = vsel %vm2267, %v1792, -inf
        %v2339 = vrot.slane %v2338, 4
        %v2340 = vmax.f32 %v2338, %v2339
        %v2341 = vrot.slane %v2340, 2
        %v2342 = vmax.f32 %v2340, %v2341
        %v2343 = vrot.slane %v2342, 1
        %v2344 = vmax.f32 %v2342, %v2343
        %v2345 = vsel %vm2267, %v1794, -inf
        %v2346 = vrot.slane %v2345, 4
        %v2347 = vmax.f32 %v2345, %v2346
        %v2348 = vrot.slane %v2347, 2
        %v2349 = vmax.f32 %v2347, %v2348
        %v2350 = vrot.slane %v2349, 1
        %v2351 = vmax.f32 %v2349, %v2350
        %v2352 = vsel %vm2267, %v1802, -inf
        %v2353 = vrot.slane %v2352, 4
        %v2354 = vmax.f32 %v2352, %v2353
        %v2355 = vrot.slane %v2354, 2
        %v2356 = vmax.f32 %v2354, %v2355
        %v2357 = vrot.slane %v2356, 1
        %v2358 = vmax.f32 %v2356, %v2357
        %v2359 = vsel %vm2267, %v1810, -inf
        %v2360 = vrot.slane %v2359, 4
        %v2361 = vmax.f32 %v2359, %v2360
        %v2362 = vrot.slane %v2361, 2
        %v2363 = vmax.f32 %v2361, %v2362
        %v2364 = vrot.slane %v2363, 1
        %v2365 = vmax.f32 %v2363, %v2364
        %v2366 = vsel %vm2267, %v1809, -inf
        %v2367 = vrot.slane %v2366, 4
        %v2368 = vmax.f32 %v2366, %v2367
        %v2369 = vrot.slane %v2368, 2
        %v2370 = vmax.f32 %v2368, %v2369
        %v2371 = vrot.slane %v2370, 1
        %v2372 = vmax.f32 %v2370, %v2371
        %v2373 = vsel %vm2267, %v1811, -inf
        %v2374 = vrot.slane %v2373, 4
        %v2375 = vmax.f32 %v2373, %v2374
        %v2376 = vrot.slane %v2375, 2
        %v2377 = vmax.f32 %v2375, %v2376
        %v2378 = vrot.slane %v2377, 1
        %v2379 = vmax.f32 %v2377, %v2378
        %v2380 = vsel %vm2267, %v1819, -inf
        %v2381 = vrot.slane %v2380, 4
        %v2382 = vmax.f32 %v2380, %v2381
        %v2383 = vrot.slane %v2382, 2
        %v2384 = vmax.f32 %v2382, %v2383
        %v2385 = vrot.slane %v2384, 1
        %v2386 = vmax.f32 %v2384, %v2385
        %v2387 = vsel %vm2267, %v1827, -inf
        %v2388 = vrot.slane %v2387, 4
        %v2389 = vmax.f32 %v2387, %v2388
        %v2390 = vrot.slane %v2389, 2
        %v2391 = vmax.f32 %v2389, %v2390
        %v2392 = vrot.slane %v2391, 1
        %v2393 = vmax.f32 %v2391, %v2392
        %v2394 = vsel %vm2267, %v1826, -inf
        %v2395 = vrot.slane %v2394, 4
        %v2396 = vmax.f32 %v2394, %v2395
        %v2397 = vrot.slane %v2396, 2
        %v2398 = vmax.f32 %v2396, %v2397
        %v2399 = vrot.slane %v2398, 1
        %v2400 = vmax.f32 %v2398, %v2399
        %v2401 = vsel %vm2267, %v1828, -inf
        %v2402 = vrot.slane %v2401, 4
        %v2403 = vmax.f32 %v2401, %v2402
        %v2404 = vrot.slane %v2403, 2
        %v2405 = vmax.f32 %v2403, %v2404
        %v2406 = vrot.slane %v2405, 1
        %v2407 = vmax.f32 %v2405, %v2406
        %v2408 = vsel %vm2267, %v1836, -inf
        %v2409 = vrot.slane %v2408, 4
        %v2410 = vmax.f32 %v2408, %v2409
        %v2411 = vrot.slane %v2410, 2
        %v2412 = vmax.f32 %v2410, %v2411
        %v2413 = vrot.slane %v2412, 1
        %v2414 = vmax.f32 %v2412, %v2413
        %v2415 = vsel %vm2267, %v1844, -inf
        %v2416 = vrot.slane %v2415, 4
        %v2417 = vmax.f32 %v2415, %v2416
        %v2418 = vrot.slane %v2417, 2
        %v2419 = vmax.f32 %v2417, %v2418
        %v2420 = vrot.slane %v2419, 1
        %v2421 = vmax.f32 %v2419, %v2420
        %v2422 = vsel %vm2267, %v1843, -inf
        %v2423 = vrot.slane %v2422, 4
        %v2424 = vmax.f32 %v2422, %v2423
        %v2425 = vrot.slane %v2424, 2
        %v2426 = vmax.f32 %v2424, %v2425
        %v2427 = vrot.slane %v2426, 1
        %v2428 = vmax.f32 %v2426, %v2427
        %v2429 = vsel %vm2267, %v1845, -inf
        %v2430 = vrot.slane %v2429, 4
        %v2431 = vmax.f32 %v2429, %v2430
        %v2432 = vrot.slane %v2431, 2
        %v2433 = vmax.f32 %v2431, %v2432
        %v2434 = vrot.slane %v2433, 1
        %v2435 = vmax.f32 %v2433, %v2434
        %v2436 = vsel %vm2267, %v1853, -inf
        %v2437 = vrot.slane %v2436, 4
        %v2438 = vmax.f32 %v2436, %v2437
        %v2439 = vrot.slane %v2438, 2
        %v2440 = vmax.f32 %v2438, %v2439
        %v2441 = vrot.slane %v2440, 1
        %v2442 = vmax.f32 %v2440, %v2441
        %v2443 = vsel %vm2267, %v1861, -inf
        %v2444 = vrot.slane %v2443, 4
        %v2445 = vmax.f32 %v2443, %v2444
        %v2446 = vrot.slane %v2445, 2
        %v2447 = vmax.f32 %v2445, %v2446
        %v2448 = vrot.slane %v2447, 1
        %v2449 = vmax.f32 %v2447, %v2448
        %v2450 = vsel %vm2267, %v1860, -inf
        %v2451 = vrot.slane %v2450, 4
        %v2452 = vmax.f32 %v2450, %v2451
        %v2453 = vrot.slane %v2452, 2
        %v2454 = vmax.f32 %v2452, %v2453
        %v2455 = vrot.slane %v2454, 1
        %v2456 = vmax.f32 %v2454, %v2455
        %v2457 = vsel %vm2267, %v1862, -inf
        %v2458 = vrot.slane %v2457, 4
        %v2459 = vmax.f32 %v2457, %v2458
        %v2460 = vrot.slane %v2459, 2
        %v2461 = vmax.f32 %v2459, %v2460
        %v2462 = vrot.slane %v2461, 1
        %v2463 = vmax.f32 %v2461, %v2462
        %v2464 = vsel %vm2267, %v1870, -inf
        %v2465 = vrot.slane %v2464, 4
        %v2466 = vmax.f32 %v2464, %v2465
        %v2467 = vrot.slane %v2466, 2
        %v2468 = vmax.f32 %v2466, %v2467
        %v2469 = vrot.slane %v2468, 1
        %v2470 = vmax.f32 %v2468, %v2469
        %v2471 = vsel %vm2267, %v1878, -inf
        %v2472 = vrot.slane %v2471, 4
        %v2473 = vmax.f32 %v2471, %v2472
        %v2474 = vrot.slane %v2473, 2
        %v2475 = vmax.f32 %v2473, %v2474
        %v2476 = vrot.slane %v2475, 1
        %v2477 = vmax.f32 %v2475, %v2476
        %v2478 = vsel %vm2267, %v1877, -inf
        %v2479 = vrot.slane %v2478, 4
        %v2480 = vmax.f32 %v2478, %v2479
        %v2481 = vrot.slane %v2480, 2
        %v2482 = vmax.f32 %v2480, %v2481
        %v2483 = vrot.slane %v2482, 1
        %v2484 = vmax.f32 %v2482, %v2483
        %v2485 = vsel %vm2267, %v1879, -inf
        %v2486 = vrot.slane %v2485, 4
        %v2487 = vmax.f32 %v2485, %v2486
        %v2488 = vrot.slane %v2487, 2
        %v2489 = vmax.f32 %v2487, %v2488
        %v2490 = vrot.slane %v2489, 1
        %v2491 = vmax.f32 %v2489, %v2490
        %v2492 = vsel %vm2267, %v1887, -inf
        %v2493 = vrot.slane %v2492, 4
        %v2494 = vmax.f32 %v2492, %v2493
        %v2495 = vrot.slane %v2494, 2
        %v2496 = vmax.f32 %v2494, %v2495
        %v2497 = vrot.slane %v2496, 1
        %v2498 = vmax.f32 %v2496, %v2497
        %v2499 = vsel %vm2267, %v1895, -inf
        %v2500 = vrot.slane %v2499, 4
        %v2501 = vmax.f32 %v2499, %v2500
        %v2502 = vrot.slane %v2501, 2
        %v2503 = vmax.f32 %v2501, %v2502
        %v2504 = vrot.slane %v2503, 1
        %v2505 = vmax.f32 %v2503, %v2504
        %v2506 = vsel %vm2267, %v1894, -inf
        %v2507 = vrot.slane %v2506, 4
        %v2508 = vmax.f32 %v2506, %v2507
        %v2509 = vrot.slane %v2508, 2
        %v2510 = vmax.f32 %v2508, %v2509
        %v2511 = vrot.slane %v2510, 1
        %v2512 = vmax.f32 %v2510, %v2511
        %v2513 = vsel %vm2267, %v1896, -inf
        %v2514 = vrot.slane %v2513, 4
        %v2515 = vmax.f32 %v2513, %v2514
        %v2516 = vrot.slane %v2515, 2
        %v2517 = vmax.f32 %v2515, %v2516
        %v2518 = vrot.slane %v2517, 1
        %v2519 = vmax.f32 %v2517, %v2518
        %v2520 = vsel %vm2267, %v1904, -inf
        %v2521 = vrot.slane %v2520, 4
        %v2522 = vmax.f32 %v2520, %v2521
        %v2523 = vrot.slane %v2522, 2
        %v2524 = vmax.f32 %v2522, %v2523
        %v2525 = vrot.slane %v2524, 1
        %v2526 = vmax.f32 %v2524, %v2525
        %v2527 = vsel %vm2267, %v1912, -inf
        %v2528 = vrot.slane %v2527, 4
        %v2529 = vmax.f32 %v2527, %v2528
        %v2530 = vrot.slane %v2529, 2
        %v2531 = vmax.f32 %v2529, %v2530
        %v2532 = vrot.slane %v2531, 1
        %v2533 = vmax.f32 %v2531, %v2532
        %v2534 = vsel %vm2267, %v1911, -inf
        %v2535 = vrot.slane %v2534, 4
        %v2536 = vmax.f32 %v2534, %v2535
        %v2537 = vrot.slane %v2536, 2
        %v2538 = vmax.f32 %v2536, %v2537
        %v2539 = vrot.slane %v2538, 1
        %v2540 = vmax.f32 %v2538, %v2539
        %v2541 = vsel %vm2267, %v1913, -inf
        %v2542 = vrot.slane %v2541, 4
        %v2543 = vmax.f32 %v2541, %v2542
        %v2544 = vrot.slane %v2543, 2
        %v2545 = vmax.f32 %v2543, %v2544
        %v2546 = vrot.slane %v2545, 1
        %v2547 = vmax.f32 %v2545, %v2546
        %v2548 = vsel %vm2267, %v1921, -inf
        %v2549 = vrot.slane %v2548, 4
        %v2550 = vmax.f32 %v2548, %v2549
        %v2551 = vrot.slane %v2550, 2
        %v2552 = vmax.f32 %v2550, %v2551
        %v2553 = vrot.slane %v2552, 1
        %v2554 = vmax.f32 %v2552, %v2553
        %v2555 = vsel %vm2267, %v1929, -inf
        %v2556 = vrot.slane %v2555, 4
        %v2557 = vmax.f32 %v2555, %v2556
        %v2558 = vrot.slane %v2557, 2
        %v2559 = vmax.f32 %v2557, %v2558
        %v2560 = vrot.slane %v2559, 1
        %v2561 = vmax.f32 %v2559, %v2560
        %v2562 = vsel %vm2267, %v1928, -inf
        %v2563 = vrot.slane %v2562, 4
        %v2564 = vmax.f32 %v2562, %v2563
        %v2565 = vrot.slane %v2564, 2
        %v2566 = vmax.f32 %v2564, %v2565
        %v2567 = vrot.slane %v2566, 1
        %v2568 = vmax.f32 %v2566, %v2567
        %v2569 = vsel %vm2267, %v1930, -inf
        %v2570 = vrot.slane %v2569, 4
        %v2571 = vmax.f32 %v2569, %v2570
        %v2572 = vrot.slane %v2571, 2
        %v2573 = vmax.f32 %v2571, %v2572
        %v2574 = vrot.slane %v2573, 1
        %v2575 = vmax.f32 %v2573, %v2574
        %v2576 = vsel %vm2267, %v1938, -inf
        %v2577 = vrot.slane %v2576, 4
        %v2578 = vmax.f32 %v2576, %v2577
        %v2579 = vrot.slane %v2578, 2
        %v2580 = vmax.f32 %v2578, %v2579
        %v2581 = vrot.slane %v2580, 1
        %v2582 = vmax.f32 %v2580, %v2581
        %v2583 = vsel %vm2267, %v1946, -inf
        %v2584 = vrot.slane %v2583, 4
        %v2585 = vmax.f32 %v2583, %v2584
        %v2586 = vrot.slane %v2585, 2
        %v2587 = vmax.f32 %v2585, %v2586
        %v2588 = vrot.slane %v2587, 1
        %v2589 = vmax.f32 %v2587, %v2588
        %v2590 = vsel %vm2267, %v1945, -inf
        %v2591 = vrot.slane %v2590, 4
        %v2592 = vmax.f32 %v2590, %v2591
        %v2593 = vrot.slane %v2592, 2
        %v2594 = vmax.f32 %v2592, %v2593
        %v2595 = vrot.slane %v2594, 1
        %v2596 = vmax.f32 %v2594, %v2595
        %v2597 = vsel %vm2267, %v1947, -inf
        %v2598 = vrot.slane %v2597, 4
        %v2599 = vmax.f32 %v2597, %v2598
        %v2600 = vrot.slane %v2599, 2
        %v2601 = vmax.f32 %v2599, %v2600
        %v2602 = vrot.slane %v2601, 1
        %v2603 = vmax.f32 %v2601, %v2602
        %v2604 = vsel %vm2267, %v1955, -inf
        %v2605 = vrot.slane %v2604, 4
        %v2606 = vmax.f32 %v2604, %v2605
        %v2607 = vrot.slane %v2606, 2
        %v2608 = vmax.f32 %v2606, %v2607
        %v2609 = vrot.slane %v2608, 1
        %v2610 = vmax.f32 %v2608, %v2609
        %v2611 = vsel %vm2267, %v1963, -inf
        %v2612 = vrot.slane %v2611, 4
        %v2613 = vmax.f32 %v2611, %v2612
        %v2614 = vrot.slane %v2613, 2
        %v2615 = vmax.f32 %v2613, %v2614
        %v2616 = vrot.slane %v2615, 1
        %v2617 = vmax.f32 %v2615, %v2616
        %v2618 = vsel %vm2267, %v1962, -inf
        %v2619 = vrot.slane %v2618, 4
        %v2620 = vmax.f32 %v2618, %v2619
        %v2621 = vrot.slane %v2620, 2
        %v2622 = vmax.f32 %v2620, %v2621
        %v2623 = vrot.slane %v2622, 1
        %v2624 = vmax.f32 %v2622, %v2623
        %v2625 = vsel %vm2267, %v1964, -inf
        %v2626 = vrot.slane %v2625, 4
        %v2627 = vmax.f32 %v2625, %v2626
        %v2628 = vrot.slane %v2627, 2
        %v2629 = vmax.f32 %v2627, %v2628
        %v2630 = vrot.slane %v2629, 1
        %v2631 = vmax.f32 %v2629, %v2630
        %v2632 = vsel %vm2267, %v1972, -inf
        %v2633 = vrot.slane %v2632, 4
        %v2634 = vmax.f32 %v2632, %v2633
        %v2635 = vrot.slane %v2634, 2
        %v2636 = vmax.f32 %v2634, %v2635
        %v2637 = vrot.slane %v2636, 1
        %v2638 = vmax.f32 %v2636, %v2637
        %v2639 = vsel %vm2267, %v1980, -inf
        %v2640 = vrot.slane %v2639, 4
        %v2641 = vmax.f32 %v2639, %v2640
        %v2642 = vrot.slane %v2641, 2
        %v2643 = vmax.f32 %v2641, %v2642
        %v2644 = vrot.slane %v2643, 1
        %v2645 = vmax.f32 %v2643, %v2644
        %v2646 = vsel %vm2267, %v1979, -inf
        %v2647 = vrot.slane %v2646, 4
        %v2648 = vmax.f32 %v2646, %v2647
        %v2649 = vrot.slane %v2648, 2
        %v2650 = vmax.f32 %v2648, %v2649
        %v2651 = vrot.slane %v2650, 1
        %v2652 = vmax.f32 %v2650, %v2651
        %v2653 = vsel %vm2267, %v1981, -inf
        %v2654 = vrot.slane %v2653, 4
        %v2655 = vmax.f32 %v2653, %v2654
        %v2656 = vrot.slane %v2655, 2
        %v2657 = vmax.f32 %v2655, %v2656
        %v2658 = vrot.slane %v2657, 1
        %v2659 = vmax.f32 %v2657, %v2658
        %v2660 = vsel %vm2267, %v1989, -inf
        %v2661 = vrot.slane %v2660, 4
        %v2662 = vmax.f32 %v2660, %v2661
        %v2663 = vrot.slane %v2662, 2
        %v2664 = vmax.f32 %v2662, %v2663
        %v2665 = vrot.slane %v2664, 1
        %v2666 = vmax.f32 %v2664, %v2665
        %v2667 = vsel %vm2267, %v1997, -inf
        %v2668 = vrot.slane %v2667, 4
        %v2669 = vmax.f32 %v2667, %v2668
        %v2670 = vrot.slane %v2669, 2
        %v2671 = vmax.f32 %v2669, %v2670
        %v2672 = vrot.slane %v2671, 1
        %v2673 = vmax.f32 %v2671, %v2672
        %v2674 = vsel %vm2267, %v1996, -inf
        %v2675 = vrot.slane %v2674, 4
        %v2676 = vmax.f32 %v2674, %v2675
        %v2677 = vrot.slane %v2676, 2
        %v2678 = vmax.f32 %v2676, %v2677
        %v2679 = vrot.slane %v2678, 1
        %v2680 = vmax.f32 %v2678, %v2679
        %v2681 = vsel %vm2267, %v1998, -inf
        %v2682 = vrot.slane %v2681, 4
        %v2683 = vmax.f32 %v2681, %v2682
        %v2684 = vrot.slane %v2683, 2
        %v2685 = vmax.f32 %v2683, %v2684
        %v2686 = vrot.slane %v2685, 1
        %v2687 = vmax.f32 %v2685, %v2686
        %v2688 = vsel %vm2267, %v2006, -inf
        %v2689 = vrot.slane %v2688, 4
        %v2690 = vmax.f32 %v2688, %v2689
        %v2691 = vrot.slane %v2690, 2
        %v2692 = vmax.f32 %v2690, %v2691
        %v2693 = vrot.slane %v2692, 1
        %v2694 = vmax.f32 %v2692, %v2693
        %v2695 = vsel %vm2267, %v2014, -inf
        %v2696 = vrot.slane %v2695, 4
        %v2697 = vmax.f32 %v2695, %v2696
        %v2698 = vrot.slane %v2697, 2
        %v2699 = vmax.f32 %v2697, %v2698
        %v2700 = vrot.slane %v2699, 1
        %v2701 = vmax.f32 %v2699, %v2700
        %v2702 = vsel %vm2267, %v2013, -inf
        %v2703 = vrot.slane %v2702, 4
        %v2704 = vmax.f32 %v2702, %v2703
        %v2705 = vrot.slane %v2704, 2
        %v2706 = vmax.f32 %v2704, %v2705
        %v2707 = vrot.slane %v2706, 1
        %v2708 = vmax.f32 %v2706, %v2707
        %v2709 = vsel %vm2267, %v2015, -inf
        %v2710 = vrot.slane %v2709, 4
        %v2711 = vmax.f32 %v2709, %v2710
        %v2712 = vrot.slane %v2711, 2
        %v2713 = vmax.f32 %v2711, %v2712
        %v2714 = vrot.slane %v2713, 1
        %v2715 = vmax.f32 %v2713, %v2714
        %v2716 = vsel %vm2267, %v2023, -inf
        %v2717 = vrot.slane %v2716, 4
        %v2718 = vmax.f32 %v2716, %v2717
        %v2719 = vrot.slane %v2718, 2
        %v2720 = vmax.f32 %v2718, %v2719
        %v2721 = vrot.slane %v2720, 1
        %v2722 = vmax.f32 %v2720, %v2721
        %v2723 = vsel %vm2267, %v2031, -inf
        %v2724 = vrot.slane %v2723, 4
        %v2725 = vmax.f32 %v2723, %v2724
        %v2726 = vrot.slane %v2725, 2
        %v2727 = vmax.f32 %v2725, %v2726
        %v2728 = vrot.slane %v2727, 1
        %v2729 = vmax.f32 %v2727, %v2728
        %v2730 = vsel %vm2267, %v2030, -inf
        %v2731 = vrot.slane %v2730, 4
        %v2732 = vmax.f32 %v2730, %v2731
        %v2733 = vrot.slane %v2732, 2
        %v2734 = vmax.f32 %v2732, %v2733
        %v2735 = vrot.slane %v2734, 1
        %v2736 = vmax.f32 %v2734, %v2735
        %v2737 = vsel %vm2267, %v2032, -inf
        %v2738 = vrot.slane %v2737, 4
        %v2739 = vmax.f32 %v2737, %v2738
        %v2740 = vrot.slane %v2739, 2
        %v2741 = vmax.f32 %v2739, %v2740
        %v2742 = vrot.slane %v2741, 1
        %v2743 = vmax.f32 %v2741, %v2742
        %v2744 = vsel %vm2267, %v2040, -inf
        %v2745 = vrot.slane %v2744, 4
        %v2746 = vmax.f32 %v2744, %v2745
        %v2747 = vrot.slane %v2746, 2
        %v2748 = vmax.f32 %v2746, %v2747
        %v2749 = vrot.slane %v2748, 1
        %v2750 = vmax.f32 %v2748, %v2749
        %v2751 = vsel %vm2267, %v2048, -inf
        %v2752 = vrot.slane %v2751, 4
        %v2753 = vmax.f32 %v2751, %v2752
        %v2754 = vrot.slane %v2753, 2
        %v2755 = vmax.f32 %v2753, %v2754
        %v2756 = vrot.slane %v2755, 1
        %v2757 = vmax.f32 %v2755, %v2756
        %v2758 = vsel %vm2267, %v2047, -inf
        %v2759 = vrot.slane %v2758, 4
        %v2760 = vmax.f32 %v2758, %v2759
        %v2761 = vrot.slane %v2760, 2
        %v2762 = vmax.f32 %v2760, %v2761
        %v2763 = vrot.slane %v2762, 1
        %v2764 = vmax.f32 %v2762, %v2763
        %v2765 = vsel %vm2267, %v2049, -inf
        %v2766 = vrot.slane %v2765, 4
        %v2767 = vmax.f32 %v2765, %v2766
        %v2768 = vrot.slane %v2767, 2
        %v2769 = vmax.f32 %v2767, %v2768
        %v2770 = vrot.slane %v2769, 1
        %v2771 = vmax.f32 %v2769, %v2770
        %v2772 = vsel %vm2267, %v2057, -inf
        %v2773 = vrot.slane %v2772, 4
        %v2774 = vmax.f32 %v2772, %v2773
        %v2775 = vrot.slane %v2774, 2
        %v2776 = vmax.f32 %v2774, %v2775
        %v2777 = vrot.slane %v2776, 1
        %v2778 = vmax.f32 %v2776, %v2777
        %v2779 = vsel %vm2267, %v2065, -inf
        %v2780 = vrot.slane %v2779, 4
        %v2781 = vmax.f32 %v2779, %v2780
        %v2782 = vrot.slane %v2781, 2
        %v2783 = vmax.f32 %v2781, %v2782
        %v2784 = vrot.slane %v2783, 1
        %v2785 = vmax.f32 %v2783, %v2784
        %v2786 = vsel %vm2267, %v2064, -inf
        %v2787 = vrot.slane %v2786, 4
        %v2788 = vmax.f32 %v2786, %v2787
        %v2789 = vrot.slane %v2788, 2
        %v2790 = vmax.f32 %v2788, %v2789
        %v2791 = vrot.slane %v2790, 1
        %v2792 = vmax.f32 %v2790, %v2791
        %v2793 = vsel %vm2267, %v2066, -inf
        %v2794 = vrot.slane %v2793, 4
        %v2795 = vmax.f32 %v2793, %v2794
        %v2796 = vrot.slane %v2795, 2
        %v2797 = vmax.f32 %v2795, %v2796
        %v2798 = vrot.slane %v2797, 1
        %v2799 = vmax.f32 %v2797, %v2798
        %v2800 = vsel %vm2267, %v2074, -inf
        %v2801 = vrot.slane %v2800, 4
        %v2802 = vmax.f32 %v2800, %v2801
        %v2803 = vrot.slane %v2802, 2
        %v2804 = vmax.f32 %v2802, %v2803
        %v2805 = vrot.slane %v2804, 1
        %v2806 = vmax.f32 %v2804, %v2805
        %v2807 = vsel %vm2267, %v2082, -inf
        %v2808 = vrot.slane %v2807, 4
        %v2809 = vmax.f32 %v2807, %v2808
        %v2810 = vrot.slane %v2809, 2
        %v2811 = vmax.f32 %v2809, %v2810
        %v2812 = vrot.slane %v2811, 1
        %v2813 = vmax.f32 %v2811, %v2812
        %v2814 = vsel %vm2267, %v2081, -inf
        %v2815 = vrot.slane %v2814, 4
        %v2816 = vmax.f32 %v2814, %v2815
        %v2817 = vrot.slane %v2816, 2
        %v2818 = vmax.f32 %v2816, %v2817
        %v2819 = vrot.slane %v2818, 1
        %v2820 = vmax.f32 %v2818, %v2819
        %v2821 = vsel %vm2267, %v2083, -inf
        %v2822 = vrot.slane %v2821, 4
        %v2823 = vmax.f32 %v2821, %v2822
        %v2824 = vrot.slane %v2823, 2
        %v2825 = vmax.f32 %v2823, %v2824
        %v2826 = vrot.slane %v2825, 1
        %v2827 = vmax.f32 %v2825, %v2826
        %v2828 = vsel %vm2267, %v2091, -inf
        %v2829 = vrot.slane %v2828, 4
        %v2830 = vmax.f32 %v2828, %v2829
        %v2831 = vrot.slane %v2830, 2
        %v2832 = vmax.f32 %v2830, %v2831
        %v2833 = vrot.slane %v2832, 1
        %v2834 = vmax.f32 %v2832, %v2833
        %v2835 = vsel %vm2267, %v2099, -inf
        %v2836 = vrot.slane %v2835, 4
        %v2837 = vmax.f32 %v2835, %v2836
        %v2838 = vrot.slane %v2837, 2
        %v2839 = vmax.f32 %v2837, %v2838
        %v2840 = vrot.slane %v2839, 1
        %v2841 = vmax.f32 %v2839, %v2840
        %v2842 = vsel %vm2267, %v2098, -inf
        %v2843 = vrot.slane %v2842, 4
        %v2844 = vmax.f32 %v2842, %v2843
        %v2845 = vrot.slane %v2844, 2
        %v2846 = vmax.f32 %v2844, %v2845
        %v2847 = vrot.slane %v2846, 1
        %v2848 = vmax.f32 %v2846, %v2847
        %v2849 = vsel %vm2267, %v2100, -inf
        %v2850 = vrot.slane %v2849, 4
        %v2851 = vmax.f32 %v2849, %v2850
        %v2852 = vrot.slane %v2851, 2
        %v2853 = vmax.f32 %v2851, %v2852
        %v2854 = vrot.slane %v2853, 1
        %v2855 = vmax.f32 %v2853, %v2854
        %v2856 = vsel %vm2267, %v2108, -inf
        %v2857 = vrot.slane %v2856, 4
        %v2858 = vmax.f32 %v2856, %v2857
        %v2859 = vrot.slane %v2858, 2
        %v2860 = vmax.f32 %v2858, %v2859
        %v2861 = vrot.slane %v2860, 1
        %v2862 = vmax.f32 %v2860, %v2861
        %v2863 = vsel %vm2267, %v2116, -inf
        %v2864 = vrot.slane %v2863, 4
        %v2865 = vmax.f32 %v2863, %v2864
        %v2866 = vrot.slane %v2865, 2
        %v2867 = vmax.f32 %v2865, %v2866
        %v2868 = vrot.slane %v2867, 1
        %v2869 = vmax.f32 %v2867, %v2868
        %v2870 = vsel %vm2267, %v2115, -inf
        %v2871 = vrot.slane %v2870, 4
        %v2872 = vmax.f32 %v2870, %v2871
        %v2873 = vrot.slane %v2872, 2
        %v2874 = vmax.f32 %v2872, %v2873
        %v2875 = vrot.slane %v2874, 1
        %v2876 = vmax.f32 %v2874, %v2875
        %v2877 = vsel %vm2267, %v2117, -inf
        %v2878 = vrot.slane %v2877, 4
        %v2879 = vmax.f32 %v2877, %v2878
        %v2880 = vrot.slane %v2879, 2
        %v2881 = vmax.f32 %v2879, %v2880
        %v2882 = vrot.slane %v2881, 1
        %v2883 = vmax.f32 %v2881, %v2882
        %v2884 = vsel %vm2267, %v2125, -inf
        %v2885 = vrot.slane %v2884, 4
        %v2886 = vmax.f32 %v2884, %v2885
        %v2887 = vrot.slane %v2886, 2
        %v2888 = vmax.f32 %v2886, %v2887
        %v2889 = vrot.slane %v2888, 1
        %v2890 = vmax.f32 %v2888, %v2889
        %v2891 = vsel %vm2267, %v2133, -inf
        %v2892 = vrot.slane %v2891, 4
        %v2893 = vmax.f32 %v2891, %v2892
        %v2894 = vrot.slane %v2893, 2
        %v2895 = vmax.f32 %v2893, %v2894
        %v2896 = vrot.slane %v2895, 1
        %v2897 = vmax.f32 %v2895, %v2896
        %v2898 = vsel %vm2267, %v2132, -inf
        %v2899 = vrot.slane %v2898, 4
        %v2900 = vmax.f32 %v2898, %v2899
        %v2901 = vrot.slane %v2900, 2
        %v2902 = vmax.f32 %v2900, %v2901
        %v2903 = vrot.slane %v2902, 1
        %v2904 = vmax.f32 %v2902, %v2903
        %v2905 = vsel %vm2267, %v2134, -inf
        %v2906 = vrot.slane %v2905, 4
        %v2907 = vmax.f32 %v2905, %v2906
        %v2908 = vrot.slane %v2907, 2
        %v2909 = vmax.f32 %v2907, %v2908
        %v2910 = vrot.slane %v2909, 1
        %v2911 = vmax.f32 %v2909, %v2910
        %v2912 = vsel %vm2267, %v2142, -inf
        %v2913 = vrot.slane %v2912, 4
        %v2914 = vmax.f32 %v2912, %v2913
        %v2915 = vrot.slane %v2914, 2
        %v2916 = vmax.f32 %v2914, %v2915
        %v2917 = vrot.slane %v2916, 1
        %v2918 = vmax.f32 %v2916, %v2917
        %v2919 = vsel %vm2267, %v2150, -inf
        %v2920 = vrot.slane %v2919, 4
        %v2921 = vmax.f32 %v2919, %v2920
        %v2922 = vrot.slane %v2921, 2
        %v2923 = vmax.f32 %v2921, %v2922
        %v2924 = vrot.slane %v2923, 1
        %v2925 = vmax.f32 %v2923, %v2924
        %v2926 = vsel %vm2267, %v2149, -inf
        %v2927 = vrot.slane %v2926, 4
        %v2928 = vmax.f32 %v2926, %v2927
        %v2929 = vrot.slane %v2928, 2
        %v2930 = vmax.f32 %v2928, %v2929
        %v2931 = vrot.slane %v2930, 1
        %v2932 = vmax.f32 %v2930, %v2931
        %v2933 = vsel %vm2267, %v2151, -inf
        %v2934 = vrot.slane %v2933, 4
        %v2935 = vmax.f32 %v2933, %v2934
        %v2936 = vrot.slane %v2935, 2
        %v2937 = vmax.f32 %v2935, %v2936
        %v2938 = vrot.slane %v2937, 1
        %v2939 = vmax.f32 %v2937, %v2938
        %v2940 = vsel %vm2267, %v2159, -inf
        %v2941 = vrot.slane %v2940, 4
        %v2942 = vmax.f32 %v2940, %v2941
        %v2943 = vrot.slane %v2942, 2
        %v2944 = vmax.f32 %v2942, %v2943
        %v2945 = vrot.slane %v2944, 1
        %v2946 = vmax.f32 %v2944, %v2945
        %v2947 = vsel %vm2267, %v2167, -inf
        %v2948 = vrot.slane %v2947, 4
        %v2949 = vmax.f32 %v2947, %v2948
        %v2950 = vrot.slane %v2949, 2
        %v2951 = vmax.f32 %v2949, %v2950
        %v2952 = vrot.slane %v2951, 1
        %v2953 = vmax.f32 %v2951, %v2952
        %v2954 = vsel %vm2267, %v2166, -inf
        %v2955 = vrot.slane %v2954, 4
        %v2956 = vmax.f32 %v2954, %v2955
        %v2957 = vrot.slane %v2956, 2
        %v2958 = vmax.f32 %v2956, %v2957
        %v2959 = vrot.slane %v2958, 1
        %v2960 = vmax.f32 %v2958, %v2959
        %vm3058 = vcmask 1041409
        %v3059 = vsel %vm3058, %v2281, %v2274
        %vm3060 = vcmask 1042434
        %v3061 = vsel %vm3060, %v2288, %v3059
        %vm3062 = vcmask 1043459
        %v3063 = vsel %vm3062, %v2295, %v3061
        %vm3064 = vcmask 1044484
        %v3065 = vsel %vm3064, %v2302, %v3063
        %vm3066 = vcmask 1045509
        %v3067 = vsel %vm3066, %v2309, %v3065
        %vm3068 = vcmask 1046534
        %v3069 = vsel %vm3068, %v2316, %v3067
        %vm3070 = vcmask 1047559
        %v3071 = vsel %vm3070, %v2323, %v3069
        %v3072 = vsel %vm3058, %v2337, %v2330
        %v3073 = vsel %vm3060, %v2344, %v3072
        %v3074 = vsel %vm3062, %v2351, %v3073
        %v3075 = vsel %vm3064, %v2358, %v3074
        %v3076 = vsel %vm3066, %v2365, %v3075
        %v3077 = vsel %vm3068, %v2372, %v3076
        %v3078 = vsel %vm3070, %v2379, %v3077
        %v3079 = vsel %vm3058, %v2393, %v2386
        %v3080 = vsel %vm3060, %v2400, %v3079
        %v3081 = vsel %vm3062, %v2407, %v3080
        %v3082 = vsel %vm3064, %v2414, %v3081
        %v3083 = vsel %vm3066, %v2421, %v3082
        %v3084 = vsel %vm3068, %v2428, %v3083
        %v3085 = vsel %vm3070, %v2435, %v3084
        %v3086 = vsel %vm3058, %v2449, %v2442
        %v3087 = vsel %vm3060, %v2456, %v3086
        %v3088 = vsel %vm3062, %v2463, %v3087
        %v3089 = vsel %vm3064, %v2470, %v3088
        %v3090 = vsel %vm3066, %v2477, %v3089
        %v3091 = vsel %vm3068, %v2484, %v3090
        %v3092 = vsel %vm3070, %v2491, %v3091
        %v3093 = vsel %vm3058, %v2505, %v2498
        %v3094 = vsel %vm3060, %v2512, %v3093
        %v3095 = vsel %vm3062, %v2519, %v3094
        %v3096 = vsel %vm3064, %v2526, %v3095
        %v3097 = vsel %vm3066, %v2533, %v3096
        %v3098 = vsel %vm3068, %v2540, %v3097
        %v3099 = vsel %vm3070, %v2547, %v3098
        %v3100 = vsel %vm3058, %v2561, %v2554
        %v3101 = vsel %vm3060, %v2568, %v3100
        %v3102 = vsel %vm3062, %v2575, %v3101
        %v3103 = vsel %vm3064, %v2582, %v3102
        %v3104 = vsel %vm3066, %v2589, %v3103
        %v3105 = vsel %vm3068, %v2596, %v3104
        %v3106 = vsel %vm3070, %v2603, %v3105
        %v3107 = vsel %vm3058, %v2617, %v2610
        %v3108 = vsel %vm3060, %v2624, %v3107
        %v3109 = vsel %vm3062, %v2631, %v3108
        %v3110 = vsel %vm3064, %v2638, %v3109
        %v3111 = vsel %vm3066, %v2645, %v3110
        %v3112 = vsel %vm3068, %v2652, %v3111
        %v3113 = vsel %vm3070, %v2659, %v3112
        %v3114 = vsel %vm3058, %v2673, %v2666
        %v3115 = vsel %vm3060, %v2680, %v3114
        %v3116 = vsel %vm3062, %v2687, %v3115
        %v3117 = vsel %vm3064, %v2694, %v3116
        %v3118 = vsel %vm3066, %v2701, %v3117
        %v3119 = vsel %vm3068, %v2708, %v3118
        %v3120 = vsel %vm3070, %v2715, %v3119
        %v3121 = vsel %vm3058, %v2729, %v2722
        %v3122 = vsel %vm3060, %v2736, %v3121
        %v3123 = vsel %vm3062, %v2743, %v3122
        %v3124 = vsel %vm3064, %v2750, %v3123
        %v3125 = vsel %vm3066, %v2757, %v3124
        %v3126 = vsel %vm3068, %v2764, %v3125
        %v3127 = vsel %vm3070, %v2771, %v3126
        %v3128 = vsel %vm3058, %v2785, %v2778
        %v3129 = vsel %vm3060, %v2792, %v3128
        %v3130 = vsel %vm3062, %v2799, %v3129
        %v3131 = vsel %vm3064, %v2806, %v3130
        %v3132 = vsel %vm3066, %v2813, %v3131
        %v3133 = vsel %vm3068, %v2820, %v3132
        %v3134 = vsel %vm3070, %v2827, %v3133
        %v3135 = vsel %vm3058, %v2841, %v2834
        %v3136 = vsel %vm3060, %v2848, %v3135
        %v3137 = vsel %vm3062, %v2855, %v3136
        %v3138 = vsel %vm3064, %v2862, %v3137
        %v3139 = vsel %vm3066, %v2869, %v3138
        %v3140 = vsel %vm3068, %v2876, %v3139
        %v3141 = vsel %vm3070, %v2883, %v3140
        %v3142 = vsel %vm3058, %v2897, %v2890
        %v3143 = vsel %vm3060, %v2904, %v3142
        %v3144 = vsel %vm3062, %v2911, %v3143
        %v3145 = vsel %vm3064, %v2918, %v3144
        %v3146 = vsel %vm3066, %v2925, %v3145
        %v3147 = vsel %vm3068, %v2932, %v3146
        %v3148 = vsel %vm3070, %v2939, %v3147
        %v3163 = vsel %vm3058, %v2288, %v2281
        %v3164 = vsel %vm3060, %v2295, %v3163
        %v3165 = vsel %vm3062, %v2302, %v3164
        %v3166 = vsel %vm3064, %v2309, %v3165
        %v3167 = vsel %vm3066, %v2316, %v3166
        %v3168 = vsel %vm3068, %v2323, %v3167
        %v3169 = vsel %vm3070, %v2330, %v3168
        %v3170 = vsel %vm3058, %v2344, %v2337
        %v3171 = vsel %vm3060, %v2351, %v3170
        %v3172 = vsel %vm3062, %v2358, %v3171
        %v3173 = vsel %vm3064, %v2365, %v3172
        %v3174 = vsel %vm3066, %v2372, %v3173
        %v3175 = vsel %vm3068, %v2379, %v3174
        %v3176 = vsel %vm3070, %v2386, %v3175
        %v3177 = vsel %vm3058, %v2400, %v2393
        %v3178 = vsel %vm3060, %v2407, %v3177
        %v3179 = vsel %vm3062, %v2414, %v3178
        %v3180 = vsel %vm3064, %v2421, %v3179
        %v3181 = vsel %vm3066, %v2428, %v3180
        %v3182 = vsel %vm3068, %v2435, %v3181
        %v3183 = vsel %vm3070, %v2442, %v3182
        %v3184 = vsel %vm3058, %v2456, %v2449
        %v3185 = vsel %vm3060, %v2463, %v3184
        %v3186 = vsel %vm3062, %v2470, %v3185
        %v3187 = vsel %vm3064, %v2477, %v3186
        %v3188 = vsel %vm3066, %v2484, %v3187
        %v3189 = vsel %vm3068, %v2491, %v3188
        %v3190 = vsel %vm3070, %v2498, %v3189
        %v3191 = vsel %vm3058, %v2512, %v2505
        %v3192 = vsel %vm3060, %v2519, %v3191
        %v3193 = vsel %vm3062, %v2526, %v3192
        %v3194 = vsel %vm3064, %v2533, %v3193
        %v3195 = vsel %vm3066, %v2540, %v3194
        %v3196 = vsel %vm3068, %v2547, %v3195
        %v3197 = vsel %vm3070, %v2554, %v3196
        %v3198 = vsel %vm3058, %v2568, %v2561
        %v3199 = vsel %vm3060, %v2575, %v3198
        %v3200 = vsel %vm3062, %v2582, %v3199
        %v3201 = vsel %vm3064, %v2589, %v3200
        %v3202 = vsel %vm3066, %v2596, %v3201
        %v3203 = vsel %vm3068, %v2603, %v3202
        %v3204 = vsel %vm3070, %v2610, %v3203
        %v3205 = vsel %vm3058, %v2624, %v2617
        %v3206 = vsel %vm3060, %v2631, %v3205
        %v3207 = vsel %vm3062, %v2638, %v3206
        %v3208 = vsel %vm3064, %v2645, %v3207
        %v3209 = vsel %vm3066, %v2652, %v3208
        %v3210 = vsel %vm3068, %v2659, %v3209
        %v3211 = vsel %vm3070, %v2666, %v3210
        %v3212 = vsel %vm3058, %v2680, %v2673
        %v3213 = vsel %vm3060, %v2687, %v3212
        %v3214 = vsel %vm3062, %v2694, %v3213
        %v3215 = vsel %vm3064, %v2701, %v3214
        %v3216 = vsel %vm3066, %v2708, %v3215
        %v3217 = vsel %vm3068, %v2715, %v3216
        %v3218 = vsel %vm3070, %v2722, %v3217
        %v3219 = vsel %vm3058, %v2736, %v2729
        %v3220 = vsel %vm3060, %v2743, %v3219
        %v3221 = vsel %vm3062, %v2750, %v3220
        %v3222 = vsel %vm3064, %v2757, %v3221
        %v3223 = vsel %vm3066, %v2764, %v3222
        %v3224 = vsel %vm3068, %v2771, %v3223
        %v3225 = vsel %vm3070, %v2778, %v3224
        %v3226 = vsel %vm3058, %v2792, %v2785
        %v3227 = vsel %vm3060, %v2799, %v3226
        %v3228 = vsel %vm3062, %v2806, %v3227
        %v3229 = vsel %vm3064, %v2813, %v3228
        %v3230 = vsel %vm3066, %v2820, %v3229
        %v3231 = vsel %vm3068, %v2827, %v3230
        %v3232 = vsel %vm3070, %v2834, %v3231
        %v3233 = vsel %vm3058, %v2848, %v2841
        %v3234 = vsel %vm3060, %v2855, %v3233
        %v3235 = vsel %vm3062, %v2862, %v3234
        %v3236 = vsel %vm3064, %v2869, %v3235
        %v3237 = vsel %vm3066, %v2876, %v3236
        %v3238 = vsel %vm3068, %v2883, %v3237
        %v3239 = vsel %vm3070, %v2890, %v3238
        %v3240 = vsel %vm3058, %v2904, %v2897
        %v3241 = vsel %vm3060, %v2911, %v3240
        %v3242 = vsel %vm3062, %v2918, %v3241
        %v3243 = vsel %vm3064, %v2925, %v3242
        %v3244 = vsel %vm3066, %v2932, %v3243
        %v3245 = vsel %vm3068, %v2939, %v3244
        %v3246 = vsel %vm3070, %v2946, %v3245
        %3247 = vrot.lane.b32.xlu0 %v3169, 32
        %v3248 = vpop.permute.xlu0 %3247
        %3249 = vrot.lane.b32.xlu0 %v3176, 32
        %v3250 = vpop.permute.xlu0 %3249
        %3251 = vrot.lane.b32.xlu0 %v3183, 32
        %v3252 = vpop.permute.xlu0 %3251
        %3253 = vrot.lane.b32.xlu0 %v3190, 32
        %v3254 = vpop.permute.xlu0 %3253
        %3255 = vrot.lane.b32.xlu0 %v3197, 32
        %v3256 = vpop.permute.xlu0 %3255
        %3257 = vrot.lane.b32.xlu0 %v3204, 32
        %v3258 = vpop.permute.xlu0 %3257
        %3259 = vrot.lane.b32.xlu0 %v3211, 32
        %v3260 = vpop.permute.xlu0 %3259
        %3261 = vrot.lane.b32.xlu0 %v3218, 32
        %v3262 = vpop.permute.xlu0 %3261
        %3263 = vrot.lane.b32.xlu0 %v3225, 32
        %v3264 = vpop.permute.xlu0 %3263
        %3265 = vrot.lane.b32.xlu0 %v3232, 32
        %v3266 = vpop.permute.xlu0 %3265
        %3267 = vrot.lane.b32.xlu0 %v3239, 32
        %v3268 = vpop.permute.xlu0 %3267
        %3269 = vrot.lane.b32.xlu0 %v3246, 32
        %v3270 = vpop.permute.xlu0 %3269
        %3271 = vrot.lane.b32.xlu0 %v2953, 32
        %v3272 = vpop.permute.xlu0 %3271
        %v3287 = vsel %vm3058, %v2295, %v2288
        %v3288 = vsel %vm3060, %v2302, %v3287
        %v3289 = vsel %vm3062, %v2309, %v3288
        %v3290 = vsel %vm3064, %v2316, %v3289
        %v3291 = vsel %vm3066, %v2323, %v3290
        %v3292 = vsel %vm3068, %v2330, %v3291
        %v3293 = vsel %vm3070, %v2337, %v3292
        %v3294 = vsel %vm3058, %v2351, %v2344
        %v3295 = vsel %vm3060, %v2358, %v3294
        %v3296 = vsel %vm3062, %v2365, %v3295
        %v3297 = vsel %vm3064, %v2372, %v3296
        %v3298 = vsel %vm3066, %v2379, %v3297
        %v3299 = vsel %vm3068, %v2386, %v3298
        %v3300 = vsel %vm3070, %v2393, %v3299
        %v3301 = vsel %vm3058, %v2407, %v2400
        %v3302 = vsel %vm3060, %v2414, %v3301
        %v3303 = vsel %vm3062, %v2421, %v3302
        %v3304 = vsel %vm3064, %v2428, %v3303
        %v3305 = vsel %vm3066, %v2435, %v3304
        %v3306 = vsel %vm3068, %v2442, %v3305
        %v3307 = vsel %vm3070, %v2449, %v3306
        %v3308 = vsel %vm3058, %v2463, %v2456
        %v3309 = vsel %vm3060, %v2470, %v3308
        %v3310 = vsel %vm3062, %v2477, %v3309
        %v3311 = vsel %vm3064, %v2484, %v3310
        %v3312 = vsel %vm3066, %v2491, %v3311
        %v3313 = vsel %vm3068, %v2498, %v3312
        %v3314 = vsel %vm3070, %v2505, %v3313
        %v3315 = vsel %vm3058, %v2519, %v2512
        %v3316 = vsel %vm3060, %v2526, %v3315
        %v3317 = vsel %vm3062, %v2533, %v3316
        %v3318 = vsel %vm3064, %v2540, %v3317
        %v3319 = vsel %vm3066, %v2547, %v3318
        %v3320 = vsel %vm3068, %v2554, %v3319
        %v3321 = vsel %vm3070, %v2561, %v3320
        %v3322 = vsel %vm3058, %v2575, %v2568
        %v3323 = vsel %vm3060, %v2582, %v3322
        %v3324 = vsel %vm3062, %v2589, %v3323
        %v3325 = vsel %vm3064, %v2596, %v3324
        %v3326 = vsel %vm3066, %v2603, %v3325
        %v3327 = vsel %vm3068, %v2610, %v3326
        %v3328 = vsel %vm3070, %v2617, %v3327
        %v3329 = vsel %vm3058, %v2631, %v2624
        %v3330 = vsel %vm3060, %v2638, %v3329
        %v3331 = vsel %vm3062, %v2645, %v3330
        %v3332 = vsel %vm3064, %v2652, %v3331
        %v3333 = vsel %vm3066, %v2659, %v3332
        %v3334 = vsel %vm3068, %v2666, %v3333
        %v3335 = vsel %vm3070, %v2673, %v3334
        %v3336 = vsel %vm3058, %v2687, %v2680
        %v3337 = vsel %vm3060, %v2694, %v3336
        %v3338 = vsel %vm3062, %v2701, %v3337
        %v3339 = vsel %vm3064, %v2708, %v3338
        %v3340 = vsel %vm3066, %v2715, %v3339
        %v3341 = vsel %vm3068, %v2722, %v3340
        %v3342 = vsel %vm3070, %v2729, %v3341
        %v3343 = vsel %vm3058, %v2743, %v2736
        %v3344 = vsel %vm3060, %v2750, %v3343
        %v3345 = vsel %vm3062, %v2757, %v3344
        %v3346 = vsel %vm3064, %v2764, %v3345
        %v3347 = vsel %vm3066, %v2771, %v3346
        %v3348 = vsel %vm3068, %v2778, %v3347
        %v3349 = vsel %vm3070, %v2785, %v3348
        %v3350 = vsel %vm3058, %v2799, %v2792
        %v3351 = vsel %vm3060, %v2806, %v3350
        %v3352 = vsel %vm3062, %v2813, %v3351
        %v3353 = vsel %vm3064, %v2820, %v3352
        %v3354 = vsel %vm3066, %v2827, %v3353
        %v3355 = vsel %vm3068, %v2834, %v3354
        %v3356 = vsel %vm3070, %v2841, %v3355
        %v3357 = vsel %vm3058, %v2855, %v2848
        %v3358 = vsel %vm3060, %v2862, %v3357
        %v3359 = vsel %vm3062, %v2869, %v3358
        %v3360 = vsel %vm3064, %v2876, %v3359
        %v3361 = vsel %vm3066, %v2883, %v3360
        %v3362 = vsel %vm3068, %v2890, %v3361
        %v3363 = vsel %vm3070, %v2897, %v3362
        %v3364 = vsel %vm3058, %v2911, %v2904
        %v3365 = vsel %vm3060, %v2918, %v3364
        %v3366 = vsel %vm3062, %v2925, %v3365
        %v3367 = vsel %vm3064, %v2932, %v3366
        %v3368 = vsel %vm3066, %v2939, %v3367
        %v3369 = vsel %vm3068, %v2946, %v3368
        %v3370 = vsel %vm3070, %v2953, %v3369
        %3371 = vrot.lane.b32.xlu0 %v3293, 64
        %v3372 = vpop.permute.xlu0 %3371
        %3373 = vrot.lane.b32.xlu0 %v3300, 64
        %v3374 = vpop.permute.xlu0 %3373
        %3375 = vrot.lane.b32.xlu0 %v3307, 64
        %v3376 = vpop.permute.xlu0 %3375
        %3377 = vrot.lane.b32.xlu0 %v3314, 64
        %v3378 = vpop.permute.xlu0 %3377
        %3379 = vrot.lane.b32.xlu0 %v3321, 64
        %v3380 = vpop.permute.xlu0 %3379
        %3381 = vrot.lane.b32.xlu0 %v3328, 64
        %v3382 = vpop.permute.xlu0 %3381
        %3383 = vrot.lane.b32.xlu0 %v3335, 64
        %v3384 = vpop.permute.xlu0 %3383
        %3385 = vrot.lane.b32.xlu0 %v3342, 64
        %v3386 = vpop.permute.xlu0 %3385
        %3387 = vrot.lane.b32.xlu0 %v3349, 64
        %v3388 = vpop.permute.xlu0 %3387
        %3389 = vrot.lane.b32.xlu0 %v3356, 64
        %v3390 = vpop.permute.xlu0 %3389
        %3391 = vrot.lane.b32.xlu0 %v3363, 64
        %v3392 = vpop.permute.xlu0 %3391
        %3393 = vrot.lane.b32.xlu0 %v3370, 64
        %v3394 = vpop.permute.xlu0 %3393
        %3395 = vrot.lane.b32.xlu0 %v2960, 64
        %v3396 = vpop.permute.xlu0 %3395
        %vm3410 = vcmask 261120
        %v3411 = vsel %vm3410, %v3071, %v3248
        %v3412 = vsel %vm3410, %v3078, %v3250
        %v3413 = vsel %vm3410, %v3085, %v3252
        %v3414 = vsel %vm3410, %v3092, %v3254
        %v3415 = vsel %vm3410, %v3099, %v3256
        %v3416 = vsel %vm3410, %v3106, %v3258
        %v3417 = vsel %vm3410, %v3113, %v3260
        %v3418 = vsel %vm3410, %v3120, %v3262
        %v3419 = vsel %vm3410, %v3127, %v3264
        %v3420 = vsel %vm3410, %v3134, %v3266
        %v3421 = vsel %vm3410, %v3141, %v3268
        %v3422 = vsel %vm3410, %v3148, %v3270
        %v3423 = vsel %vm3410, %v2946, %v3272
        %vm3424 = vcmask 523264
        %v3425 = vsel %vm3424, %v3411, %v3372
        %v3426 = vsel %vm3424, %v3412, %v3374
        %v3427 = vsel %vm3424, %v3413, %v3376
        %v3428 = vsel %vm3424, %v3414, %v3378
        %v3429 = vsel %vm3424, %v3415, %v3380
        %v3430 = vsel %vm3424, %v3416, %v3382
        %v3431 = vsel %vm3424, %v3417, %v3384
        %v3432 = vsel %vm3424, %v3418, %v3386
        %v3433 = vsel %vm3424, %v3419, %v3388
        %v3434 = vsel %vm3424, %v3420, %v3390
        %v3435 = vsel %vm3424, %v3421, %v3392
        %v3436 = vsel %vm3424, %v3422, %v3394
        %v3437 = vsel %vm3424, %v3423, %v3396
        %v3438 = vpack.c.bf16 %v3426, %v3425
        %v3439 = vpack.c.bf16 %v3428, %v3427
        %v3440 = vpack.c.bf16 %v3430, %v3429
        %v3441 = vpack.c.bf16 %v3432, %v3431
        %v3442 = vpack.c.bf16 %v3434, %v3433
        %v3443 = vpack.c.bf16 %v3436, %v3435
        %v3444 = vpack.c.bf16 %v3437, %v3437
        %v3446 = vlaneseq
        %v3447 = vshrl.u32 %v3446, 7
        %v3448 = vsub.s32 0, %v3447
        %v3449 = vrot.slane %v721, %v3448
        %v3463 = vunpack.c.l.b16 %v709
        %v3464 = vunpack.c.l.b16 %v710
        %v3465 = vunpack.c.l.b16 %v711
        %v3466 = vunpack.c.l.b16 %v712
        %v3467 = vunpack.c.l.b16 %v713
        %v3468 = vunpack.c.l.b16 %v714
        %v3469 = vunpack.c.l.b16 %v715
        %v3470 = vunpack.c.l.b16 %v716
        %v3471 = vunpack.c.l.b16 %v717
        %v3472 = vunpack.c.l.b16 %v718
        %v3473 = vunpack.c.l.b16 %v719
        %v3474 = vunpack.c.l.b16 %v720
        %v3475 = vpack.c.b16 %v3464, %v3463
        %v3476 = vpack.c.b16 %v3466, %v3465
        %v3477 = vpack.c.b16 %v3468, %v3467
        %v3478 = vpack.c.b16 %v3470, %v3469
        %v3479 = vpack.c.b16 %v3472, %v3471
        %v3480 = vpack.c.b16 %v3474, %v3473
        %vm3487 = vcmask 785408
        %v3489 = vsel %vm3487, %v3438, 0
        %v3492 = vsel %vm3487, %v3439, 0
        %v3495 = vsel %vm3487, %v3440, 0
        %v3498 = vsel %vm3487, %v3441, 0
        %v3501 = vsel %vm3487, %v3442, 0
        %v3504 = vsel %vm3487, %v3443, 0
        %v3507 = vsel %vm3487, %v3444, 0
        %3509 = vmatprep.subr.bf16.mxu0 0
        %3510 = vmatpush1.bf16.msra.mxu0 %v3475
        %3511 = vmatprep.subr.bf16.mxu0 0
        %3512 = vmatpush1.bf16.msra.mxu0 %v3476
        %3513 = vmatprep.subr.bf16.mxu0 0
        %3514 = vmatpush1.bf16.msra.mxu0 %v3477
        %3515 = vmatprep.subr.bf16.mxu0 0
        %3516 = vmatpush1.bf16.msra.mxu0 %v3478
        %3517 = vmatprep.subr.bf16.mxu0 0
        %3518 = vmatpush1.bf16.msra.mxu0 %v3479
        %3519 = vmatprep.subr.bf16.mxu0 0
        %3520 = vmatpush1.bf16.msra.mxu0 %v3480
        %3521 = vmatprep.subr.bf16.mxu0 0
        %3522 = vmatpush1.bf16.msra.mxu0 0
        %3523 = vmatprep.subr.bf16.mxu0 0
        %3524 = vmatpush1.bf16.msra.mxu0 0
        %3525 = vmatprep.subr.bf16.mxu0 0
        %3526 = vmatpush1.bf16.msra.mxu0 0
        %3527 = vmatprep.subr.bf16.mxu0 0
        %3528 = vmatpush1.bf16.msra.mxu0 0
        %3529 = vmatprep.subr.bf16.mxu0 0
        %3530 = vmatpush1.bf16.msra.mxu0 0
        %3531 = vmatprep.subr.bf16.mxu0 0
        %3532 = vmatpush1.bf16.msra.mxu0 0
        %3533 = vmatprep.subr.bf16.mxu0 0
        %3534 = vmatpush1.bf16.msra.mxu0 0
        %3535 = vmatprep.subr.bf16.mxu0 0
        %3536 = vmatpush1.bf16.msra.mxu0 0
        %3537 = vmatprep.subr.bf16.mxu0 0
        %3538 = vmatpush1.bf16.msra.mxu0 0
        %3539 = vmatprep.subr.bf16.mxu0 0
        %3540 = vmatpush1.bf16.msra.mxu0 0
        %3541 = vmatprep.mubr.bf16.mxu0 0
        %3542 = vmatmul.mubr.bf16.gmra.mrb[0].mxu0 %v3489
        %v3543 = vpop.f32.mrb[0].mxu0
        %v3544 = vadd.f32 %v3449, %v3543
        %v3545 = vpop.f32.mrb[0].mxu0
        %v3546 = vpop.f32.mrb[0].mxu0
        %v3547 = vadd.f32 %v3449, %v3546
        %v3548 = vpop.f32.mrb[0].mxu0
        %3549 = vmatprep.mubr.bf16.mxu0 0
        %3550 = vmatmul.mubr.bf16.gmra.mrb[0].mxu0 %v3492
        %v3551 = vpop.f32.mrb[0].mxu0
        %v3552 = vadd.f32 %v3449, %v3551
        %v3553 = vpop.f32.mrb[0].mxu0
        %v3554 = vpop.f32.mrb[0].mxu0
        %v3555 = vadd.f32 %v3449, %v3554
        %v3556 = vpop.f32.mrb[0].mxu0
        %3557 = vmatprep.mubr.bf16.mxu0 0
        %3558 = vmatmul.mubr.bf16.gmra.mrb[0].mxu0 %v3495
        %v3559 = vpop.f32.mrb[0].mxu0
        %v3560 = vadd.f32 %v3449, %v3559
        %v3561 = vpop.f32.mrb[0].mxu0
        %v3562 = vpop.f32.mrb[0].mxu0
        %v3563 = vadd.f32 %v3449, %v3562
        %v3564 = vpop.f32.mrb[0].mxu0
        %3565 = vmatprep.mubr.bf16.mxu0 0
        %3566 = vmatmul.mubr.bf16.gmra.mrb[0].mxu0 %v3498
        %v3567 = vpop.f32.mrb[0].mxu0
        %v3568 = vadd.f32 %v3449, %v3567
        %v3569 = vpop.f32.mrb[0].mxu0
        %v3570 = vpop.f32.mrb[0].mxu0
        %v3571 = vadd.f32 %v3449, %v3570
        %v3572 = vpop.f32.mrb[0].mxu0
        %3573 = vmatprep.mubr.bf16.mxu0 0
        %3574 = vmatmul.mubr.bf16.gmra.mrb[0].mxu0 %v3501
        %v3575 = vpop.f32.mrb[0].mxu0
        %v3576 = vadd.f32 %v3449, %v3575
        %v3577 = vpop.f32.mrb[0].mxu0
        %v3578 = vpop.f32.mrb[0].mxu0
        %v3579 = vadd.f32 %v3449, %v3578
        %v3580 = vpop.f32.mrb[0].mxu0
        %3581 = vmatprep.mubr.bf16.mxu0 0
        %3582 = vmatmul.mubr.bf16.gmra.mrb[0].mxu0 %v3504
        %v3583 = vpop.f32.mrb[0].mxu0
        %v3584 = vadd.f32 %v3449, %v3583
        %v3585 = vpop.f32.mrb[0].mxu0
        %v3586 = vpop.f32.mrb[0].mxu0
        %v3587 = vadd.f32 %v3449, %v3586
        %v3588 = vpop.f32.mrb[0].mxu0
        %3589 = vmatprep.mubr.bf16.mxu0 0
        %3590 = vmatmul.mubr.bf16.gmra.mrb[0].mxu0 %v3507
        %v3591 = vpop.f32.mrb[0].mxu0
        %v3592 = vpop.f32.mrb[0].mxu0
        %v3593 = vpop.f32.mrb[0].mxu0
        %v3594 = vpop.f32.mrb[0].mxu0
        %3595 = vdwg.mxu0
        %v3596 = vmax.f32 %v3544, 0.0
        %v3597 = vmax.f32 %v3547, 0.0
        %v3598 = vmax.f32 %v3552, 0.0
        %v3599 = vmax.f32 %v3555, 0.0
        %v3600 = vmax.f32 %v3560, 0.0
        %v3601 = vmax.f32 %v3563, 0.0
        %v3602 = vmax.f32 %v3568, 0.0
        %v3603 = vmax.f32 %v3571, 0.0
        %v3604 = vmax.f32 %v3576, 0.0
        %v3605 = vmax.f32 %v3579, 0.0
        %v3606 = vmax.f32 %v3584, 0.0
        %v3607 = vmax.f32 %v3587, 0.0
        %v3620 = vcombine.high %v3596, %v3596
        %v3622 = vunpack.c.l.s4 1983009808
        %v3623 = vunpack.c.0.s8 %v3622
        %v3624 = vlaneseq
        %v3625 = vshrl.u32 %v3624, 7
        %v3626 = vsub.s32 %v3623, %v3625
        %v3627 = vrot.slane %v3596, %v3626
        %v3629 = vunpack.c.l.s4 1983009808
        %v3630 = vunpack.c.0.s8 %v3629
        %v3631 = vlaneseq
        %v3632 = vshrl.u32 %v3631, 7
        %v3633 = vsub.s32 %v3630, %v3632
        %v3634 = vrot.slane %v3620, %v3633
        %v3635 = vcombine.high %v3627, %v3627
        %v3636 = vcombine.high %v3634, %v3634
        %v3637 = vcombine.high %v3597, %v3597
        %v3639 = vunpack.c.l.s4 1983009808
        %v3640 = vunpack.c.0.s8 %v3639
        %v3641 = vlaneseq
        %v3642 = vshrl.u32 %v3641, 7
        %v3643 = vsub.s32 %v3640, %v3642
        %v3644 = vrot.slane %v3597, %v3643
        %v3646 = vunpack.c.l.s4 1983009808
        %v3647 = vunpack.c.0.s8 %v3646
        %v3648 = vlaneseq
        %v3649 = vshrl.u32 %v3648, 7
        %v3650 = vsub.s32 %v3647, %v3649
        %v3651 = vrot.slane %v3637, %v3650
        %v3652 = vcombine.high %v3644, %v3644
        %v3653 = vcombine.high %v3651, %v3651
        %v3654 = vcombine.high %v3598, %v3598
        %v3656 = vunpack.c.l.s4 1983009808
        %v3657 = vunpack.c.0.s8 %v3656
        %v3658 = vlaneseq
        %v3659 = vshrl.u32 %v3658, 7
        %v3660 = vsub.s32 %v3657, %v3659
        %v3661 = vrot.slane %v3598, %v3660
        %v3663 = vunpack.c.l.s4 1983009808
        %v3664 = vunpack.c.0.s8 %v3663
        %v3665 = vlaneseq
        %v3666 = vshrl.u32 %v3665, 7
        %v3667 = vsub.s32 %v3664, %v3666
        %v3668 = vrot.slane %v3654, %v3667
        %v3669 = vcombine.high %v3661, %v3661
        %v3670 = vcombine.high %v3668, %v3668
        %v3671 = vcombine.high %v3599, %v3599
        %v3673 = vunpack.c.l.s4 1983009808
        %v3674 = vunpack.c.0.s8 %v3673
        %v3675 = vlaneseq
        %v3676 = vshrl.u32 %v3675, 7
        %v3677 = vsub.s32 %v3674, %v3676
        %v3678 = vrot.slane %v3599, %v3677
        %v3680 = vunpack.c.l.s4 1983009808
        %v3681 = vunpack.c.0.s8 %v3680
        %v3682 = vlaneseq
        %v3683 = vshrl.u32 %v3682, 7
        %v3684 = vsub.s32 %v3681, %v3683
        %v3685 = vrot.slane %v3671, %v3684
        %v3686 = vcombine.high %v3678, %v3678
        %v3687 = vcombine.high %v3685, %v3685
        %v3688 = vcombine.high %v3600, %v3600
        %v3690 = vunpack.c.l.s4 1983009808
        %v3691 = vunpack.c.0.s8 %v3690
        %v3692 = vlaneseq
        %v3693 = vshrl.u32 %v3692, 7
        %v3694 = vsub.s32 %v3691, %v3693
        %v3695 = vrot.slane %v3600, %v3694
        %v3697 = vunpack.c.l.s4 1983009808
        %v3698 = vunpack.c.0.s8 %v3697
        %v3699 = vlaneseq
        %v3700 = vshrl.u32 %v3699, 7
        %v3701 = vsub.s32 %v3698, %v3700
        %v3702 = vrot.slane %v3688, %v3701
        %v3703 = vcombine.high %v3695, %v3695
        %v3704 = vcombine.high %v3702, %v3702
        %v3705 = vcombine.high %v3601, %v3601
        %v3707 = vunpack.c.l.s4 1983009808
        %v3708 = vunpack.c.0.s8 %v3707
        %v3709 = vlaneseq
        %v3710 = vshrl.u32 %v3709, 7
        %v3711 = vsub.s32 %v3708, %v3710
        %v3712 = vrot.slane %v3601, %v3711
        %v3714 = vunpack.c.l.s4 1983009808
        %v3715 = vunpack.c.0.s8 %v3714
        %v3716 = vlaneseq
        %v3717 = vshrl.u32 %v3716, 7
        %v3718 = vsub.s32 %v3715, %v3717
        %v3719 = vrot.slane %v3705, %v3718
        %v3720 = vcombine.high %v3712, %v3712
        %v3721 = vcombine.high %v3719, %v3719
        %v3722 = vcombine.high %v3602, %v3602
        %v3724 = vunpack.c.l.s4 1983009808
        %v3725 = vunpack.c.0.s8 %v3724
        %v3726 = vlaneseq
        %v3727 = vshrl.u32 %v3726, 7
        %v3728 = vsub.s32 %v3725, %v3727
        %v3729 = vrot.slane %v3602, %v3728
        %v3731 = vunpack.c.l.s4 1983009808
        %v3732 = vunpack.c.0.s8 %v3731
        %v3733 = vlaneseq
        %v3734 = vshrl.u32 %v3733, 7
        %v3735 = vsub.s32 %v3732, %v3734
        %v3736 = vrot.slane %v3722, %v3735
        %v3737 = vcombine.high %v3729, %v3729
        %v3738 = vcombine.high %v3736, %v3736
        %v3739 = vcombine.high %v3603, %v3603
        %v3741 = vunpack.c.l.s4 1983009808
        %v3742 = vunpack.c.0.s8 %v3741
        %v3743 = vlaneseq
        %v3744 = vshrl.u32 %v3743, 7
        %v3745 = vsub.s32 %v3742, %v3744
        %v3746 = vrot.slane %v3603, %v3745
        %v3748 = vunpack.c.l.s4 1983009808
        %v3749 = vunpack.c.0.s8 %v3748
        %v3750 = vlaneseq
        %v3751 = vshrl.u32 %v3750, 7
        %v3752 = vsub.s32 %v3749, %v3751
        %v3753 = vrot.slane %v3739, %v3752
        %v3754 = vcombine.high %v3746, %v3746
        %v3755 = vcombine.high %v3753, %v3753
        %v3756 = vcombine.high %v3604, %v3604
        %v3758 = vunpack.c.l.s4 1983009808
        %v3759 = vunpack.c.0.s8 %v3758
        %v3760 = vlaneseq
        %v3761 = vshrl.u32 %v3760, 7
        %v3762 = vsub.s32 %v3759, %v3761
        %v3763 = vrot.slane %v3604, %v3762
        %v3765 = vunpack.c.l.s4 1983009808
        %v3766 = vunpack.c.0.s8 %v3765
        %v3767 = vlaneseq
        %v3768 = vshrl.u32 %v3767, 7
        %v3769 = vsub.s32 %v3766, %v3768
        %v3770 = vrot.slane %v3756, %v3769
        %v3771 = vcombine.high %v3763, %v3763
        %v3772 = vcombine.high %v3770, %v3770
        %v3773 = vcombine.high %v3605, %v3605
        %v3775 = vunpack.c.l.s4 1983009808
        %v3776 = vunpack.c.0.s8 %v3775
        %v3777 = vlaneseq
        %v3778 = vshrl.u32 %v3777, 7
        %v3779 = vsub.s32 %v3776, %v3778
        %v3780 = vrot.slane %v3605, %v3779
        %v3782 = vunpack.c.l.s4 1983009808
        %v3783 = vunpack.c.0.s8 %v3782
        %v3784 = vlaneseq
        %v3785 = vshrl.u32 %v3784, 7
        %v3786 = vsub.s32 %v3783, %v3785
        %v3787 = vrot.slane %v3773, %v3786
        %v3788 = vcombine.high %v3780, %v3780
        %v3789 = vcombine.high %v3787, %v3787
        %v3790 = vcombine.high %v3606, %v3606
        %v3792 = vunpack.c.l.s4 1983009808
        %v3793 = vunpack.c.0.s8 %v3792
        %v3794 = vlaneseq
        %v3795 = vshrl.u32 %v3794, 7
        %v3796 = vsub.s32 %v3793, %v3795
        %v3797 = vrot.slane %v3606, %v3796
        %v3799 = vunpack.c.l.s4 1983009808
        %v3800 = vunpack.c.0.s8 %v3799
        %v3801 = vlaneseq
        %v3802 = vshrl.u32 %v3801, 7
        %v3803 = vsub.s32 %v3800, %v3802
        %v3804 = vrot.slane %v3790, %v3803
        %v3805 = vcombine.high %v3797, %v3797
        %v3806 = vcombine.high %v3804, %v3804
        %v3807 = vcombine.high %v3607, %v3607
        %v3809 = vunpack.c.l.s4 1983009808
        %v3810 = vunpack.c.0.s8 %v3809
        %v3811 = vlaneseq
        %v3812 = vshrl.u32 %v3811, 7
        %v3813 = vsub.s32 %v3810, %v3812
        %v3814 = vrot.slane %v3607, %v3813
        %v3816 = vunpack.c.l.s4 1983009808
        %v3817 = vunpack.c.0.s8 %v3816
        %v3818 = vlaneseq
        %v3819 = vshrl.u32 %v3818, 7
        %v3820 = vsub.s32 %v3817, %v3819
        %v3821 = vrot.slane %v3807, %v3820
        %v3822 = vcombine.high %v3814, %v3814
        %v3823 = vcombine.high %v3821, %v3821
        %vm3872 = vcmask 517120
        %v3873 = vsel %vm3872, %v3627, -inf
        %v3874 = vrot.slane %v3873, 4
        %v3875 = vmax.f32 %v3873, %v3874
        %v3876 = vrot.slane %v3875, 2
        %v3877 = vmax.f32 %v3875, %v3876
        %v3878 = vrot.slane %v3877, 1
        %v3879 = vmax.f32 %v3877, %v3878
        %v3880 = vsel %vm3872, %v3635, -inf
        %v3881 = vrot.slane %v3880, 4
        %v3882 = vmax.f32 %v3880, %v3881
        %v3883 = vrot.slane %v3882, 2
        %v3884 = vmax.f32 %v3882, %v3883
        %v3885 = vrot.slane %v3884, 1
        %v3886 = vmax.f32 %v3884, %v3885
        %v3887 = vsel %vm3872, %v3634, -inf
        %v3888 = vrot.slane %v3887, 4
        %v3889 = vmax.f32 %v3887, %v3888
        %v3890 = vrot.slane %v3889, 2
        %v3891 = vmax.f32 %v3889, %v3890
        %v3892 = vrot.slane %v3891, 1
        %v3893 = vmax.f32 %v3891, %v3892
        %v3894 = vsel %vm3872, %v3636, -inf
        %v3895 = vrot.slane %v3894, 4
        %v3896 = vmax.f32 %v3894, %v3895
        %v3897 = vrot.slane %v3896, 2
        %v3898 = vmax.f32 %v3896, %v3897
        %v3899 = vrot.slane %v3898, 1
        %v3900 = vmax.f32 %v3898, %v3899
        %v3901 = vsel %vm3872, %v3644, -inf
        %v3902 = vrot.slane %v3901, 4
        %v3903 = vmax.f32 %v3901, %v3902
        %v3904 = vrot.slane %v3903, 2
        %v3905 = vmax.f32 %v3903, %v3904
        %v3906 = vrot.slane %v3905, 1
        %v3907 = vmax.f32 %v3905, %v3906
        %v3908 = vsel %vm3872, %v3652, -inf
        %v3909 = vrot.slane %v3908, 4
        %v3910 = vmax.f32 %v3908, %v3909
        %v3911 = vrot.slane %v3910, 2
        %v3912 = vmax.f32 %v3910, %v3911
        %v3913 = vrot.slane %v3912, 1
        %v3914 = vmax.f32 %v3912, %v3913
        %v3915 = vsel %vm3872, %v3651, -inf
        %v3916 = vrot.slane %v3915, 4
        %v3917 = vmax.f32 %v3915, %v3916
        %v3918 = vrot.slane %v3917, 2
        %v3919 = vmax.f32 %v3917, %v3918
        %v3920 = vrot.slane %v3919, 1
        %v3921 = vmax.f32 %v3919, %v3920
        %v3922 = vsel %vm3872, %v3653, -inf
        %v3923 = vrot.slane %v3922, 4
        %v3924 = vmax.f32 %v3922, %v3923
        %v3925 = vrot.slane %v3924, 2
        %v3926 = vmax.f32 %v3924, %v3925
        %v3927 = vrot.slane %v3926, 1
        %v3928 = vmax.f32 %v3926, %v3927
        %v3929 = vsel %vm3872, %v3661, -inf
        %v3930 = vrot.slane %v3929, 4
        %v3931 = vmax.f32 %v3929, %v3930
        %v3932 = vrot.slane %v3931, 2
        %v3933 = vmax.f32 %v3931, %v3932
        %v3934 = vrot.slane %v3933, 1
        %v3935 = vmax.f32 %v3933, %v3934
        %v3936 = vsel %vm3872, %v3669, -inf
        %v3937 = vrot.slane %v3936, 4
        %v3938 = vmax.f32 %v3936, %v3937
        %v3939 = vrot.slane %v3938, 2
        %v3940 = vmax.f32 %v3938, %v3939
        %v3941 = vrot.slane %v3940, 1
        %v3942 = vmax.f32 %v3940, %v3941
        %v3943 = vsel %vm3872, %v3668, -inf
        %v3944 = vrot.slane %v3943, 4
        %v3945 = vmax.f32 %v3943, %v3944
        %v3946 = vrot.slane %v3945, 2
        %v3947 = vmax.f32 %v3945, %v3946
        %v3948 = vrot.slane %v3947, 1
        %v3949 = vmax.f32 %v3947, %v3948
        %v3950 = vsel %vm3872, %v3670, -inf
        %v3951 = vrot.slane %v3950, 4
        %v3952 = vmax.f32 %v3950, %v3951
        %v3953 = vrot.slane %v3952, 2
        %v3954 = vmax.f32 %v3952, %v3953
        %v3955 = vrot.slane %v3954, 1
        %v3956 = vmax.f32 %v3954, %v3955
        %v3957 = vsel %vm3872, %v3678, -inf
        %v3958 = vrot.slane %v3957, 4
        %v3959 = vmax.f32 %v3957, %v3958
        %v3960 = vrot.slane %v3959, 2
        %v3961 = vmax.f32 %v3959, %v3960
        %v3962 = vrot.slane %v3961, 1
        %v3963 = vmax.f32 %v3961, %v3962
        %v3964 = vsel %vm3872, %v3686, -inf
        %v3965 = vrot.slane %v3964, 4
        %v3966 = vmax.f32 %v3964, %v3965
        %v3967 = vrot.slane %v3966, 2
        %v3968 = vmax.f32 %v3966, %v3967
        %v3969 = vrot.slane %v3968, 1
        %v3970 = vmax.f32 %v3968, %v3969
        %v3971 = vsel %vm3872, %v3685, -inf
        %v3972 = vrot.slane %v3971, 4
        %v3973 = vmax.f32 %v3971, %v3972
        %v3974 = vrot.slane %v3973, 2
        %v3975 = vmax.f32 %v3973, %v3974
        %v3976 = vrot.slane %v3975, 1
        %v3977 = vmax.f32 %v3975, %v3976
        %v3978 = vsel %vm3872, %v3687, -inf
        %v3979 = vrot.slane %v3978, 4
        %v3980 = vmax.f32 %v3978, %v3979
        %v3981 = vrot.slane %v3980, 2
        %v3982 = vmax.f32 %v3980, %v3981
        %v3983 = vrot.slane %v3982, 1
        %v3984 = vmax.f32 %v3982, %v3983
        %v3985 = vsel %vm3872, %v3695, -inf
        %v3986 = vrot.slane %v3985, 4
        %v3987 = vmax.f32 %v3985, %v3986
        %v3988 = vrot.slane %v3987, 2
        %v3989 = vmax.f32 %v3987, %v3988
        %v3990 = vrot.slane %v3989, 1
        %v3991 = vmax.f32 %v3989, %v3990
        %v3992 = vsel %vm3872, %v3703, -inf
        %v3993 = vrot.slane %v3992, 4
        %v3994 = vmax.f32 %v3992, %v3993
        %v3995 = vrot.slane %v3994, 2
        %v3996 = vmax.f32 %v3994, %v3995
        %v3997 = vrot.slane %v3996, 1
        %v3998 = vmax.f32 %v3996, %v3997
        %v3999 = vsel %vm3872, %v3702, -inf
        %v4000 = vrot.slane %v3999, 4
        %v4001 = vmax.f32 %v3999, %v4000
        %v4002 = vrot.slane %v4001, 2
        %v4003 = vmax.f32 %v4001, %v4002
        %v4004 = vrot.slane %v4003, 1
        %v4005 = vmax.f32 %v4003, %v4004
        %v4006 = vsel %vm3872, %v3704, -inf
        %v4007 = vrot.slane %v4006, 4
        %v4008 = vmax.f32 %v4006, %v4007
        %v4009 = vrot.slane %v4008, 2
        %v4010 = vmax.f32 %v4008, %v4009
        %v4011 = vrot.slane %v4010, 1
        %v4012 = vmax.f32 %v4010, %v4011
        %v4013 = vsel %vm3872, %v3712, -inf
        %v4014 = vrot.slane %v4013, 4
        %v4015 = vmax.f32 %v4013, %v4014
        %v4016 = vrot.slane %v4015, 2
        %v4017 = vmax.f32 %v4015, %v4016
        %v4018 = vrot.slane %v4017, 1
        %v4019 = vmax.f32 %v4017, %v4018
        %v4020 = vsel %vm3872, %v3720, -inf
        %v4021 = vrot.slane %v4020, 4
        %v4022 = vmax.f32 %v4020, %v4021
        %v4023 = vrot.slane %v4022, 2
        %v4024 = vmax.f32 %v4022, %v4023
        %v4025 = vrot.slane %v4024, 1
        %v4026 = vmax.f32 %v4024, %v4025
        %v4027 = vsel %vm3872, %v3719, -inf
        %v4028 = vrot.slane %v4027, 4
        %v4029 = vmax.f32 %v4027, %v4028
        %v4030 = vrot.slane %v4029, 2
        %v4031 = vmax.f32 %v4029, %v4030
        %v4032 = vrot.slane %v4031, 1
        %v4033 = vmax.f32 %v4031, %v4032
        %v4034 = vsel %vm3872, %v3721, -inf
        %v4035 = vrot.slane %v4034, 4
        %v4036 = vmax.f32 %v4034, %v4035
        %v4037 = vrot.slane %v4036, 2
        %v4038 = vmax.f32 %v4036, %v4037
        %v4039 = vrot.slane %v4038, 1
        %v4040 = vmax.f32 %v4038, %v4039
        %v4041 = vsel %vm3872, %v3729, -inf
        %v4042 = vrot.slane %v4041, 4
        %v4043 = vmax.f32 %v4041, %v4042
        %v4044 = vrot.slane %v4043, 2
        %v4045 = vmax.f32 %v4043, %v4044
        %v4046 = vrot.slane %v4045, 1
        %v4047 = vmax.f32 %v4045, %v4046
        %v4048 = vsel %vm3872, %v3737, -inf
        %v4049 = vrot.slane %v4048, 4
        %v4050 = vmax.f32 %v4048, %v4049
        %v4051 = vrot.slane %v4050, 2
        %v4052 = vmax.f32 %v4050, %v4051
        %v4053 = vrot.slane %v4052, 1
        %v4054 = vmax.f32 %v4052, %v4053
        %v4055 = vsel %vm3872, %v3736, -inf
        %v4056 = vrot.slane %v4055, 4
        %v4057 = vmax.f32 %v4055, %v4056
        %v4058 = vrot.slane %v4057, 2
        %v4059 = vmax.f32 %v4057, %v4058
        %v4060 = vrot.slane %v4059, 1
        %v4061 = vmax.f32 %v4059, %v4060
        %v4062 = vsel %vm3872, %v3738, -inf
        %v4063 = vrot.slane %v4062, 4
        %v4064 = vmax.f32 %v4062, %v4063
        %v4065 = vrot.slane %v4064, 2
        %v4066 = vmax.f32 %v4064, %v4065
        %v4067 = vrot.slane %v4066, 1
        %v4068 = vmax.f32 %v4066, %v4067
        %v4069 = vsel %vm3872, %v3746, -inf
        %v4070 = vrot.slane %v4069, 4
        %v4071 = vmax.f32 %v4069, %v4070
        %v4072 = vrot.slane %v4071, 2
        %v4073 = vmax.f32 %v4071, %v4072
        %v4074 = vrot.slane %v4073, 1
        %v4075 = vmax.f32 %v4073, %v4074
        %v4076 = vsel %vm3872, %v3754, -inf
        %v4077 = vrot.slane %v4076, 4
        %v4078 = vmax.f32 %v4076, %v4077
        %v4079 = vrot.slane %v4078, 2
        %v4080 = vmax.f32 %v4078, %v4079
        %v4081 = vrot.slane %v4080, 1
        %v4082 = vmax.f32 %v4080, %v4081
        %v4083 = vsel %vm3872, %v3753, -inf
        %v4084 = vrot.slane %v4083, 4
        %v4085 = vmax.f32 %v4083, %v4084
        %v4086 = vrot.slane %v4085, 2
        %v4087 = vmax.f32 %v4085, %v4086
        %v4088 = vrot.slane %v4087, 1
        %v4089 = vmax.f32 %v4087, %v4088
        %v4090 = vsel %vm3872, %v3755, -inf
        %v4091 = vrot.slane %v4090, 4
        %v4092 = vmax.f32 %v4090, %v4091
        %v4093 = vrot.slane %v4092, 2
        %v4094 = vmax.f32 %v4092, %v4093
        %v4095 = vrot.slane %v4094, 1
        %v4096 = vmax.f32 %v4094, %v4095
        %v4097 = vsel %vm3872, %v3763, -inf
        %v4098 = vrot.slane %v4097, 4
        %v4099 = vmax.f32 %v4097, %v4098
        %v4100 = vrot.slane %v4099, 2
        %v4101 = vmax.f32 %v4099, %v4100
        %v4102 = vrot.slane %v4101, 1
        %v4103 = vmax.f32 %v4101, %v4102
        %v4104 = vsel %vm3872, %v3771, -inf
        %v4105 = vrot.slane %v4104, 4
        %v4106 = vmax.f32 %v4104, %v4105
        %v4107 = vrot.slane %v4106, 2
        %v4108 = vmax.f32 %v4106, %v4107
        %v4109 = vrot.slane %v4108, 1
        %v4110 = vmax.f32 %v4108, %v4109
        %v4111 = vsel %vm3872, %v3770, -inf
        %v4112 = vrot.slane %v4111, 4
        %v4113 = vmax.f32 %v4111, %v4112
        %v4114 = vrot.slane %v4113, 2
        %v4115 = vmax.f32 %v4113, %v4114
        %v4116 = vrot.slane %v4115, 1
        %v4117 = vmax.f32 %v4115, %v4116
        %v4118 = vsel %vm3872, %v3772, -inf
        %v4119 = vrot.slane %v4118, 4
        %v4120 = vmax.f32 %v4118, %v4119
        %v4121 = vrot.slane %v4120, 2
        %v4122 = vmax.f32 %v4120, %v4121
        %v4123 = vrot.slane %v4122, 1
        %v4124 = vmax.f32 %v4122, %v4123
        %v4125 = vsel %vm3872, %v3780, -inf
        %v4126 = vrot.slane %v4125, 4
        %v4127 = vmax.f32 %v4125, %v4126
        %v4128 = vrot.slane %v4127, 2
        %v4129 = vmax.f32 %v4127, %v4128
        %v4130 = vrot.slane %v4129, 1
        %v4131 = vmax.f32 %v4129, %v4130
        %v4132 = vsel %vm3872, %v3788, -inf
        %v4133 = vrot.slane %v4132, 4
        %v4134 = vmax.f32 %v4132, %v4133
        %v4135 = vrot.slane %v4134, 2
        %v4136 = vmax.f32 %v4134, %v4135
        %v4137 = vrot.slane %v4136, 1
        %v4138 = vmax.f32 %v4136, %v4137
        %v4139 = vsel %vm3872, %v3787, -inf
        %v4140 = vrot.slane %v4139, 4
        %v4141 = vmax.f32 %v4139, %v4140
        %v4142 = vrot.slane %v4141, 2
        %v4143 = vmax.f32 %v4141, %v4142
        %v4144 = vrot.slane %v4143, 1
        %v4145 = vmax.f32 %v4143, %v4144
        %v4146 = vsel %vm3872, %v3789, -inf
        %v4147 = vrot.slane %v4146, 4
        %v4148 = vmax.f32 %v4146, %v4147
        %v4149 = vrot.slane %v4148, 2
        %v4150 = vmax.f32 %v4148, %v4149
        %v4151 = vrot.slane %v4150, 1
        %v4152 = vmax.f32 %v4150, %v4151
        %v4153 = vsel %vm3872, %v3797, -inf
        %v4154 = vrot.slane %v4153, 4
        %v4155 = vmax.f32 %v4153, %v4154
        %v4156 = vrot.slane %v4155, 2
        %v4157 = vmax.f32 %v4155, %v4156
        %v4158 = vrot.slane %v4157, 1
        %v4159 = vmax.f32 %v4157, %v4158
        %v4160 = vsel %vm3872, %v3805, -inf
        %v4161 = vrot.slane %v4160, 4
        %v4162 = vmax.f32 %v4160, %v4161
        %v4163 = vrot.slane %v4162, 2
        %v4164 = vmax.f32 %v4162, %v4163
        %v4165 = vrot.slane %v4164, 1
        %v4166 = vmax.f32 %v4164, %v4165
        %v4167 = vsel %vm3872, %v3804, -inf
        %v4168 = vrot.slane %v4167, 4
        %v4169 = vmax.f32 %v4167, %v4168
        %v4170 = vrot.slane %v4169, 2
        %v4171 = vmax.f32 %v4169, %v4170
        %v4172 = vrot.slane %v4171, 1
        %v4173 = vmax.f32 %v4171, %v4172
        %v4174 = vsel %vm3872, %v3806, -inf
        %v4175 = vrot.slane %v4174, 4
        %v4176 = vmax.f32 %v4174, %v4175
        %v4177 = vrot.slane %v4176, 2
        %v4178 = vmax.f32 %v4176, %v4177
        %v4179 = vrot.slane %v4178, 1
        %v4180 = vmax.f32 %v4178, %v4179
        %v4181 = vsel %vm3872, %v3814, -inf
        %v4182 = vrot.slane %v4181, 4
        %v4183 = vmax.f32 %v4181, %v4182
        %v4184 = vrot.slane %v4183, 2
        %v4185 = vmax.f32 %v4183, %v4184
        %v4186 = vrot.slane %v4185, 1
        %v4187 = vmax.f32 %v4185, %v4186
        %v4188 = vsel %vm3872, %v3822, -inf
        %v4189 = vrot.slane %v4188, 4
        %v4190 = vmax.f32 %v4188, %v4189
        %v4191 = vrot.slane %v4190, 2
        %v4192 = vmax.f32 %v4190, %v4191
        %v4193 = vrot.slane %v4192, 1
        %v4194 = vmax.f32 %v4192, %v4193
        %v4195 = vsel %vm3872, %v3821, -inf
        %v4196 = vrot.slane %v4195, 4
        %v4197 = vmax.f32 %v4195, %v4196
        %v4198 = vrot.slane %v4197, 2
        %v4199 = vmax.f32 %v4197, %v4198
        %v4200 = vrot.slane %v4199, 1
        %v4201 = vmax.f32 %v4199, %v4200
        %v4202 = vsel %vm3872, %v3823, -inf
        %v4203 = vrot.slane %v4202, 4
        %v4204 = vmax.f32 %v4202, %v4203
        %v4205 = vrot.slane %v4204, 2
        %v4206 = vmax.f32 %v4204, %v4205
        %v4207 = vrot.slane %v4206, 1
        %v4208 = vmax.f32 %v4206, %v4207
        %v4255 = vsel %vm3058, %v3886, %v3879
        %v4256 = vsel %vm3060, %v3893, %v4255
        %v4257 = vsel %vm3062, %v3900, %v4256
        %v4258 = vsel %vm3064, %v3907, %v4257
        %v4259 = vsel %vm3066, %v3914, %v4258
        %v4260 = vsel %vm3068, %v3921, %v4259
        %v4261 = vsel %vm3070, %v3928, %v4260
        %v4262 = vsel %vm3058, %v3942, %v3935
        %v4263 = vsel %vm3060, %v3949, %v4262
        %v4264 = vsel %vm3062, %v3956, %v4263
        %v4265 = vsel %vm3064, %v3963, %v4264
        %v4266 = vsel %vm3066, %v3970, %v4265
        %v4267 = vsel %vm3068, %v3977, %v4266
        %v4268 = vsel %vm3070, %v3984, %v4267
        %v4269 = vsel %vm3058, %v3998, %v3991
        %v4270 = vsel %vm3060, %v4005, %v4269
        %v4271 = vsel %vm3062, %v4012, %v4270
        %v4272 = vsel %vm3064, %v4019, %v4271
        %v4273 = vsel %vm3066, %v4026, %v4272
        %v4274 = vsel %vm3068, %v4033, %v4273
        %v4275 = vsel %vm3070, %v4040, %v4274
        %v4276 = vsel %vm3058, %v4054, %v4047
        %v4277 = vsel %vm3060, %v4061, %v4276
        %v4278 = vsel %vm3062, %v4068, %v4277
        %v4279 = vsel %vm3064, %v4075, %v4278
        %v4280 = vsel %vm3066, %v4082, %v4279
        %v4281 = vsel %vm3068, %v4089, %v4280
        %v4282 = vsel %vm3070, %v4096, %v4281
        %v4283 = vsel %vm3058, %v4110, %v4103
        %v4284 = vsel %vm3060, %v4117, %v4283
        %v4285 = vsel %vm3062, %v4124, %v4284
        %v4286 = vsel %vm3064, %v4131, %v4285
        %v4287 = vsel %vm3066, %v4138, %v4286
        %v4288 = vsel %vm3068, %v4145, %v4287
        %v4289 = vsel %vm3070, %v4152, %v4288
        %v4290 = vsel %vm3058, %v4166, %v4159
        %v4291 = vsel %vm3060, %v4173, %v4290
        %v4292 = vsel %vm3062, %v4180, %v4291
        %v4293 = vsel %vm3064, %v4187, %v4292
        %v4294 = vsel %vm3066, %v4194, %v4293
        %v4302 = vsel %vm3058, %v3893, %v3886
        %v4303 = vsel %vm3060, %v3900, %v4302
        %v4304 = vsel %vm3062, %v3907, %v4303
        %v4305 = vsel %vm3064, %v3914, %v4304
        %v4306 = vsel %vm3066, %v3921, %v4305
        %v4307 = vsel %vm3068, %v3928, %v4306
        %v4308 = vsel %vm3070, %v3935, %v4307
        %v4309 = vsel %vm3058, %v3949, %v3942
        %v4310 = vsel %vm3060, %v3956, %v4309
        %v4311 = vsel %vm3062, %v3963, %v4310
        %v4312 = vsel %vm3064, %v3970, %v4311
        %v4313 = vsel %vm3066, %v3977, %v4312
        %v4314 = vsel %vm3068, %v3984, %v4313
        %v4315 = vsel %vm3070, %v3991, %v4314
        %v4316 = vsel %vm3058, %v4005, %v3998
        %v4317 = vsel %vm3060, %v4012, %v4316
        %v4318 = vsel %vm3062, %v4019, %v4317
        %v4319 = vsel %vm3064, %v4026, %v4318
        %v4320 = vsel %vm3066, %v4033, %v4319
        %v4321 = vsel %vm3068, %v4040, %v4320
        %v4322 = vsel %vm3070, %v4047, %v4321
        %v4323 = vsel %vm3058, %v4061, %v4054
        %v4324 = vsel %vm3060, %v4068, %v4323
        %v4325 = vsel %vm3062, %v4075, %v4324
        %v4326 = vsel %vm3064, %v4082, %v4325
        %v4327 = vsel %vm3066, %v4089, %v4326
        %v4328 = vsel %vm3068, %v4096, %v4327
        %v4329 = vsel %vm3070, %v4103, %v4328
        %v4330 = vsel %vm3058, %v4117, %v4110
        %v4331 = vsel %vm3060, %v4124, %v4330
        %v4332 = vsel %vm3062, %v4131, %v4331
        %v4333 = vsel %vm3064, %v4138, %v4332
        %v4334 = vsel %vm3066, %v4145, %v4333
        %v4335 = vsel %vm3068, %v4152, %v4334
        %v4336 = vsel %vm3070, %v4159, %v4335
        %v4337 = vsel %vm3058, %v4173, %v4166
        %v4338 = vsel %vm3060, %v4180, %v4337
        %v4339 = vsel %vm3062, %v4187, %v4338
        %v4340 = vsel %vm3064, %v4194, %v4339
        %v4341 = vsel %vm3066, %v4201, %v4340
        %4342 = vrot.lane.b32.xlu0 %v4308, 64
        %v4343 = vpop.permute.xlu0 %4342
        %4344 = vrot.lane.b32.xlu0 %v4315, 64
        %v4345 = vpop.permute.xlu0 %4344
        %4346 = vrot.lane.b32.xlu0 %v4322, 64
        %v4347 = vpop.permute.xlu0 %4346
        %4348 = vrot.lane.b32.xlu0 %v4329, 64
        %v4349 = vpop.permute.xlu0 %4348
        %4350 = vrot.lane.b32.xlu0 %v4336, 64
        %v4351 = vpop.permute.xlu0 %4350
        %4352 = vrot.lane.b32.xlu0 %v4341, 64
        %v4353 = vpop.permute.xlu0 %4352
        %v4361 = vsel %vm3058, %v3900, %v3893
        %v4362 = vsel %vm3060, %v3907, %v4361
        %v4363 = vsel %vm3062, %v3914, %v4362
        %v4364 = vsel %vm3064, %v3921, %v4363
        %v4365 = vsel %vm3066, %v3928, %v4364
        %v4366 = vsel %vm3068, %v3935, %v4365
        %v4367 = vsel %vm3070, %v3942, %v4366
        %v4368 = vsel %vm3058, %v3956, %v3949
        %v4369 = vsel %vm3060, %v3963, %v4368
        %v4370 = vsel %vm3062, %v3970, %v4369
        %v4371 = vsel %vm3064, %v3977, %v4370
        %v4372 = vsel %vm3066, %v3984, %v4371
        %v4373 = vsel %vm3068, %v3991, %v4372
        %v4374 = vsel %vm3070, %v3998, %v4373
        %v4375 = vsel %vm3058, %v4012, %v4005
        %v4376 = vsel %vm3060, %v4019, %v4375
        %v4377 = vsel %vm3062, %v4026, %v4376
        %v4378 = vsel %vm3064, %v4033, %v4377
        %v4379 = vsel %vm3066, %v4040, %v4378
        %v4380 = vsel %vm3068, %v4047, %v4379
        %v4381 = vsel %vm3070, %v4054, %v4380
        %v4382 = vsel %vm3058, %v4068, %v4061
        %v4383 = vsel %vm3060, %v4075, %v4382
        %v4384 = vsel %vm3062, %v4082, %v4383
        %v4385 = vsel %vm3064, %v4089, %v4384
        %v4386 = vsel %vm3066, %v4096, %v4385
        %v4387 = vsel %vm3068, %v4103, %v4386
        %v4388 = vsel %vm3070, %v4110, %v4387
        %v4389 = vsel %vm3058, %v4124, %v4117
        %v4390 = vsel %vm3060, %v4131, %v4389
        %v4391 = vsel %vm3062, %v4138, %v4390
        %v4392 = vsel %vm3064, %v4145, %v4391
        %v4393 = vsel %vm3066, %v4152, %v4392
        %v4394 = vsel %vm3068, %v4159, %v4393
        %v4395 = vsel %vm3070, %v4166, %v4394
        %v4396 = vsel %vm3058, %v4180, %v4173
        %v4397 = vsel %vm3060, %v4187, %v4396
        %v4398 = vsel %vm3062, %v4194, %v4397
        %v4399 = vsel %vm3064, %v4201, %v4398
        %v4400 = vsel %vm3066, %v4208, %v4399
        %v4407 = vsel %vm3424, %v4261, %v4343
        %v4408 = vsel %vm3424, %v4268, %v4345
        %v4409 = vsel %vm3424, %v4275, %v4347
        %v4410 = vsel %vm3424, %v4282, %v4349
        %v4411 = vsel %vm3424, %v4289, %v4351
        %v4412 = vsel %vm3424, %v4294, %v4353
        %v4413 = vpack.c.bf16 %v4408, %v4407
        %v4414 = vpack.c.bf16 %v4374, %v4367
        %v4415 = vpack.c.bf16 %v4410, %v4409
        %v4416 = vpack.c.bf16 %v4388, %v4381
        %v4417 = vpack.c.bf16 %v4412, %v4411
        %v4418 = vpack.c.bf16 %v4400, %v4395
        %v4420 = vlaneseq
        %v4421 = vshrl.u32 %v4420, 7
        %v4422 = vsub.s32 0, %v4421
        %v4423 = vrot.slane %v746, %v4422
        %v4449 = vunpack.c.l.b16 %v722
        %v4450 = vunpack.c.l.b16 %v723
        %v4451 = vunpack.c.l.b16 %v724
        %v4452 = vunpack.c.l.b16 %v725
        %v4453 = vunpack.c.l.b16 %v726
        %v4454 = vunpack.c.l.b16 %v727
        %v4455 = vunpack.c.l.b16 %v728
        %v4456 = vunpack.c.l.b16 %v729
        %v4457 = vunpack.c.l.b16 %v730
        %v4458 = vunpack.c.l.b16 %v731
        %v4459 = vunpack.c.l.b16 %v732
        %v4460 = vunpack.c.l.b16 %v733
        %v4461 = vunpack.c.l.b16 %v734
        %v4462 = vunpack.c.l.b16 %v735
        %v4463 = vunpack.c.l.b16 %v736
        %v4464 = vunpack.c.l.b16 %v737
        %v4465 = vunpack.c.l.b16 %v738
        %v4466 = vunpack.c.l.b16 %v739
        %v4467 = vunpack.c.l.b16 %v740
        %v4468 = vunpack.c.l.b16 %v741
        %v4469 = vunpack.c.l.b16 %v742
        %v4470 = vunpack.c.l.b16 %v743
        %v4471 = vunpack.c.l.b16 %v744
        %v4472 = vunpack.c.l.b16 %v745
        %v4473 = vpack.c.b16 %v4450, %v4449
        %v4474 = vpack.c.b16 %v4452, %v4451
        %v4475 = vpack.c.b16 %v4454, %v4453
        %v4476 = vpack.c.b16 %v4456, %v4455
        %v4477 = vpack.c.b16 %v4458, %v4457
        %v4478 = vpack.c.b16 %v4460, %v4459
        %v4479 = vpack.c.b16 %v4462, %v4461
        %v4480 = vpack.c.b16 %v4464, %v4463
        %v4481 = vpack.c.b16 %v4466, %v4465
        %v4482 = vpack.c.b16 %v4468, %v4467
        %v4483 = vpack.c.b16 %v4470, %v4469
        %v4484 = vpack.c.b16 %v4472, %v4471
        %v4498 = vsel %vm3424, %v4414, 0
        %v4501 = vsel %vm3424, %v4416, 0
        %v4504 = vsel %vm3424, %v4418, 0
        %4506 = vmatprep.subr.bf16.mxu0 0
        %4507 = vmatpush1.bf16.msra.mxu0 %v4473
        %4508 = vmatprep.subr.bf16.mxu0 0
        %4509 = vmatpush1.bf16.msra.mxu0 %v4474
        %4510 = vmatprep.subr.bf16.mxu0 0
        %4511 = vmatpush1.bf16.msra.mxu0 %v4475
        %4512 = vmatprep.subr.bf16.mxu0 0
        %4513 = vmatpush1.bf16.msra.mxu0 %v4476
        %4514 = vmatprep.subr.bf16.mxu0 0
        %4515 = vmatpush1.bf16.msra.mxu0 %v4477
        %4516 = vmatprep.subr.bf16.mxu0 0
        %4517 = vmatpush1.bf16.msra.mxu0 %v4478
        %4518 = vmatprep.subr.bf16.mxu0 0
        %4519 = vmatpush1.bf16.msra.mxu0 %v4479
        %4520 = vmatprep.subr.bf16.mxu0 0
        %4521 = vmatpush1.bf16.msra.mxu0 %v4480
        %4522 = vmatprep.subr.bf16.mxu0 0
        %4523 = vmatpush1.bf16.msra.mxu0 %v4481
        %4524 = vmatprep.subr.bf16.mxu0 0
        %4525 = vmatpush1.bf16.msra.mxu0 %v4482
        %4526 = vmatprep.subr.bf16.mxu0 0
        %4527 = vmatpush1.bf16.msra.mxu0 %v4483
        %4528 = vmatprep.subr.bf16.mxu0 0
        %4529 = vmatpush1.bf16.msra.mxu0 %v4484
        %4530 = vmatprep.subr.bf16.mxu0 0
        %4531 = vmatpush1.bf16.msra.mxu0 0
        %4532 = vmatprep.subr.bf16.mxu0 0
        %4533 = vmatpush1.bf16.msra.mxu0 0
        %4534 = vmatprep.subr.bf16.mxu0 0
        %4535 = vmatpush1.bf16.msra.mxu0 0
        %4536 = vmatprep.subr.bf16.mxu0 0
        %4537 = vmatpush1.bf16.msra.mxu0 0
        %4538 = vmatprep.mubr.bf16.mxu0 %v4498
        %4539 = vmatmul.mubr.bf16.gmra.mrb[0].mxu0 %v4413
        %v4540 = vpop.f32.mrb[0].mxu0
        %v4541 = vadd.f32 %v4423, %v4540
        %v4542 = vpop.f32.mrb[0].mxu0
        %v4543 = vpop.f32.mrb[0].mxu0
        %v4544 = vadd.f32 %v4423, %v4543
        %v4545 = vpop.f32.mrb[0].mxu0
        %4546 = vmatprep.mubr.bf16.mxu0 %v4501
        %4547 = vmatmul.mubr.bf16.gmra.mrb[0].mxu0 %v4415
        %v4548 = vpop.f32.mrb[0].mxu0
        %v4549 = vadd.f32 %v4423, %v4548
        %v4550 = vpop.f32.mrb[0].mxu0
        %v4551 = vpop.f32.mrb[0].mxu0
        %v4552 = vadd.f32 %v4423, %v4551
        %v4553 = vpop.f32.mrb[0].mxu0
        %4554 = vmatprep.mubr.bf16.mxu0 %v4504
        %4555 = vmatmul.mubr.bf16.gmra.mrb[0].mxu0 %v4417
        %v4556 = vpop.f32.mrb[0].mxu0
        %v4557 = vadd.f32 %v4423, %v4556
        %v4558 = vpop.f32.mrb[0].mxu0
        %v4559 = vpop.f32.mrb[0].mxu0
        %v4560 = vadd.f32 %v4423, %v4559
        %v4561 = vpop.f32.mrb[0].mxu0
        %4562 = vdwg.mxu0
        %v4563 = vmax.f32 %v4541, 0.0
        %v4564 = vmax.f32 %v4544, 0.0
        %v4565 = vmax.f32 %v4549, 0.0
        %v4566 = vmax.f32 %v4552, 0.0
        %v4567 = vmax.f32 %v4557, 0.0
        %v4568 = vmax.f32 %v4560, 0.0
        %v4575 = vcombine.high %v4563, %v4563
        %v4577 = vunpack.c.l.s4 1983009808
        %v4578 = vunpack.c.0.s8 %v4577
        %v4579 = vlaneseq
        %v4580 = vshrl.u32 %v4579, 7
        %v4581 = vsub.s32 %v4578, %v4580
        %v4582 = vrot.slane %v4563, %v4581
        %v4584 = vunpack.c.l.s4 1983009808
        %v4585 = vunpack.c.0.s8 %v4584
        %v4586 = vlaneseq
        %v4587 = vshrl.u32 %v4586, 7
        %v4588 = vsub.s32 %v4585, %v4587
        %v4589 = vrot.slane %v4575, %v4588
        %v4590 = vcombine.high %v4582, %v4582
        %v4591 = vcombine.high %v4589, %v4589
        %v4592 = vcombine.high %v4564, %v4564
        %v4594 = vunpack.c.l.s4 1983009808
        %v4595 = vunpack.c.0.s8 %v4594
        %v4596 = vlaneseq
        %v4597 = vshrl.u32 %v4596, 7
        %v4598 = vsub.s32 %v4595, %v4597
        %v4599 = vrot.slane %v4564, %v4598
        %v4601 = vunpack.c.l.s4 1983009808
        %v4602 = vunpack.c.0.s8 %v4601
        %v4603 = vlaneseq
        %v4604 = vshrl.u32 %v4603, 7
        %v4605 = vsub.s32 %v4602, %v4604
        %v4606 = vrot.slane %v4592, %v4605
        %v4607 = vcombine.high %v4599, %v4599
        %v4608 = vcombine.high %v4606, %v4606
        %v4609 = vcombine.high %v4565, %v4565
        %v4611 = vunpack.c.l.s4 1983009808
        %v4612 = vunpack.c.0.s8 %v4611
        %v4613 = vlaneseq
        %v4614 = vshrl.u32 %v4613, 7
        %v4615 = vsub.s32 %v4612, %v4614
        %v4616 = vrot.slane %v4565, %v4615
        %v4618 = vunpack.c.l.s4 1983009808
        %v4619 = vunpack.c.0.s8 %v4618
        %v4620 = vlaneseq
        %v4621 = vshrl.u32 %v4620, 7
        %v4622 = vsub.s32 %v4619, %v4621
        %v4623 = vrot.slane %v4609, %v4622
        %v4624 = vcombine.high %v4616, %v4616
        %v4625 = vcombine.high %v4623, %v4623
        %v4626 = vcombine.high %v4566, %v4566
        %v4628 = vunpack.c.l.s4 1983009808
        %v4629 = vunpack.c.0.s8 %v4628
        %v4630 = vlaneseq
        %v4631 = vshrl.u32 %v4630, 7
        %v4632 = vsub.s32 %v4629, %v4631
        %v4633 = vrot.slane %v4566, %v4632
        %v4635 = vunpack.c.l.s4 1983009808
        %v4636 = vunpack.c.0.s8 %v4635
        %v4637 = vlaneseq
        %v4638 = vshrl.u32 %v4637, 7
        %v4639 = vsub.s32 %v4636, %v4638
        %v4640 = vrot.slane %v4626, %v4639
        %v4641 = vcombine.high %v4633, %v4633
        %v4642 = vcombine.high %v4640, %v4640
        %v4643 = vcombine.high %v4567, %v4567
        %v4645 = vunpack.c.l.s4 1983009808
        %v4646 = vunpack.c.0.s8 %v4645
        %v4647 = vlaneseq
        %v4648 = vshrl.u32 %v4647, 7
        %v4649 = vsub.s32 %v4646, %v4648
        %v4650 = vrot.slane %v4567, %v4649
        %v4652 = vunpack.c.l.s4 1983009808
        %v4653 = vunpack.c.0.s8 %v4652
        %v4654 = vlaneseq
        %v4655 = vshrl.u32 %v4654, 7
        %v4656 = vsub.s32 %v4653, %v4655
        %v4657 = vrot.slane %v4643, %v4656
        %v4658 = vcombine.high %v4650, %v4650
        %v4659 = vcombine.high %v4657, %v4657
        %v4660 = vcombine.high %v4568, %v4568
        %v4662 = vunpack.c.l.s4 1983009808
        %v4663 = vunpack.c.0.s8 %v4662
        %v4664 = vlaneseq
        %v4665 = vshrl.u32 %v4664, 7
        %v4666 = vsub.s32 %v4663, %v4665
        %v4667 = vrot.slane %v4568, %v4666
        %v4669 = vunpack.c.l.s4 1983009808
        %v4670 = vunpack.c.0.s8 %v4669
        %v4671 = vlaneseq
        %v4672 = vshrl.u32 %v4671, 7
        %v4673 = vsub.s32 %v4670, %v4672
        %v4674 = vrot.slane %v4660, %v4673
        %v4675 = vcombine.high %v4667, %v4667
        %vm4699 = vcmask 1041408
        %v4700 = vsel %vm4699, %v4582, -inf
        %v4701 = vrot.slane %v4700, 4
        %v4702 = vmax.f32 %v4700, %v4701
        %v4703 = vrot.slane %v4702, 2
        %v4704 = vmax.f32 %v4702, %v4703
        %v4705 = vrot.slane %v4704, 1
        %v4706 = vmax.f32 %v4704, %v4705
        %v4707 = vsel %vm4699, %v4590, -inf
        %v4708 = vrot.slane %v4707, 4
        %v4709 = vmax.f32 %v4707, %v4708
        %v4710 = vrot.slane %v4709, 2
        %v4711 = vmax.f32 %v4709, %v4710
        %v4712 = vrot.slane %v4711, 1
        %v4713 = vmax.f32 %v4711, %v4712
        %v4714 = vsel %vm4699, %v4589, -inf
        %v4715 = vrot.slane %v4714, 4
        %v4716 = vmax.f32 %v4714, %v4715
        %v4717 = vrot.slane %v4716, 2
        %v4718 = vmax.f32 %v4716, %v4717
        %v4719 = vrot.slane %v4718, 1
        %v4720 = vmax.f32 %v4718, %v4719
        %v4721 = vsel %vm4699, %v4591, -inf
        %v4722 = vrot.slane %v4721, 4
        %v4723 = vmax.f32 %v4721, %v4722
        %v4724 = vrot.slane %v4723, 2
        %v4725 = vmax.f32 %v4723, %v4724
        %v4726 = vrot.slane %v4725, 1
        %v4727 = vmax.f32 %v4725, %v4726
        %v4728 = vsel %vm4699, %v4599, -inf
        %v4729 = vrot.slane %v4728, 4
        %v4730 = vmax.f32 %v4728, %v4729
        %v4731 = vrot.slane %v4730, 2
        %v4732 = vmax.f32 %v4730, %v4731
        %v4733 = vrot.slane %v4732, 1
        %v4734 = vmax.f32 %v4732, %v4733
        %v4735 = vsel %vm4699, %v4607, -inf
        %v4736 = vrot.slane %v4735, 4
        %v4737 = vmax.f32 %v4735, %v4736
        %v4738 = vrot.slane %v4737, 2
        %v4739 = vmax.f32 %v4737, %v4738
        %v4740 = vrot.slane %v4739, 1
        %v4741 = vmax.f32 %v4739, %v4740
        %v4742 = vsel %vm4699, %v4606, -inf
        %v4743 = vrot.slane %v4742, 4
        %v4744 = vmax.f32 %v4742, %v4743
        %v4745 = vrot.slane %v4744, 2
        %v4746 = vmax.f32 %v4744, %v4745
        %v4747 = vrot.slane %v4746, 1
        %v4748 = vmax.f32 %v4746, %v4747
        %v4749 = vsel %vm4699, %v4608, -inf
        %v4750 = vrot.slane %v4749, 4
        %v4751 = vmax.f32 %v4749, %v4750
        %v4752 = vrot.slane %v4751, 2
        %v4753 = vmax.f32 %v4751, %v4752
        %v4754 = vrot.slane %v4753, 1
        %v4755 = vmax.f32 %v4753, %v4754
        %v4756 = vsel %vm4699, %v4616, -inf
        %v4757 = vrot.slane %v4756, 4
        %v4758 = vmax.f32 %v4756, %v4757
        %v4759 = vrot.slane %v4758, 2
        %v4760 = vmax.f32 %v4758, %v4759
        %v4761 = vrot.slane %v4760, 1
        %v4762 = vmax.f32 %v4760, %v4761
        %v4763 = vsel %vm4699, %v4624, -inf
        %v4764 = vrot.slane %v4763, 4
        %v4765 = vmax.f32 %v4763, %v4764
        %v4766 = vrot.slane %v4765, 2
        %v4767 = vmax.f32 %v4765, %v4766
        %v4768 = vrot.slane %v4767, 1
        %v4769 = vmax.f32 %v4767, %v4768
        %v4770 = vsel %vm4699, %v4623, -inf
        %v4771 = vrot.slane %v4770, 4
        %v4772 = vmax.f32 %v4770, %v4771
        %v4773 = vrot.slane %v4772, 2
        %v4774 = vmax.f32 %v4772, %v4773
        %v4775 = vrot.slane %v4774, 1
        %v4776 = vmax.f32 %v4774, %v4775
        %v4777 = vsel %vm4699, %v4625, -inf
        %v4778 = vrot.slane %v4777, 4
        %v4779 = vmax.f32 %v4777, %v4778
        %v4780 = vrot.slane %v4779, 2
        %v4781 = vmax.f32 %v4779, %v4780
        %v4782 = vrot.slane %v4781, 1
        %v4783 = vmax.f32 %v4781, %v4782
        %v4784 = vsel %vm4699, %v4633, -inf
        %v4785 = vrot.slane %v4784, 4
        %v4786 = vmax.f32 %v4784, %v4785
        %v4787 = vrot.slane %v4786, 2
        %v4788 = vmax.f32 %v4786, %v4787
        %v4789 = vrot.slane %v4788, 1
        %v4790 = vmax.f32 %v4788, %v4789
        %v4791 = vsel %vm4699, %v4641, -inf
        %v4792 = vrot.slane %v4791, 4
        %v4793 = vmax.f32 %v4791, %v4792
        %v4794 = vrot.slane %v4793, 2
        %v4795 = vmax.f32 %v4793, %v4794
        %v4796 = vrot.slane %v4795, 1
        %v4797 = vmax.f32 %v4795, %v4796
        %v4798 = vsel %vm4699, %v4640, -inf
        %v4799 = vrot.slane %v4798, 4
        %v4800 = vmax.f32 %v4798, %v4799
        %v4801 = vrot.slane %v4800, 2
        %v4802 = vmax.f32 %v4800, %v4801
        %v4803 = vrot.slane %v4802, 1
        %v4804 = vmax.f32 %v4802, %v4803
        %v4805 = vsel %vm4699, %v4642, -inf
        %v4806 = vrot.slane %v4805, 4
        %v4807 = vmax.f32 %v4805, %v4806
        %v4808 = vrot.slane %v4807, 2
        %v4809 = vmax.f32 %v4807, %v4808
        %v4810 = vrot.slane %v4809, 1
        %v4811 = vmax.f32 %v4809, %v4810
        %v4812 = vsel %vm4699, %v4650, -inf
        %v4813 = vrot.slane %v4812, 4
        %v4814 = vmax.f32 %v4812, %v4813
        %v4815 = vrot.slane %v4814, 2
        %v4816 = vmax.f32 %v4814, %v4815
        %v4817 = vrot.slane %v4816, 1
        %v4818 = vmax.f32 %v4816, %v4817
        %v4819 = vsel %vm4699, %v4658, -inf
        %v4820 = vrot.slane %v4819, 4
        %v4821 = vmax.f32 %v4819, %v4820
        %v4822 = vrot.slane %v4821, 2
        %v4823 = vmax.f32 %v4821, %v4822
        %v4824 = vrot.slane %v4823, 1
        %v4825 = vmax.f32 %v4823, %v4824
        %v4826 = vsel %vm4699, %v4657, -inf
        %v4827 = vrot.slane %v4826, 4
        %v4828 = vmax.f32 %v4826, %v4827
        %v4829 = vrot.slane %v4828, 2
        %v4830 = vmax.f32 %v4828, %v4829
        %v4831 = vrot.slane %v4830, 1
        %v4832 = vmax.f32 %v4830, %v4831
        %v4833 = vsel %vm4699, %v4659, -inf
        %v4834 = vrot.slane %v4833, 4
        %v4835 = vmax.f32 %v4833, %v4834
        %v4836 = vrot.slane %v4835, 2
        %v4837 = vmax.f32 %v4835, %v4836
        %v4838 = vrot.slane %v4837, 1
        %v4839 = vmax.f32 %v4837, %v4838
        %v4840 = vsel %vm4699, %v4667, -inf
        %v4841 = vrot.slane %v4840, 4
        %v4842 = vmax.f32 %v4840, %v4841
        %v4843 = vrot.slane %v4842, 2
        %v4844 = vmax.f32 %v4842, %v4843
        %v4845 = vrot.slane %v4844, 1
        %v4846 = vmax.f32 %v4844, %v4845
        %v4847 = vsel %vm4699, %v4675, -inf
        %v4848 = vrot.slane %v4847, 4
        %v4849 = vmax.f32 %v4847, %v4848
        %v4850 = vrot.slane %v4849, 2
        %v4851 = vmax.f32 %v4849, %v4850
        %v4852 = vrot.slane %v4851, 1
        %v4853 = vmax.f32 %v4851, %v4852
        %v4854 = vsel %vm4699, %v4674, -inf
        %v4855 = vrot.slane %v4854, 4
        %v4856 = vmax.f32 %v4854, %v4855
        %v4857 = vrot.slane %v4856, 2
        %v4858 = vmax.f32 %v4856, %v4857
        %v4859 = vrot.slane %v4858, 1
        %v4860 = vmax.f32 %v4858, %v4859
        %v4882 = vsel %vm3058, %v4713, %v4706
        %v4883 = vsel %vm3060, %v4720, %v4882
        %v4884 = vsel %vm3062, %v4727, %v4883
        %v4885 = vsel %vm3064, %v4734, %v4884
        %v4886 = vsel %vm3066, %v4741, %v4885
        %v4887 = vsel %vm3068, %v4748, %v4886
        %v4888 = vsel %vm3070, %v4755, %v4887
        %v4889 = vsel %vm3058, %v4769, %v4762
        %v4890 = vsel %vm3060, %v4776, %v4889
        %v4891 = vsel %vm3062, %v4783, %v4890
        %v4892 = vsel %vm3064, %v4790, %v4891
        %v4893 = vsel %vm3066, %v4797, %v4892
        %v4894 = vsel %vm3068, %v4804, %v4893
        %v4895 = vsel %vm3070, %v4811, %v4894
        %v4896 = vsel %vm3058, %v4825, %v4818
        %v4897 = vsel %vm3060, %v4832, %v4896
        %v4898 = vsel %vm3062, %v4839, %v4897
        %v4899 = vsel %vm3064, %v4846, %v4898
        %v4904 = vsel %vm3058, %v4720, %v4713
        %v4905 = vsel %vm3060, %v4727, %v4904
        %v4906 = vsel %vm3062, %v4734, %v4905
        %v4907 = vsel %vm3064, %v4741, %v4906
        %v4908 = vsel %vm3066, %v4748, %v4907
        %v4909 = vsel %vm3068, %v4755, %v4908
        %v4910 = vsel %vm3070, %v4762, %v4909
        %v4911 = vsel %vm3058, %v4776, %v4769
        %v4912 = vsel %vm3060, %v4783, %v4911
        %v4913 = vsel %vm3062, %v4790, %v4912
        %v4914 = vsel %vm3064, %v4797, %v4913
        %v4915 = vsel %vm3066, %v4804, %v4914
        %v4916 = vsel %vm3068, %v4811, %v4915
        %v4917 = vsel %vm3070, %v4818, %v4916
        %v4918 = vsel %vm3058, %v4832, %v4825
        %v4919 = vsel %vm3060, %v4839, %v4918
        %v4920 = vsel %vm3062, %v4846, %v4919
        %v4921 = vsel %vm3064, %v4853, %v4920
        %v4926 = vsel %vm3058, %v4727, %v4720
        %v4927 = vsel %vm3060, %v4734, %v4926
        %v4928 = vsel %vm3062, %v4741, %v4927
        %v4929 = vsel %vm3064, %v4748, %v4928
        %v4930 = vsel %vm3066, %v4755, %v4929
        %v4931 = vsel %vm3068, %v4762, %v4930
        %v4932 = vsel %vm3070, %v4769, %v4931
        %v4933 = vsel %vm3058, %v4783, %v4776
        %v4934 = vsel %vm3060, %v4790, %v4933
        %v4935 = vsel %vm3062, %v4797, %v4934
        %v4936 = vsel %vm3064, %v4804, %v4935
        %v4937 = vsel %vm3066, %v4811, %v4936
        %v4938 = vsel %vm3068, %v4818, %v4937
        %v4939 = vsel %vm3070, %v4825, %v4938
        %v4940 = vsel %vm3058, %v4839, %v4832
        %v4941 = vsel %vm3060, %v4846, %v4940
        %v4942 = vsel %vm3062, %v4853, %v4941
        %v4943 = vsel %vm3064, %v4860, %v4942
        %v4947 = vpack.c.bf16 %v4895, %v4888
        %v4948 = vpack.c.bf16 %v4917, %v4910
        %v4949 = vpack.c.bf16 %v4939, %v4932
        %v4950 = vpack.c.bf16 %v4899, %v4899
        %v4951 = vpack.c.bf16 %v4921, %v4921
        %v4952 = vpack.c.bf16 %v4943, %v4943
        %v4954 = vlaneseq
        %v4955 = vshrl.u32 %v4954, 7
        %v4956 = vsub.s32 0, %v4955
        %v4957 = vrot.slane %v795, %v4956
        %v4958 = vlaneseq
        %v4959 = vshrl.u32 %v4958, 7
        %v4960 = vsub.s32 1, %v4959
        %v4961 = vrot.slane %v795, %v4960
        %v5012 = vunpack.c.l.b16 %v747
        %v5013 = vunpack.c.h.b16 %v747
        %v5014 = vunpack.c.l.b16 %v748
        %v5015 = vunpack.c.h.b16 %v748
        %v5016 = vunpack.c.l.b16 %v749
        %v5017 = vunpack.c.h.b16 %v749
        %v5018 = vunpack.c.l.b16 %v750
        %v5019 = vunpack.c.h.b16 %v750
        %v5020 = vunpack.c.l.b16 %v751
        %v5021 = vunpack.c.h.b16 %v751
        %v5022 = vunpack.c.l.b16 %v752
        %v5023 = vunpack.c.h.b16 %v752
        %v5024 = vunpack.c.l.b16 %v753
        %v5025 = vunpack.c.h.b16 %v753
        %v5026 = vunpack.c.l.b16 %v754
        %v5027 = vunpack.c.h.b16 %v754
        %v5028 = vunpack.c.l.b16 %v755
        %v5029 = vunpack.c.h.b16 %v755
        %v5030 = vunpack.c.l.b16 %v756
        %v5031 = vunpack.c.h.b16 %v756
        %v5032 = vunpack.c.l.b16 %v757
        %v5033 = vunpack.c.h.b16 %v757
        %v5034 = vunpack.c.l.b16 %v758
        %v5035 = vunpack.c.h.b16 %v758
        %v5036 = vunpack.c.l.b16 %v759
        %v5037 = vunpack.c.h.b16 %v759
        %v5038 = vunpack.c.l.b16 %v760
        %v5039 = vunpack.c.h.b16 %v760
        %v5040 = vunpack.c.l.b16 %v761
        %v5041 = vunpack.c.h.b16 %v761
        %v5042 = vunpack.c.l.b16 %v762
        %v5043 = vunpack.c.h.b16 %v762
        %v5044 = vunpack.c.l.b16 %v763
        %v5045 = vunpack.c.h.b16 %v763
        %v5046 = vunpack.c.l.b16 %v764
        %v5047 = vunpack.c.h.b16 %v764
        %v5048 = vunpack.c.l.b16 %v765
        %v5049 = vunpack.c.h.b16 %v765
        %v5050 = vunpack.c.l.b16 %v766
        %v5051 = vunpack.c.h.b16 %v766
        %v5052 = vunpack.c.l.b16 %v767
        %v5053 = vunpack.c.h.b16 %v767
        %v5054 = vunpack.c.l.b16 %v768
        %v5055 = vunpack.c.h.b16 %v768
        %v5056 = vunpack.c.l.b16 %v769
        %v5057 = vunpack.c.h.b16 %v769
        %v5058 = vunpack.c.l.b16 %v770
        %v5059 = vunpack.c.h.b16 %v770
        %v5060 = vunpack.c.l.b16 %v771
        %v5061 = vunpack.c.h.b16 %v771
        %v5062 = vunpack.c.l.b16 %v772
        %v5063 = vunpack.c.h.b16 %v772
        %v5064 = vunpack.c.l.b16 %v773
        %v5065 = vunpack.c.h.b16 %v773
        %v5066 = vunpack.c.l.b16 %v774
        %v5067 = vunpack.c.h.b16 %v774
        %v5068 = vunpack.c.l.b16 %v775
        %v5069 = vunpack.c.h.b16 %v775
        %v5070 = vunpack.c.l.b16 %v776
        %v5071 = vunpack.c.h.b16 %v776
        %v5072 = vunpack.c.l.b16 %v777
        %v5073 = vunpack.c.h.b16 %v777
        %v5074 = vunpack.c.l.b16 %v778
        %v5075 = vunpack.c.h.b16 %v778
        %v5076 = vunpack.c.l.b16 %v779
        %v5077 = vunpack.c.h.b16 %v779
        %v5078 = vunpack.c.l.b16 %v780
        %v5079 = vunpack.c.h.b16 %v780
        %v5080 = vunpack.c.l.b16 %v781
        %v5081 = vunpack.c.h.b16 %v781
        %v5082 = vunpack.c.l.b16 %v782
        %v5083 = vunpack.c.h.b16 %v782
        %v5084 = vunpack.c.l.b16 %v783
        %v5085 = vunpack.c.h.b16 %v783
        %v5086 = vunpack.c.l.b16 %v784
        %v5087 = vunpack.c.h.b16 %v784
        %v5088 = vunpack.c.l.b16 %v785
        %v5089 = vunpack.c.h.b16 %v785
        %v5090 = vunpack.c.l.b16 %v786
        %v5091 = vunpack.c.h.b16 %v786
        %v5092 = vunpack.c.l.b16 %v787
        %v5093 = vunpack.c.h.b16 %v787
        %v5094 = vunpack.c.l.b16 %v788
        %v5095 = vunpack.c.h.b16 %v788
        %v5096 = vunpack.c.l.b16 %v789
        %v5097 = vunpack.c.h.b16 %v789
        %v5098 = vunpack.c.l.b16 %v790
        %v5099 = vunpack.c.h.b16 %v790
        %v5100 = vunpack.c.l.b16 %v791
        %v5101 = vunpack.c.h.b16 %v791
        %v5102 = vunpack.c.l.b16 %v792
        %v5103 = vunpack.c.h.b16 %v792
        %v5104 = vunpack.c.l.b16 %v793
        %v5105 = vunpack.c.h.b16 %v793
        %v5106 = vunpack.c.l.b16 %v794
        %v5107 = vunpack.c.h.b16 %v794
        %v5108 = vpack.c.b16 %v5014, %v5012
        %v5109 = vpack.c.b16 %v5015, %v5013
        %v5110 = vpack.c.b16 %v5018, %v5016
        %v5111 = vpack.c.b16 %v5019, %v5017
        %v5112 = vpack.c.b16 %v5022, %v5020
        %v5113 = vpack.c.b16 %v5023, %v5021
        %v5114 = vpack.c.b16 %v5026, %v5024
        %v5115 = vpack.c.b16 %v5027, %v5025
        %v5116 = vpack.c.b16 %v5030, %v5028
        %v5117 = vpack.c.b16 %v5031, %v5029
        %v5118 = vpack.c.b16 %v5034, %v5032
        %v5119 = vpack.c.b16 %v5035, %v5033
        %v5120 = vpack.c.b16 %v5038, %v5036
        %v5121 = vpack.c.b16 %v5039, %v5037
        %v5122 = vpack.c.b16 %v5042, %v5040
        %v5123 = vpack.c.b16 %v5043, %v5041
        %v5124 = vpack.c.b16 %v5046, %v5044
        %v5125 = vpack.c.b16 %v5047, %v5045
        %v5126 = vpack.c.b16 %v5050, %v5048
        %v5127 = vpack.c.b16 %v5051, %v5049
        %v5128 = vpack.c.b16 %v5054, %v5052
        %v5129 = vpack.c.b16 %v5055, %v5053
        %v5130 = vpack.c.b16 %v5058, %v5056
        %v5131 = vpack.c.b16 %v5059, %v5057
        %v5132 = vpack.c.b16 %v5062, %v5060
        %v5133 = vpack.c.b16 %v5063, %v5061
        %v5134 = vpack.c.b16 %v5066, %v5064
        %v5135 = vpack.c.b16 %v5067, %v5065
        %v5136 = vpack.c.b16 %v5070, %v5068
        %v5137 = vpack.c.b16 %v5071, %v5069
        %v5138 = vpack.c.b16 %v5074, %v5072
        %v5139 = vpack.c.b16 %v5075, %v5073
        %v5140 = vpack.c.b16 %v5078, %v5076
        %v5141 = vpack.c.b16 %v5079, %v5077
        %v5142 = vpack.c.b16 %v5082, %v5080
        %v5143 = vpack.c.b16 %v5083, %v5081
        %v5144 = vpack.c.b16 %v5086, %v5084
        %v5145 = vpack.c.b16 %v5087, %v5085
        %v5146 = vpack.c.b16 %v5090, %v5088
        %v5147 = vpack.c.b16 %v5091, %v5089
        %v5148 = vpack.c.b16 %v5094, %v5092
        %v5149 = vpack.c.b16 %v5095, %v5093
        %v5150 = vpack.c.b16 %v5098, %v5096
        %v5151 = vpack.c.b16 %v5099, %v5097
        %v5152 = vpack.c.b16 %v5102, %v5100
        %v5153 = vpack.c.b16 %v5103, %v5101
        %v5154 = vpack.c.b16 %v5106, %v5104
        %v5155 = vpack.c.b16 %v5107, %v5105
        %5204 = vmatprep.subr.bf16.mxu0 %v5109
        %5205 = vmatpush1.bf16.msra.mxu0 %v5108
        %5206 = vmatprep.subr.bf16.mxu0 %v5111
        %5207 = vmatpush1.bf16.msra.mxu0 %v5110
        %5208 = vmatprep.subr.bf16.mxu0 %v5113
        %5209 = vmatpush1.bf16.msra.mxu0 %v5112
        %5210 = vmatprep.subr.bf16.mxu0 %v5115
        %5211 = vmatpush1.bf16.msra.mxu0 %v5114
        %5212 = vmatprep.subr.bf16.mxu0 %v5117
        %5213 = vmatpush1.bf16.msra.mxu0 %v5116
        %5214 = vmatprep.subr.bf16.mxu0 %v5119
        %5215 = vmatpush1.bf16.msra.mxu0 %v5118
        %5216 = vmatprep.subr.bf16.mxu0 %v5121
        %5217 = vmatpush1.bf16.msra.mxu0 %v5120
        %5218 = vmatprep.subr.bf16.mxu0 %v5123
        %5219 = vmatpush1.bf16.msra.mxu0 %v5122
        %5220 = vmatprep.subr.bf16.mxu0 %v5125
        %5221 = vmatpush1.bf16.msra.mxu0 %v5124
        %5222 = vmatprep.subr.bf16.mxu0 %v5127
        %5223 = vmatpush1.bf16.msra.mxu0 %v5126
        %5224 = vmatprep.subr.bf16.mxu0 %v5129
        %5225 = vmatpush1.bf16.msra.mxu0 %v5128
        %5226 = vmatprep.subr.bf16.mxu0 %v5131
        %5227 = vmatpush1.bf16.msra.mxu0 %v5130
        %5228 = vmatprep.subr.bf16.mxu0 %v5133
        %5229 = vmatpush1.bf16.msra.mxu0 %v5132
        %5230 = vmatprep.subr.bf16.mxu0 %v5135
        %5231 = vmatpush1.bf16.msra.mxu0 %v5134
        %5232 = vmatprep.subr.bf16.mxu0 %v5137
        %5233 = vmatpush1.bf16.msra.mxu0 %v5136
        %5234 = vmatprep.subr.bf16.mxu0 %v5139
        %5235 = vmatpush1.bf16.msra.mxu0 %v5138
        %5236 = vmatprep.mubr.bf16.mxu0 %v4948
        %5237 = vmatmul.mubr.bf16.gmra.mrb[0].mxu0 %v4947
        %v5238 = vpop.f32.mrb[0].mxu0
        %v5239 = vadd.f32 %v4957, %v5238
        %v5240 = vpop.f32.mrb[0].mxu0
        %v5241 = vadd.f32 %v4961, %v5240
        %v5242 = vpop.f32.mrb[0].mxu0
        %v5243 = vadd.f32 %v4957, %v5242
        %v5244 = vpop.f32.mrb[0].mxu0
        %v5245 = vadd.f32 %v4961, %v5244
        %5246 = vmatprep.mubr.bf16.mxu0 %v4951
        %5247 = vmatmul.mubr.bf16.gmra.mrb[0].mxu0 %v4950
        %v5248 = vpop.f32.mrb[0].mxu0
        %v5249 = vadd.f32 %v4957, %v5248
        %v5250 = vpop.f32.mrb[0].mxu0
        %v5251 = vadd.f32 %v4961, %v5250
        %v5252 = vpop.f32.mrb[0].mxu0
        %v5253 = vpop.f32.mrb[0].mxu0
        %5254 = vdwg.mxu0
        %5255 = vmatprep.subr.bf16.mxu0 %v5141
        %5256 = vmatpush1.bf16.msra.mxu0 %v5140
        %5257 = vmatprep.subr.bf16.mxu0 %v5143
        %5258 = vmatpush1.bf16.msra.mxu0 %v5142
        %5259 = vmatprep.subr.bf16.mxu0 %v5145
        %5260 = vmatpush1.bf16.msra.mxu0 %v5144
        %5261 = vmatprep.subr.bf16.mxu0 %v5147
        %5262 = vmatpush1.bf16.msra.mxu0 %v5146
        %5263 = vmatprep.subr.bf16.mxu0 %v5149
        %5264 = vmatpush1.bf16.msra.mxu0 %v5148
        %5265 = vmatprep.subr.bf16.mxu0 %v5151
        %5266 = vmatpush1.bf16.msra.mxu0 %v5150
        %5267 = vmatprep.subr.bf16.mxu0 %v5153
        %5268 = vmatpush1.bf16.msra.mxu0 %v5152
        %5269 = vmatprep.subr.bf16.mxu0 %v5155
        %5270 = vmatpush1.bf16.msra.mxu0 %v5154
        %5271 = vmatprep.subr.bf16.mxu0 0
        %5272 = vmatpush1.bf16.msra.mxu0 0
        %5273 = vmatprep.subr.bf16.mxu0 0
        %5274 = vmatpush1.bf16.msra.mxu0 0
        %5275 = vmatprep.subr.bf16.mxu0 0
        %5276 = vmatpush1.bf16.msra.mxu0 0
        %5277 = vmatprep.subr.bf16.mxu0 0
        %5278 = vmatpush1.bf16.msra.mxu0 0
        %5279 = vmatprep.subr.bf16.mxu0 0
        %5280 = vmatpush1.bf16.msra.mxu0 0
        %5281 = vmatprep.subr.bf16.mxu0 0
        %5282 = vmatpush1.bf16.msra.mxu0 0
        %5283 = vmatprep.subr.bf16.mxu0 0
        %5284 = vmatpush1.bf16.msra.mxu0 0
        %5285 = vmatprep.subr.bf16.mxu0 0
        %5286 = vmatpush1.bf16.msra.mxu0 0
        %5287 = vmatprep.mubr.bf16.mxu0 0
        %5288 = vmatmul.mubr.bf16.gmra.mrb[0].mxu0 %v4949
        %v5289 = vpop.f32.mrb[0].mxu0
        %v5290 = vadd.f32 %v5239, %v5289
        %v5291 = vpop.f32.mrb[0].mxu0
        %v5292 = vadd.f32 %v5241, %v5291
        %v5293 = vpop.f32.mrb[0].mxu0
        %v5294 = vadd.f32 %v5243, %v5293
        %v5295 = vpop.f32.mrb[0].mxu0
        %v5296 = vadd.f32 %v5245, %v5295
        %5297 = vmatprep.mubr.bf16.mxu0 0
        %5298 = vmatmul.mubr.bf16.gmra.mrb[0].mxu0 %v4952
        %v5299 = vpop.f32.mrb[0].mxu0
        %v5300 = vadd.f32 %v5249, %v5299
        %v5301 = vpop.f32.mrb[0].mxu0
        %v5302 = vadd.f32 %v5251, %v5301
        %v5303 = vpop.f32.mrb[0].mxu0
        %v5304 = vpop.f32.mrb[0].mxu0
        %5305 = vdwg.mxu0
        %v5306 = vmax.f32 %v5290, 0.0
        %v5307 = vmax.f32 %v5292, 0.0
        %v5308 = vmax.f32 %v5294, 0.0
        %v5309 = vmax.f32 %v5296, 0.0
        %v5310 = vmax.f32 %v5300, 0.0
        %v5311 = vmax.f32 %v5302, 0.0
        %v5318 = vcombine.low %v5306, %v5307
        %v5319 = vcombine.high %v5306, %v5307
        %v5321 = vunpack.c.l.s4 1983009808
        %v5322 = vunpack.c.0.s8 %v5321
        %v5323 = vlaneseq
        %v5324 = vshrl.u32 %v5323, 7
        %v5325 = vsub.s32 %v5322, %v5324
        %v5326 = vrot.slane %v5318, %v5325
        %v5328 = vunpack.c.l.s4 1983009808
        %v5329 = vunpack.c.0.s8 %v5328
        %v5330 = vlaneseq
        %v5331 = vshrl.u32 %v5330, 7
        %v5332 = vsub.s32 %v5329, %v5331
        %v5333 = vrot.slane %v5319, %v5332
        %v5334 = vcombine.high %v5326, %v5326
        %v5335 = vcombine.high %v5333, %v5333
        %v5336 = vcombine.low %v5308, %v5309
        %v5337 = vcombine.high %v5308, %v5309
        %v5339 = vunpack.c.l.s4 1983009808
        %v5340 = vunpack.c.0.s8 %v5339
        %v5341 = vlaneseq
        %v5342 = vshrl.u32 %v5341, 7
        %v5343 = vsub.s32 %v5340, %v5342
        %v5344 = vrot.slane %v5336, %v5343
        %v5346 = vunpack.c.l.s4 1983009808
        %v5347 = vunpack.c.0.s8 %v5346
        %v5348 = vlaneseq
        %v5349 = vshrl.u32 %v5348, 7
        %v5350 = vsub.s32 %v5347, %v5349
        %v5351 = vrot.slane %v5337, %v5350
        %v5352 = vcombine.high %v5344, %v5344
        %v5353 = vcombine.high %v5351, %v5351
        %v5354 = vcombine.low %v5310, %v5311
        %v5356 = vunpack.c.l.s4 1983009808
        %v5357 = vunpack.c.0.s8 %v5356
        %v5358 = vlaneseq
        %v5359 = vshrl.u32 %v5358, 7
        %v5360 = vsub.s32 %v5357, %v5359
        %v5361 = vrot.slane %v5354, %v5360
        %v5362 = vcombine.high %v5361, %v5361
        %v5364 = vunpack.c.l.s4 1983009808
        %v5365 = vunpack.c.0.s8 %v5364
        %v5366 = vlaneseq
        %v5367 = vshrl.u32 %v5366, 7
        %v5368 = vsub.s32 %v5365, %v5367
        %v5369 = vrot.slane %v5326, %v5368
        %v5370 = vcombine.high %v5369, %v5369
        %v5372 = vunpack.c.l.s4 1983009808
        %v5373 = vunpack.c.0.s8 %v5372
        %v5374 = vlaneseq
        %v5375 = vshrl.u32 %v5374, 7
        %v5376 = vsub.s32 %v5373, %v5375
        %v5377 = vrot.slane %v5334, %v5376
        %v5378 = vcombine.high %v5377, %v5377
        %v5380 = vunpack.c.l.s4 1983009808
        %v5381 = vunpack.c.0.s8 %v5380
        %v5382 = vlaneseq
        %v5383 = vshrl.u32 %v5382, 7
        %v5384 = vsub.s32 %v5381, %v5383
        %v5385 = vrot.slane %v5333, %v5384
        %v5386 = vcombine.high %v5385, %v5385
        %v5388 = vunpack.c.l.s4 1983009808
        %v5389 = vunpack.c.0.s8 %v5388
        %v5390 = vlaneseq
        %v5391 = vshrl.u32 %v5390, 7
        %v5392 = vsub.s32 %v5389, %v5391
        %v5393 = vrot.slane %v5335, %v5392
        %v5394 = vcombine.high %v5393, %v5393
        %v5396 = vunpack.c.l.s4 1983009808
        %v5397 = vunpack.c.0.s8 %v5396
        %v5398 = vlaneseq
        %v5399 = vshrl.u32 %v5398, 7
        %v5400 = vsub.s32 %v5397, %v5399
        %v5401 = vrot.slane %v5344, %v5400
        %v5402 = vcombine.high %v5401, %v5401
        %v5404 = vunpack.c.l.s4 1983009808
        %v5405 = vunpack.c.0.s8 %v5404
        %v5406 = vlaneseq
        %v5407 = vshrl.u32 %v5406, 7
        %v5408 = vsub.s32 %v5405, %v5407
        %v5409 = vrot.slane %v5352, %v5408
        %v5410 = vcombine.high %v5409, %v5409
        %v5412 = vunpack.c.l.s4 1983009808
        %v5413 = vunpack.c.0.s8 %v5412
        %v5414 = vlaneseq
        %v5415 = vshrl.u32 %v5414, 7
        %v5416 = vsub.s32 %v5413, %v5415
        %v5417 = vrot.slane %v5351, %v5416
        %v5418 = vcombine.high %v5417, %v5417
        %v5420 = vunpack.c.l.s4 1983009808
        %v5421 = vunpack.c.0.s8 %v5420
        %v5422 = vlaneseq
        %v5423 = vshrl.u32 %v5422, 7
        %v5424 = vsub.s32 %v5421, %v5423
        %v5425 = vrot.slane %v5353, %v5424
        %v5426 = vcombine.high %v5425, %v5425
        %v5428 = vunpack.c.l.s4 1983009808
        %v5429 = vunpack.c.0.s8 %v5428
        %v5430 = vlaneseq
        %v5431 = vshrl.u32 %v5430, 7
        %v5432 = vsub.s32 %v5429, %v5431
        %v5433 = vrot.slane %v5361, %v5432
        %v5434 = vcombine.high %v5433, %v5433
        %v5436 = vunpack.c.l.s4 1983009808
        %v5437 = vunpack.c.0.s8 %v5436
        %v5438 = vlaneseq
        %v5439 = vshrl.u32 %v5438, 7
        %v5440 = vsub.s32 %v5437, %v5439
        %v5441 = vrot.slane %v5362, %v5440
        %v5442 = vcombine.high %v5441, %v5441
        %v5463 = vsel %vm4699, %v5369, -inf
        %v5464 = vrot.slane %v5463, 4
        %v5465 = vmax.f32 %v5463, %v5464
        %v5466 = vrot.slane %v5465, 2
        %v5467 = vmax.f32 %v5465, %v5466
        %v5468 = vrot.slane %v5467, 1
        %v5469 = vmax.f32 %v5467, %v5468
        %v5470 = vsel %vm4699, %v5370, -inf
        %v5471 = vrot.slane %v5470, 4
        %v5472 = vmax.f32 %v5470, %v5471
        %v5473 = vrot.slane %v5472, 2
        %v5474 = vmax.f32 %v5472, %v5473
        %v5475 = vrot.slane %v5474, 1
        %v5476 = vmax.f32 %v5474, %v5475
        %v5477 = vsel %vm4699, %v5377, -inf
        %v5478 = vrot.slane %v5477, 4
        %v5479 = vmax.f32 %v5477, %v5478
        %v5480 = vrot.slane %v5479, 2
        %v5481 = vmax.f32 %v5479, %v5480
        %v5482 = vrot.slane %v5481, 1
        %v5483 = vmax.f32 %v5481, %v5482
        %v5484 = vsel %vm4699, %v5378, -inf
        %v5485 = vrot.slane %v5484, 4
        %v5486 = vmax.f32 %v5484, %v5485
        %v5487 = vrot.slane %v5486, 2
        %v5488 = vmax.f32 %v5486, %v5487
        %v5489 = vrot.slane %v5488, 1
        %v5490 = vmax.f32 %v5488, %v5489
        %v5491 = vsel %vm4699, %v5385, -inf
        %v5492 = vrot.slane %v5491, 4
        %v5493 = vmax.f32 %v5491, %v5492
        %v5494 = vrot.slane %v5493, 2
        %v5495 = vmax.f32 %v5493, %v5494
        %v5496 = vrot.slane %v5495, 1
        %v5497 = vmax.f32 %v5495, %v5496
        %v5498 = vsel %vm4699, %v5386, -inf
        %v5499 = vrot.slane %v5498, 4
        %v5500 = vmax.f32 %v5498, %v5499
        %v5501 = vrot.slane %v5500, 2
        %v5502 = vmax.f32 %v5500, %v5501
        %v5503 = vrot.slane %v5502, 1
        %v5504 = vmax.f32 %v5502, %v5503
        %v5505 = vsel %vm4699, %v5393, -inf
        %v5506 = vrot.slane %v5505, 4
        %v5507 = vmax.f32 %v5505, %v5506
        %v5508 = vrot.slane %v5507, 2
        %v5509 = vmax.f32 %v5507, %v5508
        %v5510 = vrot.slane %v5509, 1
        %v5511 = vmax.f32 %v5509, %v5510
        %v5512 = vsel %vm4699, %v5394, -inf
        %v5513 = vrot.slane %v5512, 4
        %v5514 = vmax.f32 %v5512, %v5513
        %v5515 = vrot.slane %v5514, 2
        %v5516 = vmax.f32 %v5514, %v5515
        %v5517 = vrot.slane %v5516, 1
        %v5518 = vmax.f32 %v5516, %v5517
        %v5519 = vsel %vm4699, %v5401, -inf
        %v5520 = vrot.slane %v5519, 4
        %v5521 = vmax.f32 %v5519, %v5520
        %v5522 = vrot.slane %v5521, 2
        %v5523 = vmax.f32 %v5521, %v5522
        %v5524 = vrot.slane %v5523, 1
        %v5525 = vmax.f32 %v5523, %v5524
        %v5526 = vsel %vm4699, %v5402, -inf
        %v5527 = vrot.slane %v5526, 4
        %v5528 = vmax.f32 %v5526, %v5527
        %v5529 = vrot.slane %v5528, 2
        %v5530 = vmax.f32 %v5528, %v5529
        %v5531 = vrot.slane %v5530, 1
        %v5532 = vmax.f32 %v5530, %v5531
        %v5533 = vsel %vm4699, %v5409, -inf
        %v5534 = vrot.slane %v5533, 4
        %v5535 = vmax.f32 %v5533, %v5534
        %v5536 = vrot.slane %v5535, 2
        %v5537 = vmax.f32 %v5535, %v5536
        %v5538 = vrot.slane %v5537, 1
        %v5539 = vmax.f32 %v5537, %v5538
        %v5540 = vsel %vm4699, %v5410, -inf
        %v5541 = vrot.slane %v5540, 4
        %v5542 = vmax.f32 %v5540, %v5541
        %v5543 = vrot.slane %v5542, 2
        %v5544 = vmax.f32 %v5542, %v5543
        %v5545 = vrot.slane %v5544, 1
        %v5546 = vmax.f32 %v5544, %v5545
        %v5547 = vsel %vm4699, %v5417, -inf
        %v5548 = vrot.slane %v5547, 4
        %v5549 = vmax.f32 %v5547, %v5548
        %v5550 = vrot.slane %v5549, 2
        %v5551 = vmax.f32 %v5549, %v5550
        %v5552 = vrot.slane %v5551, 1
        %v5553 = vmax.f32 %v5551, %v5552
        %v5554 = vsel %vm4699, %v5418, -inf
        %v5555 = vrot.slane %v5554, 4
        %v5556 = vmax.f32 %v5554, %v5555
        %v5557 = vrot.slane %v5556, 2
        %v5558 = vmax.f32 %v5556, %v5557
        %v5559 = vrot.slane %v5558, 1
        %v5560 = vmax.f32 %v5558, %v5559
        %v5561 = vsel %vm4699, %v5425, -inf
        %v5562 = vrot.slane %v5561, 4
        %v5563 = vmax.f32 %v5561, %v5562
        %v5564 = vrot.slane %v5563, 2
        %v5565 = vmax.f32 %v5563, %v5564
        %v5566 = vrot.slane %v5565, 1
        %v5567 = vmax.f32 %v5565, %v5566
        %v5568 = vsel %vm4699, %v5426, -inf
        %v5569 = vrot.slane %v5568, 4
        %v5570 = vmax.f32 %v5568, %v5569
        %v5571 = vrot.slane %v5570, 2
        %v5572 = vmax.f32 %v5570, %v5571
        %v5573 = vrot.slane %v5572, 1
        %v5574 = vmax.f32 %v5572, %v5573
        %v5575 = vsel %vm4699, %v5433, -inf
        %v5576 = vrot.slane %v5575, 4
        %v5577 = vmax.f32 %v5575, %v5576
        %v5578 = vrot.slane %v5577, 2
        %v5579 = vmax.f32 %v5577, %v5578
        %v5580 = vrot.slane %v5579, 1
        %v5581 = vmax.f32 %v5579, %v5580
        %v5582 = vsel %vm4699, %v5434, -inf
        %v5583 = vrot.slane %v5582, 4
        %v5584 = vmax.f32 %v5582, %v5583
        %v5585 = vrot.slane %v5584, 2
        %v5586 = vmax.f32 %v5584, %v5585
        %v5587 = vrot.slane %v5586, 1
        %v5588 = vmax.f32 %v5586, %v5587
        %v5589 = vsel %vm4699, %v5441, -inf
        %v5590 = vrot.slane %v5589, 4
        %v5591 = vmax.f32 %v5589, %v5590
        %v5592 = vrot.slane %v5591, 2
        %v5593 = vmax.f32 %v5591, %v5592
        %v5594 = vrot.slane %v5593, 1
        %v5595 = vmax.f32 %v5593, %v5594
        %v5596 = vsel %vm4699, %v5442, -inf
        %v5597 = vrot.slane %v5596, 4
        %v5598 = vmax.f32 %v5596, %v5597
        %v5599 = vrot.slane %v5598, 2
        %v5600 = vmax.f32 %v5598, %v5599
        %v5601 = vrot.slane %v5600, 1
        %v5602 = vmax.f32 %v5600, %v5601
        %v5603 = vpack.c.bf16 %v5469, %v5469
        %v5604 = vpack.c.bf16 %v5476, %v5476
        %v5605 = vpack.c.bf16 %v5483, %v5483
        %v5606 = vpack.c.bf16 %v5490, %v5490
        %v5607 = vpack.c.bf16 %v5497, %v5497
        %v5608 = vpack.c.bf16 %v5504, %v5504
        %v5609 = vpack.c.bf16 %v5511, %v5511
        %v5610 = vpack.c.bf16 %v5518, %v5518
        %v5611 = vpack.c.bf16 %v5525, %v5525
        %v5612 = vpack.c.bf16 %v5532, %v5532
        %v5613 = vpack.c.bf16 %v5539, %v5539
        %v5614 = vpack.c.bf16 %v5546, %v5546
        %v5615 = vpack.c.bf16 %v5553, %v5553
        %v5616 = vpack.c.bf16 %v5560, %v5560
        %v5617 = vpack.c.bf16 %v5567, %v5567
        %v5618 = vpack.c.bf16 %v5574, %v5574
        %v5619 = vpack.c.bf16 %v5581, %v5581
        %v5620 = vpack.c.bf16 %v5588, %v5588
        %v5621 = vpack.c.bf16 %v5595, %v5595
        %v5622 = vpack.c.bf16 %v5602, %v5602
        %v5943 = vunpack.c.l.b16 %v796
        %v5944 = vunpack.c.h.b16 %v796
        %v5945 = vunpack.c.l.b16 %v797
        %v5946 = vunpack.c.h.b16 %v797
        %v5947 = vunpack.c.l.b16 %v798
        %v5948 = vunpack.c.h.b16 %v798
        %v5949 = vunpack.c.l.b16 %v799
        %v5950 = vunpack.c.h.b16 %v799
        %v5951 = vunpack.c.l.b16 %v800
        %v5952 = vunpack.c.h.b16 %v800
        %v5953 = vunpack.c.l.b16 %v801
        %v5954 = vunpack.c.h.b16 %v801
        %v5955 = vunpack.c.l.b16 %v802
        %v5956 = vunpack.c.h.b16 %v802
        %v5957 = vunpack.c.l.b16 %v803
        %v5958 = vunpack.c.h.b16 %v803
        %v5959 = vunpack.c.l.b16 %v804
        %v5960 = vunpack.c.h.b16 %v804
        %v5961 = vunpack.c.l.b16 %v805
        %v5962 = vunpack.c.h.b16 %v805
        %v5963 = vunpack.c.l.b16 %v806
        %v5964 = vunpack.c.h.b16 %v806
        %v5965 = vunpack.c.l.b16 %v807
        %v5966 = vunpack.c.h.b16 %v807
        %v5967 = vunpack.c.l.b16 %v808
        %v5968 = vunpack.c.h.b16 %v808
        %v5969 = vunpack.c.l.b16 %v809
        %v5970 = vunpack.c.h.b16 %v809
        %v5971 = vunpack.c.l.b16 %v810
        %v5972 = vunpack.c.h.b16 %v810
        %v5973 = vunpack.c.l.b16 %v811
        %v5974 = vunpack.c.h.b16 %v811
        %v5975 = vunpack.c.l.b16 %v812
        %v5976 = vunpack.c.h.b16 %v812
        %v5977 = vunpack.c.l.b16 %v813
        %v5978 = vunpack.c.h.b16 %v813
        %v5979 = vunpack.c.l.b16 %v814
        %v5980 = vunpack.c.h.b16 %v814
        %v5981 = vunpack.c.l.b16 %v815
        %v5982 = vunpack.c.h.b16 %v815
        %v5983 = vunpack.c.l.b16 %v816
        %v5984 = vunpack.c.h.b16 %v816
        %v5985 = vunpack.c.l.b16 %v817
        %v5986 = vunpack.c.h.b16 %v817
        %v5987 = vunpack.c.l.b16 %v818
        %v5988 = vunpack.c.h.b16 %v818
        %v5989 = vunpack.c.l.b16 %v819
        %v5990 = vunpack.c.h.b16 %v819
        %v5991 = vunpack.c.l.b16 %v820
        %v5992 = vunpack.c.h.b16 %v820
        %v5993 = vunpack.c.l.b16 %v821
        %v5994 = vunpack.c.h.b16 %v821
        %v5995 = vunpack.c.l.b16 %v822
        %v5996 = vunpack.c.h.b16 %v822
        %v5997 = vunpack.c.l.b16 %v823
        %v5998 = vunpack.c.h.b16 %v823
        %v5999 = vunpack.c.l.b16 %v824
        %v6000 = vunpack.c.h.b16 %v824
        %v6001 = vunpack.c.l.b16 %v825
        %v6002 = vunpack.c.h.b16 %v825
        %v6003 = vunpack.c.l.b16 %v826
        %v6004 = vunpack.c.h.b16 %v826
        %v6005 = vunpack.c.l.b16 %v827
        %v6006 = vunpack.c.h.b16 %v827
        %v6007 = vunpack.c.l.b16 %v828
        %v6008 = vunpack.c.h.b16 %v828
        %v6009 = vunpack.c.l.b16 %v829
        %v6010 = vunpack.c.h.b16 %v829
        %v6011 = vunpack.c.l.b16 %v830
        %v6012 = vunpack.c.h.b16 %v830
        %v6013 = vunpack.c.l.b16 %v831
        %v6014 = vunpack.c.h.b16 %v831
        %v6015 = vunpack.c.l.b16 %v832
        %v6016 = vunpack.c.h.b16 %v832
        %v6017 = vunpack.c.l.b16 %v833
        %v6018 = vunpack.c.h.b16 %v833
        %v6019 = vunpack.c.l.b16 %v834
        %v6020 = vunpack.c.h.b16 %v834
        %v6021 = vunpack.c.l.b16 %v835
        %v6022 = vunpack.c.h.b16 %v835
        %v6023 = vunpack.c.l.b16 %v836
        %v6024 = vunpack.c.h.b16 %v836
        %v6025 = vunpack.c.l.b16 %v837
        %v6026 = vunpack.c.h.b16 %v837
        %v6027 = vunpack.c.l.b16 %v838
        %v6028 = vunpack.c.h.b16 %v838
        %v6029 = vunpack.c.l.b16 %v839
        %v6030 = vunpack.c.h.b16 %v839
        %v6031 = vunpack.c.l.b16 %v840
        %v6032 = vunpack.c.h.b16 %v840
        %v6033 = vunpack.c.l.b16 %v841
        %v6034 = vunpack.c.h.b16 %v841
        %v6035 = vunpack.c.l.b16 %v842
        %v6036 = vunpack.c.h.b16 %v842
        %v6037 = vunpack.c.l.b16 %v843
        %v6038 = vunpack.c.h.b16 %v843
        %v6039 = vunpack.c.l.b16 %v844
        %v6040 = vunpack.c.h.b16 %v844
        %v6041 = vunpack.c.l.b16 %v845
        %v6042 = vunpack.c.h.b16 %v845
        %v6043 = vunpack.c.l.b16 %v846
        %v6044 = vunpack.c.h.b16 %v846
        %v6045 = vunpack.c.l.b16 %v847
        %v6046 = vunpack.c.h.b16 %v847
        %v6047 = vunpack.c.l.b16 %v848
        %v6048 = vunpack.c.h.b16 %v848
        %v6049 = vunpack.c.l.b16 %v849
        %v6050 = vunpack.c.h.b16 %v849
        %v6051 = vunpack.c.l.b16 %v850
        %v6052 = vunpack.c.h.b16 %v850
        %v6053 = vunpack.c.l.b16 %v851
        %v6054 = vunpack.c.h.b16 %v851
        %v6055 = vunpack.c.l.b16 %v852
        %v6056 = vunpack.c.h.b16 %v852
        %v6057 = vunpack.c.l.b16 %v853
        %v6058 = vunpack.c.h.b16 %v853
        %v6059 = vunpack.c.l.b16 %v854
        %v6060 = vunpack.c.h.b16 %v854
        %v6061 = vunpack.c.l.b16 %v855
        %v6062 = vunpack.c.h.b16 %v855
        %v6063 = vunpack.c.l.b16 %v856
        %v6064 = vunpack.c.h.b16 %v856
        %v6065 = vunpack.c.l.b16 %v857
        %v6066 = vunpack.c.h.b16 %v857
        %v6067 = vunpack.c.l.b16 %v858
        %v6068 = vunpack.c.h.b16 %v858
        %v6069 = vunpack.c.l.b16 %v859
        %v6070 = vunpack.c.h.b16 %v859
        %v6071 = vunpack.c.l.b16 %v860
        %v6072 = vunpack.c.h.b16 %v860
        %v6073 = vunpack.c.l.b16 %v861
        %v6074 = vunpack.c.h.b16 %v861
        %v6075 = vunpack.c.l.b16 %v862
        %v6076 = vunpack.c.h.b16 %v862
        %v6077 = vunpack.c.l.b16 %v863
        %v6078 = vunpack.c.h.b16 %v863
        %v6079 = vunpack.c.l.b16 %v864
        %v6080 = vunpack.c.h.b16 %v864
        %v6081 = vunpack.c.l.b16 %v865
        %v6082 = vunpack.c.h.b16 %v865
        %v6083 = vunpack.c.l.b16 %v866
        %v6084 = vunpack.c.h.b16 %v866
        %v6085 = vunpack.c.l.b16 %v867
        %v6086 = vunpack.c.h.b16 %v867
        %v6087 = vunpack.c.l.b16 %v868
        %v6088 = vunpack.c.h.b16 %v868
        %v6089 = vunpack.c.l.b16 %v869
        %v6090 = vunpack.c.h.b16 %v869
        %v6091 = vunpack.c.l.b16 %v870
        %v6092 = vunpack.c.h.b16 %v870
        %v6093 = vunpack.c.l.b16 %v871
        %v6094 = vunpack.c.h.b16 %v871
        %v6095 = vunpack.c.l.b16 %v872
        %v6096 = vunpack.c.h.b16 %v872
        %v6097 = vunpack.c.l.b16 %v873
        %v6098 = vunpack.c.h.b16 %v873
        %v6099 = vunpack.c.l.b16 %v874
        %v6100 = vunpack.c.h.b16 %v874
        %v6101 = vunpack.c.l.b16 %v875
        %v6102 = vunpack.c.h.b16 %v875
        %v6103 = vunpack.c.l.b16 %v876
        %v6104 = vunpack.c.h.b16 %v876
        %v6105 = vunpack.c.l.b16 %v877
        %v6106 = vunpack.c.h.b16 %v877
        %v6107 = vunpack.c.l.b16 %v878
        %v6108 = vunpack.c.h.b16 %v878
        %v6109 = vunpack.c.l.b16 %v879
        %v6110 = vunpack.c.h.b16 %v879
        %v6111 = vunpack.c.l.b16 %v880
        %v6112 = vunpack.c.h.b16 %v880
        %v6113 = vunpack.c.l.b16 %v881
        %v6114 = vunpack.c.h.b16 %v881
        %v6115 = vunpack.c.l.b16 %v882
        %v6116 = vunpack.c.h.b16 %v882
        %v6117 = vunpack.c.l.b16 %v883
        %v6118 = vunpack.c.h.b16 %v883
        %v6119 = vunpack.c.l.b16 %v884
        %v6120 = vunpack.c.h.b16 %v884
        %v6121 = vunpack.c.l.b16 %v885
        %v6122 = vunpack.c.h.b16 %v885
        %v6123 = vunpack.c.l.b16 %v886
        %v6124 = vunpack.c.h.b16 %v886
        %v6125 = vunpack.c.l.b16 %v887
        %v6126 = vunpack.c.h.b16 %v887
        %v6127 = vunpack.c.l.b16 %v888
        %v6128 = vunpack.c.h.b16 %v888
        %v6129 = vunpack.c.l.b16 %v889
        %v6130 = vunpack.c.h.b16 %v889
        %v6131 = vunpack.c.l.b16 %v890
        %v6132 = vunpack.c.h.b16 %v890
        %v6133 = vunpack.c.l.b16 %v891
        %v6134 = vunpack.c.h.b16 %v891
        %v6135 = vunpack.c.l.b16 %v892
        %v6136 = vunpack.c.h.b16 %v892
        %v6137 = vunpack.c.l.b16 %v893
        %v6138 = vunpack.c.h.b16 %v893
        %v6139 = vunpack.c.l.b16 %v894
        %v6140 = vunpack.c.h.b16 %v894
        %v6141 = vunpack.c.l.b16 %v895
        %v6142 = vunpack.c.h.b16 %v895
        %v6143 = vunpack.c.l.b16 %v896
        %v6144 = vunpack.c.h.b16 %v896
        %v6145 = vunpack.c.l.b16 %v897
        %v6146 = vunpack.c.h.b16 %v897
        %v6147 = vunpack.c.l.b16 %v898
        %v6148 = vunpack.c.h.b16 %v898
        %v6149 = vunpack.c.l.b16 %v899
        %v6150 = vunpack.c.h.b16 %v899
        %v6151 = vunpack.c.l.b16 %v900
        %v6152 = vunpack.c.h.b16 %v900
        %v6153 = vunpack.c.l.b16 %v901
        %v6154 = vunpack.c.h.b16 %v901
        %v6155 = vunpack.c.l.b16 %v902
        %v6156 = vunpack.c.h.b16 %v902
        %v6157 = vunpack.c.l.b16 %v903
        %v6158 = vunpack.c.h.b16 %v903
        %v6159 = vunpack.c.l.b16 %v904
        %v6160 = vunpack.c.h.b16 %v904
        %v6161 = vunpack.c.l.b16 %v905
        %v6162 = vunpack.c.h.b16 %v905
        %v6163 = vunpack.c.l.b16 %v906
        %v6164 = vunpack.c.h.b16 %v906
        %v6165 = vunpack.c.l.b16 %v907
        %v6166 = vunpack.c.h.b16 %v907
        %v6167 = vunpack.c.l.b16 %v908
        %v6168 = vunpack.c.h.b16 %v908
        %v6169 = vunpack.c.l.b16 %v909
        %v6170 = vunpack.c.h.b16 %v909
        %v6171 = vunpack.c.l.b16 %v910
        %v6172 = vunpack.c.h.b16 %v910
        %v6173 = vunpack.c.l.b16 %v911
        %v6174 = vunpack.c.h.b16 %v911
        %v6175 = vunpack.c.l.b16 %v912
        %v6176 = vunpack.c.h.b16 %v912
        %v6177 = vunpack.c.l.b16 %v913
        %v6178 = vunpack.c.h.b16 %v913
        %v6179 = vunpack.c.l.b16 %v914
        %v6180 = vunpack.c.h.b16 %v914
        %v6181 = vunpack.c.l.b16 %v915
        %v6182 = vunpack.c.h.b16 %v915
        %v6183 = vunpack.c.l.b16 %v916
        %v6184 = vunpack.c.h.b16 %v916
        %v6185 = vunpack.c.l.b16 %v917
        %v6186 = vunpack.c.h.b16 %v917
        %v6187 = vunpack.c.l.b16 %v918
        %v6188 = vunpack.c.h.b16 %v918
        %v6189 = vunpack.c.l.b16 %v919
        %v6190 = vunpack.c.h.b16 %v919
        %v6191 = vunpack.c.l.b16 %v920
        %v6192 = vunpack.c.h.b16 %v920
        %v6193 = vunpack.c.l.b16 %v921
        %v6194 = vunpack.c.h.b16 %v921
        %v6195 = vunpack.c.l.b16 %v922
        %v6196 = vunpack.c.h.b16 %v922
        %v6197 = vunpack.c.l.b16 %v923
        %v6198 = vunpack.c.h.b16 %v923
        %v6199 = vunpack.c.l.b16 %v924
        %v6200 = vunpack.c.h.b16 %v924
        %v6201 = vunpack.c.l.b16 %v925
        %v6202 = vunpack.c.h.b16 %v925
        %v6203 = vunpack.c.l.b16 %v926
        %v6204 = vunpack.c.h.b16 %v926
        %v6205 = vunpack.c.l.b16 %v927
        %v6206 = vunpack.c.h.b16 %v927
        %v6207 = vunpack.c.l.b16 %v928
        %v6208 = vunpack.c.h.b16 %v928
        %v6209 = vunpack.c.l.b16 %v929
        %v6210 = vunpack.c.h.b16 %v929
        %v6211 = vunpack.c.l.b16 %v930
        %v6212 = vunpack.c.h.b16 %v930
        %v6213 = vunpack.c.l.b16 %v931
        %v6214 = vunpack.c.h.b16 %v931
        %v6215 = vunpack.c.l.b16 %v932
        %v6216 = vunpack.c.h.b16 %v932
        %v6217 = vunpack.c.l.b16 %v933
        %v6218 = vunpack.c.h.b16 %v933
        %v6219 = vunpack.c.l.b16 %v934
        %v6220 = vunpack.c.h.b16 %v934
        %v6221 = vunpack.c.l.b16 %v935
        %v6222 = vunpack.c.h.b16 %v935
        %v6223 = vunpack.c.l.b16 %v936
        %v6224 = vunpack.c.h.b16 %v936
        %v6225 = vunpack.c.l.b16 %v937
        %v6226 = vunpack.c.h.b16 %v937
        %v6227 = vunpack.c.l.b16 %v938
        %v6228 = vunpack.c.h.b16 %v938
        %v6229 = vunpack.c.l.b16 %v939
        %v6230 = vunpack.c.h.b16 %v939
        %v6231 = vunpack.c.l.b16 %v940
        %v6232 = vunpack.c.h.b16 %v940
        %v6233 = vunpack.c.l.b16 %v941
        %v6234 = vunpack.c.h.b16 %v941
        %v6235 = vunpack.c.l.b16 %v942
        %v6236 = vunpack.c.h.b16 %v942
        %v6237 = vunpack.c.l.b16 %v943
        %v6238 = vunpack.c.h.b16 %v943
        %v6239 = vunpack.c.l.b16 %v944
        %v6240 = vunpack.c.h.b16 %v944
        %v6241 = vunpack.c.l.b16 %v945
        %v6242 = vunpack.c.h.b16 %v945
        %v6243 = vunpack.c.l.b16 %v946
        %v6244 = vunpack.c.h.b16 %v946
        %v6245 = vunpack.c.l.b16 %v947
        %v6246 = vunpack.c.h.b16 %v947
        %v6247 = vunpack.c.l.b16 %v948
        %v6248 = vunpack.c.h.b16 %v948
        %v6249 = vunpack.c.l.b16 %v949
        %v6250 = vunpack.c.h.b16 %v949
        %v6251 = vunpack.c.l.b16 %v950
        %v6252 = vunpack.c.h.b16 %v950
        %v6253 = vunpack.c.l.b16 %v951
        %v6254 = vunpack.c.h.b16 %v951
        %v6255 = vunpack.c.l.b16 %v952
        %v6256 = vunpack.c.h.b16 %v952
        %v6257 = vunpack.c.l.b16 %v953
        %v6258 = vunpack.c.h.b16 %v953
        %v6259 = vunpack.c.l.b16 %v954
        %v6260 = vunpack.c.h.b16 %v954
        %v6261 = vunpack.c.l.b16 %v955
        %v6262 = vunpack.c.h.b16 %v955
        %v6263 = vunpack.c.l.b16 %v956
        %v6264 = vunpack.c.h.b16 %v956
        %v6265 = vunpack.c.l.b16 %v957
        %v6266 = vunpack.c.h.b16 %v957
        %v6267 = vunpack.c.l.b16 %v958
        %v6268 = vunpack.c.h.b16 %v958
        %v6269 = vunpack.c.l.b16 %v959
        %v6270 = vunpack.c.h.b16 %v959
        %v6271 = vunpack.c.l.b16 %v960
        %v6272 = vunpack.c.h.b16 %v960
        %v6273 = vunpack.c.l.b16 %v961
        %v6274 = vunpack.c.h.b16 %v961
        %v6275 = vunpack.c.l.b16 %v962
        %v6276 = vunpack.c.h.b16 %v962
        %v6277 = vunpack.c.l.b16 %v963
        %v6278 = vunpack.c.h.b16 %v963
        %v6279 = vunpack.c.l.b16 %v964
        %v6280 = vunpack.c.h.b16 %v964
        %v6281 = vunpack.c.l.b16 %v965
        %v6282 = vunpack.c.h.b16 %v965
        %v6283 = vunpack.c.l.b16 %v966
        %v6284 = vunpack.c.h.b16 %v966
        %v6285 = vunpack.c.l.b16 %v967
        %v6286 = vunpack.c.h.b16 %v967
        %v6287 = vunpack.c.l.b16 %v968
        %v6288 = vunpack.c.h.b16 %v968
        %v6289 = vunpack.c.l.b16 %v969
        %v6290 = vunpack.c.h.b16 %v969
        %v6291 = vunpack.c.l.b16 %v970
        %v6292 = vunpack.c.h.b16 %v970
        %v6293 = vunpack.c.l.b16 %v971
        %v6294 = vunpack.c.h.b16 %v971
        %v6295 = vunpack.c.l.b16 %v972
        %v6296 = vunpack.c.h.b16 %v972
        %v6297 = vunpack.c.l.b16 %v973
        %v6298 = vunpack.c.h.b16 %v973
        %v6299 = vunpack.c.l.b16 %v974
        %v6300 = vunpack.c.h.b16 %v974
        %v6301 = vunpack.c.l.b16 %v975
        %v6302 = vunpack.c.h.b16 %v975
        %v6303 = vunpack.c.l.b16 %v976
        %v6304 = vunpack.c.h.b16 %v976
        %v6305 = vunpack.c.l.b16 %v977
        %v6306 = vunpack.c.h.b16 %v977
        %v6307 = vunpack.c.l.b16 %v978
        %v6308 = vunpack.c.h.b16 %v978
        %v6309 = vunpack.c.l.b16 %v979
        %v6310 = vunpack.c.h.b16 %v979
        %v6311 = vunpack.c.l.b16 %v980
        %v6312 = vunpack.c.h.b16 %v980
        %v6313 = vunpack.c.l.b16 %v981
        %v6314 = vunpack.c.h.b16 %v981
        %v6315 = vunpack.c.l.b16 %v982
        %v6316 = vunpack.c.h.b16 %v982
        %v6317 = vunpack.c.l.b16 %v983
        %v6318 = vunpack.c.h.b16 %v983
        %v6319 = vunpack.c.l.b16 %v984
        %v6320 = vunpack.c.h.b16 %v984
        %v6321 = vunpack.c.l.b16 %v985
        %v6322 = vunpack.c.h.b16 %v985
        %v6323 = vunpack.c.l.b16 %v986
        %v6324 = vunpack.c.h.b16 %v986
        %v6325 = vunpack.c.l.b16 %v987
        %v6326 = vunpack.c.h.b16 %v987
        %v6327 = vunpack.c.l.b16 %v988
        %v6328 = vunpack.c.h.b16 %v988
        %v6329 = vunpack.c.l.b16 %v989
        %v6330 = vunpack.c.h.b16 %v989
        %v6331 = vunpack.c.l.b16 %v990
        %v6332 = vunpack.c.h.b16 %v990
        %v6333 = vunpack.c.l.b16 %v991
        %v6334 = vunpack.c.h.b16 %v991
        %v6335 = vunpack.c.l.b16 %v992
        %v6336 = vunpack.c.h.b16 %v992
        %v6337 = vunpack.c.l.b16 %v993
        %v6338 = vunpack.c.h.b16 %v993
        %v6339 = vunpack.c.l.b16 %v994
        %v6340 = vunpack.c.h.b16 %v994
        %v6341 = vunpack.c.l.b16 %v995
        %v6342 = vunpack.c.h.b16 %v995
        %v6343 = vunpack.c.l.b16 %v996
        %v6344 = vunpack.c.h.b16 %v996
        %v6345 = vunpack.c.l.b16 %v997
        %v6346 = vunpack.c.h.b16 %v997
        %v6347 = vunpack.c.l.b16 %v998
        %v6348 = vunpack.c.h.b16 %v998
        %v6349 = vunpack.c.l.b16 %v999
        %v6350 = vunpack.c.h.b16 %v999
        %v6351 = vunpack.c.l.b16 %v1000
        %v6352 = vunpack.c.h.b16 %v1000
        %v6353 = vunpack.c.l.b16 %v1001
        %v6354 = vunpack.c.h.b16 %v1001
        %v6355 = vunpack.c.l.b16 %v1002
        %v6356 = vunpack.c.h.b16 %v1002
        %v6357 = vunpack.c.l.b16 %v1003
        %v6358 = vunpack.c.h.b16 %v1003
        %v6359 = vunpack.c.l.b16 %v1004
        %v6360 = vunpack.c.h.b16 %v1004
        %v6361 = vunpack.c.l.b16 %v1005
        %v6362 = vunpack.c.h.b16 %v1005
        %v6363 = vunpack.c.l.b16 %v1006
        %v6364 = vunpack.c.h.b16 %v1006
        %v6365 = vunpack.c.l.b16 %v1007
        %v6366 = vunpack.c.h.b16 %v1007
        %v6367 = vunpack.c.l.b16 %v1008
        %v6368 = vunpack.c.h.b16 %v1008
        %v6369 = vunpack.c.l.b16 %v1009
        %v6370 = vunpack.c.h.b16 %v1009
        %v6371 = vunpack.c.l.b16 %v1010
        %v6372 = vunpack.c.h.b16 %v1010
        %v6373 = vunpack.c.l.b16 %v1011
        %v6374 = vunpack.c.h.b16 %v1011
        %v6375 = vunpack.c.l.b16 %v1012
        %v6376 = vunpack.c.h.b16 %v1012
        %v6377 = vunpack.c.l.b16 %v1013
        %v6378 = vunpack.c.h.b16 %v1013
        %v6379 = vunpack.c.l.b16 %v1014
        %v6380 = vunpack.c.h.b16 %v1014
        %v6381 = vunpack.c.l.b16 %v1015
        %v6382 = vunpack.c.h.b16 %v1015
        %v6383 = vunpack.c.l.b16 %v1016
        %v6384 = vunpack.c.h.b16 %v1016
        %v6385 = vunpack.c.l.b16 %v1017
        %v6386 = vunpack.c.h.b16 %v1017
        %v6387 = vunpack.c.l.b16 %v1018
        %v6388 = vunpack.c.h.b16 %v1018
        %v6389 = vunpack.c.l.b16 %v1019
        %v6390 = vunpack.c.h.b16 %v1019
        %v6391 = vunpack.c.l.b16 %v1020
        %v6392 = vunpack.c.h.b16 %v1020
        %v6393 = vunpack.c.l.b16 %v1021
        %v6394 = vunpack.c.h.b16 %v1021
        %v6395 = vunpack.c.l.b16 %v1022
        %v6396 = vunpack.c.h.b16 %v1022
        %v6397 = vunpack.c.l.b16 %v1023
        %v6398 = vunpack.c.h.b16 %v1023
        %v6399 = vunpack.c.l.b16 %v1024
        %v6400 = vunpack.c.h.b16 %v1024
        %v6401 = vunpack.c.l.b16 %v1025
        %v6402 = vunpack.c.h.b16 %v1025
        %v6403 = vunpack.c.l.b16 %v1026
        %v6404 = vunpack.c.h.b16 %v1026
        %v6405 = vunpack.c.l.b16 %v1027
        %v6406 = vunpack.c.h.b16 %v1027
        %v6407 = vunpack.c.l.b16 %v1028
        %v6408 = vunpack.c.h.b16 %v1028
        %v6409 = vunpack.c.l.b16 %v1029
        %v6410 = vunpack.c.h.b16 %v1029
        %v6411 = vunpack.c.l.b16 %v1030
        %v6412 = vunpack.c.h.b16 %v1030
        %v6413 = vunpack.c.l.b16 %v1031
        %v6414 = vunpack.c.h.b16 %v1031
        %v6415 = vunpack.c.l.b16 %v1032
        %v6416 = vunpack.c.h.b16 %v1032
        %v6417 = vunpack.c.l.b16 %v1033
        %v6418 = vunpack.c.h.b16 %v1033
        %v6419 = vunpack.c.l.b16 %v1034
        %v6420 = vunpack.c.h.b16 %v1034
        %v6421 = vunpack.c.l.b16 %v1035
        %v6422 = vunpack.c.h.b16 %v1035
        %v6423 = vunpack.c.l.b16 %v1036
        %v6424 = vunpack.c.h.b16 %v1036
        %v6425 = vunpack.c.l.b16 %v1037
        %v6426 = vunpack.c.h.b16 %v1037
        %v6427 = vunpack.c.l.b16 %v1038
        %v6428 = vunpack.c.h.b16 %v1038
        %v6429 = vunpack.c.l.b16 %v1039
        %v6430 = vunpack.c.h.b16 %v1039
        %v6431 = vunpack.c.l.b16 %v1040
        %v6432 = vunpack.c.h.b16 %v1040
        %v6433 = vunpack.c.l.b16 %v1041
        %v6434 = vunpack.c.h.b16 %v1041
        %v6435 = vunpack.c.l.b16 %v1042
        %v6436 = vunpack.c.h.b16 %v1042
        %v6437 = vunpack.c.l.b16 %v1043
        %v6438 = vunpack.c.h.b16 %v1043
        %v6439 = vunpack.c.l.b16 %v1044
        %v6440 = vunpack.c.h.b16 %v1044
        %v6441 = vunpack.c.l.b16 %v1045
        %v6442 = vunpack.c.h.b16 %v1045
        %v6443 = vunpack.c.l.b16 %v1046
        %v6444 = vunpack.c.h.b16 %v1046
        %v6445 = vunpack.c.l.b16 %v1047
        %v6446 = vunpack.c.h.b16 %v1047
        %v6447 = vunpack.c.l.b16 %v1048
        %v6448 = vunpack.c.h.b16 %v1048
        %v6449 = vunpack.c.l.b16 %v1049
        %v6450 = vunpack.c.h.b16 %v1049
        %v6451 = vunpack.c.l.b16 %v1050
        %v6452 = vunpack.c.h.b16 %v1050
        %v6453 = vunpack.c.l.b16 %v1051
        %v6454 = vunpack.c.h.b16 %v1051
        %v6455 = vunpack.c.l.b16 %v1052
        %v6456 = vunpack.c.h.b16 %v1052
        %v6457 = vunpack.c.l.b16 %v1053
        %v6458 = vunpack.c.h.b16 %v1053
        %v6459 = vunpack.c.l.b16 %v1054
        %v6460 = vunpack.c.h.b16 %v1054
        %v6461 = vunpack.c.l.b16 %v1055
        %v6462 = vunpack.c.h.b16 %v1055
        %v6463 = vunpack.c.l.b16 %v1056
        %v6464 = vunpack.c.h.b16 %v1056
        %v6465 = vunpack.c.l.b16 %v1057
        %v6466 = vunpack.c.h.b16 %v1057
        %v6467 = vunpack.c.l.b16 %v1058
        %v6468 = vunpack.c.h.b16 %v1058
        %v6469 = vunpack.c.l.b16 %v1059
        %v6470 = vunpack.c.h.b16 %v1059
        %v6471 = vunpack.c.l.b16 %v1060
        %v6472 = vunpack.c.h.b16 %v1060
        %v6473 = vunpack.c.l.b16 %v1061
        %v6474 = vunpack.c.h.b16 %v1061
        %v6475 = vunpack.c.l.b16 %v1062
        %v6476 = vunpack.c.h.b16 %v1062
        %v6477 = vunpack.c.l.b16 %v1063
        %v6478 = vunpack.c.h.b16 %v1063
        %v6479 = vunpack.c.l.b16 %v1064
        %v6480 = vunpack.c.h.b16 %v1064
        %v6481 = vunpack.c.l.b16 %v1065
        %v6482 = vunpack.c.h.b16 %v1065
        %v6483 = vunpack.c.l.b16 %v1066
        %v6484 = vunpack.c.h.b16 %v1066
        %v6485 = vunpack.c.l.b16 %v1067
        %v6486 = vunpack.c.h.b16 %v1067
        %v6487 = vunpack.c.l.b16 %v1068
        %v6488 = vunpack.c.h.b16 %v1068
        %v6489 = vunpack.c.l.b16 %v1069
        %v6490 = vunpack.c.h.b16 %v1069
        %v6491 = vunpack.c.l.b16 %v1070
        %v6492 = vunpack.c.h.b16 %v1070
        %v6493 = vunpack.c.l.b16 %v1071
        %v6494 = vunpack.c.h.b16 %v1071
        %v6495 = vunpack.c.l.b16 %v1072
        %v6496 = vunpack.c.h.b16 %v1072
        %v6497 = vunpack.c.l.b16 %v1073
        %v6498 = vunpack.c.h.b16 %v1073
        %v6499 = vunpack.c.l.b16 %v1074
        %v6500 = vunpack.c.h.b16 %v1074
        %v6501 = vunpack.c.l.b16 %v1075
        %v6502 = vunpack.c.h.b16 %v1075
        %v6503 = vunpack.c.l.b16 %v1076
        %v6504 = vunpack.c.h.b16 %v1076
        %v6505 = vunpack.c.l.b16 %v1077
        %v6506 = vunpack.c.h.b16 %v1077
        %v6507 = vunpack.c.l.b16 %v1078
        %v6508 = vunpack.c.h.b16 %v1078
        %v6509 = vunpack.c.l.b16 %v1079
        %v6510 = vunpack.c.h.b16 %v1079
        %v6511 = vunpack.c.l.b16 %v1080
        %v6512 = vunpack.c.h.b16 %v1080
        %v6513 = vunpack.c.l.b16 %v1081
        %v6514 = vunpack.c.h.b16 %v1081
        %v6515 = vunpack.c.l.b16 %v1082
        %v6516 = vunpack.c.h.b16 %v1082
        %v6517 = vunpack.c.l.b16 %v1083
        %v6518 = vunpack.c.h.b16 %v1083
        %v6519 = vunpack.c.l.b16 %v1084
        %v6520 = vunpack.c.h.b16 %v1084
        %v6521 = vunpack.c.l.b16 %v1085
        %v6522 = vunpack.c.h.b16 %v1085
        %v6523 = vunpack.c.l.b16 %v1086
        %v6524 = vunpack.c.h.b16 %v1086
        %v6525 = vunpack.c.l.b16 %v1087
        %v6526 = vunpack.c.h.b16 %v1087
        %v6527 = vunpack.c.l.b16 %v1088
        %v6528 = vunpack.c.h.b16 %v1088
        %v6529 = vunpack.c.l.b16 %v1089
        %v6530 = vunpack.c.h.b16 %v1089
        %v6531 = vunpack.c.l.b16 %v1090
        %v6532 = vunpack.c.h.b16 %v1090
        %v6533 = vunpack.c.l.b16 %v1091
        %v6534 = vunpack.c.h.b16 %v1091
        %v6535 = vunpack.c.l.b16 %v1092
        %v6536 = vunpack.c.h.b16 %v1092
        %v6537 = vunpack.c.l.b16 %v1093
        %v6538 = vunpack.c.h.b16 %v1093
        %v6539 = vunpack.c.l.b16 %v1094
        %v6540 = vunpack.c.h.b16 %v1094
        %v6541 = vunpack.c.l.b16 %v1095
        %v6542 = vunpack.c.h.b16 %v1095
        %v6543 = vunpack.c.l.b16 %v1096
        %v6544 = vunpack.c.h.b16 %v1096
        %v6545 = vunpack.c.l.b16 %v1097
        %v6546 = vunpack.c.h.b16 %v1097
        %v6547 = vunpack.c.l.b16 %v1098
        %v6548 = vunpack.c.h.b16 %v1098
        %v6549 = vunpack.c.l.b16 %v1099
        %v6550 = vunpack.c.h.b16 %v1099
        %v6551 = vunpack.c.l.b16 %v1100
        %v6552 = vunpack.c.h.b16 %v1100
        %v6553 = vunpack.c.l.b16 %v1101
        %v6554 = vunpack.c.h.b16 %v1101
        %v6555 = vunpack.c.l.b16 %v1102
        %v6556 = vunpack.c.h.b16 %v1102
        %v6557 = vunpack.c.l.b16 %v1103
        %v6558 = vunpack.c.h.b16 %v1103
        %v6559 = vunpack.c.l.b16 %v1104
        %v6560 = vunpack.c.h.b16 %v1104
        %v6561 = vunpack.c.l.b16 %v1105
        %v6562 = vunpack.c.h.b16 %v1105
        %v6563 = vunpack.c.l.b16 %v1106
        %v6564 = vunpack.c.h.b16 %v1106
        %v6565 = vunpack.c.l.b16 %v1107
        %v6566 = vunpack.c.h.b16 %v1107
        %v6567 = vunpack.c.l.b16 %v1108
        %v6568 = vunpack.c.h.b16 %v1108
        %v6569 = vunpack.c.l.b16 %v1109
        %v6570 = vunpack.c.h.b16 %v1109
        %v6571 = vunpack.c.l.b16 %v1110
        %v6572 = vunpack.c.h.b16 %v1110
        %v6573 = vunpack.c.l.b16 %v1111
        %v6574 = vunpack.c.h.b16 %v1111
        %v6575 = vunpack.c.l.b16 %v1112
        %v6576 = vunpack.c.h.b16 %v1112
        %v6577 = vunpack.c.l.b16 %v1113
        %v6578 = vunpack.c.h.b16 %v1113
        %v6579 = vunpack.c.l.b16 %v1114
        %v6580 = vunpack.c.h.b16 %v1114
        %v6581 = vunpack.c.l.b16 %v1115
        %v6582 = vunpack.c.h.b16 %v1115
        %v6583 = vpack.c.b16 %v5945, %v5943
        %v6584 = vpack.c.b16 %v5946, %v5944
        %v6585 = vpack.c.b16 %v5949, %v5947
        %v6586 = vpack.c.b16 %v5950, %v5948
        %v6587 = vpack.c.b16 %v5953, %v5951
        %v6588 = vpack.c.b16 %v5954, %v5952
        %v6589 = vpack.c.b16 %v5957, %v5955
        %v6590 = vpack.c.b16 %v5958, %v5956
        %v6591 = vpack.c.b16 %v5961, %v5959
        %v6592 = vpack.c.b16 %v5962, %v5960
        %v6593 = vpack.c.b16 %v5965, %v5963
        %v6594 = vpack.c.b16 %v5966, %v5964
        %v6595 = vpack.c.b16 %v5969, %v5967
        %v6596 = vpack.c.b16 %v5970, %v5968
        %v6597 = vpack.c.b16 %v5973, %v5971
        %v6598 = vpack.c.b16 %v5974, %v5972
        %v6599 = vpack.c.b16 %v5977, %v5975
        %v6600 = vpack.c.b16 %v5978, %v5976
        %v6601 = vpack.c.b16 %v5981, %v5979
        %v6602 = vpack.c.b16 %v5982, %v5980
        %v6603 = vpack.c.b16 %v5985, %v5983
        %v6604 = vpack.c.b16 %v5986, %v5984
        %v6605 = vpack.c.b16 %v5989, %v5987
        %v6606 = vpack.c.b16 %v5990, %v5988
        %v6607 = vpack.c.b16 %v5993, %v5991
        %v6608 = vpack.c.b16 %v5994, %v5992
        %v6609 = vpack.c.b16 %v5997, %v5995
        %v6610 = vpack.c.b16 %v5998, %v5996
        %v6611 = vpack.c.b16 %v6001, %v5999
        %v6612 = vpack.c.b16 %v6002, %v6000
        %v6613 = vpack.c.b16 %v6005, %v6003
        %v6614 = vpack.c.b16 %v6006, %v6004
        %v6615 = vpack.c.b16 %v6009, %v6007
        %v6616 = vpack.c.b16 %v6010, %v6008
        %v6617 = vpack.c.b16 %v6013, %v6011
        %v6618 = vpack.c.b16 %v6014, %v6012
        %v6619 = vpack.c.b16 %v6017, %v6015
        %v6620 = vpack.c.b16 %v6018, %v6016
        %v6621 = vpack.c.b16 %v6021, %v6019
        %v6622 = vpack.c.b16 %v6022, %v6020
        %v6623 = vpack.c.b16 %v6025, %v6023
        %v6624 = vpack.c.b16 %v6026, %v6024
        %v6625 = vpack.c.b16 %v6029, %v6027
        %v6626 = vpack.c.b16 %v6030, %v6028
        %v6627 = vpack.c.b16 %v6033, %v6031
        %v6628 = vpack.c.b16 %v6034, %v6032
        %v6629 = vpack.c.b16 %v6037, %v6035
        %v6630 = vpack.c.b16 %v6038, %v6036
        %v6631 = vpack.c.b16 %v6041, %v6039
        %v6632 = vpack.c.b16 %v6042, %v6040
        %v6633 = vpack.c.b16 %v6045, %v6043
        %v6634 = vpack.c.b16 %v6046, %v6044
        %v6635 = vpack.c.b16 %v6049, %v6047
        %v6636 = vpack.c.b16 %v6050, %v6048
        %v6637 = vpack.c.b16 %v6053, %v6051
        %v6638 = vpack.c.b16 %v6054, %v6052
        %v6639 = vpack.c.b16 %v6057, %v6055
        %v6640 = vpack.c.b16 %v6058, %v6056
        %v6641 = vpack.c.b16 %v6061, %v6059
        %v6642 = vpack.c.b16 %v6062, %v6060
        %v6643 = vpack.c.b16 %v6065, %v6063
        %v6644 = vpack.c.b16 %v6066, %v6064
        %v6645 = vpack.c.b16 %v6069, %v6067
        %v6646 = vpack.c.b16 %v6070, %v6068
        %v6647 = vpack.c.b16 %v6073, %v6071
        %v6648 = vpack.c.b16 %v6074, %v6072
        %v6649 = vpack.c.b16 %v6077, %v6075
        %v6650 = vpack.c.b16 %v6078, %v6076
        %v6651 = vpack.c.b16 %v6081, %v6079
        %v6652 = vpack.c.b16 %v6082, %v6080
        %v6653 = vpack.c.b16 %v6085, %v6083
        %v6654 = vpack.c.b16 %v6086, %v6084
        %v6655 = vpack.c.b16 %v6089, %v6087
        %v6656 = vpack.c.b16 %v6090, %v6088
        %v6657 = vpack.c.b16 %v6093, %v6091
        %v6658 = vpack.c.b16 %v6094, %v6092
        %v6659 = vpack.c.b16 %v6097, %v6095
        %v6660 = vpack.c.b16 %v6098, %v6096
        %v6661 = vpack.c.b16 %v6101, %v6099
        %v6662 = vpack.c.b16 %v6102, %v6100
        %v6663 = vpack.c.b16 %v6105, %v6103
        %v6664 = vpack.c.b16 %v6106, %v6104
        %v6665 = vpack.c.b16 %v6109, %v6107
        %v6666 = vpack.c.b16 %v6110, %v6108
        %v6667 = vpack.c.b16 %v6113, %v6111
        %v6668 = vpack.c.b16 %v6114, %v6112
        %v6669 = vpack.c.b16 %v6117, %v6115
        %v6670 = vpack.c.b16 %v6118, %v6116
        %v6671 = vpack.c.b16 %v6121, %v6119
        %v6672 = vpack.c.b16 %v6122, %v6120
        %v6673 = vpack.c.b16 %v6125, %v6123
        %v6674 = vpack.c.b16 %v6126, %v6124
        %v6675 = vpack.c.b16 %v6129, %v6127
        %v6676 = vpack.c.b16 %v6130, %v6128
        %v6677 = vpack.c.b16 %v6133, %v6131
        %v6678 = vpack.c.b16 %v6134, %v6132
        %v6679 = vpack.c.b16 %v6137, %v6135
        %v6680 = vpack.c.b16 %v6138, %v6136
        %v6681 = vpack.c.b16 %v6141, %v6139
        %v6682 = vpack.c.b16 %v6142, %v6140
        %v6683 = vpack.c.b16 %v6145, %v6143
        %v6684 = vpack.c.b16 %v6146, %v6144
        %v6685 = vpack.c.b16 %v6149, %v6147
        %v6686 = vpack.c.b16 %v6150, %v6148
        %v6687 = vpack.c.b16 %v6153, %v6151
        %v6688 = vpack.c.b16 %v6154, %v6152
        %v6689 = vpack.c.b16 %v6157, %v6155
        %v6690 = vpack.c.b16 %v6158, %v6156
        %v6691 = vpack.c.b16 %v6161, %v6159
        %v6692 = vpack.c.b16 %v6162, %v6160
        %v6693 = vpack.c.b16 %v6165, %v6163
        %v6694 = vpack.c.b16 %v6166, %v6164
        %v6695 = vpack.c.b16 %v6169, %v6167
        %v6696 = vpack.c.b16 %v6170, %v6168
        %v6697 = vpack.c.b16 %v6173, %v6171
        %v6698 = vpack.c.b16 %v6174, %v6172
        %v6699 = vpack.c.b16 %v6177, %v6175
        %v6700 = vpack.c.b16 %v6178, %v6176
        %v6701 = vpack.c.b16 %v6181, %v6179
        %v6702 = vpack.c.b16 %v6182, %v6180
        %v6703 = vpack.c.b16 %v6185, %v6183
        %v6704 = vpack.c.b16 %v6186, %v6184
        %v6705 = vpack.c.b16 %v6189, %v6187
        %v6706 = vpack.c.b16 %v6190, %v6188
        %v6707 = vpack.c.b16 %v6193, %v6191
        %v6708 = vpack.c.b16 %v6194, %v6192
        %v6709 = vpack.c.b16 %v6197, %v6195
        %v6710 = vpack.c.b16 %v6198, %v6196
        %v6711 = vpack.c.b16 %v6201, %v6199
        %v6712 = vpack.c.b16 %v6202, %v6200
        %v6713 = vpack.c.b16 %v6205, %v6203
        %v6714 = vpack.c.b16 %v6206, %v6204
        %v6715 = vpack.c.b16 %v6209, %v6207
        %v6716 = vpack.c.b16 %v6210, %v6208
        %v6717 = vpack.c.b16 %v6213, %v6211
        %v6718 = vpack.c.b16 %v6214, %v6212
        %v6719 = vpack.c.b16 %v6217, %v6215
        %v6720 = vpack.c.b16 %v6218, %v6216
        %v6721 = vpack.c.b16 %v6221, %v6219
        %v6722 = vpack.c.b16 %v6222, %v6220
        %v6723 = vpack.c.b16 %v6225, %v6223
        %v6724 = vpack.c.b16 %v6226, %v6224
        %v6725 = vpack.c.b16 %v6229, %v6227
        %v6726 = vpack.c.b16 %v6230, %v6228
        %v6727 = vpack.c.b16 %v6233, %v6231
        %v6728 = vpack.c.b16 %v6234, %v6232
        %v6729 = vpack.c.b16 %v6237, %v6235
        %v6730 = vpack.c.b16 %v6238, %v6236
        %v6731 = vpack.c.b16 %v6241, %v6239
        %v6732 = vpack.c.b16 %v6242, %v6240
        %v6733 = vpack.c.b16 %v6245, %v6243
        %v6734 = vpack.c.b16 %v6246, %v6244
        %v6735 = vpack.c.b16 %v6249, %v6247
        %v6736 = vpack.c.b16 %v6250, %v6248
        %v6737 = vpack.c.b16 %v6253, %v6251
        %v6738 = vpack.c.b16 %v6254, %v6252
        %v6739 = vpack.c.b16 %v6257, %v6255
        %v6740 = vpack.c.b16 %v6258, %v6256
        %v6741 = vpack.c.b16 %v6261, %v6259
        %v6742 = vpack.c.b16 %v6262, %v6260
        %v6743 = vpack.c.b16 %v6265, %v6263
        %v6744 = vpack.c.b16 %v6266, %v6264
        %v6745 = vpack.c.b16 %v6269, %v6267
        %v6746 = vpack.c.b16 %v6270, %v6268
        %v6747 = vpack.c.b16 %v6273, %v6271
        %v6748 = vpack.c.b16 %v6274, %v6272
        %v6749 = vpack.c.b16 %v6277, %v6275
        %v6750 = vpack.c.b16 %v6278, %v6276
        %v6751 = vpack.c.b16 %v6281, %v6279
        %v6752 = vpack.c.b16 %v6282, %v6280
        %v6753 = vpack.c.b16 %v6285, %v6283
        %v6754 = vpack.c.b16 %v6286, %v6284
        %v6755 = vpack.c.b16 %v6289, %v6287
        %v6756 = vpack.c.b16 %v6290, %v6288
        %v6757 = vpack.c.b16 %v6293, %v6291
        %v6758 = vpack.c.b16 %v6294, %v6292
        %v6759 = vpack.c.b16 %v6297, %v6295
        %v6760 = vpack.c.b16 %v6298, %v6296
        %v6761 = vpack.c.b16 %v6301, %v6299
        %v6762 = vpack.c.b16 %v6302, %v6300
        %v6763 = vpack.c.b16 %v6305, %v6303
        %v6764 = vpack.c.b16 %v6306, %v6304
        %v6765 = vpack.c.b16 %v6309, %v6307
        %v6766 = vpack.c.b16 %v6310, %v6308
        %v6767 = vpack.c.b16 %v6313, %v6311
        %v6768 = vpack.c.b16 %v6314, %v6312
        %v6769 = vpack.c.b16 %v6317, %v6315
        %v6770 = vpack.c.b16 %v6318, %v6316
        %v6771 = vpack.c.b16 %v6321, %v6319
        %v6772 = vpack.c.b16 %v6322, %v6320
        %v6773 = vpack.c.b16 %v6325, %v6323
        %v6774 = vpack.c.b16 %v6326, %v6324
        %v6775 = vpack.c.b16 %v6329, %v6327
        %v6776 = vpack.c.b16 %v6330, %v6328
        %v6777 = vpack.c.b16 %v6333, %v6331
        %v6778 = vpack.c.b16 %v6334, %v6332
        %v6779 = vpack.c.b16 %v6337, %v6335
        %v6780 = vpack.c.b16 %v6338, %v6336
        %v6781 = vpack.c.b16 %v6341, %v6339
        %v6782 = vpack.c.b16 %v6342, %v6340
        %v6783 = vpack.c.b16 %v6345, %v6343
        %v6784 = vpack.c.b16 %v6346, %v6344
        %v6785 = vpack.c.b16 %v6349, %v6347
        %v6786 = vpack.c.b16 %v6350, %v6348
        %v6787 = vpack.c.b16 %v6353, %v6351
        %v6788 = vpack.c.b16 %v6354, %v6352
        %v6789 = vpack.c.b16 %v6357, %v6355
        %v6790 = vpack.c.b16 %v6358, %v6356
        %v6791 = vpack.c.b16 %v6361, %v6359
        %v6792 = vpack.c.b16 %v6362, %v6360
        %v6793 = vpack.c.b16 %v6365, %v6363
        %v6794 = vpack.c.b16 %v6366, %v6364
        %v6795 = vpack.c.b16 %v6369, %v6367
        %v6796 = vpack.c.b16 %v6370, %v6368
        %v6797 = vpack.c.b16 %v6373, %v6371
        %v6798 = vpack.c.b16 %v6374, %v6372
        %v6799 = vpack.c.b16 %v6377, %v6375
        %v6800 = vpack.c.b16 %v6378, %v6376
        %v6801 = vpack.c.b16 %v6381, %v6379
        %v6802 = vpack.c.b16 %v6382, %v6380
        %v6803 = vpack.c.b16 %v6385, %v6383
        %v6804 = vpack.c.b16 %v6386, %v6384
        %v6805 = vpack.c.b16 %v6389, %v6387
        %v6806 = vpack.c.b16 %v6390, %v6388
        %v6807 = vpack.c.b16 %v6393, %v6391
        %v6808 = vpack.c.b16 %v6394, %v6392
        %v6809 = vpack.c.b16 %v6397, %v6395
        %v6810 = vpack.c.b16 %v6398, %v6396
        %v6811 = vpack.c.b16 %v6401, %v6399
        %v6812 = vpack.c.b16 %v6402, %v6400
        %v6813 = vpack.c.b16 %v6405, %v6403
        %v6814 = vpack.c.b16 %v6406, %v6404
        %v6815 = vpack.c.b16 %v6409, %v6407
        %v6816 = vpack.c.b16 %v6410, %v6408
        %v6817 = vpack.c.b16 %v6413, %v6411
        %v6818 = vpack.c.b16 %v6414, %v6412
        %v6819 = vpack.c.b16 %v6417, %v6415
        %v6820 = vpack.c.b16 %v6418, %v6416
        %v6821 = vpack.c.b16 %v6421, %v6419
        %v6822 = vpack.c.b16 %v6422, %v6420
        %v6823 = vpack.c.b16 %v6425, %v6423
        %v6824 = vpack.c.b16 %v6426, %v6424
        %v6825 = vpack.c.b16 %v6429, %v6427
        %v6826 = vpack.c.b16 %v6430, %v6428
        %v6827 = vpack.c.b16 %v6433, %v6431
        %v6828 = vpack.c.b16 %v6434, %v6432
        %v6829 = vpack.c.b16 %v6437, %v6435
        %v6830 = vpack.c.b16 %v6438, %v6436
        %v6831 = vpack.c.b16 %v6441, %v6439
        %v6832 = vpack.c.b16 %v6442, %v6440
        %v6833 = vpack.c.b16 %v6445, %v6443
        %v6834 = vpack.c.b16 %v6446, %v6444
        %v6835 = vpack.c.b16 %v6449, %v6447
        %v6836 = vpack.c.b16 %v6450, %v6448
        %v6837 = vpack.c.b16 %v6453, %v6451
        %v6838 = vpack.c.b16 %v6454, %v6452
        %v6839 = vpack.c.b16 %v6457, %v6455
        %v6840 = vpack.c.b16 %v6458, %v6456
        %v6841 = vpack.c.b16 %v6461, %v6459
        %v6842 = vpack.c.b16 %v6462, %v6460
        %v6843 = vpack.c.b16 %v6465, %v6463
        %v6844 = vpack.c.b16 %v6466, %v6464
        %v6845 = vpack.c.b16 %v6469, %v6467
        %v6846 = vpack.c.b16 %v6470, %v6468
        %v6847 = vpack.c.b16 %v6473, %v6471
        %v6848 = vpack.c.b16 %v6474, %v6472
        %v6849 = vpack.c.b16 %v6477, %v6475
        %v6850 = vpack.c.b16 %v6478, %v6476
        %v6851 = vpack.c.b16 %v6481, %v6479
        %v6852 = vpack.c.b16 %v6482, %v6480
        %v6853 = vpack.c.b16 %v6485, %v6483
        %v6854 = vpack.c.b16 %v6486, %v6484
        %v6855 = vpack.c.b16 %v6489, %v6487
        %v6856 = vpack.c.b16 %v6490, %v6488
        %v6857 = vpack.c.b16 %v6493, %v6491
        %v6858 = vpack.c.b16 %v6494, %v6492
        %v6859 = vpack.c.b16 %v6497, %v6495
        %v6860 = vpack.c.b16 %v6498, %v6496
        %v6861 = vpack.c.b16 %v6501, %v6499
        %v6862 = vpack.c.b16 %v6502, %v6500
        %v6863 = vpack.c.b16 %v6505, %v6503
        %v6864 = vpack.c.b16 %v6506, %v6504
        %v6865 = vpack.c.b16 %v6509, %v6507
        %v6866 = vpack.c.b16 %v6510, %v6508
        %v6867 = vpack.c.b16 %v6513, %v6511
        %v6868 = vpack.c.b16 %v6514, %v6512
        %v6869 = vpack.c.b16 %v6517, %v6515
        %v6870 = vpack.c.b16 %v6518, %v6516
        %v6871 = vpack.c.b16 %v6521, %v6519
        %v6872 = vpack.c.b16 %v6522, %v6520
        %v6873 = vpack.c.b16 %v6525, %v6523
        %v6874 = vpack.c.b16 %v6526, %v6524
        %v6875 = vpack.c.b16 %v6529, %v6527
        %v6876 = vpack.c.b16 %v6530, %v6528
        %v6877 = vpack.c.b16 %v6533, %v6531
        %v6878 = vpack.c.b16 %v6534, %v6532
        %v6879 = vpack.c.b16 %v6537, %v6535
        %v6880 = vpack.c.b16 %v6538, %v6536
        %v6881 = vpack.c.b16 %v6541, %v6539
        %v6882 = vpack.c.b16 %v6542, %v6540
        %v6883 = vpack.c.b16 %v6545, %v6543
        %v6884 = vpack.c.b16 %v6546, %v6544
        %v6885 = vpack.c.b16 %v6549, %v6547
        %v6886 = vpack.c.b16 %v6550, %v6548
        %v6887 = vpack.c.b16 %v6553, %v6551
        %v6888 = vpack.c.b16 %v6554, %v6552
        %v6889 = vpack.c.b16 %v6557, %v6555
        %v6890 = vpack.c.b16 %v6558, %v6556
        %v6891 = vpack.c.b16 %v6561, %v6559
        %v6892 = vpack.c.b16 %v6562, %v6560
        %v6893 = vpack.c.b16 %v6565, %v6563
        %v6894 = vpack.c.b16 %v6566, %v6564
        %v6895 = vpack.c.b16 %v6569, %v6567
        %v6896 = vpack.c.b16 %v6570, %v6568
        %v6897 = vpack.c.b16 %v6573, %v6571
        %v6898 = vpack.c.b16 %v6574, %v6572
        %v6899 = vpack.c.b16 %v6577, %v6575
        %v6900 = vpack.c.b16 %v6578, %v6576
        %v6901 = vpack.c.b16 %v6581, %v6579
        %v6902 = vpack.c.b16 %v6582, %v6580
        %v7224 = vlaneseq
        %v7225 = vshrl.u32 %v7224, 7
        %v7226 = vsub.s32 0, %v7225
        %v7227 = vrot.slane %v1116, %v7226
        %v7228 = vlaneseq
        %v7229 = vshrl.u32 %v7228, 7
        %v7230 = vsub.s32 1, %v7229
        %v7231 = vrot.slane %v1116, %v7230
        %7234 = vmatprep.subr.bf16.mxu0 %v6584
        %7235 = vmatpush1.bf16.msra.mxu0 %v6583
        %7236 = vmatprep.subr.bf16.mxu0 %v6586
        %7237 = vmatpush1.bf16.msra.mxu0 %v6585
        %7238 = vmatprep.subr.bf16.mxu0 %v6588
        %7239 = vmatpush1.bf16.msra.mxu0 %v6587
        %7240 = vmatprep.subr.bf16.mxu0 %v6590
        %7241 = vmatpush1.bf16.msra.mxu0 %v6589
        %7242 = vmatprep.subr.bf16.mxu0 %v6592
        %7243 = vmatpush1.bf16.msra.mxu0 %v6591
        %7244 = vmatprep.subr.bf16.mxu0 %v6594
        %7245 = vmatpush1.bf16.msra.mxu0 %v6593
        %7246 = vmatprep.subr.bf16.mxu0 %v6596
        %7247 = vmatpush1.bf16.msra.mxu0 %v6595
        %7248 = vmatprep.subr.bf16.mxu0 %v6598
        %7249 = vmatpush1.bf16.msra.mxu0 %v6597
        %7250 = vmatprep.subr.bf16.mxu0 %v6600
        %7251 = vmatpush1.bf16.msra.mxu0 %v6599
        %7252 = vmatprep.subr.bf16.mxu0 %v6602
        %7253 = vmatpush1.bf16.msra.mxu0 %v6601
        %7254 = vmatprep.subr.bf16.mxu0 %v6604
        %7255 = vmatpush1.bf16.msra.mxu0 %v6603
        %7256 = vmatprep.subr.bf16.mxu0 %v6606
        %7257 = vmatpush1.bf16.msra.mxu0 %v6605
        %7258 = vmatprep.subr.bf16.mxu0 %v6608
        %7259 = vmatpush1.bf16.msra.mxu0 %v6607
        %7260 = vmatprep.subr.bf16.mxu0 %v6610
        %7261 = vmatpush1.bf16.msra.mxu0 %v6609
        %7262 = vmatprep.subr.bf16.mxu0 %v6612
        %7263 = vmatpush1.bf16.msra.mxu0 %v6611
        %7264 = vmatprep.subr.bf16.mxu0 %v6614
        %7265 = vmatpush1.bf16.msra.mxu0 %v6613
        %7266 = vmatprep.mubr.bf16.mxu0 %v5604
        %7267 = vmatmul.mubr.bf16.gmra.mrb[0].mxu0 %v5603
        %v7268 = vpop.f32.mrb[0].mxu0
        %v7269 = vadd.f32 %v7227, %v7268
        %v7270 = vpop.f32.mrb[0].mxu0
        %v7271 = vadd.f32 %v7231, %v7270
        %v7272 = vpop.f32.mrb[0].mxu0
        %v7273 = vpop.f32.mrb[0].mxu0
        %7274 = vdwg.mxu0
        %7275 = vmatprep.subr.bf16.mxu0 %v6616
        %7276 = vmatpush1.bf16.msra.mxu0 %v6615
        %7277 = vmatprep.subr.bf16.mxu0 %v6618
        %7278 = vmatpush1.bf16.msra.mxu0 %v6617
        %7279 = vmatprep.subr.bf16.mxu0 %v6620
        %7280 = vmatpush1.bf16.msra.mxu0 %v6619
        %7281 = vmatprep.subr.bf16.mxu0 %v6622
        %7282 = vmatpush1.bf16.msra.mxu0 %v6621
        %7283 = vmatprep.subr.bf16.mxu0 %v6624
        %7284 = vmatpush1.bf16.msra.mxu0 %v6623
        %7285 = vmatprep.subr.bf16.mxu0 %v6626
        %7286 = vmatpush1.bf16.msra.mxu0 %v6625
        %7287 = vmatprep.subr.bf16.mxu0 %v6628
        %7288 = vmatpush1.bf16.msra.mxu0 %v6627
        %7289 = vmatprep.subr.bf16.mxu0 %v6630
        %7290 = vmatpush1.bf16.msra.mxu0 %v6629
        %7291 = vmatprep.subr.bf16.mxu0 %v6632
        %7292 = vmatpush1.bf16.msra.mxu0 %v6631
        %7293 = vmatprep.subr.bf16.mxu0 %v6634
        %7294 = vmatpush1.bf16.msra.mxu0 %v6633
        %7295 = vmatprep.subr.bf16.mxu0 %v6636
        %7296 = vmatpush1.bf16.msra.mxu0 %v6635
        %7297 = vmatprep.subr.bf16.mxu0 %v6638
        %7298 = vmatpush1.bf16.msra.mxu0 %v6637
        %7299 = vmatprep.subr.bf16.mxu0 %v6640
        %7300 = vmatpush1.bf16.msra.mxu0 %v6639
        %7301 = vmatprep.subr.bf16.mxu0 %v6642
        %7302 = vmatpush1.bf16.msra.mxu0 %v6641
        %7303 = vmatprep.subr.bf16.mxu0 %v6644
        %7304 = vmatpush1.bf16.msra.mxu0 %v6643
        %7305 = vmatprep.subr.bf16.mxu0 %v6646
        %7306 = vmatpush1.bf16.msra.mxu0 %v6645
        %7307 = vmatprep.mubr.bf16.mxu0 %v5606
        %7308 = vmatmul.mubr.bf16.gmra.mrb[0].mxu0 %v5605
        %v7309 = vpop.f32.mrb[0].mxu0
        %v7310 = vadd.f32 %v7269, %v7309
        %v7311 = vpop.f32.mrb[0].mxu0
        %v7312 = vadd.f32 %v7271, %v7311
        %v7313 = vpop.f32.mrb[0].mxu0
        %v7314 = vpop.f32.mrb[0].mxu0
        %7315 = vdwg.mxu0
        %7316 = vmatprep.subr.bf16.mxu0 %v6648
        %7317 = vmatpush1.bf16.msra.mxu0 %v6647
        %7318 = vmatprep.subr.bf16.mxu0 %v6650
        %7319 = vmatpush1.bf16.msra.mxu0 %v6649
        %7320 = vmatprep.subr.bf16.mxu0 %v6652
        %7321 = vmatpush1.bf16.msra.mxu0 %v6651
        %7322 = vmatprep.subr.bf16.mxu0 %v6654
        %7323 = vmatpush1.bf16.msra.mxu0 %v6653
        %7324 = vmatprep.subr.bf16.mxu0 %v6656
        %7325 = vmatpush1.bf16.msra.mxu0 %v6655
        %7326 = vmatprep.subr.bf16.mxu0 %v6658
        %7327 = vmatpush1.bf16.msra.mxu0 %v6657
        %7328 = vmatprep.subr.bf16.mxu0 %v6660
        %7329 = vmatpush1.bf16.msra.mxu0 %v6659
        %7330 = vmatprep.subr.bf16.mxu0 %v6662
        %7331 = vmatpush1.bf16.msra.mxu0 %v6661
        %7332 = vmatprep.subr.bf16.mxu0 %v6664
        %7333 = vmatpush1.bf16.msra.mxu0 %v6663
        %7334 = vmatprep.subr.bf16.mxu0 %v6666
        %7335 = vmatpush1.bf16.msra.mxu0 %v6665
        %7336 = vmatprep.subr.bf16.mxu0 %v6668
        %7337 = vmatpush1.bf16.msra.mxu0 %v6667
        %7338 = vmatprep.subr.bf16.mxu0 %v6670
        %7339 = vmatpush1.bf16.msra.mxu0 %v6669
        %7340 = vmatprep.subr.bf16.mxu0 %v6672
        %7341 = vmatpush1.bf16.msra.mxu0 %v6671
        %7342 = vmatprep.subr.bf16.mxu0 %v6674
        %7343 = vmatpush1.bf16.msra.mxu0 %v6673
        %7344 = vmatprep.subr.bf16.mxu0 %v6676
        %7345 = vmatpush1.bf16.msra.mxu0 %v6675
        %7346 = vmatprep.subr.bf16.mxu0 %v6678
        %7347 = vmatpush1.bf16.msra.mxu0 %v6677
        %7348 = vmatprep.mubr.bf16.mxu0 %v5608
        %7349 = vmatmul.mubr.bf16.gmra.mrb[0].mxu0 %v5607
        %v7350 = vpop.f32.mrb[0].mxu0
        %v7351 = vadd.f32 %v7310, %v7350
        %v7352 = vpop.f32.mrb[0].mxu0
        %v7353 = vadd.f32 %v7312, %v7352
        %v7354 = vpop.f32.mrb[0].mxu0
        %v7355 = vpop.f32.mrb[0].mxu0
        %7356 = vdwg.mxu0
        %7357 = vmatprep.subr.bf16.mxu0 %v6680
        %7358 = vmatpush1.bf16.msra.mxu0 %v6679
        %7359 = vmatprep.subr.bf16.mxu0 %v6682
        %7360 = vmatpush1.bf16.msra.mxu0 %v6681
        %7361 = vmatprep.subr.bf16.mxu0 %v6684
        %7362 = vmatpush1.bf16.msra.mxu0 %v6683
        %7363 = vmatprep.subr.bf16.mxu0 %v6686
        %7364 = vmatpush1.bf16.msra.mxu0 %v6685
        %7365 = vmatprep.subr.bf16.mxu0 %v6688
        %7366 = vmatpush1.bf16.msra.mxu0 %v6687
        %7367 = vmatprep.subr.bf16.mxu0 %v6690
        %7368 = vmatpush1.bf16.msra.mxu0 %v6689
        %7369 = vmatprep.subr.bf16.mxu0 %v6692
        %7370 = vmatpush1.bf16.msra.mxu0 %v6691
        %7371 = vmatprep.subr.bf16.mxu0 %v6694
        %7372 = vmatpush1.bf16.msra.mxu0 %v6693
        %7373 = vmatprep.subr.bf16.mxu0 %v6696
        %7374 = vmatpush1.bf16.msra.mxu0 %v6695
        %7375 = vmatprep.subr.bf16.mxu0 %v6698
        %7376 = vmatpush1.bf16.msra.mxu0 %v6697
        %7377 = vmatprep.subr.bf16.mxu0 %v6700
        %7378 = vmatpush1.bf16.msra.mxu0 %v6699
        %7379 = vmatprep.subr.bf16.mxu0 %v6702
        %7380 = vmatpush1.bf16.msra.mxu0 %v6701
        %7381 = vmatprep.subr.bf16.mxu0 %v6704
        %7382 = vmatpush1.bf16.msra.mxu0 %v6703
        %7383 = vmatprep.subr.bf16.mxu0 %v6706
        %7384 = vmatpush1.bf16.msra.mxu0 %v6705
        %7385 = vmatprep.subr.bf16.mxu0 %v6708
        %7386 = vmatpush1.bf16.msra.mxu0 %v6707
        %7387 = vmatprep.subr.bf16.mxu0 %v6710
        %7388 = vmatpush1.bf16.msra.mxu0 %v6709
        %7389 = vmatprep.mubr.bf16.mxu0 %v5610
        %7390 = vmatmul.mubr.bf16.gmra.mrb[0].mxu0 %v5609
        %v7391 = vpop.f32.mrb[0].mxu0
        %v7392 = vadd.f32 %v7351, %v7391
        %v7393 = vpop.f32.mrb[0].mxu0
        %v7394 = vadd.f32 %v7353, %v7393
        %v7395 = vpop.f32.mrb[0].mxu0
        %v7396 = vpop.f32.mrb[0].mxu0
        %7397 = vdwg.mxu0
        %7398 = vmatprep.subr.bf16.mxu0 %v6712
        %7399 = vmatpush1.bf16.msra.mxu0 %v6711
        %7400 = vmatprep.subr.bf16.mxu0 %v6714
        %7401 = vmatpush1.bf16.msra.mxu0 %v6713
        %7402 = vmatprep.subr.bf16.mxu0 %v6716
        %7403 = vmatpush1.bf16.msra.mxu0 %v6715
        %7404 = vmatprep.subr.bf16.mxu0 %v6718
        %7405 = vmatpush1.bf16.msra.mxu0 %v6717
        %7406 = vmatprep.subr.bf16.mxu0 %v6720
        %7407 = vmatpush1.bf16.msra.mxu0 %v6719
        %7408 = vmatprep.subr.bf16.mxu0 %v6722
        %7409 = vmatpush1.bf16.msra.mxu0 %v6721
        %7410 = vmatprep.subr.bf16.mxu0 %v6724
        %7411 = vmatpush1.bf16.msra.mxu0 %v6723
        %7412 = vmatprep.subr.bf16.mxu0 %v6726
        %7413 = vmatpush1.bf16.msra.mxu0 %v6725
        %7414 = vmatprep.subr.bf16.mxu0 %v6728
        %7415 = vmatpush1.bf16.msra.mxu0 %v6727
        %7416 = vmatprep.subr.bf16.mxu0 %v6730
        %7417 = vmatpush1.bf16.msra.mxu0 %v6729
        %7418 = vmatprep.subr.bf16.mxu0 %v6732
        %7419 = vmatpush1.bf16.msra.mxu0 %v6731
        %7420 = vmatprep.subr.bf16.mxu0 %v6734
        %7421 = vmatpush1.bf16.msra.mxu0 %v6733
        %7422 = vmatprep.subr.bf16.mxu0 %v6736
        %7423 = vmatpush1.bf16.msra.mxu0 %v6735
        %7424 = vmatprep.subr.bf16.mxu0 %v6738
        %7425 = vmatpush1.bf16.msra.mxu0 %v6737
        %7426 = vmatprep.subr.bf16.mxu0 %v6740
        %7427 = vmatpush1.bf16.msra.mxu0 %v6739
        %7428 = vmatprep.subr.bf16.mxu0 %v6742
        %7429 = vmatpush1.bf16.msra.mxu0 %v6741
        %7430 = vmatprep.mubr.bf16.mxu0 %v5612
        %7431 = vmatmul.mubr.bf16.gmra.mrb[0].mxu0 %v5611
        %v7432 = vpop.f32.mrb[0].mxu0
        %v7433 = vadd.f32 %v7392, %v7432
        %v7434 = vpop.f32.mrb[0].mxu0
        %v7435 = vadd.f32 %v7394, %v7434
        %v7436 = vpop.f32.mrb[0].mxu0
        %v7437 = vpop.f32.mrb[0].mxu0
        %7438 = vdwg.mxu0
        %7439 = vmatprep.subr.bf16.mxu0 %v6744
        %7440 = vmatpush1.bf16.msra.mxu0 %v6743
        %7441 = vmatprep.subr.bf16.mxu0 %v6746
        %7442 = vmatpush1.bf16.msra.mxu0 %v6745
        %7443 = vmatprep.subr.bf16.mxu0 %v6748
        %7444 = vmatpush1.bf16.msra.mxu0 %v6747
        %7445 = vmatprep.subr.bf16.mxu0 %v6750
        %7446 = vmatpush1.bf16.msra.mxu0 %v6749
        %7447 = vmatprep.subr.bf16.mxu0 %v6752
        %7448 = vmatpush1.bf16.msra.mxu0 %v6751
        %7449 = vmatprep.subr.bf16.mxu0 %v6754
        %7450 = vmatpush1.bf16.msra.mxu0 %v6753
        %7451 = vmatprep.subr.bf16.mxu0 %v6756
        %7452 = vmatpush1.bf16.msra.mxu0 %v6755
        %7453 = vmatprep.subr.bf16.mxu0 %v6758
        %7454 = vmatpush1.bf16.msra.mxu0 %v6757
        %7455 = vmatprep.subr.bf16.mxu0 %v6760
        %7456 = vmatpush1.bf16.msra.mxu0 %v6759
        %7457 = vmatprep.subr.bf16.mxu0 %v6762
        %7458 = vmatpush1.bf16.msra.mxu0 %v6761
        %7459 = vmatprep.subr.bf16.mxu0 %v6764
        %7460 = vmatpush1.bf16.msra.mxu0 %v6763
        %7461 = vmatprep.subr.bf16.mxu0 %v6766
        %7462 = vmatpush1.bf16.msra.mxu0 %v6765
        %7463 = vmatprep.subr.bf16.mxu0 %v6768
        %7464 = vmatpush1.bf16.msra.mxu0 %v6767
        %7465 = vmatprep.subr.bf16.mxu0 %v6770
        %7466 = vmatpush1.bf16.msra.mxu0 %v6769
        %7467 = vmatprep.subr.bf16.mxu0 %v6772
        %7468 = vmatpush1.bf16.msra.mxu0 %v6771
        %7469 = vmatprep.subr.bf16.mxu0 %v6774
        %7470 = vmatpush1.bf16.msra.mxu0 %v6773
        %7471 = vmatprep.mubr.bf16.mxu0 %v5614
        %7472 = vmatmul.mubr.bf16.gmra.mrb[0].mxu0 %v5613
        %v7473 = vpop.f32.mrb[0].mxu0
        %v7474 = vadd.f32 %v7433, %v7473
        %v7475 = vpop.f32.mrb[0].mxu0
        %v7476 = vadd.f32 %v7435, %v7475
        %v7477 = vpop.f32.mrb[0].mxu0
        %v7478 = vpop.f32.mrb[0].mxu0
        %7479 = vdwg.mxu0
        %7480 = vmatprep.subr.bf16.mxu0 %v6776
        %7481 = vmatpush1.bf16.msra.mxu0 %v6775
        %7482 = vmatprep.subr.bf16.mxu0 %v6778
        %7483 = vmatpush1.bf16.msra.mxu0 %v6777
        %7484 = vmatprep.subr.bf16.mxu0 %v6780
        %7485 = vmatpush1.bf16.msra.mxu0 %v6779
        %7486 = vmatprep.subr.bf16.mxu0 %v6782
        %7487 = vmatpush1.bf16.msra.mxu0 %v6781
        %7488 = vmatprep.subr.bf16.mxu0 %v6784
        %7489 = vmatpush1.bf16.msra.mxu0 %v6783
        %7490 = vmatprep.subr.bf16.mxu0 %v6786
        %7491 = vmatpush1.bf16.msra.mxu0 %v6785
        %7492 = vmatprep.subr.bf16.mxu0 %v6788
        %7493 = vmatpush1.bf16.msra.mxu0 %v6787
        %7494 = vmatprep.subr.bf16.mxu0 %v6790
        %7495 = vmatpush1.bf16.msra.mxu0 %v6789
        %7496 = vmatprep.subr.bf16.mxu0 %v6792
        %7497 = vmatpush1.bf16.msra.mxu0 %v6791
        %7498 = vmatprep.subr.bf16.mxu0 %v6794
        %7499 = vmatpush1.bf16.msra.mxu0 %v6793
        %7500 = vmatprep.subr.bf16.mxu0 %v6796
        %7501 = vmatpush1.bf16.msra.mxu0 %v6795
        %7502 = vmatprep.subr.bf16.mxu0 %v6798
        %7503 = vmatpush1.bf16.msra.mxu0 %v6797
        %7504 = vmatprep.subr.bf16.mxu0 %v6800
        %7505 = vmatpush1.bf16.msra.mxu0 %v6799
        %7506 = vmatprep.subr.bf16.mxu0 %v6802
        %7507 = vmatpush1.bf16.msra.mxu0 %v6801
        %7508 = vmatprep.subr.bf16.mxu0 %v6804
        %7509 = vmatpush1.bf16.msra.mxu0 %v6803
        %7510 = vmatprep.subr.bf16.mxu0 %v6806
        %7511 = vmatpush1.bf16.msra.mxu0 %v6805
        %7512 = vmatprep.mubr.bf16.mxu0 %v5616
        %7513 = vmatmul.mubr.bf16.gmra.mrb[0].mxu0 %v5615
        %v7514 = vpop.f32.mrb[0].mxu0
        %v7515 = vadd.f32 %v7474, %v7514
        %v7516 = vpop.f32.mrb[0].mxu0
        %v7517 = vadd.f32 %v7476, %v7516
        %v7518 = vpop.f32.mrb[0].mxu0
        %v7519 = vpop.f32.mrb[0].mxu0
        %7520 = vdwg.mxu0
        %7521 = vmatprep.subr.bf16.mxu0 %v6808
        %7522 = vmatpush1.bf16.msra.mxu0 %v6807
        %7523 = vmatprep.subr.bf16.mxu0 %v6810
        %7524 = vmatpush1.bf16.msra.mxu0 %v6809
        %7525 = vmatprep.subr.bf16.mxu0 %v6812
        %7526 = vmatpush1.bf16.msra.mxu0 %v6811
        %7527 = vmatprep.subr.bf16.mxu0 %v6814
        %7528 = vmatpush1.bf16.msra.mxu0 %v6813
        %7529 = vmatprep.subr.bf16.mxu0 %v6816
        %7530 = vmatpush1.bf16.msra.mxu0 %v6815
        %7531 = vmatprep.subr.bf16.mxu0 %v6818
        %7532 = vmatpush1.bf16.msra.mxu0 %v6817
        %7533 = vmatprep.subr.bf16.mxu0 %v6820
        %7534 = vmatpush1.bf16.msra.mxu0 %v6819
        %7535 = vmatprep.subr.bf16.mxu0 %v6822
        %7536 = vmatpush1.bf16.msra.mxu0 %v6821
        %7537 = vmatprep.subr.bf16.mxu0 %v6824
        %7538 = vmatpush1.bf16.msra.mxu0 %v6823
        %7539 = vmatprep.subr.bf16.mxu0 %v6826
        %7540 = vmatpush1.bf16.msra.mxu0 %v6825
        %7541 = vmatprep.subr.bf16.mxu0 %v6828
        %7542 = vmatpush1.bf16.msra.mxu0 %v6827
        %7543 = vmatprep.subr.bf16.mxu0 %v6830
        %7544 = vmatpush1.bf16.msra.mxu0 %v6829
        %7545 = vmatprep.subr.bf16.mxu0 %v6832
        %7546 = vmatpush1.bf16.msra.mxu0 %v6831
        %7547 = vmatprep.subr.bf16.mxu0 %v6834
        %7548 = vmatpush1.bf16.msra.mxu0 %v6833
        %7549 = vmatprep.subr.bf16.mxu0 %v6836
        %7550 = vmatpush1.bf16.msra.mxu0 %v6835
        %7551 = vmatprep.subr.bf16.mxu0 %v6838
        %7552 = vmatpush1.bf16.msra.mxu0 %v6837
        %7553 = vmatprep.mubr.bf16.mxu0 %v5618
        %7554 = vmatmul.mubr.bf16.gmra.mrb[0].mxu0 %v5617
        %v7555 = vpop.f32.mrb[0].mxu0
        %v7556 = vadd.f32 %v7515, %v7555
        %v7557 = vpop.f32.mrb[0].mxu0
        %v7558 = vadd.f32 %v7517, %v7557
        %v7559 = vpop.f32.mrb[0].mxu0
        %v7560 = vpop.f32.mrb[0].mxu0
        %7561 = vdwg.mxu0
        %7562 = vmatprep.subr.bf16.mxu0 %v6840
        %7563 = vmatpush1.bf16.msra.mxu0 %v6839
        %7564 = vmatprep.subr.bf16.mxu0 %v6842
        %7565 = vmatpush1.bf16.msra.mxu0 %v6841
        %7566 = vmatprep.subr.bf16.mxu0 %v6844
        %7567 = vmatpush1.bf16.msra.mxu0 %v6843
        %7568 = vmatprep.subr.bf16.mxu0 %v6846
        %7569 = vmatpush1.bf16.msra.mxu0 %v6845
        %7570 = vmatprep.subr.bf16.mxu0 %v6848
        %7571 = vmatpush1.bf16.msra.mxu0 %v6847
        %7572 = vmatprep.subr.bf16.mxu0 %v6850
        %7573 = vmatpush1.bf16.msra.mxu0 %v6849
        %7574 = vmatprep.subr.bf16.mxu0 %v6852
        %7575 = vmatpush1.bf16.msra.mxu0 %v6851
        %7576 = vmatprep.subr.bf16.mxu0 %v6854
        %7577 = vmatpush1.bf16.msra.mxu0 %v6853
        %7578 = vmatprep.subr.bf16.mxu0 %v6856
        %7579 = vmatpush1.bf16.msra.mxu0 %v6855
        %7580 = vmatprep.subr.bf16.mxu0 %v6858
        %7581 = vmatpush1.bf16.msra.mxu0 %v6857
        %7582 = vmatprep.subr.bf16.mxu0 %v6860
        %7583 = vmatpush1.bf16.msra.mxu0 %v6859
        %7584 = vmatprep.subr.bf16.mxu0 %v6862
        %7585 = vmatpush1.bf16.msra.mxu0 %v6861
        %7586 = vmatprep.subr.bf16.mxu0 %v6864
        %7587 = vmatpush1.bf16.msra.mxu0 %v6863
        %7588 = vmatprep.subr.bf16.mxu0 %v6866
        %7589 = vmatpush1.bf16.msra.mxu0 %v6865
        %7590 = vmatprep.subr.bf16.mxu0 %v6868
        %7591 = vmatpush1.bf16.msra.mxu0 %v6867
        %7592 = vmatprep.subr.bf16.mxu0 %v6870
        %7593 = vmatpush1.bf16.msra.mxu0 %v6869
        %7594 = vmatprep.mubr.bf16.mxu0 %v5620
        %7595 = vmatmul.mubr.bf16.gmra.mrb[0].mxu0 %v5619
        %v7596 = vpop.f32.mrb[0].mxu0
        %v7597 = vadd.f32 %v7556, %v7596
        %v7598 = vpop.f32.mrb[0].mxu0
        %v7599 = vadd.f32 %v7558, %v7598
        %v7600 = vpop.f32.mrb[0].mxu0
        %v7601 = vpop.f32.mrb[0].mxu0
        %7602 = vdwg.mxu0
        %7603 = vmatprep.subr.bf16.mxu0 %v6872
        %7604 = vmatpush1.bf16.msra.mxu0 %v6871
        %7605 = vmatprep.subr.bf16.mxu0 %v6874
        %7606 = vmatpush1.bf16.msra.mxu0 %v6873
        %7607 = vmatprep.subr.bf16.mxu0 %v6876
        %7608 = vmatpush1.bf16.msra.mxu0 %v6875
        %7609 = vmatprep.subr.bf16.mxu0 %v6878
        %7610 = vmatpush1.bf16.msra.mxu0 %v6877
        %7611 = vmatprep.subr.bf16.mxu0 %v6880
        %7612 = vmatpush1.bf16.msra.mxu0 %v6879
        %7613 = vmatprep.subr.bf16.mxu0 %v6882
        %7614 = vmatpush1.bf16.msra.mxu0 %v6881
        %7615 = vmatprep.subr.bf16.mxu0 %v6884
        %7616 = vmatpush1.bf16.msra.mxu0 %v6883
        %7617 = vmatprep.subr.bf16.mxu0 %v6886
        %7618 = vmatpush1.bf16.msra.mxu0 %v6885
        %7619 = vmatprep.subr.bf16.mxu0 %v6888
        %7620 = vmatpush1.bf16.msra.mxu0 %v6887
        %7621 = vmatprep.subr.bf16.mxu0 %v6890
        %7622 = vmatpush1.bf16.msra.mxu0 %v6889
        %7623 = vmatprep.subr.bf16.mxu0 %v6892
        %7624 = vmatpush1.bf16.msra.mxu0 %v6891
        %7625 = vmatprep.subr.bf16.mxu0 %v6894
        %7626 = vmatpush1.bf16.msra.mxu0 %v6893
        %7627 = vmatprep.subr.bf16.mxu0 %v6896
        %7628 = vmatpush1.bf16.msra.mxu0 %v6895
        %7629 = vmatprep.subr.bf16.mxu0 %v6898
        %7630 = vmatpush1.bf16.msra.mxu0 %v6897
        %7631 = vmatprep.subr.bf16.mxu0 %v6900
        %7632 = vmatpush1.bf16.msra.mxu0 %v6899
        %7633 = vmatprep.subr.bf16.mxu0 %v6902
        %7634 = vmatpush1.bf16.msra.mxu0 %v6901
        %7635 = vmatprep.mubr.bf16.mxu0 %v5622
        %7636 = vmatmul.mubr.bf16.gmra.mrb[0].mxu0 %v5621
        %v7637 = vpop.f32.mrb[0].mxu0
        %v7638 = vadd.f32 %v7597, %v7637
        %v7639 = vpop.f32.mrb[0].mxu0
        %v7640 = vadd.f32 %v7599, %v7639
        %v7641 = vpop.f32.mrb[0].mxu0
        %v7642 = vpop.f32.mrb[0].mxu0
        %7643 = vdwg.mxu0
        %v7644 = vmax.f32 %v7638, 0.0
        %v7645 = vmax.f32 %v7640, 0.0
        %v7646 = vpack.c.bf16 %v7644, %v7644
        %v7647 = vpack.c.bf16 %v7645, %v7645
        %v7680 = vunpack.c.l.b16 %v1117
        %v7681 = vunpack.c.l.b16 %v1118
        %v7682 = vunpack.c.l.b16 %v1119
        %v7683 = vunpack.c.l.b16 %v1120
        %v7684 = vunpack.c.l.b16 %v1121
        %v7685 = vunpack.c.l.b16 %v1122
        %v7686 = vunpack.c.l.b16 %v1123
        %v7687 = vunpack.c.l.b16 %v1124
        %v7688 = vunpack.c.l.b16 %v1125
        %v7689 = vunpack.c.l.b16 %v1126
        %v7690 = vunpack.c.l.b16 %v1127
        %v7691 = vunpack.c.l.b16 %v1128
        %v7692 = vunpack.c.l.b16 %v1129
        %v7693 = vunpack.c.l.b16 %v1130
        %v7694 = vunpack.c.l.b16 %v1131
        %v7695 = vunpack.c.l.b16 %v1132
        %v7696 = vunpack.c.l.b16 %v1133
        %v7697 = vunpack.c.l.b16 %v1134
        %v7698 = vunpack.c.l.b16 %v1135
        %v7699 = vunpack.c.l.b16 %v1136
        %v7700 = vunpack.c.l.b16 %v1137
        %v7701 = vunpack.c.l.b16 %v1138
        %v7702 = vunpack.c.l.b16 %v1139
        %v7703 = vunpack.c.l.b16 %v1140
        %v7704 = vunpack.c.l.b16 %v1141
        %v7705 = vunpack.c.l.b16 %v1142
        %v7706 = vunpack.c.l.b16 %v1143
        %v7707 = vunpack.c.l.b16 %v1144
        %v7708 = vunpack.c.l.b16 %v1145
        %v7709 = vunpack.c.l.b16 %v1146
        %v7710 = vunpack.c.l.b16 %v1147
        %v7711 = vunpack.c.l.b16 %v1148
        %v7712 = vpack.c.b16 %v7681, %v7680
        %v7713 = vpack.c.b16 %v7683, %v7682
        %v7714 = vpack.c.b16 %v7685, %v7684
        %v7715 = vpack.c.b16 %v7687, %v7686
        %v7716 = vpack.c.b16 %v7689, %v7688
        %v7717 = vpack.c.b16 %v7691, %v7690
        %v7718 = vpack.c.b16 %v7693, %v7692
        %v7719 = vpack.c.b16 %v7695, %v7694
        %v7720 = vpack.c.b16 %v7697, %v7696
        %v7721 = vpack.c.b16 %v7699, %v7698
        %v7722 = vpack.c.b16 %v7701, %v7700
        %v7723 = vpack.c.b16 %v7703, %v7702
        %v7724 = vpack.c.b16 %v7705, %v7704
        %v7725 = vpack.c.b16 %v7707, %v7706
        %v7726 = vpack.c.b16 %v7709, %v7708
        %v7727 = vpack.c.b16 %v7711, %v7710
        %7744 = vmatprep.subr.bf16.mxu0 0
        %7745 = vmatpush1.bf16.msra.mxu0 %v7712
        %7746 = vmatprep.subr.bf16.mxu0 0
        %7747 = vmatpush1.bf16.msra.mxu0 %v7713
        %7748 = vmatprep.subr.bf16.mxu0 0
        %7749 = vmatpush1.bf16.msra.mxu0 %v7714
        %7750 = vmatprep.subr.bf16.mxu0 0
        %7751 = vmatpush1.bf16.msra.mxu0 %v7715
        %7752 = vmatprep.subr.bf16.mxu0 0
        %7753 = vmatpush1.bf16.msra.mxu0 %v7716
        %7754 = vmatprep.subr.bf16.mxu0 0
        %7755 = vmatpush1.bf16.msra.mxu0 %v7717
        %7756 = vmatprep.subr.bf16.mxu0 0
        %7757 = vmatpush1.bf16.msra.mxu0 %v7718
        %7758 = vmatprep.subr.bf16.mxu0 0
        %7759 = vmatpush1.bf16.msra.mxu0 %v7719
        %7760 = vmatprep.subr.bf16.mxu0 0
        %7761 = vmatpush1.bf16.msra.mxu0 %v7720
        %7762 = vmatprep.subr.bf16.mxu0 0
        %7763 = vmatpush1.bf16.msra.mxu0 %v7721
        %7764 = vmatprep.subr.bf16.mxu0 0
        %7765 = vmatpush1.bf16.msra.mxu0 %v7722
        %7766 = vmatprep.subr.bf16.mxu0 0
        %7767 = vmatpush1.bf16.msra.mxu0 %v7723
        %7768 = vmatprep.subr.bf16.mxu0 0
        %7769 = vmatpush1.bf16.msra.mxu0 %v7724
        %7770 = vmatprep.subr.bf16.mxu0 0
        %7771 = vmatpush1.bf16.msra.mxu0 %v7725
        %7772 = vmatprep.subr.bf16.mxu0 0
        %7773 = vmatpush1.bf16.msra.mxu0 %v7726
        %7774 = vmatprep.subr.bf16.mxu0 0
        %7775 = vmatpush1.bf16.msra.mxu0 %v7727
        %7776 = vmatprep.mubr.bf16.mxu0 %v7647
        %7777 = vmatmul.mubr.bf16.gmra.mrb[0].mxu0 %v7646
        %v7778 = vpop.f32.mrb[0].mxu0
        %v7779 = vadd.f32 %v1149, %v7778
        %v7780 = vpop.f32.mrb[0].mxu0
        %v7781 = vpop.f32.mrb[0].mxu0
        %v7782 = vpop.f32.mrb[0].mxu0
        %7783 = vdwg.mxu0
        %v7784 = vmax.f32 %v7779, 0.0
        %v7785 = vpack.c.bf16 %v7784, %v7784
        %v7802 = vunpack.c.l.b16 %v1150
        %v7803 = vunpack.c.l.b16 %v1151
        %v7804 = vunpack.c.l.b16 %v1152
        %v7805 = vunpack.c.l.b16 %v1153
        %v7806 = vunpack.c.l.b16 %v1154
        %v7807 = vunpack.c.l.b16 %v1155
        %v7808 = vunpack.c.l.b16 %v1156
        %v7809 = vunpack.c.l.b16 %v1157
        %v7810 = vunpack.c.l.b16 %v1158
        %v7811 = vunpack.c.l.b16 %v1159
        %v7812 = vunpack.c.l.b16 %v1160
        %v7813 = vunpack.c.l.b16 %v1161
        %v7814 = vunpack.c.l.b16 %v1162
        %v7815 = vunpack.c.l.b16 %v1163
        %v7816 = vunpack.c.l.b16 %v1164
        %v7817 = vunpack.c.l.b16 %v1165
        %v7818 = vpack.c.b16 %v7803, %v7802
        %v7819 = vpack.c.b16 %v7805, %v7804
        %v7820 = vpack.c.b16 %v7807, %v7806
        %v7821 = vpack.c.b16 %v7809, %v7808
        %v7822 = vpack.c.b16 %v7811, %v7810
        %v7823 = vpack.c.b16 %v7813, %v7812
        %v7824 = vpack.c.b16 %v7815, %v7814
        %v7825 = vpack.c.b16 %v7817, %v7816
        %7834 = vmatprep.subr.bf16.mxu0 0
        %7835 = vmatpush1.bf16.msra.mxu0 %v7818
        %7836 = vmatprep.subr.bf16.mxu0 0
        %7837 = vmatpush1.bf16.msra.mxu0 %v7819
        %7838 = vmatprep.subr.bf16.mxu0 0
        %7839 = vmatpush1.bf16.msra.mxu0 %v7820
        %7840 = vmatprep.subr.bf16.mxu0 0
        %7841 = vmatpush1.bf16.msra.mxu0 %v7821
        %7842 = vmatprep.subr.bf16.mxu0 0
        %7843 = vmatpush1.bf16.msra.mxu0 %v7822
        %7844 = vmatprep.subr.bf16.mxu0 0
        %7845 = vmatpush1.bf16.msra.mxu0 %v7823
        %7846 = vmatprep.subr.bf16.mxu0 0
        %7847 = vmatpush1.bf16.msra.mxu0 %v7824
        %7848 = vmatprep.subr.bf16.mxu0 0
        %7849 = vmatpush1.bf16.msra.mxu0 %v7825
        %7850 = vmatprep.subr.bf16.mxu0 0
        %7851 = vmatpush1.bf16.msra.mxu0 0
        %7852 = vmatprep.subr.bf16.mxu0 0
        %7853 = vmatpush1.bf16.msra.mxu0 0
        %7854 = vmatprep.subr.bf16.mxu0 0
        %7855 = vmatpush1.bf16.msra.mxu0 0
        %7856 = vmatprep.subr.bf16.mxu0 0
        %7857 = vmatpush1.bf16.msra.mxu0 0
        %7858 = vmatprep.subr.bf16.mxu0 0
        %7859 = vmatpush1.bf16.msra.mxu0 0
        %7860 = vmatprep.subr.bf16.mxu0 0
        %7861 = vmatpush1.bf16.msra.mxu0 0
        %7862 = vmatprep.subr.bf16.mxu0 0
        %7863 = vmatpush1.bf16.msra.mxu0 0
        %7864 = vmatprep.subr.bf16.mxu0 0
        %7865 = vmatpush1.bf16.msra.mxu0 0
        %7866 = vmatprep.mubr.bf16.mxu0 0
        %7867 = vmatmul.mubr.bf16.gmra.mrb[0].mxu0 %v7785
        %v7868 = vpop.f32.mrb[0].mxu0
        %v7869 = vadd.f32 %v1166, %v7868
        %v7870 = vpop.f32.mrb[0].mxu0
        %v7871 = vpop.f32.mrb[0].mxu0
        %v7872 = vpop.f32.mrb[0].mxu0
        %7873 = vdwg.mxu0
        %v7874 = vmax.f32 %v7869, 0.0
        %v7875 = vpack.c.bf16 %v7874, %v7874
        %v7884 = vunpack.c.l.b16 %v1167
        %v7885 = vunpack.c.l.b16 %v1168
        %v7886 = vunpack.c.l.b16 %v1169
        %v7887 = vunpack.c.l.b16 %v1170
        %v7888 = vunpack.c.l.b16 %v1171
        %v7889 = vunpack.c.l.b16 %v1172
        %v7890 = vunpack.c.l.b16 %v1173
        %v7891 = vunpack.c.l.b16 %v1174
        %v7892 = vpack.c.b16 %v7885, %v7884
        %v7893 = vpack.c.b16 %v7887, %v7886
        %v7894 = vpack.c.b16 %v7889, %v7888
        %v7895 = vpack.c.b16 %v7891, %v7890
        %v7901 = vsel %vm3424, %v7875, 0
        %7903 = vmatprep.subr.bf16.mxu0 0
        %7904 = vmatpush1.bf16.msra.mxu0 %v7892
        %7905 = vmatprep.subr.bf16.mxu0 0
        %7906 = vmatpush1.bf16.msra.mxu0 %v7893
        %7907 = vmatprep.subr.bf16.mxu0 0
        %7908 = vmatpush1.bf16.msra.mxu0 %v7894
        %7909 = vmatprep.subr.bf16.mxu0 0
        %7910 = vmatpush1.bf16.msra.mxu0 %v7895
        %7911 = vmatprep.subr.bf16.mxu0 0
        %7912 = vmatpush1.bf16.msra.mxu0 0
        %7913 = vmatprep.subr.bf16.mxu0 0
        %7914 = vmatpush1.bf16.msra.mxu0 0
        %7915 = vmatprep.subr.bf16.mxu0 0
        %7916 = vmatpush1.bf16.msra.mxu0 0
        %7917 = vmatprep.subr.bf16.mxu0 0
        %7918 = vmatpush1.bf16.msra.mxu0 0
        %7919 = vmatprep.subr.bf16.mxu0 0
        %7920 = vmatpush1.bf16.msra.mxu0 0
        %7921 = vmatprep.subr.bf16.mxu0 0
        %7922 = vmatpush1.bf16.msra.mxu0 0
        %7923 = vmatprep.subr.bf16.mxu0 0
        %7924 = vmatpush1.bf16.msra.mxu0 0
        %7925 = vmatprep.subr.bf16.mxu0 0
        %7926 = vmatpush1.bf16.msra.mxu0 0
        %7927 = vmatprep.subr.bf16.mxu0 0
        %7928 = vmatpush1.bf16.msra.mxu0 0
        %7929 = vmatprep.subr.bf16.mxu0 0
        %7930 = vmatpush1.bf16.msra.mxu0 0
        %7931 = vmatprep.subr.bf16.mxu0 0
        %7932 = vmatpush1.bf16.msra.mxu0 0
        %7933 = vmatprep.subr.bf16.mxu0 0
        %7934 = vmatpush1.bf16.msra.mxu0 0
        %7935 = vmatprep.mubr.bf16.mxu0 0
        %7936 = vmatmul.mubr.bf16.gmra.mrb[0].mxu0 %v7901
        %v7937 = vpop.f32.mrb[0].mxu0
        %v7938 = vadd.f32 %v1175, %v7937
        %v7939 = vpop.f32.mrb[0].mxu0
        %v7940 = vpop.f32.mrb[0].mxu0
        %v7941 = vpop.f32.mrb[0].mxu0
        %7942 = vdwg.mxu0
        %v7943 = vxor.u32 %v7938, 2147483648
        %v7944 = vmul.f32 %v7943, 1.442695
        %v7945 = vpow.pop %v7944
        %v7946 = vadd.f32 %v7945, 1.0
        %v7947 = vrcp.pop %v7946
        %v7948 = vmul.f32 1.0, %v7947
        %vm7949 = vcmask 0
        %7950 = vst.msk [vmem:[%s705] sm:$0x1] %vm7949, %v7948
        %p7951 = scmp.lt.s32.totalorder %s37, 1
        %s7952 = scalar_select %p7951, %s37, 1
        %s7953 = scalar_lea.vmem %s17, %s7952
        // Predicated region
        $region137: #{tpu_custom_call.1} parent=87 // pred_check
          %p7954 = pneg %p417
        $region138: #{tpu_custom_call.1} parent=87 // pred_check_branch
          %7956 = sbr.rel (%p7954) target = $region140
        $region139: #{tpu_custom_call.1} parent=87 // pred_region
          _
        $region140: #{tpu_custom_call.1} parent=87 // pred_fallthru
          _
      $region88: #{tpu_custom_call.1} parent=5 // pred_fallthru
        _
      %p7957 = scmp.le.s32.totalorder 2, %s32
      // Predicated region
      $region141: #{tpu_custom_call.1} parent=5 // pred_check
        %p7958 = pneg %p7957
      $region142: #{tpu_custom_call.1} parent=5 // pred_check_branch
        %7960 = sbr.rel (%p7958) target = $region144
      $region143: #{tpu_custom_call.1} parent=5 // pred_region
        %s7961 = ssub.s32 %s32, 2
        // Predicated region
        $region145: #{tpu_custom_call.1} parent=143 // pred_check
          %p7962 = pneg %p423
        $region146: #{tpu_custom_call.1} parent=143 // pred_check_branch
          %7964 = sbr.rel (%p7962) target = $region148
        $region147: #{tpu_custom_call.1} parent=143 // pred_region
          %p7965 = scmp.lt.s32.totalorder %s38, 1
          %s7966 = scalar_select %p7965, %s38, 1
          %s7967 = scalar_lea.vmem %s17, %s7966
        $region148: #{tpu_custom_call.1} parent=143 // pred_fallthru
          _
      $region144: #{tpu_custom_call.1} parent=5 // pred_fallthru
        _
    $region6: #{tpu_custom_call.1} parent=1 // loop_footer
      %s36 = sadd.s32 1, %s32
    $region7: #{tpu_custom_call.1} parent=1 // loop_footer_branch
      %31 = sbr.rel target = $region3
    $region8: #{tpu_custom_call.1} parent=1 // loop_exit
      _
    %7968 = vsyncpa [#allocation4], 1
    %s7969 = scalar_lea.sflag [#allocation4], 1
    %7970 = vsyncpa %s7969, 1
    %7971 = vsyncpa [#allocation6], 1
    %7972 = vsyncpa [#allocation9], 1
    %7973 = vsyncpa [#allocation12], 1
    %7974 = vsyncpa [#allocation15], 1
    %7975 = vsyncpa [#allocation18], 1
    %7976 = vsyncpa [#allocation21], 1

</llo_original>
